<compile_context>
chip_gen: v6e
topology: v6e:2x2x1
jax: 0.10.0
libtpu: 0.0.40
codegen_flags: <defaults>
</compile_context>

<pallas_src>
import jax
import jax.numpy as jnp
from jax import lax
from jax.experimental import pallas as pl
from jax.experimental.pallas import tpu as pltpu

EPS = 1e-5
_MIB = 1024 * 1024


# --------------------------- small helpers ---------------------------

def _silu(x):
    # exp + approximate reciprocal both map to the EUP slot; VALU stays free
    # for the matmul epilogue.
    return x * pl.reciprocal(1.0 + jnp.exp(-x), approx=True)


def _silu_ref(x):
    return x * (1.0 / (1.0 + jnp.exp(-x)))


def _tpu_vmem_capacity_bytes():
    try:
        info = pltpu.get_tpu_info()
        for name in ("vmem_capacity_bytes", "vmem_size_bytes", "vmem_bytes"):
            v = getattr(info, name, None)
            if v:
                return int(v)
    except Exception:
        pass
    return 64 * _MIB            # conservative default (v7x per-core VMEM)


def _vmem_limit_bytes():
    # Explicit limit, leaving headroom below physical capacity for
    # compiler-internal scratch (matters most on v7x: 64 MiB per TensorCore).
    cap = _tpu_vmem_capacity_bytes()
    return min(int(cap * 0.75), 100 * _MIB)


def _block_budget_bytes():
    # Budget for one pipeline stage's blocks + in-kernel temporaries; the
    # per-call `need()` estimates below count double buffers explicitly.
    return int(_vmem_limit_bytes() * 0.6)


def _compiler_params(dim_semantics):
    return pltpu.CompilerParams(
        dimension_semantics=dim_semantics,
        vmem_limit_bytes=_vmem_limit_bytes(),
    )


def _pick_row_tile(H, W, need_bytes, *, budget, n_batch=1):
    """Pick a spatial row tile t (rows of H per grid step).

    Legal t: divides H, multiple of 8 (sublane rule for second-to-last block
    dims) and t*W multiple of 128 (lane-dense channel-major stores); t == H
    (full extent) is always legal.  Among tiles fitting the VMEM budget
    (double buffers counted by `need_bytes`) prefer the largest that still
    leaves >= 4 grid steps (keeps both v7x TCs busy and the pipeline fed)."""
    cands = [t for t in range(8, H + 1, 8)
             if H % t == 0 and ((t * W) % 128 == 0 or t == H)]
    if H not in cands:
        cands.append(H)
    capped = [t for t in cands if t * W <= 2048]   # cap f32 accumulator extent
    if capped:
        cands = capped
    fits = [t for t in cands if need_bytes(t) <= budget]
    pool = fits if fits else [min(cands, key=need_bytes)]
    t = max(pool)
    busy = [s for s in pool if n_batch * (H // s) >= 4]
    if busy:
        t = max(busy)
    return t


# ------------------- cv1: 1x1 conv + folded BN + SiLU -------------------

def _make_cv1_kernel(cin, th, W):
    tm = th * W

    def kernel(x_ref, w_ref, b_ref, y_ref):
        # x_ref: (cin, th, W) f32 NCHW block (cast fused here); w_ref: (2c, cin)
        # bf16; b_ref: (2c, 1) f32; y_ref: (2c, th*W) bf16 channel-major.
        x = x_ref[...].astype(jnp.bfloat16).reshape(cin, tm)
        a = jnp.dot(w_ref[...], x, preferred_element_type=jnp.float32)
        y_ref[...] = _silu(a + b_ref[...]).astype(y_ref.dtype)

    return kernel


def conv1x1_bn_silu(x, w_t, bias, out_dtype=jnp.bfloat16):
    # x: (N, Cin, H, W) f32 NCHW; w_t: (Cout, Cin) bf16 (BN folded);
    # bias: (Cout,) f32.  One merged matmul produces all output channels;
    # output is (N, Cout, H*W) bf16 channel-major (lane-dense store).
    N, Cin, H, W = x.shape
    Cout = w_t.shape[0]

    def need(t):
        tm = t * W
        return (2 * (4 * Cin * tm + 2 * Cout * tm)      # in/out double buffers
                + 2 * Cin * tm + 4 * Cout * tm          # bf16 temp + f32 acc
                + 4 * (w_t.size + Cout))

    th = _pick_row_tile(H, W, need, budget=_block_budget_bytes(), n_batch=N)
    return pl.pallas_call(
        _make_cv1_kernel(Cin, th, W),
        out_shape=jax.ShapeDtypeStruct((N, Cout, H * W), out_dtype),
        grid=(N, H // th),
        in_specs=[
            pl.BlockSpec((None, Cin, th, W), lambda n, i: (n, 0, i, 0)),
            pl.BlockSpec((Cout, Cin), lambda n, i: (0, 0)),
            pl.BlockSpec((Cout, 1), lambda n, i: (0, 0)),
        ],
        out_specs=pl.BlockSpec((None, Cout, th * W), lambda n, i: (n, 0, i)),
        compiler_params=_compiler_params(("parallel", "parallel")),
    )(x, w_t, bias.reshape(Cout, 1))


# ------------- 3x3 conv + folded BN + SiLU (+ fused residual) -------------

def _make_conv3x3_kernel(tr, W, cin, cout, coff, res_coff, with_residual):
    tm = tr * W

    def build_patch(xc_ref, xt_ref, xb_ref, win_ref, patch_ref):
        i = pl.program_id(1)
        last = pl.num_programs(1) - 1
        dt = win_ref.dtype
        # Zero the 1-pixel "same" halo border inside VMEM (no HBM jnp.pad).
        win_ref[:, 0:1, :] = jnp.zeros((cin, 1, W + 2), dt)
        win_ref[:, tr + 1:tr + 2, :] = jnp.zeros((cin, 1, W + 2), dt)
        win_ref[:, :, 0:1] = jnp.zeros((cin, tr + 2, 1), dt)
        win_ref[:, :, W + 1:W + 2] = jnp.zeros((cin, tr + 2, 1), dt)
        # Centre rows (channel-half slice is a free outer-dim slice in NCHW).
        win_ref[:, 1:tr + 1, 1:W + 1] = xc_ref[coff:coff + cin]
        # Row halos from two auto-pipelined 8-row blocks of the same input
        # (double-buffered by the normal pipeline; no synchronous manual DMA).
        @pl.when(i > 0)
        def _():
            win_ref[:, 0:1, 1:W + 1] = xt_ref[coff:coff + cin, 7:8, :]

        @pl.when(i < last)
        def _():
            win_ref[:, tr + 1:tr + 2, 1:W + 1] = xb_ref[coff:coff + cin, 0:1, :]

        # im2col once per tile: 9 shifted taps -> (9, cin, tr, W) patch.
        for dy in range(3):
            for dx in range(3):
                patch_ref[3 * dy + dx] = win_ref[:, dy:dy + tr, dx:dx + W]

    def compute(w_ref, b_ref, patch_ref):
        # Single big-K matmul (K = 9*cin) instead of nine K=cin accumulating
        # dots: no f32 accumulator RMW, better MXU fill on v6e/v7x (and v5e).
        patch = patch_ref[...].reshape(9 * cin, tm)
        acc = jnp.dot(w_ref[...], patch, preferred_element_type=jnp.float32)
        return _silu(acc + b_ref[...])

    if with_residual:
        def kernel(xc_ref, xt_ref, xb_ref, res_ref, w_ref, b_ref, o_ref,
                   win_ref, patch_ref):
            build_patch(xc_ref, xt_ref, xb_ref, win_ref, patch_ref)
            y = compute(w_ref, b_ref, patch_ref)
            res = res_ref[res_coff:res_coff + cout].reshape(cout, tm)
            o_ref[...] = (y + res.astype(jnp.float32)).astype(o_ref.dtype)
    else:
        def kernel(xc_ref, xt_ref, xb_ref, w_ref, b_ref, o_ref,
                   win_ref, patch_ref):
            build_patch(xc_ref, xt_ref, xb_ref, win_ref, patch_ref)
            o_ref[...] = compute(w_ref, b_ref, patch_ref).astype(o_ref.dtype)

    return kernel


def conv3x3_bn_silu(x, w_t, bias, *, H, W, cin, coff=0,
                    residual=None, res_coff=0, out_dtype=jnp.bfloat16):
    # x: (N, Ct, H*W) bf16 channel-major; channels [coff, coff+cin) are used.
    # w_t: (Cout, 9*cin) bf16 (BN folded, row order (dy, dx, ci));
    # bias: (Cout,) f32; residual: optional (N, Rt, H*W) bf16 whose channels
    # [res_coff, res_coff+Cout) are added after the activation (Bottleneck add).
    N, Ct = x.shape[0], x.shape[1]
    Cout = w_t.shape[0]
    assert H % 8 == 0, "row-halo blocks require H % 8 == 0"
    assert coff + cin <= Ct
    x4 = x.reshape(N, Ct, H, W)                 # free, row-major compatible
    res4 = None
    if residual is not None:
        Rt = residual.shape[1]
        assert res_coff + Cout <= Rt
        res4 = residual.reshape(N, Rt, H, W)

    def need(t):
        tm = t * W
        blocks = (2 * Ct * tm + 2 * 2 * Ct * 8 * W + 2 * Cout * tm
                  + (2 * (res4.shape[1] if res4 is not None else 0) * tm))
        scratch = 2 * cin * (t + 2) * (W + 2) + 2 * 9 * cin * tm
        temps = 2 * 9 * cin * tm + 2 * 4 * Cout * tm
        return 2 * blocks + scratch + temps + 4 * (w_t.size + Cout)

    tr = _pick_row_tile(H, W, need, budget=_block_budget_bytes(), n_batch=N)
    rblocks = H // 8

    def top_map(n, i):      # 8-row block whose last row is input row i*tr - 1
        return (n, 0, jnp.maximum(i * (tr // 8) - 1, 0), 0)

    def bot_map(n, i):      # 8-row block whose first row is input row i*tr + tr
        return (n, 0, jnp.minimum((i + 1) * (tr // 8), rblocks - 1), 0)

    in_specs = [
        pl.BlockSpec((None, Ct, tr, W), lambda n, i: (n, 0, i, 0)),
        pl.BlockSpec((None, Ct, 8, W), top_map),
        pl.BlockSpec((None, Ct, 8, W), bot_map),
    ]
    args = [x4, x4, x4]
    if res4 is not None:
        in_specs.append(pl.BlockSpec((None, res4.shape[1], tr, W),
                                     lambda n, i: (n, 0, i, 0)))
        args.append(res4)
    in_specs += [
        pl.BlockSpec((Cout, 9 * cin), lambda n, i: (0, 0)),
        pl.BlockSpec((Cout, 1), lambda n, i: (0, 0)),
    ]
    args += [w_t, bias.reshape(Cout, 1)]

    kernel = _make_conv3x3_kernel(tr, W, cin, Cout, coff, res_coff,
                                  residual is not None)
    return pl.pallas_call(
        kernel,
        out_shape=jax.ShapeDtypeStruct((N, Cout, H * W), out_dtype),
        grid=(N, H // tr),
        in_specs=in_specs,
        out_specs=pl.BlockSpec((None, Cout, tr * W), lambda n, i: (n, 0, i)),
        scratch_shapes=[
            pltpu.VMEM((cin, tr + 2, W + 2), jnp.bfloat16),   # padded window
            pltpu.VMEM((9, cin, tr, W), jnp.bfloat16),        # im2col patch
        ],
        compiler_params=_compiler_params(("parallel", "parallel")),
    )(*args)


# ------------- cv2: 1x1 conv over the fused channel concat -------------

def _make_cv2_kernel(chunk_channels):
    n_chunks = len(chunk_channels)
    offs, off = [], 0
    for ck in chunk_channels:
        offs.append(off)
        off += ck

    def kernel(*refs):
        chunk_refs = refs[:n_chunks]
        w_ref, b_ref, o_ref, patch_ref = refs[n_chunks:n_chunks + 4]
        # Fused concat: copy each chunk tile into one (cat_ch, tm) VMEM patch,
        # then a single big-K matmul (no per-chunk accumulator passes).
        for r, ck, o in zip(chunk_refs, chunk_channels, offs):
            patch_ref[o:o + ck, :] = r[...]
        a = jnp.dot(w_ref[...], patch_ref[...],
                    preferred_element_type=jnp.float32)
        o_ref[...] = _silu(a + b_ref[...]).astype(o_ref.dtype)

    return kernel


def conv1x1_concat_bn_silu(chunks, w_t, bias, *, H, W, out_dtype=jnp.float32):
    # chunks: list of (N, c_k, H*W) bf16 channel-major; w_t: (Cout, sum c_k)
    # bf16 (BN folded); bias: (Cout,) f32.  Output is NCHW-native
    # (N, Cout, H*W) f32 — no exit transpose needed.
    N = chunks[0].shape[0]
    chunk_channels = [int(ch.shape[1]) for ch in chunks]
    cat = sum(chunk_channels)
    Cout = w_t.shape[0]
    assert w_t.shape[1] == cat

    def need(t):
        tm = t * W
        return (2 * (2 * cat * tm + 4 * Cout * tm)
                + 2 * cat * tm + 4 * Cout * tm
                + 4 * (w_t.size + Cout))

    th = _pick_row_tile(H, W, need, budget=_block_budget_bytes(), n_batch=N)
    tm = th * W
    in_specs = [pl.BlockSpec((None, ck, tm), lambda n, i: (n, 0, i))
                for ck in chunk_channels]
    in_specs += [
        pl.BlockSpec((Cout, cat), lambda n, i: (0, 0)),
        pl.BlockSpec((Cout, 1), lambda n, i: (0, 0)),
    ]
    return pl.pallas_call(
        _make_cv2_kernel(chunk_channels),
        out_shape=jax.ShapeDtypeStruct((N, Cout, H * W), out_dtype),
        grid=(N, H // th),
        in_specs=in_specs,
        out_specs=pl.BlockSpec((None, Cout, tm), lambda n, i: (n, 0, i)),
        scratch_shapes=[pltpu.VMEM((cat, tm), jnp.bfloat16)],
        compiler_params=_compiler_params(("parallel", "parallel")),
    )(*chunks, w_t, bias.reshape(Cout, 1))


# --------------------------- params (deterministic) ---------------------------

def _fold_bn(w, gamma, beta, mean, var):
    # Eval-mode BN folded into conv: y = scale*conv(x) + (beta - mean*scale)
    scale = gamma / jnp.sqrt(var + EPS)
    return w * scale, beta - mean * scale


def _init_conv_bn(key, kh, kw, cin, cout):
    kw_, kg, kb, km, kv = jax.random.split(key, 5)
    w = 0.3 * jax.random.normal(kw_, (kh, kw, cin, cout), jnp.float32)   # HWIO
    gamma = 1.0 + 0.1 * jax.random.normal(kg, (cout,), jnp.float32)
    beta = 0.1 * jax.random.normal(kb, (cout,), jnp.float32)
    mean = 0.1 * jax.random.normal(km, (cout,), jnp.float32)
    var = 0.5 + jax.random.uniform(kv, (cout,), jnp.float32)
    return _fold_bn(w, gamma, beta, mean, var)


def init_c2f_params(key, channels, num_bottlenecks, bottleneck_channels):
    keys = jax.random.split(key, 2 + 2 * num_bottlenecks)
    params = {}
    params["cv1"] = _init_conv_bn(keys[0], 1, 1, channels, channels)
    cat_ch = channels + bottleneck_channels * num_bottlenecks
    params["cv2"] = _init_conv_bn(keys[1], 1, 1, cat_ch, channels)
    bns = []
    for n in range(num_bottlenecks):
        b1 = _init_conv_bn(keys[2 + 2 * n], 3, 3,
                           bottleneck_channels, bottleneck_channels)
        b2 = _init_conv_bn(keys[3 + 2 * n], 3, 3,
                           bottleneck_channels, bottleneck_channels)
        bns.append((b1, b2))
    params["m"] = bns
    return params


# --------------------------- C2f forward (Pallas) ---------------------------

def c2f_forward(x_nchw, params):
    # QuantStub / DeQuantStub are identity in float (non-quantised) mode.
    x = x_nchw.astype(jnp.float32)
    N, C, H, W = x.shape

    # cv1 (1x1): one merged matmul emits both C2f chunk halves as a single
    # lane-dense channel-major tensor; downstream slices the channel halves.
    w1, b1 = params["cv1"]
    two_c = w1.shape[-1]
    c = two_c // 2
    if params["m"]:
        bc = params["m"][0][0][0].shape[2]
        if bc != c:
            raise ValueError("C2f requires bottleneck_channels == channels // 2")
    w1_t = jnp.transpose(w1.reshape(C, two_c)).astype(jnp.bfloat16)
    y = conv1x1_bn_silu(x, w1_t, b1)                      # (N, 2c, H*W) bf16

    # Bottlenecks: z + SiLU(BN(conv3(SiLU(BN(conv3(z)))))), fully fused.
    ys = [y]
    z, z_off = y, c                                       # z = y[:, c:2c]
    for (wa, ba), (wb, bb) in params["m"]:
        ci, co = wa.shape[2], wa.shape[3]
        wa_t = jnp.transpose(wa.reshape(9 * ci, co)).astype(jnp.bfloat16)
        wb_t = jnp.transpose(wb.reshape(9 * ci, co)).astype(jnp.bfloat16)
        h = conv3x3_bn_silu(z, wa_t, ba, H=H, W=W, cin=ci, coff=z_off)
        z_new = conv3x3_bn_silu(h, wb_t, bb, H=H, W=W, cin=ci, coff=0,
                                residual=z, res_coff=z_off)
        ys.append(z_new)
        z, z_off = z_new, 0

    # cv2 (1x1) over the fused channel concat of [y, z_1, ..., z_n].
    w2, b2 = params["cv2"]
    cat, Cout = w2.shape[2], w2.shape[3]
    w2_t = jnp.transpose(w2.reshape(cat, Cout)).astype(jnp.bfloat16)
    out = conv1x1_concat_bn_silu(ys, w2_t, b2, H=H, W=W, out_dtype=jnp.float32)
    return out.reshape(N, Cout, H, W)                     # already NCHW


# --------------------------- pure-JAX reference ---------------------------

def _conv_bn_silu_ref(x, w_eff, b_eff):
    kh, kw = w_eff.shape[0], w_eff.shape[1]
    y = lax.conv_general_dilated(
        x, w_eff, window_strides=(1, 1),
        padding=((kh // 2, kh // 2), (kw // 2, kw // 2)),
        dimension_numbers=("NHWC", "HWIO", "NHWC"),
        precision=lax.Precision.HIGHEST)
    return _silu_ref(y + b_eff)


def c2f_reference(x_nchw, params):
    x = jnp.transpose(x_nchw, (0, 2, 3, 1)).astype(jnp.float32)
    w1, b1 = params["cv1"]
    y = _conv_bn_silu_ref(x, w1, b1)
    c = y.shape[-1] // 2
    ys = [y[..., :c], y[..., c:]]
    for (w_a, b_a), (w_b, b_b) in params["m"]:
        z = ys[-1]
        ys.append(z + _conv_bn_silu_ref(_conv_bn_silu_ref(z, w_a, b_a), w_b, b_b))
    cat = jnp.concatenate(ys, axis=-1)
    w2, b2 = params["cv2"]
    out = _conv_bn_silu_ref(cat, w2, b2)
    return jnp.transpose(out, (0, 3, 1, 2))


if __name__ == "__main__":
    key = jax.random.PRNGKey(0)
    kx, kp = jax.random.split(key)

    channels, num_bottlenecks, bottleneck_channels = 4, 2, 2   # channels//2 == bottleneck_channels
    x = jax.random.normal(kx, (2, channels, 16, 16), jnp.float32)
    params = init_c2f_params(kp, channels, num_bottlenecks, bottleneck_channels)

    out = jax.block_until_ready(jax.jit(c2f_forward)(x, params))
    ref = jax.block_until_ready(c2f_reference(x, params))

    assert out.shape == (2, channels, 16, 16)
    assert out.dtype == jnp.float32

    # Kernels run bf16 on the MXU with f32 accumulation (inference precision),
    # so validate with a bf16-appropriate tolerance against the f32 reference.
    err = float(jnp.max(jnp.abs(out - ref)))
    scale = float(jnp.max(jnp.abs(ref)))
    if err > 5e-2 + 3e-2 * scale:
        raise AssertionError(
            f"mismatch vs reference: max abs err {err} (ref scale {scale})")
    print("KERNEL_OK")
</pallas_src>

<mosaic_0001>
module attributes {stable_mosaic.version = 11 : i64} {
  func.func @kernel(%arg0: i32, %arg1: i32, %arg2: memref<1x4x8x16xbf16, #tpu.memory_space<vmem>>, %arg3: memref<1x4x8x16xbf16, #tpu.memory_space<vmem>>, %arg4: memref<1x4x8x16xbf16, #tpu.memory_space<vmem>>, %arg5: memref<2x18xbf16, #tpu.memory_space<vmem>>, %arg6: memref<2x1xf32, #tpu.memory_space<vmem>>, %arg7: memref<1x2x128xbf16, #tpu.memory_space<vmem>>, %arg8: memref<2x10x18xbf16, #tpu.memory_space<vmem>>, %arg9: memref<9x2x8x16xbf16, #tpu.memory_space<vmem>>) attributes {dimension_semantics = [#tpu.dimension_semantics<parallel>, #tpu.dimension_semantics<parallel>], iteration_bounds = array<i64: 2, 2>, scalar_prefetch = 0 : i64, scratch_operands = 2 : i64, tpu.core_type = #tpu.core_type<tc>, window_params = [{transform_indices = @transform_0, window_bounds = array<i64: 1, 4, 8, 16>}, {transform_indices = @transform_1, window_bounds = array<i64: 1, 4, 8, 16>}, {transform_indices = @transform_2, window_bounds = array<i64: 1, 4, 8, 16>}, {pipeline_mode = #tpu.pipeline_mode<synchronous>, transform_indices = @transform_3, window_bounds = array<i64: 2, 18>}, {pipeline_mode = #tpu.pipeline_mode<synchronous>, transform_indices = @transform_4, window_bounds = array<i64: 2, 1>}, {transform_indices = @transform_5, window_bounds = array<i64: 1, 2, 128>}]} {
    %cst = arith.constant 0.000000e+00 : bf16
    %0 = vector.broadcast %cst : bf16 to vector<2x1x18xbf16>
    %c0 = arith.constant 0 : index
    %c0_0 = arith.constant 0 : index
    %c0_1 = arith.constant 0 : index
    %1 = vector.load %arg8[%c0, %c0_0, %c0_1] : memref<2x10x18xbf16, #tpu.memory_space<vmem>>, vector<2x1x18xbf16>
    tpu.vector_store %arg8[%c0, %c0_0, %c0_1], %0 {strides = array<i32>} : memref<2x10x18xbf16, #tpu.memory_space<vmem>>, vector<2x1x18xbf16>,
    %cst_2 = arith.constant 0.000000e+00 : bf16
    %2 = vector.broadcast %cst_2 : bf16 to vector<2x1x18xbf16>
    %c0_3 = arith.constant 0 : index
    %c9 = arith.constant 9 : index
    %c0_4 = arith.constant 0 : index
    %3 = vector.load %arg8[%c0_3, %c9, %c0_4] : memref<2x10x18xbf16, #tpu.memory_space<vmem>>, vector<2x1x18xbf16>
    tpu.vector_store %arg8[%c0_3, %c9, %c0_4], %2 {strides = array<i32>} : memref<2x10x18xbf16, #tpu.memory_space<vmem>>, vector<2x1x18xbf16>,
    %cst_5 = arith.constant 0.000000e+00 : bf16
    %4 = vector.broadcast %cst_5 : bf16 to vector<2x10x1xbf16>
    %c0_6 = arith.constant 0 : index
    %c0_7 = arith.constant 0 : index
    %c0_8 = arith.constant 0 : index
    %5 = vector.load %arg8[%c0_6, %c0_7, %c0_8] : memref<2x10x18xbf16, #tpu.memory_space<vmem>>, vector<2x10x1xbf16>
    tpu.vector_store %arg8[%c0_6, %c0_7, %c0_8], %4 {strides = array<i32>} : memref<2x10x18xbf16, #tpu.memory_space<vmem>>, vector<2x10x1xbf16>,
    %cst_9 = arith.constant 0.000000e+00 : bf16
    %6 = vector.broadcast %cst_9 : bf16 to vector<2x10x1xbf16>
    %c0_10 = arith.constant 0 : index
    %c0_11 = arith.constant 0 : index
    %c17 = arith.constant 17 : index
    %7 = vector.load %arg8[%c0_10, %c0_11, %c17] : memref<2x10x18xbf16, #tpu.memory_space<vmem>>, vector<2x10x1xbf16>
    tpu.vector_store %arg8[%c0_10, %c0_11, %c17], %6 {strides = array<i32>} : memref<2x10x18xbf16, #tpu.memory_space<vmem>>, vector<2x10x1xbf16>,
    %c0_12 = arith.constant 0 : index
    %c2 = arith.constant 2 : index
    %c0_13 = arith.constant 0 : index
    %c0_14 = arith.constant 0 : index
    %8 = vector.load %arg2[%c0_12, %c2, %c0_13, %c0_14] : memref<1x4x8x16xbf16, #tpu.memory_space<vmem>>, vector<1x2x8x16xbf16>
    %9 = vector.shape_cast %8 : vector<1x2x8x16xbf16> to vector<2x8x16xbf16>
    %c0_15 = arith.constant 0 : index
    %c1 = arith.constant 1 : index
    %c1_16 = arith.constant 1 : index
    %10 = vector.load %arg8[%c0_15, %c1, %c1_16] : memref<2x10x18xbf16, #tpu.memory_space<vmem>>, vector<2x8x16xbf16>
    tpu.vector_store %arg8[%c0_15, %c1, %c1_16], %9 {strides = array<i32>} : memref<2x10x18xbf16, #tpu.memory_space<vmem>>, vector<2x8x16xbf16>,
    %c0_i32 = arith.constant 0 : i32
    %11 = arith.cmpi sgt, %arg1, %c0_i32 : i32
    %12 = arith.extui %11 : i1 to i32
    %c0_i32_17 = arith.constant 0 : i32
    %13 = arith.cmpi ne, %12, %c0_i32_17 : i32
    scf.if %13 {
      %c0_90 = arith.constant 0 : index
      %c2_91 = arith.constant 2 : index
      %c7_92 = arith.constant 7 : index
      %c0_93 = arith.constant 0 : index
      %71 = vector.load %arg3[%c0_90, %c2_91, %c7_92, %c0_93] : memref<1x4x8x16xbf16, #tpu.memory_space<vmem>>, vector<1x2x1x16xbf16>
      %72 = vector.shape_cast %71 : vector<1x2x1x16xbf16> to vector<2x1x16xbf16>
      %c0_94 = arith.constant 0 : index
      %c0_95 = arith.constant 0 : index
      %c1_96 = arith.constant 1 : index
      %73 = vector.load %arg8[%c0_94, %c0_95, %c1_96] : memref<2x10x18xbf16, #tpu.memory_space<vmem>>, vector<2x1x16xbf16>
      tpu.vector_store %arg8[%c0_94, %c0_95, %c1_96], %72 {strides = array<i32>} : memref<2x10x18xbf16, #tpu.memory_space<vmem>>, vector<2x1x16xbf16>,
    } else {
    }
    %c1_i32 = arith.constant 1 : i32
    %14 = arith.cmpi slt, %arg1, %c1_i32 : i32
    %15 = arith.extui %14 : i1 to i32
    %c0_i32_18 = arith.constant 0 : i32
    %16 = arith.cmpi ne, %15, %c0_i32_18 : i32
    scf.if %16 {
      %c0_90 = arith.constant 0 : index
      %c2_91 = arith.constant 2 : index
      %c0_92 = arith.constant 0 : index
      %c0_93 = arith.constant 0 : index
      %71 = vector.load %arg4[%c0_90, %c2_91, %c0_92, %c0_93] : memref<1x4x8x16xbf16, #tpu.memory_space<vmem>>, vector<1x2x1x16xbf16>
      %72 = vector.shape_cast %71 : vector<1x2x1x16xbf16> to vector<2x1x16xbf16>
      %c0_94 = arith.constant 0 : index
      %c9_95 = arith.constant 9 : index
      %c1_96 = arith.constant 1 : index
      %73 = vector.load %arg8[%c0_94, %c9_95, %c1_96] : memref<2x10x18xbf16, #tpu.memory_space<vmem>>, vector<2x1x16xbf16>
      tpu.vector_store %arg8[%c0_94, %c9_95, %c1_96], %72 {strides = array<i32>} : memref<2x10x18xbf16, #tpu.memory_space<vmem>>, vector<2x1x16xbf16>,
    } else {
    }
    %c0_19 = arith.constant 0 : index
    %c0_20 = arith.constant 0 : index
    %c0_21 = arith.constant 0 : index
    %17 = vector.load %arg8[%c0_19, %c0_20, %c0_21] : memref<2x10x18xbf16, #tpu.memory_space<vmem>>, vector<2x8x16xbf16>
    %c0_22 = arith.constant 0 : index
    %c0_23 = arith.constant 0 : index
    %c0_24 = arith.constant 0 : index
    %c0_25 = arith.constant 0 : index
    %18 = vector.load %arg9[%c0_22, %c0_23, %c0_24, %c0_25] : memref<9x2x8x16xbf16, #tpu.memory_space<vmem>>, vector<1x2x8x16xbf16>
    %19 = vector.shape_cast %18 : vector<1x2x8x16xbf16> to vector<2x8x16xbf16>
    %20 = vector.shape_cast %17 : vector<2x8x16xbf16> to vector<1x2x8x16xbf16>
    tpu.vector_store %arg9[%c0_22, %c0_23, %c0_24, %c0_25], %20 {strides = array<i32>} : memref<9x2x8x16xbf16, #tpu.memory_space<vmem>>, vector<1x2x8x16xbf16>,
    %c0_26 = arith.constant 0 : index
    %c0_27 = arith.constant 0 : index
    %c1_28 = arith.constant 1 : index
    %21 = vector.load %arg8[%c0_26, %c0_27, %c1_28] : memref<2x10x18xbf16, #tpu.memory_space<vmem>>, vector<2x8x16xbf16>
    %c1_29 = arith.constant 1 : index
    %c0_30 = arith.constant 0 : index
    %c0_31 = arith.constant 0 : index
    %c0_32 = arith.constant 0 : index
    %22 = vector.load %arg9[%c1_29, %c0_30, %c0_31, %c0_32] : memref<9x2x8x16xbf16, #tpu.memory_space<vmem>>, vector<1x2x8x16xbf16>
    %23 = vector.shape_cast %22 : vector<1x2x8x16xbf16> to vector<2x8x16xbf16>
    %24 = vector.shape_cast %21 : vector<2x8x16xbf16> to vector<1x2x8x16xbf16>
    tpu.vector_store %arg9[%c1_29, %c0_30, %c0_31, %c0_32], %24 {strides = array<i32>} : memref<9x2x8x16xbf16, #tpu.memory_space<vmem>>, vector<1x2x8x16xbf16>,
    %c0_33 = arith.constant 0 : index
    %c0_34 = arith.constant 0 : index
    %c2_35 = arith.constant 2 : index
    %25 = vector.load %arg8[%c0_33, %c0_34, %c2_35] : memref<2x10x18xbf16, #tpu.memory_space<vmem>>, vector<2x8x16xbf16>
    %c2_36 = arith.constant 2 : index
    %c0_37 = arith.constant 0 : index
    %c0_38 = arith.constant 0 : index
    %c0_39 = arith.constant 0 : index
    %26 = vector.load %arg9[%c2_36, %c0_37, %c0_38, %c0_39] : memref<9x2x8x16xbf16, #tpu.memory_space<vmem>>, vector<1x2x8x16xbf16>
    %27 = vector.shape_cast %26 : vector<1x2x8x16xbf16> to vector<2x8x16xbf16>
    %28 = vector.shape_cast %25 : vector<2x8x16xbf16> to vector<1x2x8x16xbf16>
    tpu.vector_store %arg9[%c2_36, %c0_37, %c0_38, %c0_39], %28 {strides = array<i32>} : memref<9x2x8x16xbf16, #tpu.memory_space<vmem>>, vector<1x2x8x16xbf16>,
    %c0_40 = arith.constant 0 : index
    %c1_41 = arith.constant 1 : index
    %c0_42 = arith.constant 0 : index
    %29 = vector.load %arg8[%c0_40, %c1_41, %c0_42] : memref<2x10x18xbf16, #tpu.memory_space<vmem>>, vector<2x8x16xbf16>
    %c3 = arith.constant 3 : index
    %c0_43 = arith.constant 0 : index
    %c0_44 = arith.constant 0 : index
    %c0_45 = arith.constant 0 : index
    %30 = vector.load %arg9[%c3, %c0_43, %c0_44, %c0_45] : memref<9x2x8x16xbf16, #tpu.memory_space<vmem>>, vector<1x2x8x16xbf16>
    %31 = vector.shape_cast %30 : vector<1x2x8x16xbf16> to vector<2x8x16xbf16>
    %32 = vector.shape_cast %29 : vector<2x8x16xbf16> to vector<1x2x8x16xbf16>
    tpu.vector_store %arg9[%c3, %c0_43, %c0_44, %c0_45], %32 {strides = array<i32>} : memref<9x2x8x16xbf16, #tpu.memory_space<vmem>>, vector<1x2x8x16xbf16>,
    %c0_46 = arith.constant 0 : index
    %c1_47 = arith.constant 1 : index
    %c1_48 = arith.constant 1 : index
    %33 = vector.load %arg8[%c0_46, %c1_47, %c1_48] : memref<2x10x18xbf16, #tpu.memory_space<vmem>>, vector<2x8x16xbf16>
    %c4 = arith.constant 4 : index
    %c0_49 = arith.constant 0 : index
    %c0_50 = arith.constant 0 : index
    %c0_51 = arith.constant 0 : index
    %34 = vector.load %arg9[%c4, %c0_49, %c0_50, %c0_51] : memref<9x2x8x16xbf16, #tpu.memory_space<vmem>>, vector<1x2x8x16xbf16>
    %35 = vector.shape_cast %34 : vector<1x2x8x16xbf16> to vector<2x8x16xbf16>
    %36 = vector.shape_cast %33 : vector<2x8x16xbf16> to vector<1x2x8x16xbf16>
    tpu.vector_store %arg9[%c4, %c0_49, %c0_50, %c0_51], %36 {strides = array<i32>} : memref<9x2x8x16xbf16, #tpu.memory_space<vmem>>, vector<1x2x8x16xbf16>,
    %c0_52 = arith.constant 0 : index
    %c1_53 = arith.constant 1 : index
    %c2_54 = arith.constant 2 : index
    %37 = vector.load %arg8[%c0_52, %c1_53, %c2_54] : memref<2x10x18xbf16, #tpu.memory_space<vmem>>, vector<2x8x16xbf16>
    %c5 = arith.constant 5 : index
    %c0_55 = arith.constant 0 : index
    %c0_56 = arith.constant 0 : index
    %c0_57 = arith.constant 0 : index
    %38 = vector.load %arg9[%c5, %c0_55, %c0_56, %c0_57] : memref<9x2x8x16xbf16, #tpu.memory_space<vmem>>, vector<1x2x8x16xbf16>
    %39 = vector.shape_cast %38 : vector<1x2x8x16xbf16> to vector<2x8x16xbf16>
    %40 = vector.shape_cast %37 : vector<2x8x16xbf16> to vector<1x2x8x16xbf16>
    tpu.vector_store %arg9[%c5, %c0_55, %c0_56, %c0_57], %40 {strides = array<i32>} : memref<9x2x8x16xbf16, #tpu.memory_space<vmem>>, vector<1x2x8x16xbf16>,
    %c0_58 = arith.constant 0 : index
    %c2_59 = arith.constant 2 : index
    %c0_60 = arith.constant 0 : index
    %41 = vector.load %arg8[%c0_58, %c2_59, %c0_60] : memref<2x10x18xbf16, #tpu.memory_space<vmem>>, vector<2x8x16xbf16>
    %c6 = arith.constant 6 : index
    %c0_61 = arith.constant 0 : index
    %c0_62 = arith.constant 0 : index
    %c0_63 = arith.constant 0 : index
    %42 = vector.load %arg9[%c6, %c0_61, %c0_62, %c0_63] : memref<9x2x8x16xbf16, #tpu.memory_space<vmem>>, vector<1x2x8x16xbf16>
    %43 = vector.shape_cast %42 : vector<1x2x8x16xbf16> to vector<2x8x16xbf16>
    %44 = vector.shape_cast %41 : vector<2x8x16xbf16> to vector<1x2x8x16xbf16>
    tpu.vector_store %arg9[%c6, %c0_61, %c0_62, %c0_63], %44 {strides = array<i32>} : memref<9x2x8x16xbf16, #tpu.memory_space<vmem>>, vector<1x2x8x16xbf16>,
    %c0_64 = arith.constant 0 : index
    %c2_65 = arith.constant 2 : index
    %c1_66 = arith.constant 1 : index
    %45 = vector.load %arg8[%c0_64, %c2_65, %c1_66] : memref<2x10x18xbf16, #tpu.memory_space<vmem>>, vector<2x8x16xbf16>
    %c7 = arith.constant 7 : index
    %c0_67 = arith.constant 0 : index
    %c0_68 = arith.constant 0 : index
    %c0_69 = arith.constant 0 : index
    %46 = vector.load %arg9[%c7, %c0_67, %c0_68, %c0_69] : memref<9x2x8x16xbf16, #tpu.memory_space<vmem>>, vector<1x2x8x16xbf16>
    %47 = vector.shape_cast %46 : vector<1x2x8x16xbf16> to vector<2x8x16xbf16>
    %48 = vector.shape_cast %45 : vector<2x8x16xbf16> to vector<1x2x8x16xbf16>
    tpu.vector_store %arg9[%c7, %c0_67, %c0_68, %c0_69], %48 {strides = array<i32>} : memref<9x2x8x16xbf16, #tpu.memory_space<vmem>>, vector<1x2x8x16xbf16>,
    %c0_70 = arith.constant 0 : index
    %c2_71 = arith.constant 2 : index
    %c2_72 = arith.constant 2 : index
    %49 = vector.load %arg8[%c0_70, %c2_71, %c2_72] : memref<2x10x18xbf16, #tpu.memory_space<vmem>>, vector<2x8x16xbf16>
    %c8 = arith.constant 8 : index
    %c0_73 = arith.constant 0 : index
    %c0_74 = arith.constant 0 : index
    %c0_75 = arith.constant 0 : index
    %50 = vector.load %arg9[%c8, %c0_73, %c0_74, %c0_75] : memref<9x2x8x16xbf16, #tpu.memory_space<vmem>>, vector<1x2x8x16xbf16>
    %51 = vector.shape_cast %50 : vector<1x2x8x16xbf16> to vector<2x8x16xbf16>
    %52 = vector.shape_cast %49 : vector<2x8x16xbf16> to vector<1x2x8x16xbf16>
    tpu.vector_store %arg9[%c8, %c0_73, %c0_74, %c0_75], %52 {strides = array<i32>} : memref<9x2x8x16xbf16, #tpu.memory_space<vmem>>, vector<1x2x8x16xbf16>,
    %c0_76 = arith.constant 0 : index
    %c0_77 = arith.constant 0 : index
    %c0_78 = arith.constant 0 : index
    %c0_79 = arith.constant 0 : index
    %53 = vector.load %arg9[%c0_76, %c0_77, %c0_78, %c0_79] : memref<9x2x8x16xbf16, #tpu.memory_space<vmem>>, vector<9x2x8x16xbf16>
    %54 = vector.shape_cast %53 : vector<9x2x8x16xbf16> to vector<18x128xbf16>
    %c0_80 = arith.constant 0 : index
    %c0_81 = arith.constant 0 : index
    %55 = vector.load %arg5[%c0_80, %c0_81] : memref<2x18xbf16, #tpu.memory_space<vmem>>, vector<2x18xbf16>
    %cst_82 = arith.constant dense<0.000000e+00> : vector<2x128xf32>
    %56 = tpu.matmul %55, %54, %cst_82 {dimension_numbers = #tpu.dot_dimension_numbers<[1], [0], [0], [1], [0, 0, 1, 1], [], []>} : vector<2x18xbf16>, vector<18x128xbf16>, vector<2x128xf32> -> vector<2x128xf32>
    %c0_83 = arith.constant 0 : index
    %c0_84 = arith.constant 0 : index
    %57 = vector.load %arg6[%c0_83, %c0_84] : memref<2x1xf32, #tpu.memory_space<vmem>>, vector<2x1xf32>
    %58 = vector.broadcast %57 : vector<2x1xf32> to vector<2x128xf32>
    %59 = arith.addf %56, %58 : vector<2x128xf32>
    %cst_85 = arith.constant 0.000000e+00 : f32
    %60 = vector.broadcast %cst_85 : f32 to vector<2x128xf32>
    %61 = arith.subf %60, %59 : vector<2x128xf32>
    %62 = math.exp %61 : vector<2x128xf32>
    %cst_86 = arith.constant 1.000000e+00 : f32
    %63 = vector.broadcast %cst_86 : f32 to vector<2x128xf32>
    %64 = arith.addf %63, %62 : vector<2x128xf32>
    %65 = tpu.reciprocal %64 {approx = true} : vector<2x128xf32> -> vector<2x128xf32>
    %66 = arith.mulf %59, %65 : vector<2x128xf32>
    %67 = arith.truncf %66 : vector<2x128xf32> to vector<2x128xbf16>
    %c0_87 = arith.constant 0 : index
    %c0_88 = arith.constant 0 : index
    %c0_89 = arith.constant 0 : index
    %68 = vector.load %arg7[%c0_87, %c0_88, %c0_89] : memref<1x2x128xbf16, #tpu.memory_space<vmem>>, vector<1x2x128xbf16>
    %69 = vector.shape_cast %68 : vector<1x2x128xbf16> to vector<2x128xbf16>
    %70 = vector.shape_cast %67 : vector<2x128xbf16> to vector<1x2x128xbf16>
    tpu.vector_store %arg7[%c0_87, %c0_88, %c0_89], %70 {strides = array<i32>} : memref<1x2x128xbf16, #tpu.memory_space<vmem>>, vector<1x2x128xbf16>,
    return
  }
  func.func @transform_0(%arg0: i32, %arg1: i32) -> (i32, i32, i32, i32) {
    %c0_i32 = arith.constant 0 : i32
    %c0_i32_0 = arith.constant 0 : i32
    %c0_i32_1 = arith.constant 0 : i32
    return %arg0, %c0_i32, %arg1, %c0_i32_0 : i32, i32, i32, i32
  }
  func.func @transform_1(%arg0: i32, %arg1: i32) -> (i32, i32, i32, i32) {
    %c1_i32 = arith.constant 1 : i32
    %0 = arith.muli %arg1, %c1_i32 : i32
    %c1_i32_0 = arith.constant 1 : i32
    %1 = arith.subi %0, %c1_i32_0 : i32
    %c0_i32 = arith.constant 0 : i32
    %2 = arith.maxsi %1, %c0_i32 : i32
    %c0_i32_1 = arith.constant 0 : i32
    %c0_i32_2 = arith.constant 0 : i32
    %c0_i32_3 = arith.constant 0 : i32
    return %arg0, %c0_i32_1, %2, %c0_i32_2 : i32, i32, i32, i32
  }
  func.func @transform_2(%arg0: i32, %arg1: i32) -> (i32, i32, i32, i32) {
    %c1_i32 = arith.constant 1 : i32
    %0 = arith.addi %arg1, %c1_i32 : i32
    %c1_i32_0 = arith.constant 1 : i32
    %1 = arith.muli %0, %c1_i32_0 : i32
    %c1_i32_1 = arith.constant 1 : i32
    %2 = arith.minsi %1, %c1_i32_1 : i32
    %c0_i32 = arith.constant 0 : i32
    %c0_i32_2 = arith.constant 0 : i32
    %c0_i32_3 = arith.constant 0 : i32
    return %arg0, %c0_i32, %2, %c0_i32_2 : i32, i32, i32, i32
  }
  func.func @transform_3(%arg0: i32, %arg1: i32) -> (i32, i32) {
    %c0_i32 = arith.constant 0 : i32
    %c0_i32_0 = arith.constant 0 : i32
    %c0_i32_1 = arith.constant 0 : i32
    return %c0_i32, %c0_i32_0 : i32, i32
  }
  func.func @transform_4(%arg0: i32, %arg1: i32) -> (i32, i32) {
    %c0_i32 = arith.constant 0 : i32
    %c0_i32_0 = arith.constant 0 : i32
    %c0_i32_1 = arith.constant 0 : i32
    return %c0_i32, %c0_i32_0 : i32, i32
  }
  func.func @transform_5(%arg0: i32, %arg1: i32) -> (i32, i32, i32) {
    %c0_i32 = arith.constant 0 : i32
    %c0_i32_0 = arith.constant 0 : i32
    return %arg0, %c0_i32, %arg1 : i32, i32, i32
  }
}

module attributes {stable_mosaic.version = 11 : i64} {
  func.func @kernel(%arg0: i32, %arg1: i32, %arg2: memref<1x4x8x16xf32, #tpu.memory_space<vmem>>, %arg3: memref<4x4xbf16, #tpu.memory_space<vmem>>, %arg4: memref<4x1xf32, #tpu.memory_space<vmem>>, %arg5: memref<1x4x128xbf16, #tpu.memory_space<vmem>>) attributes {dimension_semantics = [#tpu.dimension_semantics<parallel>, #tpu.dimension_semantics<parallel>], iteration_bounds = array<i64: 2, 2>, scalar_prefetch = 0 : i64, scratch_operands = 0 : i64, tpu.core_type = #tpu.core_type<tc>, window_params = [{transform_indices = @transform_0, window_bounds = array<i64: 1, 4, 8, 16>}, {pipeline_mode = #tpu.pipeline_mode<synchronous>, transform_indices = @transform_1, window_bounds = array<i64: 4, 4>}, {pipeline_mode = #tpu.pipeline_mode<synchronous>, transform_indices = @transform_2, window_bounds = array<i64: 4, 1>}, {transform_indices = @transform_3, window_bounds = array<i64: 1, 4, 128>}]} {
    %c0 = arith.constant 0 : index
    %c0_0 = arith.constant 0 : index
    %c0_1 = arith.constant 0 : index
    %c0_2 = arith.constant 0 : index
    %0 = vector.load %arg2[%c0, %c0_0, %c0_1, %c0_2] : memref<1x4x8x16xf32, #tpu.memory_space<vmem>>, vector<1x4x8x16xf32>
    %1 = vector.shape_cast %0 : vector<1x4x8x16xf32> to vector<4x8x16xf32>
    %2 = arith.truncf %1 : vector<4x8x16xf32> to vector<4x8x16xbf16>
    %3 = vector.shape_cast %2 : vector<4x8x16xbf16> to vector<4x128xbf16>
    %c0_3 = arith.constant 0 : index
    %c0_4 = arith.constant 0 : index
    %4 = vector.load %arg3[%c0_3, %c0_4] : memref<4x4xbf16, #tpu.memory_space<vmem>>, vector<4x4xbf16>
    %cst = arith.constant dense<0.000000e+00> : vector<4x128xf32>
    %5 = tpu.matmul %4, %3, %cst {dimension_numbers = #tpu.dot_dimension_numbers<[1], [0], [0], [1], [0, 0, 1, 1], [], []>} : vector<4x4xbf16>, vector<4x128xbf16>, vector<4x128xf32> -> vector<4x128xf32>
    %c0_5 = arith.constant 0 : index
    %c0_6 = arith.constant 0 : index
    %6 = vector.load %arg4[%c0_5, %c0_6] : memref<4x1xf32, #tpu.memory_space<vmem>>, vector<4x1xf32>
    %7 = vector.broadcast %6 : vector<4x1xf32> to vector<4x128xf32>
    %8 = arith.addf %5, %7 : vector<4x128xf32>
    %cst_7 = arith.constant 0.000000e+00 : f32
    %9 = vector.broadcast %cst_7 : f32 to vector<4x128xf32>
    %10 = arith.subf %9, %8 : vector<4x128xf32>
    %11 = math.exp %10 : vector<4x128xf32>
    %cst_8 = arith.constant 1.000000e+00 : f32
    %12 = vector.broadcast %cst_8 : f32 to vector<4x128xf32>
    %13 = arith.addf %12, %11 : vector<4x128xf32>
    %14 = tpu.reciprocal %13 {approx = true} : vector<4x128xf32> -> vector<4x128xf32>
    %15 = arith.mulf %8, %14 : vector<4x128xf32>
    %16 = arith.truncf %15 : vector<4x128xf32> to vector<4x128xbf16>
    %c0_9 = arith.constant 0 : index
    %c0_10 = arith.constant 0 : index
    %c0_11 = arith.constant 0 : index
    %17 = vector.load %arg5[%c0_9, %c0_10, %c0_11] : memref<1x4x128xbf16, #tpu.memory_space<vmem>>, vector<1x4x128xbf16>
    %18 = vector.shape_cast %17 : vector<1x4x128xbf16> to vector<4x128xbf16>
    %19 = vector.shape_cast %16 : vector<4x128xbf16> to vector<1x4x128xbf16>
    tpu.vector_store %arg5[%c0_9, %c0_10, %c0_11], %19 {strides = array<i32>} : memref<1x4x128xbf16, #tpu.memory_space<vmem>>, vector<1x4x128xbf16>,
    return
  }
  func.func @transform_0(%arg0: i32, %arg1: i32) -> (i32, i32, i32, i32) {
    %c0_i32 = arith.constant 0 : i32
    %c0_i32_0 = arith.constant 0 : i32
    %c0_i32_1 = arith.constant 0 : i32
    return %arg0, %c0_i32, %arg1, %c0_i32_0 : i32, i32, i32, i32
  }
  func.func @transform_1(%arg0: i32, %arg1: i32) -> (i32, i32) {
    %c0_i32 = arith.constant 0 : i32
    %c0_i32_0 = arith.constant 0 : i32
    %c0_i32_1 = arith.constant 0 : i32
    return %c0_i32, %c0_i32_0 : i32, i32
  }
  func.func @transform_2(%arg0: i32, %arg1: i32) -> (i32, i32) {
    %c0_i32 = arith.constant 0 : i32
    %c0_i32_0 = arith.constant 0 : i32
    %c0_i32_1 = arith.constant 0 : i32
    return %c0_i32, %c0_i32_0 : i32, i32
  }
  func.func @transform_3(%arg0: i32, %arg1: i32) -> (i32, i32, i32) {
    %c0_i32 = arith.constant 0 : i32
    %c0_i32_0 = arith.constant 0 : i32
    return %arg0, %c0_i32, %arg1 : i32, i32, i32
  }
}

module attributes {stable_mosaic.version = 11 : i64} {
  func.func @kernel(%arg0: i32, %arg1: i32, %arg2: memref<1x2x8x16xbf16, #tpu.memory_space<vmem>>, %arg3: memref<1x2x8x16xbf16, #tpu.memory_space<vmem>>, %arg4: memref<1x2x8x16xbf16, #tpu.memory_space<vmem>>, %arg5: memref<1x4x8x16xbf16, #tpu.memory_space<vmem>>, %arg6: memref<2x18xbf16, #tpu.memory_space<vmem>>, %arg7: memref<2x1xf32, #tpu.memory_space<vmem>>, %arg8: memref<1x2x128xbf16, #tpu.memory_space<vmem>>, %arg9: memref<2x10x18xbf16, #tpu.memory_space<vmem>>, %arg10: memref<9x2x8x16xbf16, #tpu.memory_space<vmem>>) attributes {dimension_semantics = [#tpu.dimension_semantics<parallel>, #tpu.dimension_semantics<parallel>], iteration_bounds = array<i64: 2, 2>, scalar_prefetch = 0 : i64, scratch_operands = 2 : i64, tpu.core_type = #tpu.core_type<tc>, window_params = [{transform_indices = @transform_0, window_bounds = array<i64: 1, 2, 8, 16>}, {transform_indices = @transform_1, window_bounds = array<i64: 1, 2, 8, 16>}, {transform_indices = @transform_2, window_bounds = array<i64: 1, 2, 8, 16>}, {transform_indices = @transform_3, window_bounds = array<i64: 1, 4, 8, 16>}, {pipeline_mode = #tpu.pipeline_mode<synchronous>, transform_indices = @transform_4, window_bounds = array<i64: 2, 18>}, {pipeline_mode = #tpu.pipeline_mode<synchronous>, transform_indices = @transform_5, window_bounds = array<i64: 2, 1>}, {transform_indices = @transform_6, window_bounds = array<i64: 1, 2, 128>}]} {
    %cst = arith.constant 0.000000e+00 : bf16
    %0 = vector.broadcast %cst : bf16 to vector<2x1x18xbf16>
    %c0 = arith.constant 0 : index
    %c0_0 = arith.constant 0 : index
    %c0_1 = arith.constant 0 : index
    %1 = vector.load %arg9[%c0, %c0_0, %c0_1] : memref<2x10x18xbf16, #tpu.memory_space<vmem>>, vector<2x1x18xbf16>
    tpu.vector_store %arg9[%c0, %c0_0, %c0_1], %0 {strides = array<i32>} : memref<2x10x18xbf16, #tpu.memory_space<vmem>>, vector<2x1x18xbf16>,
    %cst_2 = arith.constant 0.000000e+00 : bf16
    %2 = vector.broadcast %cst_2 : bf16 to vector<2x1x18xbf16>
    %c0_3 = arith.constant 0 : index
    %c9 = arith.constant 9 : index
    %c0_4 = arith.constant 0 : index
    %3 = vector.load %arg9[%c0_3, %c9, %c0_4] : memref<2x10x18xbf16, #tpu.memory_space<vmem>>, vector<2x1x18xbf16>
    tpu.vector_store %arg9[%c0_3, %c9, %c0_4], %2 {strides = array<i32>} : memref<2x10x18xbf16, #tpu.memory_space<vmem>>, vector<2x1x18xbf16>,
    %cst_5 = arith.constant 0.000000e+00 : bf16
    %4 = vector.broadcast %cst_5 : bf16 to vector<2x10x1xbf16>
    %c0_6 = arith.constant 0 : index
    %c0_7 = arith.constant 0 : index
    %c0_8 = arith.constant 0 : index
    %5 = vector.load %arg9[%c0_6, %c0_7, %c0_8] : memref<2x10x18xbf16, #tpu.memory_space<vmem>>, vector<2x10x1xbf16>
    tpu.vector_store %arg9[%c0_6, %c0_7, %c0_8], %4 {strides = array<i32>} : memref<2x10x18xbf16, #tpu.memory_space<vmem>>, vector<2x10x1xbf16>,
    %cst_9 = arith.constant 0.000000e+00 : bf16
    %6 = vector.broadcast %cst_9 : bf16 to vector<2x10x1xbf16>
    %c0_10 = arith.constant 0 : index
    %c0_11 = arith.constant 0 : index
    %c17 = arith.constant 17 : index
    %7 = vector.load %arg9[%c0_10, %c0_11, %c17] : memref<2x10x18xbf16, #tpu.memory_space<vmem>>, vector<2x10x1xbf16>
    tpu.vector_store %arg9[%c0_10, %c0_11, %c17], %6 {strides = array<i32>} : memref<2x10x18xbf16, #tpu.memory_space<vmem>>, vector<2x10x1xbf16>,
    %c0_12 = arith.constant 0 : index
    %c0_13 = arith.constant 0 : index
    %c0_14 = arith.constant 0 : index
    %c0_15 = arith.constant 0 : index
    %8 = vector.load %arg2[%c0_12, %c0_13, %c0_14, %c0_15] : memref<1x2x8x16xbf16, #tpu.memory_space<vmem>>, vector<1x2x8x16xbf16>
    %9 = vector.shape_cast %8 : vector<1x2x8x16xbf16> to vector<2x8x16xbf16>
    %c0_16 = arith.constant 0 : index
    %c1 = arith.constant 1 : index
    %c1_17 = arith.constant 1 : index
    %10 = vector.load %arg9[%c0_16, %c1, %c1_17] : memref<2x10x18xbf16, #tpu.memory_space<vmem>>, vector<2x8x16xbf16>
    tpu.vector_store %arg9[%c0_16, %c1, %c1_17], %9 {strides = array<i32>} : memref<2x10x18xbf16, #tpu.memory_space<vmem>>, vector<2x8x16xbf16>,
    %c0_i32 = arith.constant 0 : i32
    %11 = arith.cmpi sgt, %arg1, %c0_i32 : i32
    %12 = arith.extui %11 : i1 to i32
    %c0_i32_18 = arith.constant 0 : i32
    %13 = arith.cmpi ne, %12, %c0_i32_18 : i32
    scf.if %13 {
      %c0_94 = arith.constant 0 : index
      %c0_95 = arith.constant 0 : index
      %c7_96 = arith.constant 7 : index
      %c0_97 = arith.constant 0 : index
      %76 = vector.load %arg3[%c0_94, %c0_95, %c7_96, %c0_97] : memref<1x2x8x16xbf16, #tpu.memory_space<vmem>>, vector<1x2x1x16xbf16>
      %77 = vector.shape_cast %76 : vector<1x2x1x16xbf16> to vector<2x1x16xbf16>
      %c0_98 = arith.constant 0 : index
      %c0_99 = arith.constant 0 : index
      %c1_100 = arith.constant 1 : index
      %78 = vector.load %arg9[%c0_98, %c0_99, %c1_100] : memref<2x10x18xbf16, #tpu.memory_space<vmem>>, vector<2x1x16xbf16>
      tpu.vector_store %arg9[%c0_98, %c0_99, %c1_100], %77 {strides = array<i32>} : memref<2x10x18xbf16, #tpu.memory_space<vmem>>, vector<2x1x16xbf16>,
    } else {
    }
    %c1_i32 = arith.constant 1 : i32
    %14 = arith.cmpi slt, %arg1, %c1_i32 : i32
    %15 = arith.extui %14 : i1 to i32
    %c0_i32_19 = arith.constant 0 : i32
    %16 = arith.cmpi ne, %15, %c0_i32_19 : i32
    scf.if %16 {
      %c0_94 = arith.constant 0 : index
      %c0_95 = arith.constant 0 : index
      %c0_96 = arith.constant 0 : index
      %c0_97 = arith.constant 0 : index
      %76 = vector.load %arg4[%c0_94, %c0_95, %c0_96, %c0_97] : memref<1x2x8x16xbf16, #tpu.memory_space<vmem>>, vector<1x2x1x16xbf16>
      %77 = vector.shape_cast %76 : vector<1x2x1x16xbf16> to vector<2x1x16xbf16>
      %c0_98 = arith.constant 0 : index
      %c9_99 = arith.constant 9 : index
      %c1_100 = arith.constant 1 : index
      %78 = vector.load %arg9[%c0_98, %c9_99, %c1_100] : memref<2x10x18xbf16, #tpu.memory_space<vmem>>, vector<2x1x16xbf16>
      tpu.vector_store %arg9[%c0_98, %c9_99, %c1_100], %77 {strides = array<i32>} : memref<2x10x18xbf16, #tpu.memory_space<vmem>>, vector<2x1x16xbf16>,
    } else {
    }
    %c0_20 = arith.constant 0 : index
    %c0_21 = arith.constant 0 : index
    %c0_22 = arith.constant 0 : index
    %17 = vector.load %arg9[%c0_20, %c0_21, %c0_22] : memref<2x10x18xbf16, #tpu.memory_space<vmem>>, vector<2x8x16xbf16>
    %c0_23 = arith.constant 0 : index
    %c0_24 = arith.constant 0 : index
    %c0_25 = arith.constant 0 : index
    %c0_26 = arith.constant 0 : index
    %18 = vector.load %arg10[%c0_23, %c0_24, %c0_25, %c0_26] : memref<9x2x8x16xbf16, #tpu.memory_space<vmem>>, vector<1x2x8x16xbf16>
    %19 = vector.shape_cast %18 : vector<1x2x8x16xbf16> to vector<2x8x16xbf16>
    %20 = vector.shape_cast %17 : vector<2x8x16xbf16> to vector<1x2x8x16xbf16>
    tpu.vector_store %arg10[%c0_23, %c0_24, %c0_25, %c0_26], %20 {strides = array<i32>} : memref<9x2x8x16xbf16, #tpu.memory_space<vmem>>, vector<1x2x8x16xbf16>,
    %c0_27 = arith.constant 0 : index
    %c0_28 = arith.constant 0 : index
    %c1_29 = arith.constant 1 : index
    %21 = vector.load %arg9[%c0_27, %c0_28, %c1_29] : memref<2x10x18xbf16, #tpu.memory_space<vmem>>, vector<2x8x16xbf16>
    %c1_30 = arith.constant 1 : index
    %c0_31 = arith.constant 0 : index
    %c0_32 = arith.constant 0 : index
    %c0_33 = arith.constant 0 : index
    %22 = vector.load %arg10[%c1_30, %c0_31, %c0_32, %c0_33] : memref<9x2x8x16xbf16, #tpu.memory_space<vmem>>, vector<1x2x8x16xbf16>
    %23 = vector.shape_cast %22 : vector<1x2x8x16xbf16> to vector<2x8x16xbf16>
    %24 = vector.shape_cast %21 : vector<2x8x16xbf16> to vector<1x2x8x16xbf16>
    tpu.vector_store %arg10[%c1_30, %c0_31, %c0_32, %c0_33], %24 {strides = array<i32>} : memref<9x2x8x16xbf16, #tpu.memory_space<vmem>>, vector<1x2x8x16xbf16>,
    %c0_34 = arith.constant 0 : index
    %c0_35 = arith.constant 0 : index
    %c2 = arith.constant 2 : index
    %25 = vector.load %arg9[%c0_34, %c0_35, %c2] : memref<2x10x18xbf16, #tpu.memory_space<vmem>>, vector<2x8x16xbf16>
    %c2_36 = arith.constant 2 : index
    %c0_37 = arith.constant 0 : index
    %c0_38 = arith.constant 0 : index
    %c0_39 = arith.constant 0 : index
    %26 = vector.load %arg10[%c2_36, %c0_37, %c0_38, %c0_39] : memref<9x2x8x16xbf16, #tpu.memory_space<vmem>>, vector<1x2x8x16xbf16>
    %27 = vector.shape_cast %26 : vector<1x2x8x16xbf16> to vector<2x8x16xbf16>
    %28 = vector.shape_cast %25 : vector<2x8x16xbf16> to vector<1x2x8x16xbf16>
    tpu.vector_store %arg10[%c2_36, %c0_37, %c0_38, %c0_39], %28 {strides = array<i32>} : memref<9x2x8x16xbf16, #tpu.memory_space<vmem>>, vector<1x2x8x16xbf16>,
    %c0_40 = arith.constant 0 : index
    %c1_41 = arith.constant 1 : index
    %c0_42 = arith.constant 0 : index
    %29 = vector.load %arg9[%c0_40, %c1_41, %c0_42] : memref<2x10x18xbf16, #tpu.memory_space<vmem>>, vector<2x8x16xbf16>
    %c3 = arith.constant 3 : index
    %c0_43 = arith.constant 0 : index
    %c0_44 = arith.constant 0 : index
    %c0_45 = arith.constant 0 : index
    %30 = vector.load %arg10[%c3, %c0_43, %c0_44, %c0_45] : memref<9x2x8x16xbf16, #tpu.memory_space<vmem>>, vector<1x2x8x16xbf16>
    %31 = vector.shape_cast %30 : vector<1x2x8x16xbf16> to vector<2x8x16xbf16>
    %32 = vector.shape_cast %29 : vector<2x8x16xbf16> to vector<1x2x8x16xbf16>
    tpu.vector_store %arg10[%c3, %c0_43, %c0_44, %c0_45], %32 {strides = array<i32>} : memref<9x2x8x16xbf16, #tpu.memory_space<vmem>>, vector<1x2x8x16xbf16>,
    %c0_46 = arith.constant 0 : index
    %c1_47 = arith.constant 1 : index
    %c1_48 = arith.constant 1 : index
    %33 = vector.load %arg9[%c0_46, %c1_47, %c1_48] : memref<2x10x18xbf16, #tpu.memory_space<vmem>>, vector<2x8x16xbf16>
    %c4 = arith.constant 4 : index
    %c0_49 = arith.constant 0 : index
    %c0_50 = arith.constant 0 : index
    %c0_51 = arith.constant 0 : index
    %34 = vector.load %arg10[%c4, %c0_49, %c0_50, %c0_51] : memref<9x2x8x16xbf16, #tpu.memory_space<vmem>>, vector<1x2x8x16xbf16>
    %35 = vector.shape_cast %34 : vector<1x2x8x16xbf16> to vector<2x8x16xbf16>
    %36 = vector.shape_cast %33 : vector<2x8x16xbf16> to vector<1x2x8x16xbf16>
    tpu.vector_store %arg10[%c4, %c0_49, %c0_50, %c0_51], %36 {strides = array<i32>} : memref<9x2x8x16xbf16, #tpu.memory_space<vmem>>, vector<1x2x8x16xbf16>,
    %c0_52 = arith.constant 0 : index
    %c1_53 = arith.constant 1 : index
    %c2_54 = arith.constant 2 : index
    %37 = vector.load %arg9[%c0_52, %c1_53, %c2_54] : memref<2x10x18xbf16, #tpu.memory_space<vmem>>, vector<2x8x16xbf16>
    %c5 = arith.constant 5 : index
    %c0_55 = arith.constant 0 : index
    %c0_56 = arith.constant 0 : index
    %c0_57 = arith.constant 0 : index
    %38 = vector.load %arg10[%c5, %c0_55, %c0_56, %c0_57] : memref<9x2x8x16xbf16, #tpu.memory_space<vmem>>, vector<1x2x8x16xbf16>
    %39 = vector.shape_cast %38 : vector<1x2x8x16xbf16> to vector<2x8x16xbf16>
    %40 = vector.shape_cast %37 : vector<2x8x16xbf16> to vector<1x2x8x16xbf16>
    tpu.vector_store %arg10[%c5, %c0_55, %c0_56, %c0_57], %40 {strides = array<i32>} : memref<9x2x8x16xbf16, #tpu.memory_space<vmem>>, vector<1x2x8x16xbf16>,
    %c0_58 = arith.constant 0 : index
    %c2_59 = arith.constant 2 : index
    %c0_60 = arith.constant 0 : index
    %41 = vector.load %arg9[%c0_58, %c2_59, %c0_60] : memref<2x10x18xbf16, #tpu.memory_space<vmem>>, vector<2x8x16xbf16>
    %c6 = arith.constant 6 : index
    %c0_61 = arith.constant 0 : index
    %c0_62 = arith.constant 0 : index
    %c0_63 = arith.constant 0 : index
    %42 = vector.load %arg10[%c6, %c0_61, %c0_62, %c0_63] : memref<9x2x8x16xbf16, #tpu.memory_space<vmem>>, vector<1x2x8x16xbf16>
    %43 = vector.shape_cast %42 : vector<1x2x8x16xbf16> to vector<2x8x16xbf16>
    %44 = vector.shape_cast %41 : vector<2x8x16xbf16> to vector<1x2x8x16xbf16>
    tpu.vector_store %arg10[%c6, %c0_61, %c0_62, %c0_63], %44 {strides = array<i32>} : memref<9x2x8x16xbf16, #tpu.memory_space<vmem>>, vector<1x2x8x16xbf16>,
    %c0_64 = arith.constant 0 : index
    %c2_65 = arith.constant 2 : index
    %c1_66 = arith.constant 1 : index
    %45 = vector.load %arg9[%c0_64, %c2_65, %c1_66] : memref<2x10x18xbf16, #tpu.memory_space<vmem>>, vector<2x8x16xbf16>
    %c7 = arith.constant 7 : index
    %c0_67 = arith.constant 0 : index
    %c0_68 = arith.constant 0 : index
    %c0_69 = arith.constant 0 : index
    %46 = vector.load %arg10[%c7, %c0_67, %c0_68, %c0_69] : memref<9x2x8x16xbf16, #tpu.memory_space<vmem>>, vector<1x2x8x16xbf16>
    %47 = vector.shape_cast %46 : vector<1x2x8x16xbf16> to vector<2x8x16xbf16>
    %48 = vector.shape_cast %45 : vector<2x8x16xbf16> to vector<1x2x8x16xbf16>
    tpu.vector_store %arg10[%c7, %c0_67, %c0_68, %c0_69], %48 {strides = array<i32>} : memref<9x2x8x16xbf16, #tpu.memory_space<vmem>>, vector<1x2x8x16xbf16>,
    %c0_70 = arith.constant 0 : index
    %c2_71 = arith.constant 2 : index
    %c2_72 = arith.constant 2 : index
    %49 = vector.load %arg9[%c0_70, %c2_71, %c2_72] : memref<2x10x18xbf16, #tpu.memory_space<vmem>>, vector<2x8x16xbf16>
    %c8 = arith.constant 8 : index
    %c0_73 = arith.constant 0 : index
    %c0_74 = arith.constant 0 : index
    %c0_75 = arith.constant 0 : index
    %50 = vector.load %arg10[%c8, %c0_73, %c0_74, %c0_75] : memref<9x2x8x16xbf16, #tpu.memory_space<vmem>>, vector<1x2x8x16xbf16>
    %51 = vector.shape_cast %50 : vector<1x2x8x16xbf16> to vector<2x8x16xbf16>
    %52 = vector.shape_cast %49 : vector<2x8x16xbf16> to vector<1x2x8x16xbf16>
    tpu.vector_store %arg10[%c8, %c0_73, %c0_74, %c0_75], %52 {strides = array<i32>} : memref<9x2x8x16xbf16, #tpu.memory_space<vmem>>, vector<1x2x8x16xbf16>,
    %c0_76 = arith.constant 0 : index
    %c0_77 = arith.constant 0 : index
    %c0_78 = arith.constant 0 : index
    %c0_79 = arith.constant 0 : index
    %53 = vector.load %arg10[%c0_76, %c0_77, %c0_78, %c0_79] : memref<9x2x8x16xbf16, #tpu.memory_space<vmem>>, vector<9x2x8x16xbf16>
    %54 = vector.shape_cast %53 : vector<9x2x8x16xbf16> to vector<18x128xbf16>
    %c0_80 = arith.constant 0 : index
    %c0_81 = arith.constant 0 : index
    %55 = vector.load %arg6[%c0_80, %c0_81] : memref<2x18xbf16, #tpu.memory_space<vmem>>, vector<2x18xbf16>
    %cst_82 = arith.constant dense<0.000000e+00> : vector<2x128xf32>
    %56 = tpu.matmul %55, %54, %cst_82 {dimension_numbers = #tpu.dot_dimension_numbers<[1], [0], [0], [1], [0, 0, 1, 1], [], []>} : vector<2x18xbf16>, vector<18x128xbf16>, vector<2x128xf32> -> vector<2x128xf32>
    %c0_83 = arith.constant 0 : index
    %c0_84 = arith.constant 0 : index
    %57 = vector.load %arg7[%c0_83, %c0_84] : memref<2x1xf32, #tpu.memory_space<vmem>>, vector<2x1xf32>
    %58 = vector.broadcast %57 : vector<2x1xf32> to vector<2x128xf32>
    %59 = arith.addf %56, %58 : vector<2x128xf32>
    %cst_85 = arith.constant 0.000000e+00 : f32
    %60 = vector.broadcast %cst_85 : f32 to vector<2x128xf32>
    %61 = arith.subf %60, %59 : vector<2x128xf32>
    %62 = math.exp %61 : vector<2x128xf32>
    %cst_86 = arith.constant 1.000000e+00 : f32
    %63 = vector.broadcast %cst_86 : f32 to vector<2x128xf32>
    %64 = arith.addf %63, %62 : vector<2x128xf32>
    %65 = tpu.reciprocal %64 {approx = true} : vector<2x128xf32> -> vector<2x128xf32>
    %66 = arith.mulf %59, %65 : vector<2x128xf32>
    %c0_87 = arith.constant 0 : index
    %c2_88 = arith.constant 2 : index
    %c0_89 = arith.constant 0 : index
    %c0_90 = arith.constant 0 : index
    %67 = vector.load %arg5[%c0_87, %c2_88, %c0_89, %c0_90] : memref<1x4x8x16xbf16, #tpu.memory_space<vmem>>, vector<1x2x8x16xbf16>
    %68 = vector.shape_cast %67 : vector<1x2x8x16xbf16> to vector<2x8x16xbf16>
    %69 = vector.shape_cast %68 : vector<2x8x16xbf16> to vector<2x128xbf16>
    %70 = arith.extf %69 : vector<2x128xbf16> to vector<2x128xf32>
    %71 = arith.addf %66, %70 : vector<2x128xf32>
    %72 = arith.truncf %71 : vector<2x128xf32> to vector<2x128xbf16>
    %c0_91 = arith.constant 0 : index
    %c0_92 = arith.constant 0 : index
    %c0_93 = arith.constant 0 : index
    %73 = vector.load %arg8[%c0_91, %c0_92, %c0_93] : memref<1x2x128xbf16, #tpu.memory_space<vmem>>, vector<1x2x128xbf16>
    %74 = vector.shape_cast %73 : vector<1x2x128xbf16> to vector<2x128xbf16>
    %75 = vector.shape_cast %72 : vector<2x128xbf16> to vector<1x2x128xbf16>
    tpu.vector_store %arg8[%c0_91, %c0_92, %c0_93], %75 {strides = array<i32>} : memref<1x2x128xbf16, #tpu.memory_space<vmem>>, vector<1x2x128xbf16>,
    return
  }
  func.func @transform_0(%arg0: i32, %arg1: i32) -> (i32, i32, i32, i32) {
    %c0_i32 = arith.constant 0 : i32
    %c0_i32_0 = arith.constant 0 : i32
    %c0_i32_1 = arith.constant 0 : i32
    return %arg0, %c0_i32, %arg1, %c0_i32_0 : i32, i32, i32, i32
  }
  func.func @transform_1(%arg0: i32, %arg1: i32) -> (i32, i32, i32, i32) {
    %c1_i32 = arith.constant 1 : i32
    %0 = arith.muli %arg1, %c1_i32 : i32
    %c1_i32_0 = arith.constant 1 : i32
    %1 = arith.subi %0, %c1_i32_0 : i32
    %c0_i32 = arith.constant 0 : i32
    %2 = arith.maxsi %1, %c0_i32 : i32
    %c0_i32_1 = arith.constant 0 : i32
    %c0_i32_2 = arith.constant 0 : i32
    %c0_i32_3 = arith.constant 0 : i32
    return %arg0, %c0_i32_1, %2, %c0_i32_2 : i32, i32, i32, i32
  }
  func.func @transform_2(%arg0: i32, %arg1: i32) -> (i32, i32, i32, i32) {
    %c1_i32 = arith.constant 1 : i32
    %0 = arith.addi %arg1, %c1_i32 : i32
    %c1_i32_0 = arith.constant 1 : i32
    %1 = arith.muli %0, %c1_i32_0 : i32
    %c1_i32_1 = arith.constant 1 : i32
    %2 = arith.minsi %1, %c1_i32_1 : i32
    %c0_i32 = arith.constant 0 : i32
    %c0_i32_2 = arith.constant 0 : i32
    %c0_i32_3 = arith.constant 0 : i32
    return %arg0, %c0_i32, %2, %c0_i32_2 : i32, i32, i32, i32
  }
  func.func @transform_3(%arg0: i32, %arg1: i32) -> (i32, i32, i32, i32) {
    %c0_i32 = arith.constant 0 : i32
    %c0_i32_0 = arith.constant 0 : i32
    %c0_i32_1 = arith.constant 0 : i32
    return %arg0, %c0_i32, %arg1, %c0_i32_0 : i32, i32, i32, i32
  }
  func.func @transform_4(%arg0: i32, %arg1: i32) -> (i32, i32) {
    %c0_i32 = arith.constant 0 : i32
    %c0_i32_0 = arith.constant 0 : i32
    %c0_i32_1 = arith.constant 0 : i32
    return %c0_i32, %c0_i32_0 : i32, i32
  }
  func.func @transform_5(%arg0: i32, %arg1: i32) -> (i32, i32) {
    %c0_i32 = arith.constant 0 : i32
    %c0_i32_0 = arith.constant 0 : i32
    %c0_i32_1 = arith.constant 0 : i32
    return %c0_i32, %c0_i32_0 : i32, i32
  }
  func.func @transform_6(%arg0: i32, %arg1: i32) -> (i32, i32, i32) {
    %c0_i32 = arith.constant 0 : i32
    %c0_i32_0 = arith.constant 0 : i32
    return %arg0, %c0_i32, %arg1 : i32, i32, i32
  }
}

module attributes {stable_mosaic.version = 11 : i64} {
  func.func @kernel(%arg0: i32, %arg1: i32, %arg2: memref<1x2x8x16xbf16, #tpu.memory_space<vmem>>, %arg3: memref<1x2x8x16xbf16, #tpu.memory_space<vmem>>, %arg4: memref<1x2x8x16xbf16, #tpu.memory_space<vmem>>, %arg5: memref<2x18xbf16, #tpu.memory_space<vmem>>, %arg6: memref<2x1xf32, #tpu.memory_space<vmem>>, %arg7: memref<1x2x128xbf16, #tpu.memory_space<vmem>>, %arg8: memref<2x10x18xbf16, #tpu.memory_space<vmem>>, %arg9: memref<9x2x8x16xbf16, #tpu.memory_space<vmem>>) attributes {dimension_semantics = [#tpu.dimension_semantics<parallel>, #tpu.dimension_semantics<parallel>], iteration_bounds = array<i64: 2, 2>, scalar_prefetch = 0 : i64, scratch_operands = 2 : i64, tpu.core_type = #tpu.core_type<tc>, window_params = [{transform_indices = @transform_0, window_bounds = array<i64: 1, 2, 8, 16>}, {transform_indices = @transform_1, window_bounds = array<i64: 1, 2, 8, 16>}, {transform_indices = @transform_2, window_bounds = array<i64: 1, 2, 8, 16>}, {pipeline_mode = #tpu.pipeline_mode<synchronous>, transform_indices = @transform_3, window_bounds = array<i64: 2, 18>}, {pipeline_mode = #tpu.pipeline_mode<synchronous>, transform_indices = @transform_4, window_bounds = array<i64: 2, 1>}, {transform_indices = @transform_5, window_bounds = array<i64: 1, 2, 128>}]} {
    %cst = arith.constant 0.000000e+00 : bf16
    %0 = vector.broadcast %cst : bf16 to vector<2x1x18xbf16>
    %c0 = arith.constant 0 : index
    %c0_0 = arith.constant 0 : index
    %c0_1 = arith.constant 0 : index
    %1 = vector.load %arg8[%c0, %c0_0, %c0_1] : memref<2x10x18xbf16, #tpu.memory_space<vmem>>, vector<2x1x18xbf16>
    tpu.vector_store %arg8[%c0, %c0_0, %c0_1], %0 {strides = array<i32>} : memref<2x10x18xbf16, #tpu.memory_space<vmem>>, vector<2x1x18xbf16>,
    %cst_2 = arith.constant 0.000000e+00 : bf16
    %2 = vector.broadcast %cst_2 : bf16 to vector<2x1x18xbf16>
    %c0_3 = arith.constant 0 : index
    %c9 = arith.constant 9 : index
    %c0_4 = arith.constant 0 : index
    %3 = vector.load %arg8[%c0_3, %c9, %c0_4] : memref<2x10x18xbf16, #tpu.memory_space<vmem>>, vector<2x1x18xbf16>
    tpu.vector_store %arg8[%c0_3, %c9, %c0_4], %2 {strides = array<i32>} : memref<2x10x18xbf16, #tpu.memory_space<vmem>>, vector<2x1x18xbf16>,
    %cst_5 = arith.constant 0.000000e+00 : bf16
    %4 = vector.broadcast %cst_5 : bf16 to vector<2x10x1xbf16>
    %c0_6 = arith.constant 0 : index
    %c0_7 = arith.constant 0 : index
    %c0_8 = arith.constant 0 : index
    %5 = vector.load %arg8[%c0_6, %c0_7, %c0_8] : memref<2x10x18xbf16, #tpu.memory_space<vmem>>, vector<2x10x1xbf16>
    tpu.vector_store %arg8[%c0_6, %c0_7, %c0_8], %4 {strides = array<i32>} : memref<2x10x18xbf16, #tpu.memory_space<vmem>>, vector<2x10x1xbf16>,
    %cst_9 = arith.constant 0.000000e+00 : bf16
    %6 = vector.broadcast %cst_9 : bf16 to vector<2x10x1xbf16>
    %c0_10 = arith.constant 0 : index
    %c0_11 = arith.constant 0 : index
    %c17 = arith.constant 17 : index
    %7 = vector.load %arg8[%c0_10, %c0_11, %c17] : memref<2x10x18xbf16, #tpu.memory_space<vmem>>, vector<2x10x1xbf16>
    tpu.vector_store %arg8[%c0_10, %c0_11, %c17], %6 {strides = array<i32>} : memref<2x10x18xbf16, #tpu.memory_space<vmem>>, vector<2x10x1xbf16>,
    %c0_12 = arith.constant 0 : index
    %c0_13 = arith.constant 0 : index
    %c0_14 = arith.constant 0 : index
    %c0_15 = arith.constant 0 : index
    %8 = vector.load %arg2[%c0_12, %c0_13, %c0_14, %c0_15] : memref<1x2x8x16xbf16, #tpu.memory_space<vmem>>, vector<1x2x8x16xbf16>
    %9 = vector.shape_cast %8 : vector<1x2x8x16xbf16> to vector<2x8x16xbf16>
    %c0_16 = arith.constant 0 : index
    %c1 = arith.constant 1 : index
    %c1_17 = arith.constant 1 : index
    %10 = vector.load %arg8[%c0_16, %c1, %c1_17] : memref<2x10x18xbf16, #tpu.memory_space<vmem>>, vector<2x8x16xbf16>
    tpu.vector_store %arg8[%c0_16, %c1, %c1_17], %9 {strides = array<i32>} : memref<2x10x18xbf16, #tpu.memory_space<vmem>>, vector<2x8x16xbf16>,
    %c0_i32 = arith.constant 0 : i32
    %11 = arith.cmpi sgt, %arg1, %c0_i32 : i32
    %12 = arith.extui %11 : i1 to i32
    %c0_i32_18 = arith.constant 0 : i32
    %13 = arith.cmpi ne, %12, %c0_i32_18 : i32
    scf.if %13 {
      %c0_90 = arith.constant 0 : index
      %c0_91 = arith.constant 0 : index
      %c7_92 = arith.constant 7 : index
      %c0_93 = arith.constant 0 : index
      %71 = vector.load %arg3[%c0_90, %c0_91, %c7_92, %c0_93] : memref<1x2x8x16xbf16, #tpu.memory_space<vmem>>, vector<1x2x1x16xbf16>
      %72 = vector.shape_cast %71 : vector<1x2x1x16xbf16> to vector<2x1x16xbf16>
      %c0_94 = arith.constant 0 : index
      %c0_95 = arith.constant 0 : index
      %c1_96 = arith.constant 1 : index
      %73 = vector.load %arg8[%c0_94, %c0_95, %c1_96] : memref<2x10x18xbf16, #tpu.memory_space<vmem>>, vector<2x1x16xbf16>
      tpu.vector_store %arg8[%c0_94, %c0_95, %c1_96], %72 {strides = array<i32>} : memref<2x10x18xbf16, #tpu.memory_space<vmem>>, vector<2x1x16xbf16>,
    } else {
    }
    %c1_i32 = arith.constant 1 : i32
    %14 = arith.cmpi slt, %arg1, %c1_i32 : i32
    %15 = arith.extui %14 : i1 to i32
    %c0_i32_19 = arith.constant 0 : i32
    %16 = arith.cmpi ne, %15, %c0_i32_19 : i32
    scf.if %16 {
      %c0_90 = arith.constant 0 : index
      %c0_91 = arith.constant 0 : index
      %c0_92 = arith.constant 0 : index
      %c0_93 = arith.constant 0 : index
      %71 = vector.load %arg4[%c0_90, %c0_91, %c0_92, %c0_93] : memref<1x2x8x16xbf16, #tpu.memory_space<vmem>>, vector<1x2x1x16xbf16>
      %72 = vector.shape_cast %71 : vector<1x2x1x16xbf16> to vector<2x1x16xbf16>
      %c0_94 = arith.constant 0 : index
      %c9_95 = arith.constant 9 : index
      %c1_96 = arith.constant 1 : index
      %73 = vector.load %arg8[%c0_94, %c9_95, %c1_96] : memref<2x10x18xbf16, #tpu.memory_space<vmem>>, vector<2x1x16xbf16>
      tpu.vector_store %arg8[%c0_94, %c9_95, %c1_96], %72 {strides = array<i32>} : memref<2x10x18xbf16, #tpu.memory_space<vmem>>, vector<2x1x16xbf16>,
    } else {
    }
    %c0_20 = arith.constant 0 : index
    %c0_21 = arith.constant 0 : index
    %c0_22 = arith.constant 0 : index
    %17 = vector.load %arg8[%c0_20, %c0_21, %c0_22] : memref<2x10x18xbf16, #tpu.memory_space<vmem>>, vector<2x8x16xbf16>
    %c0_23 = arith.constant 0 : index
    %c0_24 = arith.constant 0 : index
    %c0_25 = arith.constant 0 : index
    %c0_26 = arith.constant 0 : index
    %18 = vector.load %arg9[%c0_23, %c0_24, %c0_25, %c0_26] : memref<9x2x8x16xbf16, #tpu.memory_space<vmem>>, vector<1x2x8x16xbf16>
    %19 = vector.shape_cast %18 : vector<1x2x8x16xbf16> to vector<2x8x16xbf16>
    %20 = vector.shape_cast %17 : vector<2x8x16xbf16> to vector<1x2x8x16xbf16>
    tpu.vector_store %arg9[%c0_23, %c0_24, %c0_25, %c0_26], %20 {strides = array<i32>} : memref<9x2x8x16xbf16, #tpu.memory_space<vmem>>, vector<1x2x8x16xbf16>,
    %c0_27 = arith.constant 0 : index
    %c0_28 = arith.constant 0 : index
    %c1_29 = arith.constant 1 : index
    %21 = vector.load %arg8[%c0_27, %c0_28, %c1_29] : memref<2x10x18xbf16, #tpu.memory_space<vmem>>, vector<2x8x16xbf16>
    %c1_30 = arith.constant 1 : index
    %c0_31 = arith.constant 0 : index
    %c0_32 = arith.constant 0 : index
    %c0_33 = arith.constant 0 : index
    %22 = vector.load %arg9[%c1_30, %c0_31, %c0_32, %c0_33] : memref<9x2x8x16xbf16, #tpu.memory_space<vmem>>, vector<1x2x8x16xbf16>
    %23 = vector.shape_cast %22 : vector<1x2x8x16xbf16> to vector<2x8x16xbf16>
    %24 = vector.shape_cast %21 : vector<2x8x16xbf16> to vector<1x2x8x16xbf16>
    tpu.vector_store %arg9[%c1_30, %c0_31, %c0_32, %c0_33], %24 {strides = array<i32>} : memref<9x2x8x16xbf16, #tpu.memory_space<vmem>>, vector<1x2x8x16xbf16>,
    %c0_34 = arith.constant 0 : index
    %c0_35 = arith.constant 0 : index
    %c2 = arith.constant 2 : index
    %25 = vector.load %arg8[%c0_34, %c0_35, %c2] : memref<2x10x18xbf16, #tpu.memory_space<vmem>>, vector<2x8x16xbf16>
    %c2_36 = arith.constant 2 : index
    %c0_37 = arith.constant 0 : index
    %c0_38 = arith.constant 0 : index
    %c0_39 = arith.constant 0 : index
    %26 = vector.load %arg9[%c2_36, %c0_37, %c0_38, %c0_39] : memref<9x2x8x16xbf16, #tpu.memory_space<vmem>>, vector<1x2x8x16xbf16>
    %27 = vector.shape_cast %26 : vector<1x2x8x16xbf16> to vector<2x8x16xbf16>
    %28 = vector.shape_cast %25 : vector<2x8x16xbf16> to vector<1x2x8x16xbf16>
    tpu.vector_store %arg9[%c2_36, %c0_37, %c0_38, %c0_39], %28 {strides = array<i32>} : memref<9x2x8x16xbf16, #tpu.memory_space<vmem>>, vector<1x2x8x16xbf16>,
    %c0_40 = arith.constant 0 : index
    %c1_41 = arith.constant 1 : index
    %c0_42 = arith.constant 0 : index
    %29 = vector.load %arg8[%c0_40, %c1_41, %c0_42] : memref<2x10x18xbf16, #tpu.memory_space<vmem>>, vector<2x8x16xbf16>
    %c3 = arith.constant 3 : index
    %c0_43 = arith.constant 0 : index
    %c0_44 = arith.constant 0 : index
    %c0_45 = arith.constant 0 : index
    %30 = vector.load %arg9[%c3, %c0_43, %c0_44, %c0_45] : memref<9x2x8x16xbf16, #tpu.memory_space<vmem>>, vector<1x2x8x16xbf16>
    %31 = vector.shape_cast %30 : vector<1x2x8x16xbf16> to vector<2x8x16xbf16>
    %32 = vector.shape_cast %29 : vector<2x8x16xbf16> to vector<1x2x8x16xbf16>
    tpu.vector_store %arg9[%c3, %c0_43, %c0_44, %c0_45], %32 {strides = array<i32>} : memref<9x2x8x16xbf16, #tpu.memory_space<vmem>>, vector<1x2x8x16xbf16>,
    %c0_46 = arith.constant 0 : index
    %c1_47 = arith.constant 1 : index
    %c1_48 = arith.constant 1 : index
    %33 = vector.load %arg8[%c0_46, %c1_47, %c1_48] : memref<2x10x18xbf16, #tpu.memory_space<vmem>>, vector<2x8x16xbf16>
    %c4 = arith.constant 4 : index
    %c0_49 = arith.constant 0 : index
    %c0_50 = arith.constant 0 : index
    %c0_51 = arith.constant 0 : index
    %34 = vector.load %arg9[%c4, %c0_49, %c0_50, %c0_51] : memref<9x2x8x16xbf16, #tpu.memory_space<vmem>>, vector<1x2x8x16xbf16>
    %35 = vector.shape_cast %34 : vector<1x2x8x16xbf16> to vector<2x8x16xbf16>
    %36 = vector.shape_cast %33 : vector<2x8x16xbf16> to vector<1x2x8x16xbf16>
    tpu.vector_store %arg9[%c4, %c0_49, %c0_50, %c0_51], %36 {strides = array<i32>} : memref<9x2x8x16xbf16, #tpu.memory_space<vmem>>, vector<1x2x8x16xbf16>,
    %c0_52 = arith.constant 0 : index
    %c1_53 = arith.constant 1 : index
    %c2_54 = arith.constant 2 : index
    %37 = vector.load %arg8[%c0_52, %c1_53, %c2_54] : memref<2x10x18xbf16, #tpu.memory_space<vmem>>, vector<2x8x16xbf16>
    %c5 = arith.constant 5 : index
    %c0_55 = arith.constant 0 : index
    %c0_56 = arith.constant 0 : index
    %c0_57 = arith.constant 0 : index
    %38 = vector.load %arg9[%c5, %c0_55, %c0_56, %c0_57] : memref<9x2x8x16xbf16, #tpu.memory_space<vmem>>, vector<1x2x8x16xbf16>
    %39 = vector.shape_cast %38 : vector<1x2x8x16xbf16> to vector<2x8x16xbf16>
    %40 = vector.shape_cast %37 : vector<2x8x16xbf16> to vector<1x2x8x16xbf16>
    tpu.vector_store %arg9[%c5, %c0_55, %c0_56, %c0_57], %40 {strides = array<i32>} : memref<9x2x8x16xbf16, #tpu.memory_space<vmem>>, vector<1x2x8x16xbf16>,
    %c0_58 = arith.constant 0 : index
    %c2_59 = arith.constant 2 : index
    %c0_60 = arith.constant 0 : index
    %41 = vector.load %arg8[%c0_58, %c2_59, %c0_60] : memref<2x10x18xbf16, #tpu.memory_space<vmem>>, vector<2x8x16xbf16>
    %c6 = arith.constant 6 : index
    %c0_61 = arith.constant 0 : index
    %c0_62 = arith.constant 0 : index
    %c0_63 = arith.constant 0 : index
    %42 = vector.load %arg9[%c6, %c0_61, %c0_62, %c0_63] : memref<9x2x8x16xbf16, #tpu.memory_space<vmem>>, vector<1x2x8x16xbf16>
    %43 = vector.shape_cast %42 : vector<1x2x8x16xbf16> to vector<2x8x16xbf16>
    %44 = vector.shape_cast %41 : vector<2x8x16xbf16> to vector<1x2x8x16xbf16>
    tpu.vector_store %arg9[%c6, %c0_61, %c0_62, %c0_63], %44 {strides = array<i32>} : memref<9x2x8x16xbf16, #tpu.memory_space<vmem>>, vector<1x2x8x16xbf16>,
    %c0_64 = arith.constant 0 : index
    %c2_65 = arith.constant 2 : index
    %c1_66 = arith.constant 1 : index
    %45 = vector.load %arg8[%c0_64, %c2_65, %c1_66] : memref<2x10x18xbf16, #tpu.memory_space<vmem>>, vector<2x8x16xbf16>
    %c7 = arith.constant 7 : index
    %c0_67 = arith.constant 0 : index
    %c0_68 = arith.constant 0 : index
    %c0_69 = arith.constant 0 : index
    %46 = vector.load %arg9[%c7, %c0_67, %c0_68, %c0_69] : memref<9x2x8x16xbf16, #tpu.memory_space<vmem>>, vector<1x2x8x16xbf16>
    %47 = vector.shape_cast %46 : vector<1x2x8x16xbf16> to vector<2x8x16xbf16>
    %48 = vector.shape_cast %45 : vector<2x8x16xbf16> to vector<1x2x8x16xbf16>
    tpu.vector_store %arg9[%c7, %c0_67, %c0_68, %c0_69], %48 {strides = array<i32>} : memref<9x2x8x16xbf16, #tpu.memory_space<vmem>>, vector<1x2x8x16xbf16>,
    %c0_70 = arith.constant 0 : index
    %c2_71 = arith.constant 2 : index
    %c2_72 = arith.constant 2 : index
    %49 = vector.load %arg8[%c0_70, %c2_71, %c2_72] : memref<2x10x18xbf16, #tpu.memory_space<vmem>>, vector<2x8x16xbf16>
    %c8 = arith.constant 8 : index
    %c0_73 = arith.constant 0 : index
    %c0_74 = arith.constant 0 : index
    %c0_75 = arith.constant 0 : index
    %50 = vector.load %arg9[%c8, %c0_73, %c0_74, %c0_75] : memref<9x2x8x16xbf16, #tpu.memory_space<vmem>>, vector<1x2x8x16xbf16>
    %51 = vector.shape_cast %50 : vector<1x2x8x16xbf16> to vector<2x8x16xbf16>
    %52 = vector.shape_cast %49 : vector<2x8x16xbf16> to vector<1x2x8x16xbf16>
    tpu.vector_store %arg9[%c8, %c0_73, %c0_74, %c0_75], %52 {strides = array<i32>} : memref<9x2x8x16xbf16, #tpu.memory_space<vmem>>, vector<1x2x8x16xbf16>,
    %c0_76 = arith.constant 0 : index
    %c0_77 = arith.constant 0 : index
    %c0_78 = arith.constant 0 : index
    %c0_79 = arith.constant 0 : index
    %53 = vector.load %arg9[%c0_76, %c0_77, %c0_78, %c0_79] : memref<9x2x8x16xbf16, #tpu.memory_space<vmem>>, vector<9x2x8x16xbf16>
    %54 = vector.shape_cast %53 : vector<9x2x8x16xbf16> to vector<18x128xbf16>
    %c0_80 = arith.constant 0 : index
    %c0_81 = arith.constant 0 : index
    %55 = vector.load %arg5[%c0_80, %c0_81] : memref<2x18xbf16, #tpu.memory_space<vmem>>, vector<2x18xbf16>
    %cst_82 = arith.constant dense<0.000000e+00> : vector<2x128xf32>
    %56 = tpu.matmul %55, %54, %cst_82 {dimension_numbers = #tpu.dot_dimension_numbers<[1], [0], [0], [1], [0, 0, 1, 1], [], []>} : vector<2x18xbf16>, vector<18x128xbf16>, vector<2x128xf32> -> vector<2x128xf32>
    %c0_83 = arith.constant 0 : index
    %c0_84 = arith.constant 0 : index
    %57 = vector.load %arg6[%c0_83, %c0_84] : memref<2x1xf32, #tpu.memory_space<vmem>>, vector<2x1xf32>
    %58 = vector.broadcast %57 : vector<2x1xf32> to vector<2x128xf32>
    %59 = arith.addf %56, %58 : vector<2x128xf32>
    %cst_85 = arith.constant 0.000000e+00 : f32
    %60 = vector.broadcast %cst_85 : f32 to vector<2x128xf32>
    %61 = arith.subf %60, %59 : vector<2x128xf32>
    %62 = math.exp %61 : vector<2x128xf32>
    %cst_86 = arith.constant 1.000000e+00 : f32
    %63 = vector.broadcast %cst_86 : f32 to vector<2x128xf32>
    %64 = arith.addf %63, %62 : vector<2x128xf32>
    %65 = tpu.reciprocal %64 {approx = true} : vector<2x128xf32> -> vector<2x128xf32>
    %66 = arith.mulf %59, %65 : vector<2x128xf32>
    %67 = arith.truncf %66 : vector<2x128xf32> to vector<2x128xbf16>
    %c0_87 = arith.constant 0 : index
    %c0_88 = arith.constant 0 : index
    %c0_89 = arith.constant 0 : index
    %68 = vector.load %arg7[%c0_87, %c0_88, %c0_89] : memref<1x2x128xbf16, #tpu.memory_space<vmem>>, vector<1x2x128xbf16>
    %69 = vector.shape_cast %68 : vector<1x2x128xbf16> to vector<2x128xbf16>
    %70 = vector.shape_cast %67 : vector<2x128xbf16> to vector<1x2x128xbf16>
    tpu.vector_store %arg7[%c0_87, %c0_88, %c0_89], %70 {strides = array<i32>} : memref<1x2x128xbf16, #tpu.memory_space<vmem>>, vector<1x2x128xbf16>,
    return
  }
  func.func @transform_0(%arg0: i32, %arg1: i32) -> (i32, i32, i32, i32) {
    %c0_i32 = arith.constant 0 : i32
    %c0_i32_0 = arith.constant 0 : i32
    %c0_i32_1 = arith.constant 0 : i32
    return %arg0, %c0_i32, %arg1, %c0_i32_0 : i32, i32, i32, i32
  }
  func.func @transform_1(%arg0: i32, %arg1: i32) -> (i32, i32, i32, i32) {
    %c1_i32 = arith.constant 1 : i32
    %0 = arith.muli %arg1, %c1_i32 : i32
    %c1_i32_0 = arith.constant 1 : i32
    %1 = arith.subi %0, %c1_i32_0 : i32
    %c0_i32 = arith.constant 0 : i32
    %2 = arith.maxsi %1, %c0_i32 : i32
    %c0_i32_1 = arith.constant 0 : i32
    %c0_i32_2 = arith.constant 0 : i32
    %c0_i32_3 = arith.constant 0 : i32
    return %arg0, %c0_i32_1, %2, %c0_i32_2 : i32, i32, i32, i32
  }
  func.func @transform_2(%arg0: i32, %arg1: i32) -> (i32, i32, i32, i32) {
    %c1_i32 = arith.constant 1 : i32
    %0 = arith.addi %arg1, %c1_i32 : i32
    %c1_i32_0 = arith.constant 1 : i32
    %1 = arith.muli %0, %c1_i32_0 : i32
    %c1_i32_1 = arith.constant 1 : i32
    %2 = arith.minsi %1, %c1_i32_1 : i32
    %c0_i32 = arith.constant 0 : i32
    %c0_i32_2 = arith.constant 0 : i32
    %c0_i32_3 = arith.constant 0 : i32
    return %arg0, %c0_i32, %2, %c0_i32_2 : i32, i32, i32, i32
  }
  func.func @transform_3(%arg0: i32, %arg1: i32) -> (i32, i32) {
    %c0_i32 = arith.constant 0 : i32
    %c0_i32_0 = arith.constant 0 : i32
    %c0_i32_1 = arith.constant 0 : i32
    return %c0_i32, %c0_i32_0 : i32, i32
  }
  func.func @transform_4(%arg0: i32, %arg1: i32) -> (i32, i32) {
    %c0_i32 = arith.constant 0 : i32
    %c0_i32_0 = arith.constant 0 : i32
    %c0_i32_1 = arith.constant 0 : i32
    return %c0_i32, %c0_i32_0 : i32, i32
  }
  func.func @transform_5(%arg0: i32, %arg1: i32) -> (i32, i32, i32) {
    %c0_i32 = arith.constant 0 : i32
    %c0_i32_0 = arith.constant 0 : i32
    return %arg0, %c0_i32, %arg1 : i32, i32, i32
  }
}

module attributes {stable_mosaic.version = 11 : i64} {
  func.func @kernel(%arg0: i32, %arg1: i32, %arg2: memref<1x2x8x16xbf16, #tpu.memory_space<vmem>>, %arg3: memref<1x2x8x16xbf16, #tpu.memory_space<vmem>>, %arg4: memref<1x2x8x16xbf16, #tpu.memory_space<vmem>>, %arg5: memref<1x2x8x16xbf16, #tpu.memory_space<vmem>>, %arg6: memref<2x18xbf16, #tpu.memory_space<vmem>>, %arg7: memref<2x1xf32, #tpu.memory_space<vmem>>, %arg8: memref<1x2x128xbf16, #tpu.memory_space<vmem>>, %arg9: memref<2x10x18xbf16, #tpu.memory_space<vmem>>, %arg10: memref<9x2x8x16xbf16, #tpu.memory_space<vmem>>) attributes {dimension_semantics = [#tpu.dimension_semantics<parallel>, #tpu.dimension_semantics<parallel>], iteration_bounds = array<i64: 2, 2>, scalar_prefetch = 0 : i64, scratch_operands = 2 : i64, tpu.core_type = #tpu.core_type<tc>, window_params = [{transform_indices = @transform_0, window_bounds = array<i64: 1, 2, 8, 16>}, {transform_indices = @transform_1, window_bounds = array<i64: 1, 2, 8, 16>}, {transform_indices = @transform_2, window_bounds = array<i64: 1, 2, 8, 16>}, {transform_indices = @transform_3, window_bounds = array<i64: 1, 2, 8, 16>}, {pipeline_mode = #tpu.pipeline_mode<synchronous>, transform_indices = @transform_4, window_bounds = array<i64: 2, 18>}, {pipeline_mode = #tpu.pipeline_mode<synchronous>, transform_indices = @transform_5, window_bounds = array<i64: 2, 1>}, {transform_indices = @transform_6, window_bounds = array<i64: 1, 2, 128>}]} {
    %cst = arith.constant 0.000000e+00 : bf16
    %0 = vector.broadcast %cst : bf16 to vector<2x1x18xbf16>
    %c0 = arith.constant 0 : index
    %c0_0 = arith.constant 0 : index
    %c0_1 = arith.constant 0 : index
    %1 = vector.load %arg9[%c0, %c0_0, %c0_1] : memref<2x10x18xbf16, #tpu.memory_space<vmem>>, vector<2x1x18xbf16>
    tpu.vector_store %arg9[%c0, %c0_0, %c0_1], %0 {strides = array<i32>} : memref<2x10x18xbf16, #tpu.memory_space<vmem>>, vector<2x1x18xbf16>,
    %cst_2 = arith.constant 0.000000e+00 : bf16
    %2 = vector.broadcast %cst_2 : bf16 to vector<2x1x18xbf16>
    %c0_3 = arith.constant 0 : index
    %c9 = arith.constant 9 : index
    %c0_4 = arith.constant 0 : index
    %3 = vector.load %arg9[%c0_3, %c9, %c0_4] : memref<2x10x18xbf16, #tpu.memory_space<vmem>>, vector<2x1x18xbf16>
    tpu.vector_store %arg9[%c0_3, %c9, %c0_4], %2 {strides = array<i32>} : memref<2x10x18xbf16, #tpu.memory_space<vmem>>, vector<2x1x18xbf16>,
    %cst_5 = arith.constant 0.000000e+00 : bf16
    %4 = vector.broadcast %cst_5 : bf16 to vector<2x10x1xbf16>
    %c0_6 = arith.constant 0 : index
    %c0_7 = arith.constant 0 : index
    %c0_8 = arith.constant 0 : index
    %5 = vector.load %arg9[%c0_6, %c0_7, %c0_8] : memref<2x10x18xbf16, #tpu.memory_space<vmem>>, vector<2x10x1xbf16>
    tpu.vector_store %arg9[%c0_6, %c0_7, %c0_8], %4 {strides = array<i32>} : memref<2x10x18xbf16, #tpu.memory_space<vmem>>, vector<2x10x1xbf16>,
    %cst_9 = arith.constant 0.000000e+00 : bf16
    %6 = vector.broadcast %cst_9 : bf16 to vector<2x10x1xbf16>
    %c0_10 = arith.constant 0 : index
    %c0_11 = arith.constant 0 : index
    %c17 = arith.constant 17 : index
    %7 = vector.load %arg9[%c0_10, %c0_11, %c17] : memref<2x10x18xbf16, #tpu.memory_space<vmem>>, vector<2x10x1xbf16>
    tpu.vector_store %arg9[%c0_10, %c0_11, %c17], %6 {strides = array<i32>} : memref<2x10x18xbf16, #tpu.memory_space<vmem>>, vector<2x10x1xbf16>,
    %c0_12 = arith.constant 0 : index
    %c0_13 = arith.constant 0 : index
    %c0_14 = arith.constant 0 : index
    %c0_15 = arith.constant 0 : index
    %8 = vector.load %arg2[%c0_12, %c0_13, %c0_14, %c0_15] : memref<1x2x8x16xbf16, #tpu.memory_space<vmem>>, vector<1x2x8x16xbf16>
    %9 = vector.shape_cast %8 : vector<1x2x8x16xbf16> to vector<2x8x16xbf16>
    %c0_16 = arith.constant 0 : index
    %c1 = arith.constant 1 : index
    %c1_17 = arith.constant 1 : index
    %10 = vector.load %arg9[%c0_16, %c1, %c1_17] : memref<2x10x18xbf16, #tpu.memory_space<vmem>>, vector<2x8x16xbf16>
    tpu.vector_store %arg9[%c0_16, %c1, %c1_17], %9 {strides = array<i32>} : memref<2x10x18xbf16, #tpu.memory_space<vmem>>, vector<2x8x16xbf16>,
    %c0_i32 = arith.constant 0 : i32
    %11 = arith.cmpi sgt, %arg1, %c0_i32 : i32
    %12 = arith.extui %11 : i1 to i32
    %c0_i32_18 = arith.constant 0 : i32
    %13 = arith.cmpi ne, %12, %c0_i32_18 : i32
    scf.if %13 {
      %c0_94 = arith.constant 0 : index
      %c0_95 = arith.constant 0 : index
      %c7_96 = arith.constant 7 : index
      %c0_97 = arith.constant 0 : index
      %76 = vector.load %arg3[%c0_94, %c0_95, %c7_96, %c0_97] : memref<1x2x8x16xbf16, #tpu.memory_space<vmem>>, vector<1x2x1x16xbf16>
      %77 = vector.shape_cast %76 : vector<1x2x1x16xbf16> to vector<2x1x16xbf16>
      %c0_98 = arith.constant 0 : index
      %c0_99 = arith.constant 0 : index
      %c1_100 = arith.constant 1 : index
      %78 = vector.load %arg9[%c0_98, %c0_99, %c1_100] : memref<2x10x18xbf16, #tpu.memory_space<vmem>>, vector<2x1x16xbf16>
      tpu.vector_store %arg9[%c0_98, %c0_99, %c1_100], %77 {strides = array<i32>} : memref<2x10x18xbf16, #tpu.memory_space<vmem>>, vector<2x1x16xbf16>,
    } else {
    }
    %c1_i32 = arith.constant 1 : i32
    %14 = arith.cmpi slt, %arg1, %c1_i32 : i32
    %15 = arith.extui %14 : i1 to i32
    %c0_i32_19 = arith.constant 0 : i32
    %16 = arith.cmpi ne, %15, %c0_i32_19 : i32
    scf.if %16 {
      %c0_94 = arith.constant 0 : index
      %c0_95 = arith.constant 0 : index
      %c0_96 = arith.constant 0 : index
      %c0_97 = arith.constant 0 : index
      %76 = vector.load %arg4[%c0_94, %c0_95, %c0_96, %c0_97] : memref<1x2x8x16xbf16, #tpu.memory_space<vmem>>, vector<1x2x1x16xbf16>
      %77 = vector.shape_cast %76 : vector<1x2x1x16xbf16> to vector<2x1x16xbf16>
      %c0_98 = arith.constant 0 : index
      %c9_99 = arith.constant 9 : index
      %c1_100 = arith.constant 1 : index
      %78 = vector.load %arg9[%c0_98, %c9_99, %c1_100] : memref<2x10x18xbf16, #tpu.memory_space<vmem>>, vector<2x1x16xbf16>
      tpu.vector_store %arg9[%c0_98, %c9_99, %c1_100], %77 {strides = array<i32>} : memref<2x10x18xbf16, #tpu.memory_space<vmem>>, vector<2x1x16xbf16>,
    } else {
    }
    %c0_20 = arith.constant 0 : index
    %c0_21 = arith.constant 0 : index
    %c0_22 = arith.constant 0 : index
    %17 = vector.load %arg9[%c0_20, %c0_21, %c0_22] : memref<2x10x18xbf16, #tpu.memory_space<vmem>>, vector<2x8x16xbf16>
    %c0_23 = arith.constant 0 : index
    %c0_24 = arith.constant 0 : index
    %c0_25 = arith.constant 0 : index
    %c0_26 = arith.constant 0 : index
    %18 = vector.load %arg10[%c0_23, %c0_24, %c0_25, %c0_26] : memref<9x2x8x16xbf16, #tpu.memory_space<vmem>>, vector<1x2x8x16xbf16>
    %19 = vector.shape_cast %18 : vector<1x2x8x16xbf16> to vector<2x8x16xbf16>
    %20 = vector.shape_cast %17 : vector<2x8x16xbf16> to vector<1x2x8x16xbf16>
    tpu.vector_store %arg10[%c0_23, %c0_24, %c0_25, %c0_26], %20 {strides = array<i32>} : memref<9x2x8x16xbf16, #tpu.memory_space<vmem>>, vector<1x2x8x16xbf16>,
    %c0_27 = arith.constant 0 : index
    %c0_28 = arith.constant 0 : index
    %c1_29 = arith.constant 1 : index
    %21 = vector.load %arg9[%c0_27, %c0_28, %c1_29] : memref<2x10x18xbf16, #tpu.memory_space<vmem>>, vector<2x8x16xbf16>
    %c1_30 = arith.constant 1 : index
    %c0_31 = arith.constant 0 : index
    %c0_32 = arith.constant 0 : index
    %c0_33 = arith.constant 0 : index
    %22 = vector.load %arg10[%c1_30, %c0_31, %c0_32, %c0_33] : memref<9x2x8x16xbf16, #tpu.memory_space<vmem>>, vector<1x2x8x16xbf16>
    %23 = vector.shape_cast %22 : vector<1x2x8x16xbf16> to vector<2x8x16xbf16>
    %24 = vector.shape_cast %21 : vector<2x8x16xbf16> to vector<1x2x8x16xbf16>
    tpu.vector_store %arg10[%c1_30, %c0_31, %c0_32, %c0_33], %24 {strides = array<i32>} : memref<9x2x8x16xbf16, #tpu.memory_space<vmem>>, vector<1x2x8x16xbf16>,
    %c0_34 = arith.constant 0 : index
    %c0_35 = arith.constant 0 : index
    %c2 = arith.constant 2 : index
    %25 = vector.load %arg9[%c0_34, %c0_35, %c2] : memref<2x10x18xbf16, #tpu.memory_space<vmem>>, vector<2x8x16xbf16>
    %c2_36 = arith.constant 2 : index
    %c0_37 = arith.constant 0 : index
    %c0_38 = arith.constant 0 : index
    %c0_39 = arith.constant 0 : index
    %26 = vector.load %arg10[%c2_36, %c0_37, %c0_38, %c0_39] : memref<9x2x8x16xbf16, #tpu.memory_space<vmem>>, vector<1x2x8x16xbf16>
    %27 = vector.shape_cast %26 : vector<1x2x8x16xbf16> to vector<2x8x16xbf16>
    %28 = vector.shape_cast %25 : vector<2x8x16xbf16> to vector<1x2x8x16xbf16>
    tpu.vector_store %arg10[%c2_36, %c0_37, %c0_38, %c0_39], %28 {strides = array<i32>} : memref<9x2x8x16xbf16, #tpu.memory_space<vmem>>, vector<1x2x8x16xbf16>,
    %c0_40 = arith.constant 0 : index
    %c1_41 = arith.constant 1 : index
    %c0_42 = arith.constant 0 : index
    %29 = vector.load %arg9[%c0_40, %c1_41, %c0_42] : memref<2x10x18xbf16, #tpu.memory_space<vmem>>, vector<2x8x16xbf16>
    %c3 = arith.constant 3 : index
    %c0_43 = arith.constant 0 : index
    %c0_44 = arith.constant 0 : index
    %c0_45 = arith.constant 0 : index
    %30 = vector.load %arg10[%c3, %c0_43, %c0_44, %c0_45] : memref<9x2x8x16xbf16, #tpu.memory_space<vmem>>, vector<1x2x8x16xbf16>
    %31 = vector.shape_cast %30 : vector<1x2x8x16xbf16> to vector<2x8x16xbf16>
    %32 = vector.shape_cast %29 : vector<2x8x16xbf16> to vector<1x2x8x16xbf16>
    tpu.vector_store %arg10[%c3, %c0_43, %c0_44, %c0_45], %32 {strides = array<i32>} : memref<9x2x8x16xbf16, #tpu.memory_space<vmem>>, vector<1x2x8x16xbf16>,
    %c0_46 = arith.constant 0 : index
    %c1_47 = arith.constant 1 : index
    %c1_48 = arith.constant 1 : index
    %33 = vector.load %arg9[%c0_46, %c1_47, %c1_48] : memref<2x10x18xbf16, #tpu.memory_space<vmem>>, vector<2x8x16xbf16>
    %c4 = arith.constant 4 : index
    %c0_49 = arith.constant 0 : index
    %c0_50 = arith.constant 0 : index
    %c0_51 = arith.constant 0 : index
    %34 = vector.load %arg10[%c4, %c0_49, %c0_50, %c0_51] : memref<9x2x8x16xbf16, #tpu.memory_space<vmem>>, vector<1x2x8x16xbf16>
    %35 = vector.shape_cast %34 : vector<1x2x8x16xbf16> to vector<2x8x16xbf16>
    %36 = vector.shape_cast %33 : vector<2x8x16xbf16> to vector<1x2x8x16xbf16>
    tpu.vector_store %arg10[%c4, %c0_49, %c0_50, %c0_51], %36 {strides = array<i32>} : memref<9x2x8x16xbf16, #tpu.memory_space<vmem>>, vector<1x2x8x16xbf16>,
    %c0_52 = arith.constant 0 : index
    %c1_53 = arith.constant 1 : index
    %c2_54 = arith.constant 2 : index
    %37 = vector.load %arg9[%c0_52, %c1_53, %c2_54] : memref<2x10x18xbf16, #tpu.memory_space<vmem>>, vector<2x8x16xbf16>
    %c5 = arith.constant 5 : index
    %c0_55 = arith.constant 0 : index
    %c0_56 = arith.constant 0 : index
    %c0_57 = arith.constant 0 : index
    %38 = vector.load %arg10[%c5, %c0_55, %c0_56, %c0_57] : memref<9x2x8x16xbf16, #tpu.memory_space<vmem>>, vector<1x2x8x16xbf16>
    %39 = vector.shape_cast %38 : vector<1x2x8x16xbf16> to vector<2x8x16xbf16>
    %40 = vector.shape_cast %37 : vector<2x8x16xbf16> to vector<1x2x8x16xbf16>
    tpu.vector_store %arg10[%c5, %c0_55, %c0_56, %c0_57], %40 {strides = array<i32>} : memref<9x2x8x16xbf16, #tpu.memory_space<vmem>>, vector<1x2x8x16xbf16>,
    %c0_58 = arith.constant 0 : index
    %c2_59 = arith.constant 2 : index
    %c0_60 = arith.constant 0 : index
    %41 = vector.load %arg9[%c0_58, %c2_59, %c0_60] : memref<2x10x18xbf16, #tpu.memory_space<vmem>>, vector<2x8x16xbf16>
    %c6 = arith.constant 6 : index
    %c0_61 = arith.constant 0 : index
    %c0_62 = arith.constant 0 : index
    %c0_63 = arith.constant 0 : index
    %42 = vector.load %arg10[%c6, %c0_61, %c0_62, %c0_63] : memref<9x2x8x16xbf16, #tpu.memory_space<vmem>>, vector<1x2x8x16xbf16>
    %43 = vector.shape_cast %42 : vector<1x2x8x16xbf16> to vector<2x8x16xbf16>
    %44 = vector.shape_cast %41 : vector<2x8x16xbf16> to vector<1x2x8x16xbf16>
    tpu.vector_store %arg10[%c6, %c0_61, %c0_62, %c0_63], %44 {strides = array<i32>} : memref<9x2x8x16xbf16, #tpu.memory_space<vmem>>, vector<1x2x8x16xbf16>,
    %c0_64 = arith.constant 0 : index
    %c2_65 = arith.constant 2 : index
    %c1_66 = arith.constant 1 : index
    %45 = vector.load %arg9[%c0_64, %c2_65, %c1_66] : memref<2x10x18xbf16, #tpu.memory_space<vmem>>, vector<2x8x16xbf16>
    %c7 = arith.constant 7 : index
    %c0_67 = arith.constant 0 : index
    %c0_68 = arith.constant 0 : index
    %c0_69 = arith.constant 0 : index
    %46 = vector.load %arg10[%c7, %c0_67, %c0_68, %c0_69] : memref<9x2x8x16xbf16, #tpu.memory_space<vmem>>, vector<1x2x8x16xbf16>
    %47 = vector.shape_cast %46 : vector<1x2x8x16xbf16> to vector<2x8x16xbf16>
    %48 = vector.shape_cast %45 : vector<2x8x16xbf16> to vector<1x2x8x16xbf16>
    tpu.vector_store %arg10[%c7, %c0_67, %c0_68, %c0_69], %48 {strides = array<i32>} : memref<9x2x8x16xbf16, #tpu.memory_space<vmem>>, vector<1x2x8x16xbf16>,
    %c0_70 = arith.constant 0 : index
    %c2_71 = arith.constant 2 : index
    %c2_72 = arith.constant 2 : index
    %49 = vector.load %arg9[%c0_70, %c2_71, %c2_72] : memref<2x10x18xbf16, #tpu.memory_space<vmem>>, vector<2x8x16xbf16>
    %c8 = arith.constant 8 : index
    %c0_73 = arith.constant 0 : index
    %c0_74 = arith.constant 0 : index
    %c0_75 = arith.constant 0 : index
    %50 = vector.load %arg10[%c8, %c0_73, %c0_74, %c0_75] : memref<9x2x8x16xbf16, #tpu.memory_space<vmem>>, vector<1x2x8x16xbf16>
    %51 = vector.shape_cast %50 : vector<1x2x8x16xbf16> to vector<2x8x16xbf16>
    %52 = vector.shape_cast %49 : vector<2x8x16xbf16> to vector<1x2x8x16xbf16>
    tpu.vector_store %arg10[%c8, %c0_73, %c0_74, %c0_75], %52 {strides = array<i32>} : memref<9x2x8x16xbf16, #tpu.memory_space<vmem>>, vector<1x2x8x16xbf16>,
    %c0_76 = arith.constant 0 : index
    %c0_77 = arith.constant 0 : index
    %c0_78 = arith.constant 0 : index
    %c0_79 = arith.constant 0 : index
    %53 = vector.load %arg10[%c0_76, %c0_77, %c0_78, %c0_79] : memref<9x2x8x16xbf16, #tpu.memory_space<vmem>>, vector<9x2x8x16xbf16>
    %54 = vector.shape_cast %53 : vector<9x2x8x16xbf16> to vector<18x128xbf16>
    %c0_80 = arith.constant 0 : index
    %c0_81 = arith.constant 0 : index
    %55 = vector.load %arg6[%c0_80, %c0_81] : memref<2x18xbf16, #tpu.memory_space<vmem>>, vector<2x18xbf16>
    %cst_82 = arith.constant dense<0.000000e+00> : vector<2x128xf32>
    %56 = tpu.matmul %55, %54, %cst_82 {dimension_numbers = #tpu.dot_dimension_numbers<[1], [0], [0], [1], [0, 0, 1, 1], [], []>} : vector<2x18xbf16>, vector<18x128xbf16>, vector<2x128xf32> -> vector<2x128xf32>
    %c0_83 = arith.constant 0 : index
    %c0_84 = arith.constant 0 : index
    %57 = vector.load %arg7[%c0_83, %c0_84] : memref<2x1xf32, #tpu.memory_space<vmem>>, vector<2x1xf32>
    %58 = vector.broadcast %57 : vector<2x1xf32> to vector<2x128xf32>
    %59 = arith.addf %56, %58 : vector<2x128xf32>
    %cst_85 = arith.constant 0.000000e+00 : f32
    %60 = vector.broadcast %cst_85 : f32 to vector<2x128xf32>
    %61 = arith.subf %60, %59 : vector<2x128xf32>
    %62 = math.exp %61 : vector<2x128xf32>
    %cst_86 = arith.constant 1.000000e+00 : f32
    %63 = vector.broadcast %cst_86 : f32 to vector<2x128xf32>
    %64 = arith.addf %63, %62 : vector<2x128xf32>
    %65 = tpu.reciprocal %64 {approx = true} : vector<2x128xf32> -> vector<2x128xf32>
    %66 = arith.mulf %59, %65 : vector<2x128xf32>
    %c0_87 = arith.constant 0 : index
    %c0_88 = arith.constant 0 : index
    %c0_89 = arith.constant 0 : index
    %c0_90 = arith.constant 0 : index
    %67 = vector.load %arg5[%c0_87, %c0_88, %c0_89, %c0_90] : memref<1x2x8x16xbf16, #tpu.memory_space<vmem>>, vector<1x2x8x16xbf16>
    %68 = vector.shape_cast %67 : vector<1x2x8x16xbf16> to vector<2x8x16xbf16>
    %69 = vector.shape_cast %68 : vector<2x8x16xbf16> to vector<2x128xbf16>
    %70 = arith.extf %69 : vector<2x128xbf16> to vector<2x128xf32>
    %71 = arith.addf %66, %70 : vector<2x128xf32>
    %72 = arith.truncf %71 : vector<2x128xf32> to vector<2x128xbf16>
    %c0_91 = arith.constant 0 : index
    %c0_92 = arith.constant 0 : index
    %c0_93 = arith.constant 0 : index
    %73 = vector.load %arg8[%c0_91, %c0_92, %c0_93] : memref<1x2x128xbf16, #tpu.memory_space<vmem>>, vector<1x2x128xbf16>
    %74 = vector.shape_cast %73 : vector<1x2x128xbf16> to vector<2x128xbf16>
    %75 = vector.shape_cast %72 : vector<2x128xbf16> to vector<1x2x128xbf16>
    tpu.vector_store %arg8[%c0_91, %c0_92, %c0_93], %75 {strides = array<i32>} : memref<1x2x128xbf16, #tpu.memory_space<vmem>>, vector<1x2x128xbf16>,
    return
  }
  func.func @transform_0(%arg0: i32, %arg1: i32) -> (i32, i32, i32, i32) {
    %c0_i32 = arith.constant 0 : i32
    %c0_i32_0 = arith.constant 0 : i32
    %c0_i32_1 = arith.constant 0 : i32
    return %arg0, %c0_i32, %arg1, %c0_i32_0 : i32, i32, i32, i32
  }
  func.func @transform_1(%arg0: i32, %arg1: i32) -> (i32, i32, i32, i32) {
    %c1_i32 = arith.constant 1 : i32
    %0 = arith.muli %arg1, %c1_i32 : i32
    %c1_i32_0 = arith.constant 1 : i32
    %1 = arith.subi %0, %c1_i32_0 : i32
    %c0_i32 = arith.constant 0 : i32
    %2 = arith.maxsi %1, %c0_i32 : i32
    %c0_i32_1 = arith.constant 0 : i32
    %c0_i32_2 = arith.constant 0 : i32
    %c0_i32_3 = arith.constant 0 : i32
    return %arg0, %c0_i32_1, %2, %c0_i32_2 : i32, i32, i32, i32
  }
  func.func @transform_2(%arg0: i32, %arg1: i32) -> (i32, i32, i32, i32) {
    %c1_i32 = arith.constant 1 : i32
    %0 = arith.addi %arg1, %c1_i32 : i32
    %c1_i32_0 = arith.constant 1 : i32
    %1 = arith.muli %0, %c1_i32_0 : i32
    %c1_i32_1 = arith.constant 1 : i32
    %2 = arith.minsi %1, %c1_i32_1 : i32
    %c0_i32 = arith.constant 0 : i32
    %c0_i32_2 = arith.constant 0 : i32
    %c0_i32_3 = arith.constant 0 : i32
    return %arg0, %c0_i32, %2, %c0_i32_2 : i32, i32, i32, i32
  }
  func.func @transform_3(%arg0: i32, %arg1: i32) -> (i32, i32, i32, i32) {
    %c0_i32 = arith.constant 0 : i32
    %c0_i32_0 = arith.constant 0 : i32
    %c0_i32_1 = arith.constant 0 : i32
    return %arg0, %c0_i32, %arg1, %c0_i32_0 : i32, i32, i32, i32
  }
  func.func @transform_4(%arg0: i32, %arg1: i32) -> (i32, i32) {
    %c0_i32 = arith.constant 0 : i32
    %c0_i32_0 = arith.constant 0 : i32
    %c0_i32_1 = arith.constant 0 : i32
    return %c0_i32, %c0_i32_0 : i32, i32
  }
  func.func @transform_5(%arg0: i32, %arg1: i32) -> (i32, i32) {
    %c0_i32 = arith.constant 0 : i32
    %c0_i32_0 = arith.constant 0 : i32
    %c0_i32_1 = arith.constant 0 : i32
    return %c0_i32, %c0_i32_0 : i32, i32
  }
  func.func @transform_6(%arg0: i32, %arg1: i32) -> (i32, i32, i32) {
    %c0_i32 = arith.constant 0 : i32
    %c0_i32_0 = arith.constant 0 : i32
    return %arg0, %c0_i32, %arg1 : i32, i32, i32
  }
}

module attributes {stable_mosaic.version = 11 : i64} {
  func.func @kernel(%arg0: i32, %arg1: i32, %arg2: memref<1x4x128xbf16, #tpu.memory_space<vmem>>, %arg3: memref<1x2x128xbf16, #tpu.memory_space<vmem>>, %arg4: memref<1x2x128xbf16, #tpu.memory_space<vmem>>, %arg5: memref<4x8xbf16, #tpu.memory_space<vmem>>, %arg6: memref<4x1xf32, #tpu.memory_space<vmem>>, %arg7: memref<1x4x128xf32, #tpu.memory_space<vmem>>, %arg8: memref<8x128xbf16, #tpu.memory_space<vmem>>) attributes {dimension_semantics = [#tpu.dimension_semantics<parallel>, #tpu.dimension_semantics<parallel>], iteration_bounds = array<i64: 2, 2>, scalar_prefetch = 0 : i64, scratch_operands = 1 : i64, tpu.core_type = #tpu.core_type<tc>, window_params = [{transform_indices = @transform_0, window_bounds = array<i64: 1, 4, 128>}, {transform_indices = @transform_1, window_bounds = array<i64: 1, 2, 128>}, {transform_indices = @transform_2, window_bounds = array<i64: 1, 2, 128>}, {pipeline_mode = #tpu.pipeline_mode<synchronous>, transform_indices = @transform_3, window_bounds = array<i64: 4, 8>}, {pipeline_mode = #tpu.pipeline_mode<synchronous>, transform_indices = @transform_4, window_bounds = array<i64: 4, 1>}, {transform_indices = @transform_5, window_bounds = array<i64: 1, 4, 128>}]} {
    %c0 = arith.constant 0 : index
    %c0_0 = arith.constant 0 : index
    %c0_1 = arith.constant 0 : index
    %0 = vector.load %arg2[%c0, %c0_0, %c0_1] : memref<1x4x128xbf16, #tpu.memory_space<vmem>>, vector<1x4x128xbf16>
    %1 = vector.shape_cast %0 : vector<1x4x128xbf16> to vector<4x128xbf16>
    %c0_2 = arith.constant 0 : index
    %c0_3 = arith.constant 0 : index
    %2 = vector.load %arg8[%c0_2, %c0_3] : memref<8x128xbf16, #tpu.memory_space<vmem>>, vector<4x128xbf16>
    tpu.vector_store %arg8[%c0_2, %c0_3], %1 {strides = array<i32>} : memref<8x128xbf16, #tpu.memory_space<vmem>>, vector<4x128xbf16>,
    %c0_4 = arith.constant 0 : index
    %c0_5 = arith.constant 0 : index
    %c0_6 = arith.constant 0 : index
    %3 = vector.load %arg3[%c0_4, %c0_5, %c0_6] : memref<1x2x128xbf16, #tpu.memory_space<vmem>>, vector<1x2x128xbf16>
    %4 = vector.shape_cast %3 : vector<1x2x128xbf16> to vector<2x128xbf16>
    %c4 = arith.constant 4 : index
    %c0_7 = arith.constant 0 : index
    %5 = vector.load %arg8[%c4, %c0_7] : memref<8x128xbf16, #tpu.memory_space<vmem>>, vector<2x128xbf16>
    tpu.vector_store %arg8[%c4, %c0_7], %4 {strides = array<i32>} : memref<8x128xbf16, #tpu.memory_space<vmem>>, vector<2x128xbf16>,
    %c0_8 = arith.constant 0 : index
    %c0_9 = arith.constant 0 : index
    %c0_10 = arith.constant 0 : index
    %6 = vector.load %arg4[%c0_8, %c0_9, %c0_10] : memref<1x2x128xbf16, #tpu.memory_space<vmem>>, vector<1x2x128xbf16>
    %7 = vector.shape_cast %6 : vector<1x2x128xbf16> to vector<2x128xbf16>
    %c6 = arith.constant 6 : index
    %c0_11 = arith.constant 0 : index
    %8 = vector.load %arg8[%c6, %c0_11] : memref<8x128xbf16, #tpu.memory_space<vmem>>, vector<2x128xbf16>
    tpu.vector_store %arg8[%c6, %c0_11], %7 {strides = array<i32>} : memref<8x128xbf16, #tpu.memory_space<vmem>>, vector<2x128xbf16>,
    %c0_12 = arith.constant 0 : index
    %c0_13 = arith.constant 0 : index
    %9 = vector.load %arg5[%c0_12, %c0_13] : memref<4x8xbf16, #tpu.memory_space<vmem>>, vector<4x8xbf16>
    %c0_14 = arith.constant 0 : index
    %c0_15 = arith.constant 0 : index
    %10 = vector.load %arg8[%c0_14, %c0_15] : memref<8x128xbf16, #tpu.memory_space<vmem>>, vector<8x128xbf16>
    %cst = arith.constant dense<0.000000e+00> : vector<4x128xf32>
    %11 = tpu.matmul %9, %10, %cst {dimension_numbers = #tpu.dot_dimension_numbers<[1], [0], [0], [1], [0, 0, 1, 1], [], []>} : vector<4x8xbf16>, vector<8x128xbf16>, vector<4x128xf32> -> vector<4x128xf32>
    %c0_16 = arith.constant 0 : index
    %c0_17 = arith.constant 0 : index
    %12 = vector.load %arg6[%c0_16, %c0_17] : memref<4x1xf32, #tpu.memory_space<vmem>>, vector<4x1xf32>
    %13 = vector.broadcast %12 : vector<4x1xf32> to vector<4x128xf32>
    %14 = arith.addf %11, %13 : vector<4x128xf32>
    %cst_18 = arith.constant 0.000000e+00 : f32
    %15 = vector.broadcast %cst_18 : f32 to vector<4x128xf32>
    %16 = arith.subf %15, %14 : vector<4x128xf32>
    %17 = math.exp %16 : vector<4x128xf32>
    %cst_19 = arith.constant 1.000000e+00 : f32
    %18 = vector.broadcast %cst_19 : f32 to vector<4x128xf32>
    %19 = arith.addf %18, %17 : vector<4x128xf32>
    %20 = tpu.reciprocal %19 {approx = true} : vector<4x128xf32> -> vector<4x128xf32>
    %21 = arith.mulf %14, %20 : vector<4x128xf32>
    %c0_20 = arith.constant 0 : index
    %c0_21 = arith.constant 0 : index
    %c0_22 = arith.constant 0 : index
    %22 = vector.load %arg7[%c0_20, %c0_21, %c0_22] : memref<1x4x128xf32, #tpu.memory_space<vmem>>, vector<1x4x128xf32>
    %23 = vector.shape_cast %22 : vector<1x4x128xf32> to vector<4x128xf32>
    %24 = vector.shape_cast %21 : vector<4x128xf32> to vector<1x4x128xf32>
    tpu.vector_store %arg7[%c0_20, %c0_21, %c0_22], %24 {strides = array<i32>} : memref<1x4x128xf32, #tpu.memory_space<vmem>>, vector<1x4x128xf32>,
    return
  }
  func.func @transform_0(%arg0: i32, %arg1: i32) -> (i32, i32, i32) {
    %c0_i32 = arith.constant 0 : i32
    %c0_i32_0 = arith.constant 0 : i32
    return %arg0, %c0_i32, %arg1 : i32, i32, i32
  }
  func.func @transform_1(%arg0: i32, %arg1: i32) -> (i32, i32, i32) {
    %c0_i32 = arith.constant 0 : i32
    %c0_i32_0 = arith.constant 0 : i32
    return %arg0, %c0_i32, %arg1 : i32, i32, i32
  }
  func.func @transform_2(%arg0: i32, %arg1: i32) -> (i32, i32, i32) {
    %c0_i32 = arith.constant 0 : i32
    %c0_i32_0 = arith.constant 0 : i32
    return %arg0, %c0_i32, %arg1 : i32, i32, i32
  }
  func.func @transform_3(%arg0: i32, %arg1: i32) -> (i32, i32) {
    %c0_i32 = arith.constant 0 : i32
    %c0_i32_0 = arith.constant 0 : i32
    %c0_i32_1 = arith.constant 0 : i32
    return %c0_i32, %c0_i32_0 : i32, i32
  }
  func.func @transform_4(%arg0: i32, %arg1: i32) -> (i32, i32) {
    %c0_i32 = arith.constant 0 : i32
    %c0_i32_0 = arith.constant 0 : i32
    %c0_i32_1 = arith.constant 0 : i32
    return %c0_i32, %c0_i32_0 : i32, i32
  }
  func.func @transform_5(%arg0: i32, %arg1: i32) -> (i32, i32, i32) {
    %c0_i32 = arith.constant 0 : i32
    %c0_i32_0 = arith.constant 0 : i32
    return %arg0, %c0_i32, %arg1 : i32, i32, i32
  }
}

</mosaic_0001>

<llo_original>
// kernel: c2f_forward.6
$region0: #{c2f_forward.6}
  #allocation0 [shape = 'u32[]', space=smem, size = 0x4, offset = 0x4, fixed_abs, tag = 'smem constant byte address 0x4 - core index']
  #allocation1 [shape = 'u32[144,128]{1,0:T(1,128)}', space=vmem, size = 0x12000, scoped, tag = 'internal scratch']
  %s0 = inlined_call_operand.hbm [shape: f32[2,4,16,16], index: 0, kind: input, shape index: {}]
  %s1 = inlined_call_operand.vmem [shape: bf16[4,4], index: 1, kind: input, shape index: {}]
  %s2 = inlined_call_operand.vmem [shape: f32[4,1], index: 2, kind: input, shape index: {}]
  %s3 = inlined_call_operand.vmem [shape: bf16[2,4,256], index: 3, kind: output, shape index: {}]
  %s4 = sld [smem:[#allocation0]]
  $region49: #{c2f_forward.6} parent=0
    _
  %s6 = ssub.s32 1, %s4
  %s7 = scalar_select 0, %s6, %s4
  $region1: #{c2f_forward.6} parent=0
    #allocation2 [shape = 'u8[32768]{0}', space=vmem, size = 0x8000, scoped, tag = 'input window, operand 0']
    #allocation3 [shape = 's32[2]{0}', space=sflag, size = 0x8, scoped, tag = 'scoped memory for c2f_forward.6']
    %8 = vsyncpa [#allocation3], 0
    %s9 = scalar_lea.sflag [#allocation3], 1
    %10 = vsyncpa %s9, 0
    loop: start=0, step=1, limit=6
    $region2: #{c2f_forward.6} parent=1 // loop_pre_header
      _
    $region3: #{c2f_forward.6} parent=1 // loop_header
      %s12 = sphi 0, %s16
      %p13 = scmp.ge.s32.totalorder %s12, 6
      %s19 = sphi 0, %s31
      %s20 = sphi 0, %s27
      %s21 = sphi 0, %s19
      %s22 = sphi 0, %s20
      %s23 = sphi 0, %s21
      %s24 = sphi 0, %s22
      %s36 = sphi 0, %s38
      %s39 = sphi 0, %s36
      %s40 = sphi 0, %s39
      %s56 = sphi 0, %s40
      %s60 = sphi 0, %s60
      %s62 = sphi 0, %s60
      %s63 = sphi 0, %s62
      %s77 = sphi 0, %s63
      %s81 = sphi 0, %s81
      %s83 = sphi 0, %s81
      %s84 = sphi 0, %s83
      %s98 = sphi 0, %s84
      %s106 = sphi 0, %s108
      %s109 = sphi 0, %s106
      %s110 = sphi 0, %s109
      %s126 = sphi 0, %s110
    $region4: #{c2f_forward.6} parent=1 // loop_header_branch
      %15 = sbr.rel (%p13) target = $region8
    $region5: #{c2f_forward.6} parent=1 // loop_body
      %s17 = ssub.s32 %s12, 1
      %s18 = ssub.s32 %s12, 2
      %s25 = sadd.s32 1, %s20
      %p26 = scmp.ge.s32.totalorder %s25, 2
      %s27 = scalar_select %p26, 0, %s25
      %s28 = sadd.s32 1, %s19
      %s29 = scalar_select %p26, %s28, %s19
      %p30 = scmp.ge.s32.totalorder %s29, 2
      %s31 = scalar_select %p30, 0, %s29
      %s32 = ssub.s32 %s19, %s31
      %s33 = ssub.s32 %s20, %s27
      %s34 = sor.u32 %s32, %s33
      %p35 = scmp.eq.s32.totalorder %s34, 0
      %s37 = sadd.s32 %s36, 1
      %s38 = scalar_select %p35, %s36, %s37
      %p41 = pneg %p35
      %p42 = scmp.eq.s32.totalorder %s12, 3
      %p43 = por %p41, %p42
      %p44 = scmp.ne.s32.totalorder %s36, %s39
      %p45 = scmp.eq.s32.totalorder %s12, 0
      %p46 = por %p44, %p45
      %p47 = scmp.ne.s32.totalorder %s36, %s39
      %p48 = scmp.eq.s32.totalorder %s17, 3
      %p49 = por %p47, %p48
      %p50 = scmp.ne.s32.totalorder %s39, %s40
      %p51 = scmp.eq.s32.totalorder %s17, 0
      %p52 = por %p50, %p51
      %p53 = scmp.ne.s32.totalorder %s39, %s40
      %p54 = scmp.eq.s32.totalorder %s18, 3
      %p55 = por %p53, %p54
      %p57 = scmp.ne.s32.totalorder %s40, %s56
      %p58 = scmp.eq.s32.totalorder %s18, 0
      %p59 = por %p57, %p58
      %s61 = sadd.s32 %s60, 1
      %p64 = scmp.eq.s32.totalorder %s12, 3
      %p65 = scmp.ne.s32.totalorder %s60, %s62
      %p66 = scmp.eq.s32.totalorder %s12, 0
      %p67 = por %p65, %p66
      %p68 = scmp.ne.s32.totalorder %s60, %s62
      %p69 = scmp.eq.s32.totalorder %s17, 3
      %p70 = por %p68, %p69
      %p71 = scmp.ne.s32.totalorder %s62, %s63
      %p72 = scmp.eq.s32.totalorder %s17, 0
      %p73 = por %p71, %p72
      %p74 = scmp.ne.s32.totalorder %s62, %s63
      %p75 = scmp.eq.s32.totalorder %s18, 3
      %p76 = por %p74, %p75
      %p78 = scmp.ne.s32.totalorder %s63, %s77
      %p79 = scmp.eq.s32.totalorder %s18, 0
      %p80 = por %p78, %p79
      %s82 = sadd.s32 %s81, 1
      %p85 = scmp.eq.s32.totalorder %s12, 3
      %p86 = scmp.ne.s32.totalorder %s81, %s83
      %p87 = scmp.eq.s32.totalorder %s12, 0
      %p88 = por %p86, %p87
      %p89 = scmp.ne.s32.totalorder %s81, %s83
      %p90 = scmp.eq.s32.totalorder %s17, 3
      %p91 = por %p89, %p90
      %p92 = scmp.ne.s32.totalorder %s83, %s84
      %p93 = scmp.eq.s32.totalorder %s17, 0
      %p94 = por %p92, %p93
      %p95 = scmp.ne.s32.totalorder %s83, %s84
      %p96 = scmp.eq.s32.totalorder %s18, 3
      %p97 = por %p95, %p96
      %p99 = scmp.ne.s32.totalorder %s84, %s98
      %p100 = scmp.eq.s32.totalorder %s18, 0
      %p101 = por %p99, %p100
      %s102 = ssub.s32 %s19, %s31
      %s103 = ssub.s32 %s20, %s27
      %s104 = sor.u32 %s102, %s103
      %p105 = scmp.eq.s32.totalorder %s104, 0
      %s107 = sadd.s32 %s106, 1
      %s108 = scalar_select %p105, %s106, %s107
      %p111 = pneg %p105
      %p112 = scmp.eq.s32.totalorder %s12, 3
      %p113 = por %p111, %p112
      %p114 = scmp.ne.s32.totalorder %s106, %s109
      %p115 = scmp.eq.s32.totalorder %s12, 0
      %p116 = por %p114, %p115
      %p117 = scmp.ne.s32.totalorder %s106, %s109
      %p118 = scmp.eq.s32.totalorder %s17, 3
      %p119 = por %p117, %p118
      %p120 = scmp.ne.s32.totalorder %s109, %s110
      %p121 = scmp.eq.s32.totalorder %s17, 0
      %p122 = por %p120, %p121
      %p123 = scmp.ne.s32.totalorder %s109, %s110
      %p124 = scmp.eq.s32.totalorder %s18, 3
      %p125 = por %p123, %p124
      %p127 = scmp.ne.s32.totalorder %s110, %s126
      %p128 = scmp.eq.s32.totalorder %s18, 0
      %p129 = por %p127, %p128
      %p130 = scmp.le.s32.totalorder 1, %s12
      %p131 = scmp.lt.s32.totalorder %s12, 5
      %p132 = pnand %p130, %p131
      %p133 = pneg %p132
      // Predicated region
      $region9: #{c2f_forward.6} parent=5 // pred_check
        _
      $region10: #{c2f_forward.6} parent=5 // pred_check_branch
        %135 = sbr.rel (%p132) target = $region12
      $region11: #{c2f_forward.6} parent=5 // pred_region
        %s136 = ssub.s32 %s12, 1
        // Predicated region
        $region13: #{c2f_forward.6} parent=11 // pred_check
          %p137 = pneg %p73
        $region14: #{c2f_forward.6} parent=11 // pred_check_branch
          %139 = sbr.rel (%p137) target = $region16
        $region15: #{c2f_forward.6} parent=11 // pred_region
          _
        $region16: #{c2f_forward.6} parent=11 // pred_fallthru
          _
        // Predicated region
        $region17: #{c2f_forward.6} parent=11 // pred_check
          %p140 = pneg %p94
        $region18: #{c2f_forward.6} parent=11 // pred_check_branch
          %142 = sbr.rel (%p140) target = $region20
        $region19: #{c2f_forward.6} parent=11 // pred_region
          _
        $region20: #{c2f_forward.6} parent=11 // pred_fallthru
          _
      $region12: #{c2f_forward.6} parent=5 // pred_fallthru
        _
      %p143 = scmp.lt.s32.totalorder %s12, 4
      // Predicated region
      $region21: #{c2f_forward.6} parent=5 // pred_check
        %p144 = pneg %p143
      $region22: #{c2f_forward.6} parent=5 // pred_check_branch
        %146 = sbr.rel (%p144) target = $region24
      $region23: #{c2f_forward.6} parent=5 // pred_region
        // Predicated region
        $region25: #{c2f_forward.6} parent=23 // pred_check
          %p147 = pneg %p46
        $region26: #{c2f_forward.6} parent=23 // pred_check_branch
          %149 = sbr.rel (%p147) target = $region28
        $region27: #{c2f_forward.6} parent=23 // pred_region
          %s150 = sand.u32 %s36, 1
          %s151 = scalar_lea.sflag [#allocation3], %s150
          %s152 = sand.u32 %s36, 1
          %s153 = smul.addr %s152, 32
          %s154 = scalar_lea.vmem [#allocation2], %s153
          %s156 = ssub.s32 512, 512
          %157 = vsyncadd %s151, %s156
          %s158 = smul.addr %s19, 8
          %s159 = sadd.s32 %s20, %s158
          %s160 = smul.addr %s159, 128
          %s161 = scalar_lea.hbm %s0, %s160
          %s162 = sshll.u32 %s154, 4
          %s163 = int_to_ptr.vmem [resolvable:$true] %s162
          %168 = dma.hbm_to_vmem [thread:$0]  %s161, 512, %s163, %s151, 256, 128, 8
        $region28: #{c2f_forward.6} parent=23 // pred_fallthru
          _
      $region24: #{c2f_forward.6} parent=5 // pred_fallthru
        _
      %p169 = scmp.le.s32.totalorder 1, %s12
      %p170 = scmp.lt.s32.totalorder %s12, 5
      %p171 = pnand %p169, %p170
      %p172 = pneg %p171
      // Predicated region
      $region29: #{c2f_forward.6} parent=5 // pred_check
        _
      $region30: #{c2f_forward.6} parent=5 // pred_check_branch
        %174 = sbr.rel (%p171) target = $region32
      $region31: #{c2f_forward.6} parent=5 // pred_region
        %s175 = ssub.s32 %s12, 1
        %s176 = sand.u32 %s39, 1
        %s177 = scalar_lea.sflag [#allocation3], %s176
        %s178 = sand.u32 %s39, 1
        %s179 = smul.addr %s178, 32
        %s180 = scalar_lea.vmem [#allocation2], %s179
        // Predicated region
        $region33: #{c2f_forward.6} parent=31 // pred_check
          %p181 = pneg %p52
        $region34: #{c2f_forward.6} parent=31 // pred_check_branch
          %183 = sbr.rel (%p181) target = $region36
        $region35: #{c2f_forward.6} parent=31 // pred_region
          %184 = dma.done %s177, 512
        $region36: #{c2f_forward.6} parent=31 // pred_fallthru
          _
        %s185 = sand.u32 %s39, 1
        %s186 = scalar_lea.sflag [#allocation3], %s185
        %s187 = sand.u32 %s39, 1
        %s188 = smul.addr %s187, 32
        %s189 = scalar_lea.vmem [#allocation2], %s188
        %p190 = pneg %p52
        %p191 = pneg %p49
        %p192 = pneg %p73
        %p193 = pneg %p70
        %p194 = pneg %p94
        %p195 = pneg %p91
        %p196 = pneg %p122
        %p197 = pneg %p119
        %p198 = scmp.lt.s32.totalorder %s21, 1
        %s199 = scalar_select %p198, %s21, 1
        %p200 = scmp.lt.s32.totalorder %s22, 1
        %s201 = scalar_select %p200, %s22, 1
        %s202 = smul.addr %s199, 2
        %s203 = sadd.s32 %s201, %s202
        %s204 = smul.addr %s203, 2
        %s205 = scalar_lea.vmem %s3, %s204
        %p206 = scmp.lt.s32.totalorder %s21, 1
        %s207 = scalar_select %p206, %s21, 1
        %p208 = scmp.lt.s32.totalorder %s22, 1
        %s209 = scalar_select %p208, %s22, 1
        %s210 = smul.addr %s207, 2
        %s211 = sadd.s32 %s209, %s210
        %s212 = smul.addr %s211, 2
        %s213 = scalar_lea.vmem %s3, %s212
        %v215 = vld [vmem:[%s180] sm:$0xff]
        %v216 = vld [vmem:[%s180 + $0x8] sm:$0xff]
        %v217 = vld [vmem:[%s180 + $0x10] sm:$0xff]
        %v218 = vld [vmem:[%s180 + $0x18] sm:$0xff]
        %v219 = vpack.c.bf16 %v215, %v215
        %v221 = vunpack.c.l.s4 1983009808
        %v222 = vunpack.c.0.s8 %v221
        %v223 = vlaneseq
        %v224 = vshrl.u32 %v223, 7
        %v225 = vsub.s32 %v222, %v224
        %v226 = vrot.slane %v219, %v225
        %v227 = vpack.c.bf16 %v217, %v217
        %v229 = vunpack.c.l.s4 1983009808
        %v230 = vunpack.c.0.s8 %v229
        %v231 = vlaneseq
        %v232 = vshrl.u32 %v231, 7
        %v233 = vsub.s32 %v230, %v232
        %v234 = vrot.slane %v227, %v233
        %v235 = vcombine.low %v226, %v234
        %v236 = vcombine.high %v226, %v234
        %v238 = vunpack.c.l.s4 1934713408
        %v239 = vunpack.c.0.s8 %v238
        %v240 = vlaneseq
        %v241 = vshrl.u32 %v240, 7
        %v242 = vsub.s32 %v239, %v241
        %v243 = vrot.slane %v235, %v242
        %v245 = vunpack.c.l.s4 1934713408
        %v246 = vunpack.c.0.s8 %v245
        %v247 = vlaneseq
        %v248 = vshrl.u32 %v247, 7
        %v249 = vsub.s32 %v246, %v248
        %v250 = vrot.slane %v236, %v249
        %v251 = vcombine.high %v243, 0
        %v252 = vcombine.high %v250, 0
        %v253 = vpack.c.bf16 %v216, %v216
        %v255 = vunpack.c.l.s4 1983009808
        %v256 = vunpack.c.0.s8 %v255
        %v257 = vlaneseq
        %v258 = vshrl.u32 %v257, 7
        %v259 = vsub.s32 %v256, %v258
        %v260 = vrot.slane %v253, %v259
        %v261 = vpack.c.bf16 %v218, %v218
        %v263 = vunpack.c.l.s4 1983009808
        %v264 = vunpack.c.0.s8 %v263
        %v265 = vlaneseq
        %v266 = vshrl.u32 %v265, 7
        %v267 = vsub.s32 %v264, %v266
        %v268 = vrot.slane %v261, %v267
        %v269 = vcombine.low %v260, %v268
        %v270 = vcombine.high %v260, %v268
        %v272 = vunpack.c.l.s4 1934713408
        %v273 = vunpack.c.0.s8 %v272
        %v274 = vlaneseq
        %v275 = vshrl.u32 %v274, 7
        %v276 = vsub.s32 %v273, %v275
        %v277 = vrot.slane %v269, %v276
        %v279 = vunpack.c.l.s4 1934713408
        %v280 = vunpack.c.0.s8 %v279
        %v281 = vlaneseq
        %v282 = vshrl.u32 %v281, 7
        %v283 = vsub.s32 %v280, %v282
        %v284 = vrot.slane %v270, %v283
        %v285 = vcombine.high %v277, 0
        %v286 = vcombine.high %v284, 0
        %v289 = vpack.i.b16 %v277, %v243
        %v290 = vshrl.u32 %v243, 16
        %v291 = vshrl.u32 %v277, 16
        %v292 = vpack.i.b16 %v291, %v290
        %v295 = vpack.i.b16 %v285, %v251
        %v296 = vshrl.u32 %v251, 16
        %v297 = vshrl.u32 %v285, 16
        %v298 = vpack.i.b16 %v297, %v296
        %v301 = vpack.i.b16 %v284, %v250
        %v302 = vshrl.u32 %v250, 16
        %v303 = vshrl.u32 %v284, 16
        %v304 = vpack.i.b16 %v303, %v302
        %v307 = vpack.i.b16 %v286, %v252
        %v308 = vshrl.u32 %v252, 16
        %v309 = vshrl.u32 %v286, 16
        %v310 = vpack.i.b16 %v309, %v308
        %311 = vrot.lane.b32.xlu0 %v292, 16
        %v312 = vpop.permute.xlu0 %311
        %313 = vrot.lane.b32.xlu0 %v295, 32
        %v314 = vpop.permute.xlu0 %313
        %315 = vrot.lane.b32.xlu0 %v298, 48
        %v316 = vpop.permute.xlu0 %315
        %317 = vrot.lane.b32.xlu0 %v301, 64
        %v318 = vpop.permute.xlu0 %317
        %319 = vrot.lane.b32.xlu0 %v304, 80
        %v320 = vpop.permute.xlu0 %319
        %321 = vrot.lane.b32.xlu0 %v307, 96
        %v322 = vpop.permute.xlu0 %321
        %323 = vrot.lane.b32.xlu0 %v310, 112
        %v324 = vpop.permute.xlu0 %323
        %vm325 = vcmask 130048
        %v328 = vsel %vm325, %v289, %v312
        %vm329 = vcmask 261120
        %v331 = vsel %vm329, %v328, %v314
        %vm332 = vcmask 392192
        %v334 = vsel %vm332, %v331, %v316
        %vm335 = vcmask 523264
        %v337 = vsel %vm335, %v334, %v318
        %vm338 = vcmask 654336
        %v340 = vsel %vm338, %v337, %v320
        %vm341 = vcmask 785408
        %v343 = vsel %vm341, %v340, %v322
        %vm344 = vcmask 916480
        %v346 = vsel %vm344, %v343, %v324
        %v347 = vld [vmem:[%s1] sm:$0x3]
        %v348 = vld [vmem:[%s2] sm:$0xf]
        %350 = vset.pattern.permute.xlu0 0
        %351 = vperm.xlu0 %350, %v348
        %v352 = vpop.permute.xlu0 %351
        %vm354 = vcmask 31744
        %v356 = vsel %vm354, %v347, 0
        %vm358 = vcmask 1041408
        %v359 = vsel %vm358, %v346, 0
        %361 = vmatprep.subr.bf16.mxu0 0
        %362 = vmatpush1.bf16.msra.mxu0 0
        %363 = vmatprep.subr.bf16.mxu0 0
        %364 = vmatpush1.bf16.msra.mxu0 0
        %365 = vmatprep.subr.bf16.mxu0 0
        %366 = vmatpush1.bf16.msra.mxu0 0
        %367 = vmatprep.subr.bf16.mxu0 0
        %368 = vmatpush1.bf16.msra.mxu0 0
        %369 = vmatprep.subr.bf16.mxu0 0
        %370 = vmatpush1.bf16.msra.mxu0 0
        %371 = vmatprep.subr.bf16.mxu0 0
        %372 = vmatpush1.bf16.msra.mxu0 0
        %373 = vmatprep.subr.bf16.mxu0 0
        %374 = vmatpush1.bf16.msra.mxu0 0
        %375 = vmatprep.subr.bf16.mxu0 0
        %376 = vmatpush1.bf16.msra.mxu0 %v359
        %377 = vmatprep.subr.bf16.mxu0 0
        %378 = vmatpush2.bf16.msra.mxu0 0
        %379 = vmatprep.subr.bf16.mxu0 0
        %380 = vmatpush2.bf16.msra.mxu0 0
        %381 = vmatprep.subr.bf16.mxu0 0
        %382 = vmatpush2.bf16.msra.mxu0 0
        %383 = vmatprep.subr.bf16.mxu0 0
        %384 = vmatpush2.bf16.msra.mxu0 0
        %385 = vmatprep.subr.bf16.mxu0 0
        %386 = vmatpush2.bf16.msra.mxu0 0
        %387 = vmatprep.subr.bf16.mxu0 0
        %388 = vmatpush2.bf16.msra.mxu0 0
        %389 = vmatprep.subr.bf16.mxu0 0
        %390 = vmatpush2.bf16.msra.mxu0 0
        %391 = vmatprep.subr.bf16.mxu0 0
        %392 = vmatpush2.bf16.msra.mxu0 0
        %393 = vmatprep.mubr.bf16.mxu0 0
        %394 = vmatmul.mubr.bf16.gmra.mxu0 %v356
        %v395 = vpop.f32.mrf.mxu0
        %v396 = vadd.f32 %v352, %v395
        %v397 = vpop.f32.mrf.mxu0
        %v398 = vpop.f32.mrf.mxu0
        %v399 = vpop.f32.mrf.mxu0
        %400 = vdwg.mxu0
        %v401 = vsub.f32 0.0, %v396
        %v402 = vmul.f32 %v401, 1.442695
        %v403 = vpow.pop %v402
        %v404 = vadd.f32 %v403, 1.0
        %v405 = vrcp.pop %v404
        %v406 = vmul.f32 %v396, %v405
        %v407 = vpack.c.bf16 %v406, %v406
        %408 = vst [vmem:[%s213] sm:$0x3] %v407
        %p409 = scmp.lt.s32.totalorder %s21, 1
        %s410 = scalar_select %p409, %s21, 1
        %p411 = scmp.lt.s32.totalorder %s22, 1
        %s412 = scalar_select %p411, %s22, 1
        %s413 = smul.addr %s410, 2
        %s414 = sadd.s32 %s412, %s413
        %s415 = smul.addr %s414, 2
        %s416 = scalar_lea.vmem %s3, %s415
        // Predicated region
        $region37: #{c2f_forward.6} parent=31 // pred_check
          %p417 = pneg %p119
        $region38: #{c2f_forward.6} parent=31 // pred_check_branch
          %419 = sbr.rel (%p417) target = $region40
        $region39: #{c2f_forward.6} parent=31 // pred_region
          _
        $region40: #{c2f_forward.6} parent=31 // pred_fallthru
          _
      $region32: #{c2f_forward.6} parent=5 // pred_fallthru
        _
      %p420 = scmp.le.s32.totalorder 2, %s12
      // Predicated region
      $region41: #{c2f_forward.6} parent=5 // pred_check
        %p421 = pneg %p420
      $region42: #{c2f_forward.6} parent=5 // pred_check_branch
        %423 = sbr.rel (%p421) target = $region44
      $region43: #{c2f_forward.6} parent=5 // pred_region
        %s424 = ssub.s32 %s12, 2
        // Predicated region
        $region45: #{c2f_forward.6} parent=43 // pred_check
          %p425 = pneg %p125
        $region46: #{c2f_forward.6} parent=43 // pred_check_branch
          %427 = sbr.rel (%p425) target = $region48
        $region47: #{c2f_forward.6} parent=43 // pred_region
          %p428 = scmp.lt.s32.totalorder %s23, 1
          %s429 = scalar_select %p428, %s23, 1
          %p430 = scmp.lt.s32.totalorder %s24, 1
          %s431 = scalar_select %p430, %s24, 1
          %s432 = smul.addr %s429, 2
          %s433 = sadd.s32 %s431, %s432
          %s434 = smul.addr %s433, 2
          %s435 = scalar_lea.vmem %s3, %s434
        $region48: #{c2f_forward.6} parent=43 // pred_fallthru
          _
      $region44: #{c2f_forward.6} parent=5 // pred_fallthru
        _
    $region6: #{c2f_forward.6} parent=1 // loop_footer
      %s16 = sadd.s32 1, %s12
    $region7: #{c2f_forward.6} parent=1 // loop_footer_branch
      %11 = sbr.rel target = $region3
    $region8: #{c2f_forward.6} parent=1 // loop_exit
      _
    %436 = vsyncpa [#allocation3], 1
    %s437 = scalar_lea.sflag [#allocation3], 1
    %438 = vsyncpa %s437, 1

// kernel: c2f_forward.7
$region0: #{c2f_forward.7}
  #allocation0 [shape = 'u32[]', space=smem, size = 0x4, offset = 0x4, fixed_abs, tag = 'smem constant byte address 0x4 - core index']
  #allocation1 [shape = 'u32[144,128]{1,0:T(1,128)}', space=vmem, size = 0x12000, scoped, tag = 'internal scratch']
  #allocation2 [shape = 'bf16[2,10,18]{2,1,0:T(8,128)(2,1)}', space=vmem, size = 0x2000, scoped, tag = 'scratch operand']
  #allocation3 [shape = 'bf16[9,2,8,16]{3,2,1,0:T(8,128)(2,1)}', space=vmem, size = 0x9000, scoped, tag = 'scratch operand']
  %s0 = inlined_call_operand.vmem [shape: bf16[2,4,16,16], index: 0, kind: input, shape index: {}, may-alias: {0,1,2}]
  %s1 = inlined_call_operand.vmem [shape: bf16[2,4,16,16], index: 1, kind: input, shape index: {}, may-alias: {0,1,2}]
  %s2 = inlined_call_operand.vmem [shape: bf16[2,4,16,16], index: 2, kind: input, shape index: {}, may-alias: {0,1,2}]
  %s3 = inlined_call_operand.vmem [shape: bf16[2,18], index: 3, kind: input, shape index: {}]
  %s4 = inlined_call_operand.vmem [shape: f32[2,1], index: 4, kind: input, shape index: {}]
  %s5 = inlined_call_operand.vmem [shape: bf16[2,2,256], index: 5, kind: output, shape index: {}]
  %s6 = sld [smem:[#allocation0]]
  $region184: #{c2f_forward.7} parent=0
    _
  %s8 = ssub.s32 1, %s6
  %s9 = scalar_select 0, %s8, %s6
  $region1: #{c2f_forward.7} parent=0
    #allocation4 [shape = 'u8[16384]{0}', space=vmem, size = 0x4000, scoped, tag = 'input window, operand 0']
    #allocation5 [shape = 'u8[16384]{0}', space=vmem, size = 0x4000, scoped, tag = 'input window, operand 1']
    #allocation6 [shape = 'u8[16384]{0}', space=vmem, size = 0x4000, scoped, tag = 'input window, operand 2']
    loop: start=0, step=1, limit=6
    $region2: #{c2f_forward.7} parent=1 // loop_pre_header
      _
    $region3: #{c2f_forward.7} parent=1 // loop_header
      %s11 = sphi 0, %s15
      %p12 = scmp.ge.s32.totalorder %s11, 6
      %s18 = sphi 0, %s30
      %s19 = sphi 0, %s26
      %s20 = sphi 0, %s18
      %s21 = sphi 0, %s19
      %s22 = sphi 0, %s20
      %s23 = sphi 0, %s21
      %s35 = sphi 0, %s37
      %s38 = sphi 0, %s35
      %s39 = sphi 0, %s38
      %s55 = sphi 0, %s39
      %s69 = sphi 0, %s71
      %s72 = sphi 0, %s69
      %s73 = sphi 0, %s72
      %s89 = sphi 0, %s73
      %s103 = sphi 0, %s105
      %s106 = sphi 0, %s103
      %s107 = sphi 0, %s106
      %s123 = sphi 0, %s107
      %s127 = sphi 0, %s127
      %s129 = sphi 0, %s127
      %s130 = sphi 0, %s129
      %s144 = sphi 0, %s130
      %s148 = sphi 0, %s148
      %s150 = sphi 0, %s148
      %s151 = sphi 0, %s150
      %s165 = sphi 0, %s151
      %s173 = sphi 0, %s175
      %s176 = sphi 0, %s173
      %s177 = sphi 0, %s176
      %s193 = sphi 0, %s177
    $region4: #{c2f_forward.7} parent=1 // loop_header_branch
      %14 = sbr.rel (%p12) target = $region8
    $region5: #{c2f_forward.7} parent=1 // loop_body
      %s16 = ssub.s32 %s11, 1
      %s17 = ssub.s32 %s11, 2
      %s24 = sadd.s32 1, %s19
      %p25 = scmp.ge.s32.totalorder %s24, 2
      %s26 = scalar_select %p25, 0, %s24
      %s27 = sadd.s32 1, %s18
      %s28 = scalar_select %p25, %s27, %s18
      %p29 = scmp.ge.s32.totalorder %s28, 2
      %s30 = scalar_select %p29, 0, %s28
      %s31 = ssub.s32 %s18, %s30
      %s32 = ssub.s32 %s19, %s26
      %s33 = sor.u32 %s31, %s32
      %p34 = scmp.eq.s32.totalorder %s33, 0
      %s36 = sadd.s32 %s35, 1
      %s37 = scalar_select %p34, %s35, %s36
      %p40 = pneg %p34
      %p41 = scmp.eq.s32.totalorder %s11, 3
      %p42 = por %p40, %p41
      %p43 = scmp.ne.s32.totalorder %s35, %s38
      %p44 = scmp.eq.s32.totalorder %s11, 0
      %p45 = por %p43, %p44
      %p46 = scmp.ne.s32.totalorder %s35, %s38
      %p47 = scmp.eq.s32.totalorder %s16, 3
      %p48 = por %p46, %p47
      %p49 = scmp.ne.s32.totalorder %s38, %s39
      %p50 = scmp.eq.s32.totalorder %s16, 0
      %p51 = por %p49, %p50
      %p52 = scmp.ne.s32.totalorder %s38, %s39
      %p53 = scmp.eq.s32.totalorder %s17, 3
      %p54 = por %p52, %p53
      %p56 = scmp.ne.s32.totalorder %s39, %s55
      %p57 = scmp.eq.s32.totalorder %s17, 0
      %p58 = por %p56, %p57
      %s59 = ssub.s32 %s19, 1
      %p60 = scmp.gt.s32.totalorder %s59, 0
      %s61 = scalar_select %p60, %s59, 0
      %s62 = ssub.s32 %s26, 1
      %p63 = scmp.gt.s32.totalorder %s62, 0
      %s64 = scalar_select %p63, %s62, 0
      %s65 = ssub.s32 %s18, %s30
      %s66 = ssub.s32 %s61, %s64
      %s67 = sor.u32 %s65, %s66
      %p68 = scmp.eq.s32.totalorder %s67, 0
      %s70 = sadd.s32 %s69, 1
      %s71 = scalar_select %p68, %s69, %s70
      %p74 = pneg %p68
      %p75 = scmp.eq.s32.totalorder %s11, 3
      %p76 = por %p74, %p75
      %p77 = scmp.ne.s32.totalorder %s69, %s72
      %p78 = scmp.eq.s32.totalorder %s11, 0
      %p79 = por %p77, %p78
      %p80 = scmp.ne.s32.totalorder %s69, %s72
      %p81 = scmp.eq.s32.totalorder %s16, 3
      %p82 = por %p80, %p81
      %p83 = scmp.ne.s32.totalorder %s72, %s73
      %p84 = scmp.eq.s32.totalorder %s16, 0
      %p85 = por %p83, %p84
      %p86 = scmp.ne.s32.totalorder %s72, %s73
      %p87 = scmp.eq.s32.totalorder %s17, 3
      %p88 = por %p86, %p87
      %p90 = scmp.ne.s32.totalorder %s73, %s89
      %p91 = scmp.eq.s32.totalorder %s17, 0
      %p92 = por %p90, %p91
      %s93 = sadd.s32 %s19, 1
      %p94 = scmp.lt.s32.totalorder %s93, 1
      %s95 = scalar_select %p94, %s93, 1
      %s96 = sadd.s32 %s26, 1
      %p97 = scmp.lt.s32.totalorder %s96, 1
      %s98 = scalar_select %p97, %s96, 1
      %s99 = ssub.s32 %s18, %s30
      %s100 = ssub.s32 %s95, %s98
      %s101 = sor.u32 %s99, %s100
      %p102 = scmp.eq.s32.totalorder %s101, 0
      %s104 = sadd.s32 %s103, 1
      %s105 = scalar_select %p102, %s103, %s104
      %p108 = pneg %p102
      %p109 = scmp.eq.s32.totalorder %s11, 3
      %p110 = por %p108, %p109
      %p111 = scmp.ne.s32.totalorder %s103, %s106
      %p112 = scmp.eq.s32.totalorder %s11, 0
      %p113 = por %p111, %p112
      %p114 = scmp.ne.s32.totalorder %s103, %s106
      %p115 = scmp.eq.s32.totalorder %s16, 3
      %p116 = por %p114, %p115
      %p117 = scmp.ne.s32.totalorder %s106, %s107
      %p118 = scmp.eq.s32.totalorder %s16, 0
      %p119 = por %p117, %p118
      %p120 = scmp.ne.s32.totalorder %s106, %s107
      %p121 = scmp.eq.s32.totalorder %s17, 3
      %p122 = por %p120, %p121
      %p124 = scmp.ne.s32.totalorder %s107, %s123
      %p125 = scmp.eq.s32.totalorder %s17, 0
      %p126 = por %p124, %p125
      %s128 = sadd.s32 %s127, 1
      %p131 = scmp.eq.s32.totalorder %s11, 3
      %p132 = scmp.ne.s32.totalorder %s127, %s129
      %p133 = scmp.eq.s32.totalorder %s11, 0
      %p134 = por %p132, %p133
      %p135 = scmp.ne.s32.totalorder %s127, %s129
      %p136 = scmp.eq.s32.totalorder %s16, 3
      %p137 = por %p135, %p136
      %p138 = scmp.ne.s32.totalorder %s129, %s130
      %p139 = scmp.eq.s32.totalorder %s16, 0
      %p140 = por %p138, %p139
      %p141 = scmp.ne.s32.totalorder %s129, %s130
      %p142 = scmp.eq.s32.totalorder %s17, 3
      %p143 = por %p141, %p142
      %p145 = scmp.ne.s32.totalorder %s130, %s144
      %p146 = scmp.eq.s32.totalorder %s17, 0
      %p147 = por %p145, %p146
      %s149 = sadd.s32 %s148, 1
      %p152 = scmp.eq.s32.totalorder %s11, 3
      %p153 = scmp.ne.s32.totalorder %s148, %s150
      %p154 = scmp.eq.s32.totalorder %s11, 0
      %p155 = por %p153, %p154
      %p156 = scmp.ne.s32.totalorder %s148, %s150
      %p157 = scmp.eq.s32.totalorder %s16, 3
      %p158 = por %p156, %p157
      %p159 = scmp.ne.s32.totalorder %s150, %s151
      %p160 = scmp.eq.s32.totalorder %s16, 0
      %p161 = por %p159, %p160
      %p162 = scmp.ne.s32.totalorder %s150, %s151
      %p163 = scmp.eq.s32.totalorder %s17, 3
      %p164 = por %p162, %p163
      %p166 = scmp.ne.s32.totalorder %s151, %s165
      %p167 = scmp.eq.s32.totalorder %s17, 0
      %p168 = por %p166, %p167
      %s169 = ssub.s32 %s18, %s30
      %s170 = ssub.s32 %s19, %s26
      %s171 = sor.u32 %s169, %s170
      %p172 = scmp.eq.s32.totalorder %s171, 0
      %s174 = sadd.s32 %s173, 1
      %s175 = scalar_select %p172, %s173, %s174
      %p178 = pneg %p172
      %p179 = scmp.eq.s32.totalorder %s11, 3
      %p180 = por %p178, %p179
      %p181 = scmp.ne.s32.totalorder %s173, %s176
      %p182 = scmp.eq.s32.totalorder %s11, 0
      %p183 = por %p181, %p182
      %p184 = scmp.ne.s32.totalorder %s173, %s176
      %p185 = scmp.eq.s32.totalorder %s16, 3
      %p186 = por %p184, %p185
      %p187 = scmp.ne.s32.totalorder %s176, %s177
      %p188 = scmp.eq.s32.totalorder %s16, 0
      %p189 = por %p187, %p188
      %p190 = scmp.ne.s32.totalorder %s176, %s177
      %p191 = scmp.eq.s32.totalorder %s17, 3
      %p192 = por %p190, %p191
      %p194 = scmp.ne.s32.totalorder %s177, %s193
      %p195 = scmp.eq.s32.totalorder %s17, 0
      %p196 = por %p194, %p195
      %p197 = scmp.le.s32.totalorder 1, %s11
      %p198 = scmp.lt.s32.totalorder %s11, 5
      %p199 = pnand %p197, %p198
      %p200 = pneg %p199
      // Predicated region
      $region9: #{c2f_forward.7} parent=5 // pred_check
        _
      $region10: #{c2f_forward.7} parent=5 // pred_check_branch
        %202 = sbr.rel (%p199) target = $region12
      $region11: #{c2f_forward.7} parent=5 // pred_region
        %s203 = ssub.s32 %s11, 1
        // Predicated region
        $region13: #{c2f_forward.7} parent=11 // pred_check
          %p204 = pneg %p140
        $region14: #{c2f_forward.7} parent=11 // pred_check_branch
          %206 = sbr.rel (%p204) target = $region16
        $region15: #{c2f_forward.7} parent=11 // pred_region
          _
        $region16: #{c2f_forward.7} parent=11 // pred_fallthru
          _
        // Predicated region
        $region17: #{c2f_forward.7} parent=11 // pred_check
          %p207 = pneg %p161
        $region18: #{c2f_forward.7} parent=11 // pred_check_branch
          %209 = sbr.rel (%p207) target = $region20
        $region19: #{c2f_forward.7} parent=11 // pred_region
          _
        $region20: #{c2f_forward.7} parent=11 // pred_fallthru
          _
      $region12: #{c2f_forward.7} parent=5 // pred_fallthru
        _
      %p210 = scmp.lt.s32.totalorder %s11, 4
      // Predicated region
      $region21: #{c2f_forward.7} parent=5 // pred_check
        %p211 = pneg %p210
      $region22: #{c2f_forward.7} parent=5 // pred_check_branch
        %213 = sbr.rel (%p211) target = $region24
      $region23: #{c2f_forward.7} parent=5 // pred_region
        // Predicated region
        $region25: #{c2f_forward.7} parent=23 // pred_check
          %p214 = pneg %p45
        $region26: #{c2f_forward.7} parent=23 // pred_check_branch
          %216 = sbr.rel (%p214) target = $region28
        $region27: #{c2f_forward.7} parent=23 // pred_region
          %s217 = sand.u32 %s35, 1
          %s218 = sand.u32 %s35, 1
          %s219 = smul.addr %s218, 16
          %s220 = scalar_lea.vmem [#allocation4], %s219
          %s221 = smul.addr %s18, 8
          %s222 = sadd.s32 %s19, %s221
          %s223 = smul.addr %s222, 4
          %s224 = scalar_lea.vmem %s0, %s223
          // Predicated region
          $region29: #{c2f_forward.7} parent=27 // pred_check
            _
          $region30: #{c2f_forward.7} parent=27 // pred_check_branch
            %226 = sbr.rel (0) target = $region32
          $region31: #{c2f_forward.7} parent=27 // pred_region
            // Predicated region
            $region33: #{c2f_forward.7} parent=31 // pred_check
              _
            $region34: #{c2f_forward.7} parent=31 // pred_check_branch
              %228 = sbr.rel target = $region36
            $region35: #{c2f_forward.7} parent=31 // pred_region
              // Predicated region
              $region48: #{c2f_forward.7} parent=35 // pred_check
                _
              $region49: #{c2f_forward.7} parent=35 // pred_check_branch
                %250 = sbr.rel (0) target = $region51
              $region50: #{c2f_forward.7} parent=35 // pred_region
                loop: start=0, step=1, limit=1
                $region52: #{c2f_forward.7} parent=50 // loop_pre_header
                  _
                $region53: #{c2f_forward.7} parent=50 // loop_header
                  %s252 = sphi 0, %s256
                  %p253 = scmp.ge.s32.totalorder %s252, 1
                  %s257 = sphi %s224, %s224
                  %s258 = sphi %s220, %s220
                $region54: #{c2f_forward.7} parent=50 // loop_header_branch
                  %255 = sbr.rel (%p253) target = $region58
                $region55: #{c2f_forward.7} parent=50 // loop_body
                  _
                $region56: #{c2f_forward.7} parent=50 // loop_footer
                  %s256 = sadd.s32 1, %s252
                $region57: #{c2f_forward.7} parent=50 // loop_footer_branch
                  %251 = sbr.rel target = $region53
                $region58: #{c2f_forward.7} parent=50 // loop_exit
                  _
                %s260 = ssub.s32 16, 1
                loop: start=0, step=1, limit=1
                $region59: #{c2f_forward.7} parent=50 // loop_pre_header
                  _
                $region60: #{c2f_forward.7} parent=50 // loop_header
                  %s262 = sphi 0, %s266
                  %p263 = scmp.ge.s32.totalorder %s262, 1
                  %s267 = sphi %s224, %s224
                  %s268 = sphi %s220, %s220
                $region61: #{c2f_forward.7} parent=50 // loop_header_branch
                  %265 = sbr.rel (%p263) target = $region65
                $region62: #{c2f_forward.7} parent=50 // loop_body
                  %v269 = vld [vmem:[%s267] sm:%s260]
                  %270 = vst [vmem:[%s268] sm:%s260] %v269
                  %v271 = vld [vmem:[%s267 + $0x8] sm:%s260]
                  %272 = vst [vmem:[%s268 + $0x4] sm:%s260] %v271
                  %v273 = vld [vmem:[%s267 + $0x10] sm:%s260]
                  %274 = vst [vmem:[%s268 + $0x8] sm:%s260] %v273
                  %v275 = vld [vmem:[%s267 + $0x18] sm:%s260]
                  %276 = vst [vmem:[%s268 + $0xc] sm:%s260] %v275
                $region63: #{c2f_forward.7} parent=50 // loop_footer
                  %s266 = sadd.s32 1, %s262
                $region64: #{c2f_forward.7} parent=50 // loop_footer_branch
                  %261 = sbr.rel target = $region60
                $region65: #{c2f_forward.7} parent=50 // loop_exit
                  _
              $region51: #{c2f_forward.7} parent=35 // pred_fallthru
                _
            $region36: #{c2f_forward.7} parent=31 // pred_fallthru
              _
            // Predicated region
            $region37: #{c2f_forward.7} parent=31 // pred_check
              _
            $region38: #{c2f_forward.7} parent=31 // pred_check_branch
              %230 = sbr.rel (0) target = $region40
            $region39: #{c2f_forward.7} parent=31 // pred_region
              %s232 = ssub.s32 16, 1
              loop: start=0, step=1, limit=1
              $region41: #{c2f_forward.7} parent=39 // loop_pre_header
                _
              $region42: #{c2f_forward.7} parent=39 // loop_header
                %s234 = sphi 0, %s238
                %p235 = scmp.ge.s32.totalorder %s234, 1
                %s239 = sphi %s224, %s224
                %s240 = sphi %s220, %s220
              $region43: #{c2f_forward.7} parent=39 // loop_header_branch
                %237 = sbr.rel (%p235) target = $region47
              $region44: #{c2f_forward.7} parent=39 // loop_body
                %v241 = vld [vmem:[%s239] sm:%s232]
                %242 = vst [vmem:[%s240] sm:%s232] %v241
                %v243 = vld [vmem:[%s239 + $0x8] sm:%s232]
                %244 = vst [vmem:[%s240 + $0x4] sm:%s232] %v243
                %v245 = vld [vmem:[%s239 + $0x10] sm:%s232]
                %246 = vst [vmem:[%s240 + $0x8] sm:%s232] %v245
                %v247 = vld [vmem:[%s239 + $0x18] sm:%s232]
                %248 = vst [vmem:[%s240 + $0xc] sm:%s232] %v247
              $region45: #{c2f_forward.7} parent=39 // loop_footer
                %s238 = sadd.s32 1, %s234
              $region46: #{c2f_forward.7} parent=39 // loop_footer_branch
                %233 = sbr.rel target = $region42
              $region47: #{c2f_forward.7} parent=39 // loop_exit
                _
            $region40: #{c2f_forward.7} parent=31 // pred_fallthru
              _
          $region32: #{c2f_forward.7} parent=27 // pred_fallthru
            _
          %277 = vnop
        $region28: #{c2f_forward.7} parent=23 // pred_fallthru
          _
        // Predicated region
        $region66: #{c2f_forward.7} parent=23 // pred_check
          %p278 = pneg %p79
        $region67: #{c2f_forward.7} parent=23 // pred_check_branch
          %280 = sbr.rel (%p278) target = $region69
        $region68: #{c2f_forward.7} parent=23 // pred_region
          %s281 = sand.u32 %s69, 1
          %s282 = sand.u32 %s69, 1
          %s283 = smul.addr %s282, 16
          %s284 = scalar_lea.vmem [#allocation5], %s283
          %s285 = ssub.s32 %s19, 1
          %p286 = scmp.gt.s32.totalorder %s285, 0
          %s287 = scalar_select %p286, %s285, 0
          %s288 = smul.addr %s18, 8
          %s289 = sadd.s32 %s287, %s288
          %s290 = smul.addr %s289, 4
          %s291 = scalar_lea.vmem %s1, %s290
          // Predicated region
          $region70: #{c2f_forward.7} parent=68 // pred_check
            _
          $region71: #{c2f_forward.7} parent=68 // pred_check_branch
            %293 = sbr.rel (0) target = $region73
          $region72: #{c2f_forward.7} parent=68 // pred_region
            // Predicated region
            $region74: #{c2f_forward.7} parent=72 // pred_check
              _
            $region75: #{c2f_forward.7} parent=72 // pred_check_branch
              %295 = sbr.rel target = $region77
            $region76: #{c2f_forward.7} parent=72 // pred_region
              // Predicated region
              $region89: #{c2f_forward.7} parent=76 // pred_check
                _
              $region90: #{c2f_forward.7} parent=76 // pred_check_branch
                %317 = sbr.rel (0) target = $region92
              $region91: #{c2f_forward.7} parent=76 // pred_region
                loop: start=0, step=1, limit=1
                $region93: #{c2f_forward.7} parent=91 // loop_pre_header
                  _
                $region94: #{c2f_forward.7} parent=91 // loop_header
                  %s319 = sphi 0, %s323
                  %p320 = scmp.ge.s32.totalorder %s319, 1
                  %s324 = sphi %s291, %s291
                  %s325 = sphi %s284, %s284
                $region95: #{c2f_forward.7} parent=91 // loop_header_branch
                  %322 = sbr.rel (%p320) target = $region99
                $region96: #{c2f_forward.7} parent=91 // loop_body
                  _
                $region97: #{c2f_forward.7} parent=91 // loop_footer
                  %s323 = sadd.s32 1, %s319
                $region98: #{c2f_forward.7} parent=91 // loop_footer_branch
                  %318 = sbr.rel target = $region94
                $region99: #{c2f_forward.7} parent=91 // loop_exit
                  _
                %s327 = ssub.s32 16, 1
                loop: start=0, step=1, limit=1
                $region100: #{c2f_forward.7} parent=91 // loop_pre_header
                  _
                $region101: #{c2f_forward.7} parent=91 // loop_header
                  %s329 = sphi 0, %s333
                  %p330 = scmp.ge.s32.totalorder %s329, 1
                  %s334 = sphi %s291, %s291
                  %s335 = sphi %s284, %s284
                $region102: #{c2f_forward.7} parent=91 // loop_header_branch
                  %332 = sbr.rel (%p330) target = $region106
                $region103: #{c2f_forward.7} parent=91 // loop_body
                  %v336 = vld [vmem:[%s334] sm:%s327]
                  %337 = vst [vmem:[%s335] sm:%s327] %v336
                  %v338 = vld [vmem:[%s334 + $0x8] sm:%s327]
                  %339 = vst [vmem:[%s335 + $0x4] sm:%s327] %v338
                  %v340 = vld [vmem:[%s334 + $0x10] sm:%s327]
                  %341 = vst [vmem:[%s335 + $0x8] sm:%s327] %v340
                  %v342 = vld [vmem:[%s334 + $0x18] sm:%s327]
                  %343 = vst [vmem:[%s335 + $0xc] sm:%s327] %v342
                $region104: #{c2f_forward.7} parent=91 // loop_footer
                  %s333 = sadd.s32 1, %s329
                $region105: #{c2f_forward.7} parent=91 // loop_footer_branch
                  %328 = sbr.rel target = $region101
                $region106: #{c2f_forward.7} parent=91 // loop_exit
                  _
              $region92: #{c2f_forward.7} parent=76 // pred_fallthru
                _
            $region77: #{c2f_forward.7} parent=72 // pred_fallthru
              _
            // Predicated region
            $region78: #{c2f_forward.7} parent=72 // pred_check
              _
            $region79: #{c2f_forward.7} parent=72 // pred_check_branch
              %297 = sbr.rel (0) target = $region81
            $region80: #{c2f_forward.7} parent=72 // pred_region
              %s299 = ssub.s32 16, 1
              loop: start=0, step=1, limit=1
              $region82: #{c2f_forward.7} parent=80 // loop_pre_header
                _
              $region83: #{c2f_forward.7} parent=80 // loop_header
                %s301 = sphi 0, %s305
                %p302 = scmp.ge.s32.totalorder %s301, 1
                %s306 = sphi %s291, %s291
                %s307 = sphi %s284, %s284
              $region84: #{c2f_forward.7} parent=80 // loop_header_branch
                %304 = sbr.rel (%p302) target = $region88
              $region85: #{c2f_forward.7} parent=80 // loop_body
                %v308 = vld [vmem:[%s306] sm:%s299]
                %309 = vst [vmem:[%s307] sm:%s299] %v308
                %v310 = vld [vmem:[%s306 + $0x8] sm:%s299]
                %311 = vst [vmem:[%s307 + $0x4] sm:%s299] %v310
                %v312 = vld [vmem:[%s306 + $0x10] sm:%s299]
                %313 = vst [vmem:[%s307 + $0x8] sm:%s299] %v312
                %v314 = vld [vmem:[%s306 + $0x18] sm:%s299]
                %315 = vst [vmem:[%s307 + $0xc] sm:%s299] %v314
              $region86: #{c2f_forward.7} parent=80 // loop_footer
                %s305 = sadd.s32 1, %s301
              $region87: #{c2f_forward.7} parent=80 // loop_footer_branch
                %300 = sbr.rel target = $region83
              $region88: #{c2f_forward.7} parent=80 // loop_exit
                _
            $region81: #{c2f_forward.7} parent=72 // pred_fallthru
              _
          $region73: #{c2f_forward.7} parent=68 // pred_fallthru
            _
          %344 = vnop
        $region69: #{c2f_forward.7} parent=23 // pred_fallthru
          _
        // Predicated region
        $region107: #{c2f_forward.7} parent=23 // pred_check
          %p345 = pneg %p113
        $region108: #{c2f_forward.7} parent=23 // pred_check_branch
          %347 = sbr.rel (%p345) target = $region110
        $region109: #{c2f_forward.7} parent=23 // pred_region
          %s348 = sand.u32 %s103, 1
          %s349 = sand.u32 %s103, 1
          %s350 = smul.addr %s349, 16
          %s351 = scalar_lea.vmem [#allocation6], %s350
          %s352 = sadd.s32 %s19, 1
          %p353 = scmp.lt.s32.totalorder %s352, 1
          %s354 = scalar_select %p353, %s352, 1
          %s355 = smul.addr %s18, 8
          %s356 = sadd.s32 %s354, %s355
          %s357 = smul.addr %s356, 4
          %s358 = scalar_lea.vmem %s2, %s357
          // Predicated region
          $region111: #{c2f_forward.7} parent=109 // pred_check
            _
          $region112: #{c2f_forward.7} parent=109 // pred_check_branch
            %360 = sbr.rel (0) target = $region114
          $region113: #{c2f_forward.7} parent=109 // pred_region
            // Predicated region
            $region115: #{c2f_forward.7} parent=113 // pred_check
              _
            $region116: #{c2f_forward.7} parent=113 // pred_check_branch
              %362 = sbr.rel target = $region118
            $region117: #{c2f_forward.7} parent=113 // pred_region
              // Predicated region
              $region130: #{c2f_forward.7} parent=117 // pred_check
                _
              $region131: #{c2f_forward.7} parent=117 // pred_check_branch
                %384 = sbr.rel (0) target = $region133
              $region132: #{c2f_forward.7} parent=117 // pred_region
                loop: start=0, step=1, limit=1
                $region134: #{c2f_forward.7} parent=132 // loop_pre_header
                  _
                $region135: #{c2f_forward.7} parent=132 // loop_header
                  %s386 = sphi 0, %s390
                  %p387 = scmp.ge.s32.totalorder %s386, 1
                  %s391 = sphi %s358, %s358
                  %s392 = sphi %s351, %s351
                $region136: #{c2f_forward.7} parent=132 // loop_header_branch
                  %389 = sbr.rel (%p387) target = $region140
                $region137: #{c2f_forward.7} parent=132 // loop_body
                  _
                $region138: #{c2f_forward.7} parent=132 // loop_footer
                  %s390 = sadd.s32 1, %s386
                $region139: #{c2f_forward.7} parent=132 // loop_footer_branch
                  %385 = sbr.rel target = $region135
                $region140: #{c2f_forward.7} parent=132 // loop_exit
                  _
                %s394 = ssub.s32 16, 1
                loop: start=0, step=1, limit=1
                $region141: #{c2f_forward.7} parent=132 // loop_pre_header
                  _
                $region142: #{c2f_forward.7} parent=132 // loop_header
                  %s396 = sphi 0, %s400
                  %p397 = scmp.ge.s32.totalorder %s396, 1
                  %s401 = sphi %s358, %s358
                  %s402 = sphi %s351, %s351
                $region143: #{c2f_forward.7} parent=132 // loop_header_branch
                  %399 = sbr.rel (%p397) target = $region147
                $region144: #{c2f_forward.7} parent=132 // loop_body
                  %v403 = vld [vmem:[%s401] sm:%s394]
                  %404 = vst [vmem:[%s402] sm:%s394] %v403
                  %v405 = vld [vmem:[%s401 + $0x8] sm:%s394]
                  %406 = vst [vmem:[%s402 + $0x4] sm:%s394] %v405
                  %v407 = vld [vmem:[%s401 + $0x10] sm:%s394]
                  %408 = vst [vmem:[%s402 + $0x8] sm:%s394] %v407
                  %v409 = vld [vmem:[%s401 + $0x18] sm:%s394]
                  %410 = vst [vmem:[%s402 + $0xc] sm:%s394] %v409
                $region145: #{c2f_forward.7} parent=132 // loop_footer
                  %s400 = sadd.s32 1, %s396
                $region146: #{c2f_forward.7} parent=132 // loop_footer_branch
                  %395 = sbr.rel target = $region142
                $region147: #{c2f_forward.7} parent=132 // loop_exit
                  _
              $region133: #{c2f_forward.7} parent=117 // pred_fallthru
                _
            $region118: #{c2f_forward.7} parent=113 // pred_fallthru
              _
            // Predicated region
            $region119: #{c2f_forward.7} parent=113 // pred_check
              _
            $region120: #{c2f_forward.7} parent=113 // pred_check_branch
              %364 = sbr.rel (0) target = $region122
            $region121: #{c2f_forward.7} parent=113 // pred_region
              %s366 = ssub.s32 16, 1
              loop: start=0, step=1, limit=1
              $region123: #{c2f_forward.7} parent=121 // loop_pre_header
                _
              $region124: #{c2f_forward.7} parent=121 // loop_header
                %s368 = sphi 0, %s372
                %p369 = scmp.ge.s32.totalorder %s368, 1
                %s373 = sphi %s358, %s358
                %s374 = sphi %s351, %s351
              $region125: #{c2f_forward.7} parent=121 // loop_header_branch
                %371 = sbr.rel (%p369) target = $region129
              $region126: #{c2f_forward.7} parent=121 // loop_body
                %v375 = vld [vmem:[%s373] sm:%s366]
                %376 = vst [vmem:[%s374] sm:%s366] %v375
                %v377 = vld [vmem:[%s373 + $0x8] sm:%s366]
                %378 = vst [vmem:[%s374 + $0x4] sm:%s366] %v377
                %v379 = vld [vmem:[%s373 + $0x10] sm:%s366]
                %380 = vst [vmem:[%s374 + $0x8] sm:%s366] %v379
                %v381 = vld [vmem:[%s373 + $0x18] sm:%s366]
                %382 = vst [vmem:[%s374 + $0xc] sm:%s366] %v381
              $region127: #{c2f_forward.7} parent=121 // loop_footer
                %s372 = sadd.s32 1, %s368
              $region128: #{c2f_forward.7} parent=121 // loop_footer_branch
                %367 = sbr.rel target = $region124
              $region129: #{c2f_forward.7} parent=121 // loop_exit
                _
            $region122: #{c2f_forward.7} parent=113 // pred_fallthru
              _
          $region114: #{c2f_forward.7} parent=109 // pred_fallthru
            _
          %411 = vnop
        $region110: #{c2f_forward.7} parent=23 // pred_fallthru
          _
      $region24: #{c2f_forward.7} parent=5 // pred_fallthru
        _
      %p412 = scmp.le.s32.totalorder 1, %s11
      %p413 = scmp.lt.s32.totalorder %s11, 5
      %p414 = pnand %p412, %p413
      %p415 = pneg %p414
      // Predicated region
      $region148: #{c2f_forward.7} parent=5 // pred_check
        _
      $region149: #{c2f_forward.7} parent=5 // pred_check_branch
        %417 = sbr.rel (%p414) target = $region151
      $region150: #{c2f_forward.7} parent=5 // pred_region
        %s418 = ssub.s32 %s11, 1
        %s419 = sand.u32 %s38, 1
        %s420 = sand.u32 %s38, 1
        %s421 = smul.addr %s420, 16
        %s422 = scalar_lea.vmem [#allocation4], %s421
        // Predicated region
        $region152: #{c2f_forward.7} parent=150 // pred_check
          %p423 = pneg %p51
        $region153: #{c2f_forward.7} parent=150 // pred_check_branch
          %425 = sbr.rel (%p423) target = $region155
        $region154: #{c2f_forward.7} parent=150 // pred_region
          _
        $region155: #{c2f_forward.7} parent=150 // pred_fallthru
          _
        %s426 = sand.u32 %s72, 1
        %s427 = sand.u32 %s72, 1
        %s428 = smul.addr %s427, 16
        %s429 = scalar_lea.vmem [#allocation5], %s428
        // Predicated region
        $region156: #{c2f_forward.7} parent=150 // pred_check
          %p430 = pneg %p85
        $region157: #{c2f_forward.7} parent=150 // pred_check_branch
          %432 = sbr.rel (%p430) target = $region159
        $region158: #{c2f_forward.7} parent=150 // pred_region
          _
        $region159: #{c2f_forward.7} parent=150 // pred_fallthru
          _
        %s433 = sand.u32 %s106, 1
        %s434 = sand.u32 %s106, 1
        %s435 = smul.addr %s434, 16
        %s436 = scalar_lea.vmem [#allocation6], %s435
        // Predicated region
        $region160: #{c2f_forward.7} parent=150 // pred_check
          %p437 = pneg %p119
        $region161: #{c2f_forward.7} parent=150 // pred_check_branch
          %439 = sbr.rel (%p437) target = $region163
        $region162: #{c2f_forward.7} parent=150 // pred_region
          _
        $region163: #{c2f_forward.7} parent=150 // pred_fallthru
          _
        %s440 = sand.u32 %s38, 1
        %s441 = sand.u32 %s38, 1
        %s442 = smul.addr %s441, 16
        %s443 = scalar_lea.vmem [#allocation4], %s442
        %p444 = pneg %p51
        %p445 = pneg %p48
        %s446 = sand.u32 %s72, 1
        %s447 = sand.u32 %s72, 1
        %s448 = smul.addr %s447, 16
        %s449 = scalar_lea.vmem [#allocation5], %s448
        %p450 = pneg %p85
        %p451 = pneg %p82
        %s452 = sand.u32 %s106, 1
        %s453 = sand.u32 %s106, 1
        %s454 = smul.addr %s453, 16
        %s455 = scalar_lea.vmem [#allocation6], %s454
        %p456 = pneg %p119
        %p457 = pneg %p116
        %p458 = pneg %p140
        %p459 = pneg %p137
        %p460 = pneg %p161
        %p461 = pneg %p158
        %p462 = pneg %p189
        %p463 = pneg %p186
        %p464 = scmp.lt.s32.totalorder %s20, 1
        %s465 = scalar_select %p464, %s20, 1
        %p466 = scmp.lt.s32.totalorder %s21, 1
        %s467 = scalar_select %p466, %s21, 1
        %s468 = smul.addr %s465, 2
        %s469 = sadd.s32 %s467, %s468
        %s470 = scalar_lea.vmem %s5, %s469
        %s471 = ssub.s32 %s21, 1
        %p472 = scmp.gt.s32.totalorder %s471, 0
        %s473 = scalar_select %p472, %s471, 0
        %s474 = sadd.s32 %s21, 1
        %p475 = scmp.lt.s32.totalorder %s474, 1
        %s476 = scalar_select %p475, %s474, 1
        %p477 = scmp.lt.s32.totalorder %s20, 1
        %s478 = scalar_select %p477, %s20, 1
        %p479 = scmp.lt.s32.totalorder %s21, 1
        %s480 = scalar_select %p479, %s21, 1
        %s481 = smul.addr %s478, 2
        %s482 = sadd.s32 %s480, %s481
        %s483 = scalar_lea.vmem %s5, %s482
        %vm485 = vcmask 139264
        %vm486 = vsmask.f32 256
        %vm487 = vmand %vm485, %vm486
        %v488 = vld [vmem:[#allocation2] sm:$0x1]
        %v489 = vsel %vm487, 0, %v488
        %490 = vst [vmem:[#allocation2] sm:$0x1] %v489
        %v491 = vld [vmem:[#allocation2 + $0x8] sm:$0x1]
        %v492 = vsel %vm487, 0, %v491
        %493 = vst [vmem:[#allocation2 + $0x8] sm:$0x1] %v492
        %vm494 = vsmask.f32 7938
        %vm495 = vmand %vm485, %vm494
        %v496 = vld [vmem:[#allocation2 + $0x4] sm:$0x1]
        %v497 = vsel %vm495, 0, %v496
        %498 = vst [vmem:[#allocation2 + $0x4] sm:$0x1] %v497
        %v499 = vld [vmem:[#allocation2 + $0xc] sm:$0x1]
        %v500 = vsel %vm495, 0, %v499
        %501 = vst [vmem:[#allocation2 + $0xc] sm:$0x1] %v500
        %vm502 = vcmask 3072
        %503 = vst.msk [vmem:[#allocation2] sm:$0xf] %vm502, 0
        %vm504 = vcmask 0
        %505 = vst.msk [vmem:[#allocation2 + $0x4] sm:$0x1] %vm504, 0
        %506 = vst.msk [vmem:[#allocation2 + $0x8] sm:$0xf] %vm502, 0
        %507 = vst.msk [vmem:[#allocation2 + $0xc] sm:$0x1] %vm504, 0
        %vm508 = vcmask 142472
        %509 = vst.msk [vmem:[#allocation2] sm:$0xf] %vm508, 0
        %vm510 = vcmask 139400
        %511 = vst.msk [vmem:[#allocation2 + $0x4] sm:$0x1] %vm510, 0
        %512 = vst.msk [vmem:[#allocation2 + $0x8] sm:$0xf] %vm508, 0
        %513 = vst.msk [vmem:[#allocation2 + $0xc] sm:$0x1] %vm510, 0
        %s514 = scalar_lea.vmem %s422, 8 [#allocation4]
        %v515 = vld [vmem:[%s514] sm:$0xf]
        %v516 = vld [vmem:[%s514 + $0x4] sm:$0xf]
        %v518 = vshrl.u32 %v515, 16
        %v520 = vrot.slane %v518, 7
        %v521 = vshll.u32 %v515, 16
        %v523 = vor.u32 %v520, %v521
        %v524 = vrot.slane %v520, 4
        %v526 = vshrl.u32 %v516, 16
        %v528 = vrot.slane %v526, 7
        %v529 = vshll.u32 %v516, 16
        %v531 = vor.u32 %v528, %v529
        %v532 = vrot.slane %v528, 4
        %533 = vrot.lane.b32.xlu0 %v523, 1
        %v534 = vpop.permute.xlu0 %533
        %535 = vrot.lane.b32.xlu0 %v524, 1
        %v536 = vpop.permute.xlu0 %535
        %537 = vrot.lane.b32.xlu0 %v531, 1
        %v538 = vpop.permute.xlu0 %537
        %539 = vrot.lane.b32.xlu0 %v532, 1
        %v540 = vpop.permute.xlu0 %539
        %vm545 = vcmask 134152
        %vm546 = vmand %vm545, %vm494
        %v547 = vld [vmem:[#allocation2] sm:$0xf]
        %v548 = vsel %vm546, %v534, %v547
        %549 = vst [vmem:[#allocation2] sm:$0xf] %v548
        %vm550 = vcmask 131080
        %vm551 = vmand %vm550, %vm486
        %v552 = vld [vmem:[#allocation2 + $0x4] sm:$0x1]
        %v553 = vsel %vm551, %v536, %v552
        %554 = vst [vmem:[#allocation2 + $0x4] sm:$0x1] %v553
        %v555 = vld [vmem:[#allocation2 + $0x8] sm:$0xf]
        %v556 = vsel %vm546, %v538, %v555
        %557 = vst [vmem:[#allocation2 + $0x8] sm:$0xf] %v556
        %v558 = vld [vmem:[#allocation2 + $0xc] sm:$0x1]
        %v559 = vsel %vm551, %v540, %v558
        %560 = vst [vmem:[#allocation2 + $0xc] sm:$0x1] %v559
        %p561 = scmp.gt.s32.totalorder %s21, 0
        // Predicated region
        $region164: #{c2f_forward.7} parent=150 // pred_check
          %p562 = pneg %p561
        $region165: #{c2f_forward.7} parent=150 // pred_check_branch
          %564 = sbr.rel (%p562) target = $region167
        $region166: #{c2f_forward.7} parent=150 // pred_region
          %s565 = scalar_lea.vmem %s429, 8 [#allocation5]
          %v566 = vld [vmem:[%s565] sm:$0x8]
          %v567 = vld [vmem:[%s565 + $0x4] sm:$0x8]
          %v569 = vshrl.u32 %v566, 16
          %v571 = vrot.slane %v569, 7
          %v572 = vrot.slane %v571, 4
          %v574 = vshrl.u32 %v567, 16
          %v576 = vrot.slane %v574, 7
          %v577 = vrot.slane %v576, 4
          %578 = vrot.lane.b32.xlu0 %v572, 1
          %v579 = vpop.permute.xlu0 %578
          %580 = vrot.lane.b32.xlu0 %v577, 1
          %v581 = vpop.permute.xlu0 %580
          %v584 = vld [vmem:[#allocation2] sm:$0x1]
          %v585 = vsel %vm551, %v579, %v584
          %586 = vst [vmem:[#allocation2] sm:$0x1] %v585
          %v587 = vld [vmem:[#allocation2 + $0x8] sm:$0x1]
          %v588 = vsel %vm551, %v581, %v587
          %589 = vst [vmem:[#allocation2 + $0x8] sm:$0x1] %v588
        $region167: #{c2f_forward.7} parent=150 // pred_fallthru
          _
        %p590 = scmp.lt.s32.totalorder %s21, 1
        // Predicated region
        $region168: #{c2f_forward.7} parent=150 // pred_check
          %p591 = pneg %p590
        $region169: #{c2f_forward.7} parent=150 // pred_check_branch
          %593 = sbr.rel (%p591) target = $region171
        $region170: #{c2f_forward.7} parent=150 // pred_region
          %s594 = scalar_lea.vmem %s436, 8 [#allocation6]
          %v595 = vld [vmem:[%s594] sm:$0x1]
          %v596 = vld [vmem:[%s594 + $0x4] sm:$0x1]
          %v598 = vshll.u32 %v595, 16
          %v601 = vshll.u32 %v596, 16
          %603 = vrot.lane.b32.xlu0 %v598, 1
          %v604 = vpop.permute.xlu0 %603
          %605 = vrot.lane.b32.xlu0 %v601, 1
          %v606 = vpop.permute.xlu0 %605
          %vm609 = vmand %vm550, %vm494
          %v610 = vld [vmem:[#allocation2 + $0x4] sm:$0x1]
          %v611 = vsel %vm609, %v604, %v610
          %612 = vst [vmem:[#allocation2 + $0x4] sm:$0x1] %v611
          %v613 = vld [vmem:[#allocation2 + $0xc] sm:$0x1]
          %v614 = vsel %vm609, %v606, %v613
          %615 = vst [vmem:[#allocation2 + $0xc] sm:$0x1] %v614
        $region171: #{c2f_forward.7} parent=150 // pred_fallthru
          _
        %v616 = vld [vmem:[#allocation2] sm:$0xf]
        %v617 = vld [vmem:[#allocation2 + $0x8] sm:$0xf]
        %vm618 = vcmask 125952
        %619 = vst.msk [vmem:[#allocation3] sm:$0xf] %vm618, %v616
        %620 = vst.msk [vmem:[#allocation3 + $0x4] sm:$0xf] %vm618, %v617
        %v621 = vld [vmem:[#allocation2] sm:$0xf]
        %v622 = vld [vmem:[#allocation2 + $0x8] sm:$0xf]
        %625 = vrot.lane.b32.xlu0 %v621, 127
        %v626 = vpop.permute.xlu0 %625
        %627 = vrot.lane.b32.xlu0 %v622, 127
        %v628 = vpop.permute.xlu0 %627
        %s631 = scalar_lea.vmem [#allocation3], 8
        %632 = vst.msk [vmem:[%s631] sm:$0xf] %vm618, %v626
        %633 = vst.msk [vmem:[%s631 + $0x4] sm:$0xf] %vm618, %v628
        %v634 = vld [vmem:[#allocation2] sm:$0xf]
        %v635 = vld [vmem:[#allocation2 + $0x8] sm:$0xf]
        %638 = vrot.lane.b32.xlu0 %v634, 126
        %v639 = vpop.permute.xlu0 %638
        %640 = vrot.lane.b32.xlu0 %v635, 126
        %v641 = vpop.permute.xlu0 %640
        %s644 = scalar_lea.vmem [#allocation3], 16
        %645 = vst.msk [vmem:[%s644] sm:$0xf] %vm618, %v639
        %646 = vst.msk [vmem:[%s644 + $0x4] sm:$0xf] %vm618, %v641
        %v647 = vld [vmem:[#allocation2] sm:$0xf]
        %v648 = vld [vmem:[#allocation2 + $0x4] sm:$0x1]
        %v649 = vld [vmem:[#allocation2 + $0x8] sm:$0xf]
        %v650 = vld [vmem:[#allocation2 + $0xc] sm:$0x1]
        %vm651 = vsmask.f32 3328
        %vm652 = vsmask.f32 7440
        %vm653 = vmor %vm651, %vm652
        %v655 = vshrl.u32 %v647, 16
        %v657 = vrot.slane %v655, 4
        %v658 = vshll.u32 %v647, 16
        %v660 = vrot.slane %v658, 5
        %v661 = vor.u32 %v657, %v660
        %v662 = vrot.slane %v661, 4
        %v664 = vshll.u32 %v648, 16
        %v666 = vrot.slane %v664, 5
        %v667 = vsel %vm653, %v662, %v666
        %v669 = vshrl.u32 %v649, 16
        %v671 = vrot.slane %v669, 4
        %v672 = vshll.u32 %v649, 16
        %v674 = vrot.slane %v672, 5
        %v675 = vor.u32 %v671, %v674
        %v676 = vrot.slane %v675, 4
        %v678 = vshll.u32 %v650, 16
        %v680 = vrot.slane %v678, 5
        %v681 = vsel %vm653, %v676, %v680
        %s684 = scalar_lea.vmem [#allocation3], 24
        %685 = vst.msk [vmem:[%s684] sm:$0xf] %vm618, %v667
        %686 = vst.msk [vmem:[%s684 + $0x4] sm:$0xf] %vm618, %v681
        %v687 = vld [vmem:[#allocation2] sm:$0xf]
        %v688 = vld [vmem:[#allocation2 + $0x4] sm:$0x1]
        %v689 = vld [vmem:[#allocation2 + $0x8] sm:$0xf]
        %v690 = vld [vmem:[#allocation2 + $0xc] sm:$0x1]
        %v692 = vshrl.u32 %v687, 16
        %v694 = vrot.slane %v692, 4
        %v695 = vshll.u32 %v687, 16
        %v697 = vrot.slane %v695, 5
        %v698 = vor.u32 %v694, %v697
        %v699 = vrot.slane %v698, 4
        %v701 = vshll.u32 %v688, 16
        %v703 = vrot.slane %v701, 5
        %v704 = vsel %vm653, %v699, %v703
        %v706 = vshrl.u32 %v689, 16
        %v708 = vrot.slane %v706, 4
        %v709 = vshll.u32 %v689, 16
        %v711 = vrot.slane %v709, 5
        %v712 = vor.u32 %v708, %v711
        %v713 = vrot.slane %v712, 4
        %v715 = vshll.u32 %v690, 16
        %v717 = vrot.slane %v715, 5
        %v718 = vsel %vm653, %v713, %v717
        %719 = vrot.lane.b32.xlu0 %v704, 127
        %v720 = vpop.permute.xlu0 %719
        %721 = vrot.lane.b32.xlu0 %v718, 127
        %v722 = vpop.permute.xlu0 %721
        %s725 = scalar_lea.vmem [#allocation3], 32
        %726 = vst.msk [vmem:[%s725] sm:$0xf] %vm618, %v720
        %727 = vst.msk [vmem:[%s725 + $0x4] sm:$0xf] %vm618, %v722
        %v728 = vld [vmem:[#allocation2] sm:$0xf]
        %v729 = vld [vmem:[#allocation2 + $0x4] sm:$0x1]
        %v730 = vld [vmem:[#allocation2 + $0x8] sm:$0xf]
        %v731 = vld [vmem:[#allocation2 + $0xc] sm:$0x1]
        %v733 = vshrl.u32 %v728, 16
        %v735 = vrot.slane %v733, 4
        %v736 = vshll.u32 %v728, 16
        %v738 = vrot.slane %v736, 5
        %v739 = vor.u32 %v735, %v738
        %v740 = vrot.slane %v739, 4
        %v742 = vshll.u32 %v729, 16
        %v744 = vrot.slane %v742, 5
        %v745 = vsel %vm653, %v740, %v744
        %v747 = vshrl.u32 %v730, 16
        %v749 = vrot.slane %v747, 4
        %v750 = vshll.u32 %v730, 16
        %v752 = vrot.slane %v750, 5
        %v753 = vor.u32 %v749, %v752
        %v754 = vrot.slane %v753, 4
        %v756 = vshll.u32 %v731, 16
        %v758 = vrot.slane %v756, 5
        %v759 = vsel %vm653, %v754, %v758
        %760 = vrot.lane.b32.xlu0 %v745, 126
        %v761 = vpop.permute.xlu0 %760
        %762 = vrot.lane.b32.xlu0 %v759, 126
        %v763 = vpop.permute.xlu0 %762
        %s766 = scalar_lea.vmem [#allocation3], 40
        %767 = vst.msk [vmem:[%s766] sm:$0xf] %vm618, %v761
        %768 = vst.msk [vmem:[%s766 + $0x4] sm:$0xf] %vm618, %v763
        %v769 = vld [vmem:[#allocation2] sm:$0xe]
        %v770 = vld [vmem:[#allocation2 + $0x4] sm:$0x1]
        %v771 = vld [vmem:[#allocation2 + $0x8] sm:$0xe]
        %v772 = vld [vmem:[#allocation2 + $0xc] sm:$0x1]
        %vm777 = vcmask 1042432
        %vm778 = vcmask 1046532
        %vm779 = vmor %vm777, %vm778
        %v780 = vrot.slane %v769, 5
        %v781 = vrot.slane %v780, 4
        %v782 = vrot.slane %v770, 5
        %v783 = vsel %vm779, %v781, %v782
        %v784 = vrot.slane %v771, 5
        %v785 = vrot.slane %v784, 4
        %v786 = vrot.slane %v772, 5
        %v787 = vsel %vm779, %v785, %v786
        %s790 = scalar_lea.vmem [#allocation3], 48
        %791 = vst.msk [vmem:[%s790] sm:$0xf] %vm618, %v783
        %792 = vst.msk [vmem:[%s790 + $0x4] sm:$0xf] %vm618, %v787
        %v793 = vld [vmem:[#allocation2] sm:$0xe]
        %v794 = vld [vmem:[#allocation2 + $0x4] sm:$0x1]
        %v795 = vld [vmem:[#allocation2 + $0x8] sm:$0xe]
        %v796 = vld [vmem:[#allocation2 + $0xc] sm:$0x1]
        %v801 = vrot.slane %v793, 5
        %v802 = vrot.slane %v801, 4
        %v803 = vrot.slane %v794, 5
        %v804 = vsel %vm779, %v802, %v803
        %v805 = vrot.slane %v795, 5
        %v806 = vrot.slane %v805, 4
        %v807 = vrot.slane %v796, 5
        %v808 = vsel %vm779, %v806, %v807
        %809 = vrot.lane.b32.xlu0 %v804, 127
        %v810 = vpop.permute.xlu0 %809
        %811 = vrot.lane.b32.xlu0 %v808, 127
        %v812 = vpop.permute.xlu0 %811
        %s815 = scalar_lea.vmem [#allocation3], 56
        %816 = vst.msk [vmem:[%s815] sm:$0xf] %vm618, %v810
        %817 = vst.msk [vmem:[%s815 + $0x4] sm:$0xf] %vm618, %v812
        %v818 = vld [vmem:[#allocation2] sm:$0xe]
        %v819 = vld [vmem:[#allocation2 + $0x4] sm:$0x1]
        %v820 = vld [vmem:[#allocation2 + $0x8] sm:$0xe]
        %v821 = vld [vmem:[#allocation2 + $0xc] sm:$0x1]
        %v826 = vrot.slane %v818, 5
        %v827 = vrot.slane %v826, 4
        %v828 = vrot.slane %v819, 5
        %v829 = vsel %vm779, %v827, %v828
        %v830 = vrot.slane %v820, 5
        %v831 = vrot.slane %v830, 4
        %v832 = vrot.slane %v821, 5
        %v833 = vsel %vm779, %v831, %v832
        %834 = vrot.lane.b32.xlu0 %v829, 126
        %v835 = vpop.permute.xlu0 %834
        %836 = vrot.lane.b32.xlu0 %v833, 126
        %v837 = vpop.permute.xlu0 %836
        %s840 = scalar_lea.vmem [#allocation3], 64
        %841 = vst.msk [vmem:[%s840] sm:$0xf] %vm618, %v835
        %842 = vst.msk [vmem:[%s840 + $0x4] sm:$0xf] %vm618, %v837
        %v843 = vld [vmem:[#allocation3] sm:$0xf]
        %v844 = vld [vmem:[#allocation3 + $0x4] sm:$0xf]
        %v845 = vld [vmem:[#allocation3 + $0x8] sm:$0xf]
        %v846 = vld [vmem:[#allocation3 + $0xc] sm:$0xf]
        %v847 = vld [vmem:[#allocation3 + $0x10] sm:$0xf]
        %v848 = vld [vmem:[#allocation3 + $0x14] sm:$0xf]
        %v849 = vld [vmem:[#allocation3 + $0x18] sm:$0xf]
        %v850 = vld [vmem:[#allocation3 + $0x1c] sm:$0xf]
        %v851 = vld [vmem:[#allocation3 + $0x20] sm:$0xf]
        %v852 = vld [vmem:[#allocation3 + $0x24] sm:$0xf]
        %v853 = vld [vmem:[#allocation3 + $0x28] sm:$0xf]
        %v854 = vld [vmem:[#allocation3 + $0x2c] sm:$0xf]
        %v855 = vld [vmem:[#allocation3 + $0x30] sm:$0xf]
        %v856 = vld [vmem:[#allocation3 + $0x34] sm:$0xf]
        %v857 = vld [vmem:[#allocation3 + $0x38] sm:$0xf]
        %v858 = vld [vmem:[#allocation3 + $0x3c] sm:$0xf]
        %v859 = vld [vmem:[#allocation3 + $0x40] sm:$0xf]
        %v860 = vld [vmem:[#allocation3 + $0x44] sm:$0xf]
        %v863 = vpack.i.b16 %v844, %v843
        %v865 = vshrl.u32 %v843, 16
        %v866 = vshrl.u32 %v844, 16
        %v867 = vpack.i.b16 %v866, %v865
        %v871 = vpack.i.b16 %v846, %v845
        %v873 = vshrl.u32 %v845, 16
        %v874 = vshrl.u32 %v846, 16
        %v875 = vpack.i.b16 %v874, %v873
        %v879 = vpack.i.b16 %v848, %v847
        %v881 = vshrl.u32 %v847, 16
        %v882 = vshrl.u32 %v848, 16
        %v883 = vpack.i.b16 %v882, %v881
        %v887 = vpack.i.b16 %v850, %v849
        %v889 = vshrl.u32 %v849, 16
        %v890 = vshrl.u32 %v850, 16
        %v891 = vpack.i.b16 %v890, %v889
        %v895 = vpack.i.b16 %v852, %v851
        %v897 = vshrl.u32 %v851, 16
        %v898 = vshrl.u32 %v852, 16
        %v899 = vpack.i.b16 %v898, %v897
        %v903 = vpack.i.b16 %v854, %v853
        %v905 = vshrl.u32 %v853, 16
        %v906 = vshrl.u32 %v854, 16
        %v907 = vpack.i.b16 %v906, %v905
        %v911 = vpack.i.b16 %v856, %v855
        %v913 = vshrl.u32 %v855, 16
        %v914 = vshrl.u32 %v856, 16
        %v915 = vpack.i.b16 %v914, %v913
        %v919 = vpack.i.b16 %v858, %v857
        %v921 = vshrl.u32 %v857, 16
        %v922 = vshrl.u32 %v858, 16
        %v923 = vpack.i.b16 %v922, %v921
        %v927 = vpack.i.b16 %v860, %v859
        %v928 = vshrl.u32 %v859, 16
        %v929 = vshrl.u32 %v860, 16
        %v930 = vpack.i.b16 %v929, %v928
        %v931 = vcombine.low %v863, %v879
        %v933 = vunpack.c.l.s4 1983009808
        %v934 = vunpack.c.0.s8 %v933
        %v935 = vlaneseq
        %v936 = vshrl.u32 %v935, 7
        %v937 = vsub.s32 %v934, %v936
        %v938 = vrot.slane %v931, %v937
        %v939 = vcombine.low %v871, %v887
        %v941 = vunpack.c.l.s4 1983009808
        %v942 = vunpack.c.0.s8 %v941
        %v943 = vlaneseq
        %v944 = vshrl.u32 %v943, 7
        %v945 = vsub.s32 %v942, %v944
        %v946 = vrot.slane %v939, %v945
        %v947 = vcombine.low %v938, %v946
        %v948 = vcombine.high %v938, %v946
        %v950 = vunpack.c.l.s4 1934713408
        %v951 = vunpack.c.0.s8 %v950
        %v952 = vlaneseq
        %v953 = vshrl.u32 %v952, 7
        %v954 = vsub.s32 %v951, %v953
        %v955 = vrot.slane %v947, %v954
        %v957 = vunpack.c.l.s4 1934713408
        %v958 = vunpack.c.0.s8 %v957
        %v959 = vlaneseq
        %v960 = vshrl.u32 %v959, 7
        %v961 = vsub.s32 %v958, %v960
        %v962 = vrot.slane %v948, %v961
        %v963 = vcombine.high %v955, 0
        %v964 = vcombine.high %v962, 0
        %v965 = vcombine.low %v867, %v883
        %v967 = vunpack.c.l.s4 1983009808
        %v968 = vunpack.c.0.s8 %v967
        %v969 = vlaneseq
        %v970 = vshrl.u32 %v969, 7
        %v971 = vsub.s32 %v968, %v970
        %v972 = vrot.slane %v965, %v971
        %v973 = vcombine.low %v875, %v891
        %v975 = vunpack.c.l.s4 1983009808
        %v976 = vunpack.c.0.s8 %v975
        %v977 = vlaneseq
        %v978 = vshrl.u32 %v977, 7
        %v979 = vsub.s32 %v976, %v978
        %v980 = vrot.slane %v973, %v979
        %v981 = vcombine.low %v972, %v980
        %v982 = vcombine.high %v972, %v980
        %v984 = vunpack.c.l.s4 1934713408
        %v985 = vunpack.c.0.s8 %v984
        %v986 = vlaneseq
        %v987 = vshrl.u32 %v986, 7
        %v988 = vsub.s32 %v985, %v987
        %v989 = vrot.slane %v981, %v988
        %v991 = vunpack.c.l.s4 1934713408
        %v992 = vunpack.c.0.s8 %v991
        %v993 = vlaneseq
        %v994 = vshrl.u32 %v993, 7
        %v995 = vsub.s32 %v992, %v994
        %v996 = vrot.slane %v982, %v995
        %v997 = vcombine.high %v989, 0
        %v998 = vcombine.high %v996, 0
        %v999 = vcombine.low %v895, %v911
        %v1001 = vunpack.c.l.s4 1983009808
        %v1002 = vunpack.c.0.s8 %v1001
        %v1003 = vlaneseq
        %v1004 = vshrl.u32 %v1003, 7
        %v1005 = vsub.s32 %v1002, %v1004
        %v1006 = vrot.slane %v999, %v1005
        %v1007 = vcombine.low %v903, %v919
        %v1009 = vunpack.c.l.s4 1983009808
        %v1010 = vunpack.c.0.s8 %v1009
        %v1011 = vlaneseq
        %v1012 = vshrl.u32 %v1011, 7
        %v1013 = vsub.s32 %v1010, %v1012
        %v1014 = vrot.slane %v1007, %v1013
        %v1015 = vcombine.low %v1006, %v1014
        %v1016 = vcombine.high %v1006, %v1014
        %v1018 = vunpack.c.l.s4 1934713408
        %v1019 = vunpack.c.0.s8 %v1018
        %v1020 = vlaneseq
        %v1021 = vshrl.u32 %v1020, 7
        %v1022 = vsub.s32 %v1019, %v1021
        %v1023 = vrot.slane %v1015, %v1022
        %v1025 = vunpack.c.l.s4 1934713408
        %v1026 = vunpack.c.0.s8 %v1025
        %v1027 = vlaneseq
        %v1028 = vshrl.u32 %v1027, 7
        %v1029 = vsub.s32 %v1026, %v1028
        %v1030 = vrot.slane %v1016, %v1029
        %v1031 = vcombine.high %v1023, 0
        %v1032 = vcombine.high %v1030, 0
        %v1033 = vcombine.low %v899, %v915
        %v1035 = vunpack.c.l.s4 1983009808
        %v1036 = vunpack.c.0.s8 %v1035
        %v1037 = vlaneseq
        %v1038 = vshrl.u32 %v1037, 7
        %v1039 = vsub.s32 %v1036, %v1038
        %v1040 = vrot.slane %v1033, %v1039
        %v1041 = vcombine.low %v907, %v923
        %v1043 = vunpack.c.l.s4 1983009808
        %v1044 = vunpack.c.0.s8 %v1043
        %v1045 = vlaneseq
        %v1046 = vshrl.u32 %v1045, 7
        %v1047 = vsub.s32 %v1044, %v1046
        %v1048 = vrot.slane %v1041, %v1047
        %v1049 = vcombine.low %v1040, %v1048
        %v1050 = vcombine.high %v1040, %v1048
        %v1052 = vunpack.c.l.s4 1934713408
        %v1053 = vunpack.c.0.s8 %v1052
        %v1054 = vlaneseq
        %v1055 = vshrl.u32 %v1054, 7
        %v1056 = vsub.s32 %v1053, %v1055
        %v1057 = vrot.slane %v1049, %v1056
        %v1059 = vunpack.c.l.s4 1934713408
        %v1060 = vunpack.c.0.s8 %v1059
        %v1061 = vlaneseq
        %v1062 = vshrl.u32 %v1061, 7
        %v1063 = vsub.s32 %v1060, %v1062
        %v1064 = vrot.slane %v1050, %v1063
        %v1065 = vcombine.high %v1057, 0
        %v1066 = vcombine.high %v1064, 0
        %v1069 = vunpack.c.l.s4 1983009808
        %v1070 = vunpack.c.0.s8 %v1069
        %v1071 = vlaneseq
        %v1072 = vshrl.u32 %v1071, 7
        %v1073 = vsub.s32 %v1070, %v1072
        %v1074 = vrot.slane %v927, %v1073
        %v1075 = vcombine.high %v1074, 0
        %v1077 = vunpack.c.l.s4 1934713408
        %v1078 = vunpack.c.0.s8 %v1077
        %v1079 = vlaneseq
        %v1080 = vshrl.u32 %v1079, 7
        %v1081 = vsub.s32 %v1078, %v1080
        %v1082 = vrot.slane %v1074, %v1081
        %v1084 = vunpack.c.l.s4 1934713408
        %v1085 = vunpack.c.0.s8 %v1084
        %v1086 = vlaneseq
        %v1087 = vshrl.u32 %v1086, 7
        %v1088 = vsub.s32 %v1085, %v1087
        %v1089 = vrot.slane %v1075, %v1088
        %v1090 = vcombine.high %v1082, 0
        %v1091 = vcombine.high %v1089, 0
        %v1094 = vunpack.c.l.s4 1983009808
        %v1095 = vunpack.c.0.s8 %v1094
        %v1096 = vlaneseq
        %v1097 = vshrl.u32 %v1096, 7
        %v1098 = vsub.s32 %v1095, %v1097
        %v1099 = vrot.slane %v930, %v1098
        %v1100 = vcombine.high %v1099, 0
        %v1102 = vunpack.c.l.s4 1934713408
        %v1103 = vunpack.c.0.s8 %v1102
        %v1104 = vlaneseq
        %v1105 = vshrl.u32 %v1104, 7
        %v1106 = vsub.s32 %v1103, %v1105
        %v1107 = vrot.slane %v1099, %v1106
        %v1109 = vunpack.c.l.s4 1934713408
        %v1110 = vunpack.c.0.s8 %v1109
        %v1111 = vlaneseq
        %v1112 = vshrl.u32 %v1111, 7
        %v1113 = vsub.s32 %v1110, %v1112
        %v1114 = vrot.slane %v1100, %v1113
        %v1115 = vcombine.high %v1107, 0
        %v1116 = vcombine.high %v1114, 0
        %v1120 = vunpack.c.l.b16 %v955
        %v1121 = vunpack.c.l.b16 %v1023
        %v1122 = vunpack.c.l.b16 %v1082
        %v1123 = vpack.c.b16 %v1121, %v1120
        %v1124 = vpack.c.b16 %v1122, %v1122
        %v1128 = vunpack.c.l.b16 %v989
        %v1129 = vunpack.c.l.b16 %v1057
        %v1130 = vunpack.c.l.b16 %v1107
        %v1131 = vpack.c.b16 %v1129, %v1128
        %v1132 = vpack.c.b16 %v1130, %v1130
        %1133 = vrot.lane.b32.xlu0 %v1131, 16
        %v1134 = vpop.permute.xlu0 %1133
        %1135 = vrot.lane.b32.xlu0 %v1132, 16
        %v1136 = vpop.permute.xlu0 %1135
        %v1140 = vunpack.c.l.b16 %v963
        %v1141 = vunpack.c.l.b16 %v1031
        %v1142 = vunpack.c.l.b16 %v1090
        %v1143 = vpack.c.b16 %v1141, %v1140
        %v1144 = vpack.c.b16 %v1142, %v1142
        %1145 = vrot.lane.b32.xlu0 %v1143, 32
        %v1146 = vpop.permute.xlu0 %1145
        %1147 = vrot.lane.b32.xlu0 %v1144, 32
        %v1148 = vpop.permute.xlu0 %1147
        %v1152 = vunpack.c.l.b16 %v997
        %v1153 = vunpack.c.l.b16 %v1065
        %v1154 = vunpack.c.l.b16 %v1115
        %v1155 = vpack.c.b16 %v1153, %v1152
        %v1156 = vpack.c.b16 %v1154, %v1154
        %1157 = vrot.lane.b32.xlu0 %v1155, 48
        %v1158 = vpop.permute.xlu0 %1157
        %1159 = vrot.lane.b32.xlu0 %v1156, 48
        %v1160 = vpop.permute.xlu0 %1159
        %v1164 = vunpack.c.l.b16 %v962
        %v1165 = vunpack.c.l.b16 %v1030
        %v1166 = vunpack.c.l.b16 %v1089
        %v1167 = vpack.c.b16 %v1165, %v1164
        %v1168 = vpack.c.b16 %v1166, %v1166
        %1169 = vrot.lane.b32.xlu0 %v1167, 64
        %v1170 = vpop.permute.xlu0 %1169
        %1171 = vrot.lane.b32.xlu0 %v1168, 64
        %v1172 = vpop.permute.xlu0 %1171
        %v1176 = vunpack.c.l.b16 %v996
        %v1177 = vunpack.c.l.b16 %v1064
        %v1178 = vunpack.c.l.b16 %v1114
        %v1179 = vpack.c.b16 %v1177, %v1176
        %v1180 = vpack.c.b16 %v1178, %v1178
        %1181 = vrot.lane.b32.xlu0 %v1179, 80
        %v1182 = vpop.permute.xlu0 %1181
        %1183 = vrot.lane.b32.xlu0 %v1180, 80
        %v1184 = vpop.permute.xlu0 %1183
        %v1188 = vunpack.c.l.b16 %v964
        %v1189 = vunpack.c.l.b16 %v1032
        %v1190 = vunpack.c.l.b16 %v1091
        %v1191 = vpack.c.b16 %v1189, %v1188
        %v1192 = vpack.c.b16 %v1190, %v1190
        %1193 = vrot.lane.b32.xlu0 %v1191, 96
        %v1194 = vpop.permute.xlu0 %1193
        %1195 = vrot.lane.b32.xlu0 %v1192, 96
        %v1196 = vpop.permute.xlu0 %1195
        %v1200 = vunpack.c.l.b16 %v998
        %v1201 = vunpack.c.l.b16 %v1066
        %v1202 = vunpack.c.l.b16 %v1116
        %v1203 = vpack.c.b16 %v1201, %v1200
        %v1204 = vpack.c.b16 %v1202, %v1202
        %1205 = vrot.lane.b32.xlu0 %v1203, 112
        %v1206 = vpop.permute.xlu0 %1205
        %1207 = vrot.lane.b32.xlu0 %v1204, 112
        %v1208 = vpop.permute.xlu0 %1207
        %vm1209 = vcmask 130048
        %v1212 = vsel %vm1209, %v1123, %v1134
        %v1215 = vsel %vm1209, %v1124, %v1136
        %vm1216 = vcmask 261120
        %v1218 = vsel %vm1216, %v1212, %v1146
        %v1220 = vsel %vm1216, %v1215, %v1148
        %vm1221 = vcmask 392192
        %v1223 = vsel %vm1221, %v1218, %v1158
        %v1225 = vsel %vm1221, %v1220, %v1160
        %vm1226 = vcmask 523264
        %v1228 = vsel %vm1226, %v1223, %v1170
        %v1230 = vsel %vm1226, %v1225, %v1172
        %vm1231 = vcmask 654336
        %v1233 = vsel %vm1231, %v1228, %v1182
        %v1235 = vsel %vm1231, %v1230, %v1184
        %vm1236 = vcmask 785408
        %v1238 = vsel %vm1236, %v1233, %v1194
        %v1240 = vsel %vm1236, %v1235, %v1196
        %vm1241 = vcmask 916480
        %v1243 = vsel %vm1241, %v1238, %v1206
        %v1246 = vsel %vm1241, %v1240, %v1208
        %v1247 = vld [vmem:[%s3] sm:$0x1]
        %v1248 = vld [vmem:[%s4] sm:$0x3]
        %1250 = vset.pattern.permute.xlu0 0
        %1251 = vperm.xlu0 %1250, %v1248
        %v1252 = vpop.permute.xlu0 %1251
        %vm1254 = vcmask 146432
        %v1256 = vsel %vm1254, %v1247, 0
        %vm1258 = vcmask 1040384
        %v1259 = vsel %vm1258, %v1246, 0
        %1261 = vmatprep.subr.bf16.mxu0 0
        %1262 = vmatpush1.bf16.msra.mxu0 0
        %1263 = vmatprep.subr.bf16.mxu0 0
        %1264 = vmatpush1.bf16.msra.mxu0 0
        %1265 = vmatprep.subr.bf16.mxu0 0
        %1266 = vmatpush1.bf16.msra.mxu0 0
        %1267 = vmatprep.subr.bf16.mxu0 0
        %1268 = vmatpush1.bf16.msra.mxu0 0
        %1269 = vmatprep.subr.bf16.mxu0 0
        %1270 = vmatpush1.bf16.msra.mxu0 0
        %1271 = vmatprep.subr.bf16.mxu0 0
        %1272 = vmatpush1.bf16.msra.mxu0 0
        %1273 = vmatprep.subr.bf16.mxu0 0
        %1274 = vmatpush1.bf16.msra.mxu0 %v1259
        %1275 = vmatprep.subr.bf16.mxu0 0
        %1276 = vmatpush1.bf16.msra.mxu0 %v1243
        %1277 = vmatprep.subr.bf16.mxu0 0
        %1278 = vmatpush2.bf16.msra.mxu0 0
        %1279 = vmatprep.subr.bf16.mxu0 0
        %1280 = vmatpush2.bf16.msra.mxu0 0
        %1281 = vmatprep.subr.bf16.mxu0 0
        %1282 = vmatpush2.bf16.msra.mxu0 0
        %1283 = vmatprep.subr.bf16.mxu0 0
        %1284 = vmatpush2.bf16.msra.mxu0 0
        %1285 = vmatprep.subr.bf16.mxu0 0
        %1286 = vmatpush2.bf16.msra.mxu0 0
        %1287 = vmatprep.subr.bf16.mxu0 0
        %1288 = vmatpush2.bf16.msra.mxu0 0
        %1289 = vmatprep.subr.bf16.mxu0 0
        %1290 = vmatpush2.bf16.msra.mxu0 0
        %1291 = vmatprep.subr.bf16.mxu0 0
        %1292 = vmatpush2.bf16.msra.mxu0 0
        %1293 = vmatprep.mubr.bf16.mxu0 0
        %1294 = vmatmul.mubr.bf16.gmra.mxu0 %v1256
        %v1295 = vpop.f32.mrf.mxu0
        %v1296 = vadd.f32 %v1252, %v1295
        %v1297 = vpop.f32.mrf.mxu0
        %v1298 = vpop.f32.mrf.mxu0
        %v1299 = vpop.f32.mrf.mxu0
        %1300 = vdwg.mxu0
        %v1301 = vsub.f32 0.0, %v1296
        %v1302 = vmul.f32 %v1301, 1.442695
        %v1303 = vpow.pop %v1302
        %v1304 = vadd.f32 %v1303, 1.0
        %v1305 = vrcp.pop %v1304
        %v1306 = vmul.f32 %v1296, %v1305
        %v1307 = vpack.c.bf16 %v1306, %v1306
        %1308 = vst [vmem:[%s483] sm:$0x1] %v1307
        %p1309 = scmp.lt.s32.totalorder %s20, 1
        %s1310 = scalar_select %p1309, %s20, 1
        %p1311 = scmp.lt.s32.totalorder %s21, 1
        %s1312 = scalar_select %p1311, %s21, 1
        %s1313 = smul.addr %s1310, 2
        %s1314 = sadd.s32 %s1312, %s1313
        %s1315 = scalar_lea.vmem %s5, %s1314
        // Predicated region
        $region172: #{c2f_forward.7} parent=150 // pred_check
          %p1316 = pneg %p186
        $region173: #{c2f_forward.7} parent=150 // pred_check_branch
          %1318 = sbr.rel (%p1316) target = $region175
        $region174: #{c2f_forward.7} parent=150 // pred_region
          _
        $region175: #{c2f_forward.7} parent=150 // pred_fallthru
          _
      $region151: #{c2f_forward.7} parent=5 // pred_fallthru
        _
      %p1319 = scmp.le.s32.totalorder 2, %s11
      // Predicated region
      $region176: #{c2f_forward.7} parent=5 // pred_check
        %p1320 = pneg %p1319
      $region177: #{c2f_forward.7} parent=5 // pred_check_branch
        %1322 = sbr.rel (%p1320) target = $region179
      $region178: #{c2f_forward.7} parent=5 // pred_region
        %s1323 = ssub.s32 %s11, 2
        // Predicated region
        $region180: #{c2f_forward.7} parent=178 // pred_check
          %p1324 = pneg %p192
        $region181: #{c2f_forward.7} parent=178 // pred_check_branch
          %1326 = sbr.rel (%p1324) target = $region183
        $region182: #{c2f_forward.7} parent=178 // pred_region
          %p1327 = scmp.lt.s32.totalorder %s22, 1
          %s1328 = scalar_select %p1327, %s22, 1
          %p1329 = scmp.lt.s32.totalorder %s23, 1
          %s1330 = scalar_select %p1329, %s23, 1
          %s1331 = smul.addr %s1328, 2
          %s1332 = sadd.s32 %s1330, %s1331
          %s1333 = scalar_lea.vmem %s5, %s1332
        $region183: #{c2f_forward.7} parent=178 // pred_fallthru
          _
      $region179: #{c2f_forward.7} parent=5 // pred_fallthru
        _
    $region6: #{c2f_forward.7} parent=1 // loop_footer
      %s15 = sadd.s32 1, %s11
    $region7: #{c2f_forward.7} parent=1 // loop_footer_branch
      %10 = sbr.rel target = $region3
    $region8: #{c2f_forward.7} parent=1 // loop_exit
      _

// kernel: c2f_forward.8
$region0: #{c2f_forward.8}
  #allocation0 [shape = 'u32[]', space=smem, size = 0x4, offset = 0x4, fixed_abs, tag = 'smem constant byte address 0x4 - core index']
  #allocation1 [shape = 'u32[144,128]{1,0:T(1,128)}', space=vmem, size = 0x12000, scoped, tag = 'internal scratch']
  #allocation2 [shape = 'bf16[2,10,18]{2,1,0:T(8,128)(2,1)}', space=vmem, size = 0x2000, scoped, tag = 'scratch operand']
  #allocation3 [shape = 'bf16[9,2,8,16]{3,2,1,0:T(8,128)(2,1)}', space=vmem, size = 0x9000, scoped, tag = 'scratch operand']
  %s0 = inlined_call_operand.vmem [shape: bf16[2,2,16,16], index: 0, kind: input, shape index: {}, may-alias: {0,1,2}]
  %s1 = inlined_call_operand.vmem [shape: bf16[2,2,16,16], index: 1, kind: input, shape index: {}, may-alias: {0,1,2}]
  %s2 = inlined_call_operand.vmem [shape: bf16[2,2,16,16], index: 2, kind: input, shape index: {}, may-alias: {0,1,2}]
  %s3 = inlined_call_operand.vmem [shape: bf16[2,4,16,16], index: 3, kind: input, shape index: {}]
  %s4 = inlined_call_operand.vmem [shape: bf16[2,18], index: 4, kind: input, shape index: {}]
  %s5 = inlined_call_operand.vmem [shape: f32[2,1], index: 5, kind: input, shape index: {}]
  %s6 = inlined_call_operand.vmem [shape: bf16[2,2,256], index: 6, kind: output, shape index: {}]
  %s7 = sld [smem:[#allocation0]]
  $region229: #{c2f_forward.8} parent=0
    _
  %s9 = ssub.s32 1, %s7
  %s10 = scalar_select 0, %s9, %s7
  $region1: #{c2f_forward.8} parent=0
    #allocation4 [shape = 'u8[8192]{0}', space=vmem, size = 0x2000, scoped, tag = 'input window, operand 0']
    #allocation5 [shape = 'u8[8192]{0}', space=vmem, size = 0x2000, scoped, tag = 'input window, operand 1']
    #allocation6 [shape = 'u8[8192]{0}', space=vmem, size = 0x2000, scoped, tag = 'input window, operand 2']
    #allocation7 [shape = 'u8[16384]{0}', space=vmem, size = 0x4000, scoped, tag = 'input window, operand 3']
    loop: start=0, step=1, limit=6
    $region2: #{c2f_forward.8} parent=1 // loop_pre_header
      _
    $region3: #{c2f_forward.8} parent=1 // loop_header
      %s12 = sphi 0, %s16
      %p13 = scmp.ge.s32.totalorder %s12, 6
      %s19 = sphi 0, %s31
      %s20 = sphi 0, %s27
      %s21 = sphi 0, %s19
      %s22 = sphi 0, %s20
      %s23 = sphi 0, %s21
      %s24 = sphi 0, %s22
      %s36 = sphi 0, %s38
      %s39 = sphi 0, %s36
      %s40 = sphi 0, %s39
      %s56 = sphi 0, %s40
      %s70 = sphi 0, %s72
      %s73 = sphi 0, %s70
      %s74 = sphi 0, %s73
      %s90 = sphi 0, %s74
      %s104 = sphi 0, %s106
      %s107 = sphi 0, %s104
      %s108 = sphi 0, %s107
      %s124 = sphi 0, %s108
      %s132 = sphi 0, %s134
      %s135 = sphi 0, %s132
      %s136 = sphi 0, %s135
      %s152 = sphi 0, %s136
      %s156 = sphi 0, %s156
      %s158 = sphi 0, %s156
      %s159 = sphi 0, %s158
      %s173 = sphi 0, %s159
      %s177 = sphi 0, %s177
      %s179 = sphi 0, %s177
      %s180 = sphi 0, %s179
      %s194 = sphi 0, %s180
      %s202 = sphi 0, %s204
      %s205 = sphi 0, %s202
      %s206 = sphi 0, %s205
      %s222 = sphi 0, %s206
    $region4: #{c2f_forward.8} parent=1 // loop_header_branch
      %15 = sbr.rel (%p13) target = $region8
    $region5: #{c2f_forward.8} parent=1 // loop_body
      %s17 = ssub.s32 %s12, 1
      %s18 = ssub.s32 %s12, 2
      %s25 = sadd.s32 1, %s20
      %p26 = scmp.ge.s32.totalorder %s25, 2
      %s27 = scalar_select %p26, 0, %s25
      %s28 = sadd.s32 1, %s19
      %s29 = scalar_select %p26, %s28, %s19
      %p30 = scmp.ge.s32.totalorder %s29, 2
      %s31 = scalar_select %p30, 0, %s29
      %s32 = ssub.s32 %s19, %s31
      %s33 = ssub.s32 %s20, %s27
      %s34 = sor.u32 %s32, %s33
      %p35 = scmp.eq.s32.totalorder %s34, 0
      %s37 = sadd.s32 %s36, 1
      %s38 = scalar_select %p35, %s36, %s37
      %p41 = pneg %p35
      %p42 = scmp.eq.s32.totalorder %s12, 3
      %p43 = por %p41, %p42
      %p44 = scmp.ne.s32.totalorder %s36, %s39
      %p45 = scmp.eq.s32.totalorder %s12, 0
      %p46 = por %p44, %p45
      %p47 = scmp.ne.s32.totalorder %s36, %s39
      %p48 = scmp.eq.s32.totalorder %s17, 3
      %p49 = por %p47, %p48
      %p50 = scmp.ne.s32.totalorder %s39, %s40
      %p51 = scmp.eq.s32.totalorder %s17, 0
      %p52 = por %p50, %p51
      %p53 = scmp.ne.s32.totalorder %s39, %s40
      %p54 = scmp.eq.s32.totalorder %s18, 3
      %p55 = por %p53, %p54
      %p57 = scmp.ne.s32.totalorder %s40, %s56
      %p58 = scmp.eq.s32.totalorder %s18, 0
      %p59 = por %p57, %p58
      %s60 = ssub.s32 %s20, 1
      %p61 = scmp.gt.s32.totalorder %s60, 0
      %s62 = scalar_select %p61, %s60, 0
      %s63 = ssub.s32 %s27, 1
      %p64 = scmp.gt.s32.totalorder %s63, 0
      %s65 = scalar_select %p64, %s63, 0
      %s66 = ssub.s32 %s19, %s31
      %s67 = ssub.s32 %s62, %s65
      %s68 = sor.u32 %s66, %s67
      %p69 = scmp.eq.s32.totalorder %s68, 0
      %s71 = sadd.s32 %s70, 1
      %s72 = scalar_select %p69, %s70, %s71
      %p75 = pneg %p69
      %p76 = scmp.eq.s32.totalorder %s12, 3
      %p77 = por %p75, %p76
      %p78 = scmp.ne.s32.totalorder %s70, %s73
      %p79 = scmp.eq.s32.totalorder %s12, 0
      %p80 = por %p78, %p79
      %p81 = scmp.ne.s32.totalorder %s70, %s73
      %p82 = scmp.eq.s32.totalorder %s17, 3
      %p83 = por %p81, %p82
      %p84 = scmp.ne.s32.totalorder %s73, %s74
      %p85 = scmp.eq.s32.totalorder %s17, 0
      %p86 = por %p84, %p85
      %p87 = scmp.ne.s32.totalorder %s73, %s74
      %p88 = scmp.eq.s32.totalorder %s18, 3
      %p89 = por %p87, %p88
      %p91 = scmp.ne.s32.totalorder %s74, %s90
      %p92 = scmp.eq.s32.totalorder %s18, 0
      %p93 = por %p91, %p92
      %s94 = sadd.s32 %s20, 1
      %p95 = scmp.lt.s32.totalorder %s94, 1
      %s96 = scalar_select %p95, %s94, 1
      %s97 = sadd.s32 %s27, 1
      %p98 = scmp.lt.s32.totalorder %s97, 1
      %s99 = scalar_select %p98, %s97, 1
      %s100 = ssub.s32 %s19, %s31
      %s101 = ssub.s32 %s96, %s99
      %s102 = sor.u32 %s100, %s101
      %p103 = scmp.eq.s32.totalorder %s102, 0
      %s105 = sadd.s32 %s104, 1
      %s106 = scalar_select %p103, %s104, %s105
      %p109 = pneg %p103
      %p110 = scmp.eq.s32.totalorder %s12, 3
      %p111 = por %p109, %p110
      %p112 = scmp.ne.s32.totalorder %s104, %s107
      %p113 = scmp.eq.s32.totalorder %s12, 0
      %p114 = por %p112, %p113
      %p115 = scmp.ne.s32.totalorder %s104, %s107
      %p116 = scmp.eq.s32.totalorder %s17, 3
      %p117 = por %p115, %p116
      %p118 = scmp.ne.s32.totalorder %s107, %s108
      %p119 = scmp.eq.s32.totalorder %s17, 0
      %p120 = por %p118, %p119
      %p121 = scmp.ne.s32.totalorder %s107, %s108
      %p122 = scmp.eq.s32.totalorder %s18, 3
      %p123 = por %p121, %p122
      %p125 = scmp.ne.s32.totalorder %s108, %s124
      %p126 = scmp.eq.s32.totalorder %s18, 0
      %p127 = por %p125, %p126
      %s128 = ssub.s32 %s19, %s31
      %s129 = ssub.s32 %s20, %s27
      %s130 = sor.u32 %s128, %s129
      %p131 = scmp.eq.s32.totalorder %s130, 0
      %s133 = sadd.s32 %s132, 1
      %s134 = scalar_select %p131, %s132, %s133
      %p137 = pneg %p131
      %p138 = scmp.eq.s32.totalorder %s12, 3
      %p139 = por %p137, %p138
      %p140 = scmp.ne.s32.totalorder %s132, %s135
      %p141 = scmp.eq.s32.totalorder %s12, 0
      %p142 = por %p140, %p141
      %p143 = scmp.ne.s32.totalorder %s132, %s135
      %p144 = scmp.eq.s32.totalorder %s17, 3
      %p145 = por %p143, %p144
      %p146 = scmp.ne.s32.totalorder %s135, %s136
      %p147 = scmp.eq.s32.totalorder %s17, 0
      %p148 = por %p146, %p147
      %p149 = scmp.ne.s32.totalorder %s135, %s136
      %p150 = scmp.eq.s32.totalorder %s18, 3
      %p151 = por %p149, %p150
      %p153 = scmp.ne.s32.totalorder %s136, %s152
      %p154 = scmp.eq.s32.totalorder %s18, 0
      %p155 = por %p153, %p154
      %s157 = sadd.s32 %s156, 1
      %p160 = scmp.eq.s32.totalorder %s12, 3
      %p161 = scmp.ne.s32.totalorder %s156, %s158
      %p162 = scmp.eq.s32.totalorder %s12, 0
      %p163 = por %p161, %p162
      %p164 = scmp.ne.s32.totalorder %s156, %s158
      %p165 = scmp.eq.s32.totalorder %s17, 3
      %p166 = por %p164, %p165
      %p167 = scmp.ne.s32.totalorder %s158, %s159
      %p168 = scmp.eq.s32.totalorder %s17, 0
      %p169 = por %p167, %p168
      %p170 = scmp.ne.s32.totalorder %s158, %s159
      %p171 = scmp.eq.s32.totalorder %s18, 3
      %p172 = por %p170, %p171
      %p174 = scmp.ne.s32.totalorder %s159, %s173
      %p175 = scmp.eq.s32.totalorder %s18, 0
      %p176 = por %p174, %p175
      %s178 = sadd.s32 %s177, 1
      %p181 = scmp.eq.s32.totalorder %s12, 3
      %p182 = scmp.ne.s32.totalorder %s177, %s179
      %p183 = scmp.eq.s32.totalorder %s12, 0
      %p184 = por %p182, %p183
      %p185 = scmp.ne.s32.totalorder %s177, %s179
      %p186 = scmp.eq.s32.totalorder %s17, 3
      %p187 = por %p185, %p186
      %p188 = scmp.ne.s32.totalorder %s179, %s180
      %p189 = scmp.eq.s32.totalorder %s17, 0
      %p190 = por %p188, %p189
      %p191 = scmp.ne.s32.totalorder %s179, %s180
      %p192 = scmp.eq.s32.totalorder %s18, 3
      %p193 = por %p191, %p192
      %p195 = scmp.ne.s32.totalorder %s180, %s194
      %p196 = scmp.eq.s32.totalorder %s18, 0
      %p197 = por %p195, %p196
      %s198 = ssub.s32 %s19, %s31
      %s199 = ssub.s32 %s20, %s27
      %s200 = sor.u32 %s198, %s199
      %p201 = scmp.eq.s32.totalorder %s200, 0
      %s203 = sadd.s32 %s202, 1
      %s204 = scalar_select %p201, %s202, %s203
      %p207 = pneg %p201
      %p208 = scmp.eq.s32.totalorder %s12, 3
      %p209 = por %p207, %p208
      %p210 = scmp.ne.s32.totalorder %s202, %s205
      %p211 = scmp.eq.s32.totalorder %s12, 0
      %p212 = por %p210, %p211
      %p213 = scmp.ne.s32.totalorder %s202, %s205
      %p214 = scmp.eq.s32.totalorder %s17, 3
      %p215 = por %p213, %p214
      %p216 = scmp.ne.s32.totalorder %s205, %s206
      %p217 = scmp.eq.s32.totalorder %s17, 0
      %p218 = por %p216, %p217
      %p219 = scmp.ne.s32.totalorder %s205, %s206
      %p220 = scmp.eq.s32.totalorder %s18, 3
      %p221 = por %p219, %p220
      %p223 = scmp.ne.s32.totalorder %s206, %s222
      %p224 = scmp.eq.s32.totalorder %s18, 0
      %p225 = por %p223, %p224
      %p226 = scmp.le.s32.totalorder 1, %s12
      %p227 = scmp.lt.s32.totalorder %s12, 5
      %p228 = pnand %p226, %p227
      %p229 = pneg %p228
      // Predicated region
      $region9: #{c2f_forward.8} parent=5 // pred_check
        _
      $region10: #{c2f_forward.8} parent=5 // pred_check_branch
        %231 = sbr.rel (%p228) target = $region12
      $region11: #{c2f_forward.8} parent=5 // pred_region
        %s232 = ssub.s32 %s12, 1
        // Predicated region
        $region13: #{c2f_forward.8} parent=11 // pred_check
          %p233 = pneg %p169
        $region14: #{c2f_forward.8} parent=11 // pred_check_branch
          %235 = sbr.rel (%p233) target = $region16
        $region15: #{c2f_forward.8} parent=11 // pred_region
          _
        $region16: #{c2f_forward.8} parent=11 // pred_fallthru
          _
        // Predicated region
        $region17: #{c2f_forward.8} parent=11 // pred_check
          %p236 = pneg %p190
        $region18: #{c2f_forward.8} parent=11 // pred_check_branch
          %238 = sbr.rel (%p236) target = $region20
        $region19: #{c2f_forward.8} parent=11 // pred_region
          _
        $region20: #{c2f_forward.8} parent=11 // pred_fallthru
          _
      $region12: #{c2f_forward.8} parent=5 // pred_fallthru
        _
      %p239 = scmp.lt.s32.totalorder %s12, 4
      // Predicated region
      $region21: #{c2f_forward.8} parent=5 // pred_check
        %p240 = pneg %p239
      $region22: #{c2f_forward.8} parent=5 // pred_check_branch
        %242 = sbr.rel (%p240) target = $region24
      $region23: #{c2f_forward.8} parent=5 // pred_region
        // Predicated region
        $region25: #{c2f_forward.8} parent=23 // pred_check
          %p243 = pneg %p46
        $region26: #{c2f_forward.8} parent=23 // pred_check_branch
          %245 = sbr.rel (%p243) target = $region28
        $region27: #{c2f_forward.8} parent=23 // pred_region
          %s246 = sand.u32 %s36, 1
          %s247 = sand.u32 %s36, 1
          %s248 = smul.addr %s247, 8
          %s249 = scalar_lea.vmem [#allocation4], %s248
          %s250 = smul.addr %s19, 4
          %s251 = sadd.s32 %s20, %s250
          %s252 = smul.addr %s251, 4
          %s253 = scalar_lea.vmem %s0, %s252
          // Predicated region
          $region29: #{c2f_forward.8} parent=27 // pred_check
            _
          $region30: #{c2f_forward.8} parent=27 // pred_check_branch
            %255 = sbr.rel (0) target = $region32
          $region31: #{c2f_forward.8} parent=27 // pred_region
            // Predicated region
            $region33: #{c2f_forward.8} parent=31 // pred_check
              _
            $region34: #{c2f_forward.8} parent=31 // pred_check_branch
              %257 = sbr.rel target = $region36
            $region35: #{c2f_forward.8} parent=31 // pred_region
              // Predicated region
              $region48: #{c2f_forward.8} parent=35 // pred_check
                _
              $region49: #{c2f_forward.8} parent=35 // pred_check_branch
                %275 = sbr.rel (0) target = $region51
              $region50: #{c2f_forward.8} parent=35 // pred_region
                loop: start=0, step=1, limit=1
                $region52: #{c2f_forward.8} parent=50 // loop_pre_header
                  _
                $region53: #{c2f_forward.8} parent=50 // loop_header
                  %s277 = sphi 0, %s281
                  %p278 = scmp.ge.s32.totalorder %s277, 1
                  %s282 = sphi %s253, %s253
                  %s283 = sphi %s249, %s249
                $region54: #{c2f_forward.8} parent=50 // loop_header_branch
                  %280 = sbr.rel (%p278) target = $region58
                $region55: #{c2f_forward.8} parent=50 // loop_body
                  _
                $region56: #{c2f_forward.8} parent=50 // loop_footer
                  %s281 = sadd.s32 1, %s277
                $region57: #{c2f_forward.8} parent=50 // loop_footer_branch
                  %276 = sbr.rel target = $region53
                $region58: #{c2f_forward.8} parent=50 // loop_exit
                  _
                %s285 = ssub.s32 16, 1
                loop: start=0, step=1, limit=1
                $region59: #{c2f_forward.8} parent=50 // loop_pre_header
                  _
                $region60: #{c2f_forward.8} parent=50 // loop_header
                  %s287 = sphi 0, %s291
                  %p288 = scmp.ge.s32.totalorder %s287, 1
                  %s292 = sphi %s253, %s253
                  %s293 = sphi %s249, %s249
                $region61: #{c2f_forward.8} parent=50 // loop_header_branch
                  %290 = sbr.rel (%p288) target = $region65
                $region62: #{c2f_forward.8} parent=50 // loop_body
                  %v294 = vld [vmem:[%s292] sm:%s285]
                  %295 = vst [vmem:[%s293] sm:%s285] %v294
                  %v296 = vld [vmem:[%s292 + $0x8] sm:%s285]
                  %297 = vst [vmem:[%s293 + $0x4] sm:%s285] %v296
                $region63: #{c2f_forward.8} parent=50 // loop_footer
                  %s291 = sadd.s32 1, %s287
                $region64: #{c2f_forward.8} parent=50 // loop_footer_branch
                  %286 = sbr.rel target = $region60
                $region65: #{c2f_forward.8} parent=50 // loop_exit
                  _
              $region51: #{c2f_forward.8} parent=35 // pred_fallthru
                _
            $region36: #{c2f_forward.8} parent=31 // pred_fallthru
              _
            // Predicated region
            $region37: #{c2f_forward.8} parent=31 // pred_check
              _
            $region38: #{c2f_forward.8} parent=31 // pred_check_branch
              %259 = sbr.rel (0) target = $region40
            $region39: #{c2f_forward.8} parent=31 // pred_region
              %s261 = ssub.s32 16, 1
              loop: start=0, step=1, limit=1
              $region41: #{c2f_forward.8} parent=39 // loop_pre_header
                _
              $region42: #{c2f_forward.8} parent=39 // loop_header
                %s263 = sphi 0, %s267
                %p264 = scmp.ge.s32.totalorder %s263, 1
                %s268 = sphi %s253, %s253
                %s269 = sphi %s249, %s249
              $region43: #{c2f_forward.8} parent=39 // loop_header_branch
                %266 = sbr.rel (%p264) target = $region47
              $region44: #{c2f_forward.8} parent=39 // loop_body
                %v270 = vld [vmem:[%s268] sm:%s261]
                %271 = vst [vmem:[%s269] sm:%s261] %v270
                %v272 = vld [vmem:[%s268 + $0x8] sm:%s261]
                %273 = vst [vmem:[%s269 + $0x4] sm:%s261] %v272
              $region45: #{c2f_forward.8} parent=39 // loop_footer
                %s267 = sadd.s32 1, %s263
              $region46: #{c2f_forward.8} parent=39 // loop_footer_branch
                %262 = sbr.rel target = $region42
              $region47: #{c2f_forward.8} parent=39 // loop_exit
                _
            $region40: #{c2f_forward.8} parent=31 // pred_fallthru
              _
          $region32: #{c2f_forward.8} parent=27 // pred_fallthru
            _
          %298 = vnop
        $region28: #{c2f_forward.8} parent=23 // pred_fallthru
          _
        // Predicated region
        $region66: #{c2f_forward.8} parent=23 // pred_check
          %p299 = pneg %p80
        $region67: #{c2f_forward.8} parent=23 // pred_check_branch
          %301 = sbr.rel (%p299) target = $region69
        $region68: #{c2f_forward.8} parent=23 // pred_region
          %s302 = sand.u32 %s70, 1
          %s303 = sand.u32 %s70, 1
          %s304 = smul.addr %s303, 8
          %s305 = scalar_lea.vmem [#allocation5], %s304
          %s306 = ssub.s32 %s20, 1
          %p307 = scmp.gt.s32.totalorder %s306, 0
          %s308 = scalar_select %p307, %s306, 0
          %s309 = smul.addr %s19, 4
          %s310 = sadd.s32 %s308, %s309
          %s311 = smul.addr %s310, 4
          %s312 = scalar_lea.vmem %s1, %s311
          // Predicated region
          $region70: #{c2f_forward.8} parent=68 // pred_check
            _
          $region71: #{c2f_forward.8} parent=68 // pred_check_branch
            %314 = sbr.rel (0) target = $region73
          $region72: #{c2f_forward.8} parent=68 // pred_region
            // Predicated region
            $region74: #{c2f_forward.8} parent=72 // pred_check
              _
            $region75: #{c2f_forward.8} parent=72 // pred_check_branch
              %316 = sbr.rel target = $region77
            $region76: #{c2f_forward.8} parent=72 // pred_region
              // Predicated region
              $region89: #{c2f_forward.8} parent=76 // pred_check
                _
              $region90: #{c2f_forward.8} parent=76 // pred_check_branch
                %334 = sbr.rel (0) target = $region92
              $region91: #{c2f_forward.8} parent=76 // pred_region
                loop: start=0, step=1, limit=1
                $region93: #{c2f_forward.8} parent=91 // loop_pre_header
                  _
                $region94: #{c2f_forward.8} parent=91 // loop_header
                  %s336 = sphi 0, %s340
                  %p337 = scmp.ge.s32.totalorder %s336, 1
                  %s341 = sphi %s312, %s312
                  %s342 = sphi %s305, %s305
                $region95: #{c2f_forward.8} parent=91 // loop_header_branch
                  %339 = sbr.rel (%p337) target = $region99
                $region96: #{c2f_forward.8} parent=91 // loop_body
                  _
                $region97: #{c2f_forward.8} parent=91 // loop_footer
                  %s340 = sadd.s32 1, %s336
                $region98: #{c2f_forward.8} parent=91 // loop_footer_branch
                  %335 = sbr.rel target = $region94
                $region99: #{c2f_forward.8} parent=91 // loop_exit
                  _
                %s344 = ssub.s32 16, 1
                loop: start=0, step=1, limit=1
                $region100: #{c2f_forward.8} parent=91 // loop_pre_header
                  _
                $region101: #{c2f_forward.8} parent=91 // loop_header
                  %s346 = sphi 0, %s350
                  %p347 = scmp.ge.s32.totalorder %s346, 1
                  %s351 = sphi %s312, %s312
                  %s352 = sphi %s305, %s305
                $region102: #{c2f_forward.8} parent=91 // loop_header_branch
                  %349 = sbr.rel (%p347) target = $region106
                $region103: #{c2f_forward.8} parent=91 // loop_body
                  %v353 = vld [vmem:[%s351] sm:%s344]
                  %354 = vst [vmem:[%s352] sm:%s344] %v353
                  %v355 = vld [vmem:[%s351 + $0x8] sm:%s344]
                  %356 = vst [vmem:[%s352 + $0x4] sm:%s344] %v355
                $region104: #{c2f_forward.8} parent=91 // loop_footer
                  %s350 = sadd.s32 1, %s346
                $region105: #{c2f_forward.8} parent=91 // loop_footer_branch
                  %345 = sbr.rel target = $region101
                $region106: #{c2f_forward.8} parent=91 // loop_exit
                  _
              $region92: #{c2f_forward.8} parent=76 // pred_fallthru
                _
            $region77: #{c2f_forward.8} parent=72 // pred_fallthru
              _
            // Predicated region
            $region78: #{c2f_forward.8} parent=72 // pred_check
              _
            $region79: #{c2f_forward.8} parent=72 // pred_check_branch
              %318 = sbr.rel (0) target = $region81
            $region80: #{c2f_forward.8} parent=72 // pred_region
              %s320 = ssub.s32 16, 1
              loop: start=0, step=1, limit=1
              $region82: #{c2f_forward.8} parent=80 // loop_pre_header
                _
              $region83: #{c2f_forward.8} parent=80 // loop_header
                %s322 = sphi 0, %s326
                %p323 = scmp.ge.s32.totalorder %s322, 1
                %s327 = sphi %s312, %s312
                %s328 = sphi %s305, %s305
              $region84: #{c2f_forward.8} parent=80 // loop_header_branch
                %325 = sbr.rel (%p323) target = $region88
              $region85: #{c2f_forward.8} parent=80 // loop_body
                %v329 = vld [vmem:[%s327] sm:%s320]
                %330 = vst [vmem:[%s328] sm:%s320] %v329
                %v331 = vld [vmem:[%s327 + $0x8] sm:%s320]
                %332 = vst [vmem:[%s328 + $0x4] sm:%s320] %v331
              $region86: #{c2f_forward.8} parent=80 // loop_footer
                %s326 = sadd.s32 1, %s322
              $region87: #{c2f_forward.8} parent=80 // loop_footer_branch
                %321 = sbr.rel target = $region83
              $region88: #{c2f_forward.8} parent=80 // loop_exit
                _
            $region81: #{c2f_forward.8} parent=72 // pred_fallthru
              _
          $region73: #{c2f_forward.8} parent=68 // pred_fallthru
            _
          %357 = vnop
        $region69: #{c2f_forward.8} parent=23 // pred_fallthru
          _
        // Predicated region
        $region107: #{c2f_forward.8} parent=23 // pred_check
          %p358 = pneg %p114
        $region108: #{c2f_forward.8} parent=23 // pred_check_branch
          %360 = sbr.rel (%p358) target = $region110
        $region109: #{c2f_forward.8} parent=23 // pred_region
          %s361 = sand.u32 %s104, 1
          %s362 = sand.u32 %s104, 1
          %s363 = smul.addr %s362, 8
          %s364 = scalar_lea.vmem [#allocation6], %s363
          %s365 = sadd.s32 %s20, 1
          %p366 = scmp.lt.s32.totalorder %s365, 1
          %s367 = scalar_select %p366, %s365, 1
          %s368 = smul.addr %s19, 4
          %s369 = sadd.s32 %s367, %s368
          %s370 = smul.addr %s369, 4
          %s371 = scalar_lea.vmem %s2, %s370
          // Predicated region
          $region111: #{c2f_forward.8} parent=109 // pred_check
            _
          $region112: #{c2f_forward.8} parent=109 // pred_check_branch
            %373 = sbr.rel (0) target = $region114
          $region113: #{c2f_forward.8} parent=109 // pred_region
            // Predicated region
            $region115: #{c2f_forward.8} parent=113 // pred_check
              _
            $region116: #{c2f_forward.8} parent=113 // pred_check_branch
              %375 = sbr.rel target = $region118
            $region117: #{c2f_forward.8} parent=113 // pred_region
              // Predicated region
              $region130: #{c2f_forward.8} parent=117 // pred_check
                _
              $region131: #{c2f_forward.8} parent=117 // pred_check_branch
                %393 = sbr.rel (0) target = $region133
              $region132: #{c2f_forward.8} parent=117 // pred_region
                loop: start=0, step=1, limit=1
                $region134: #{c2f_forward.8} parent=132 // loop_pre_header
                  _
                $region135: #{c2f_forward.8} parent=132 // loop_header
                  %s395 = sphi 0, %s399
                  %p396 = scmp.ge.s32.totalorder %s395, 1
                  %s400 = sphi %s371, %s371
                  %s401 = sphi %s364, %s364
                $region136: #{c2f_forward.8} parent=132 // loop_header_branch
                  %398 = sbr.rel (%p396) target = $region140
                $region137: #{c2f_forward.8} parent=132 // loop_body
                  _
                $region138: #{c2f_forward.8} parent=132 // loop_footer
                  %s399 = sadd.s32 1, %s395
                $region139: #{c2f_forward.8} parent=132 // loop_footer_branch
                  %394 = sbr.rel target = $region135
                $region140: #{c2f_forward.8} parent=132 // loop_exit
                  _
                %s403 = ssub.s32 16, 1
                loop: start=0, step=1, limit=1
                $region141: #{c2f_forward.8} parent=132 // loop_pre_header
                  _
                $region142: #{c2f_forward.8} parent=132 // loop_header
                  %s405 = sphi 0, %s409
                  %p406 = scmp.ge.s32.totalorder %s405, 1
                  %s410 = sphi %s371, %s371
                  %s411 = sphi %s364, %s364
                $region143: #{c2f_forward.8} parent=132 // loop_header_branch
                  %408 = sbr.rel (%p406) target = $region147
                $region144: #{c2f_forward.8} parent=132 // loop_body
                  %v412 = vld [vmem:[%s410] sm:%s403]
                  %413 = vst [vmem:[%s411] sm:%s403] %v412
                  %v414 = vld [vmem:[%s410 + $0x8] sm:%s403]
                  %415 = vst [vmem:[%s411 + $0x4] sm:%s403] %v414
                $region145: #{c2f_forward.8} parent=132 // loop_footer
                  %s409 = sadd.s32 1, %s405
                $region146: #{c2f_forward.8} parent=132 // loop_footer_branch
                  %404 = sbr.rel target = $region142
                $region147: #{c2f_forward.8} parent=132 // loop_exit
                  _
              $region133: #{c2f_forward.8} parent=117 // pred_fallthru
                _
            $region118: #{c2f_forward.8} parent=113 // pred_fallthru
              _
            // Predicated region
            $region119: #{c2f_forward.8} parent=113 // pred_check
              _
            $region120: #{c2f_forward.8} parent=113 // pred_check_branch
              %377 = sbr.rel (0) target = $region122
            $region121: #{c2f_forward.8} parent=113 // pred_region
              %s379 = ssub.s32 16, 1
              loop: start=0, step=1, limit=1
              $region123: #{c2f_forward.8} parent=121 // loop_pre_header
                _
              $region124: #{c2f_forward.8} parent=121 // loop_header
                %s381 = sphi 0, %s385
                %p382 = scmp.ge.s32.totalorder %s381, 1
                %s386 = sphi %s371, %s371
                %s387 = sphi %s364, %s364
              $region125: #{c2f_forward.8} parent=121 // loop_header_branch
                %384 = sbr.rel (%p382) target = $region129
              $region126: #{c2f_forward.8} parent=121 // loop_body
                %v388 = vld [vmem:[%s386] sm:%s379]
                %389 = vst [vmem:[%s387] sm:%s379] %v388
                %v390 = vld [vmem:[%s386 + $0x8] sm:%s379]
                %391 = vst [vmem:[%s387 + $0x4] sm:%s379] %v390
              $region127: #{c2f_forward.8} parent=121 // loop_footer
                %s385 = sadd.s32 1, %s381
              $region128: #{c2f_forward.8} parent=121 // loop_footer_branch
                %380 = sbr.rel target = $region124
              $region129: #{c2f_forward.8} parent=121 // loop_exit
                _
            $region122: #{c2f_forward.8} parent=113 // pred_fallthru
              _
          $region114: #{c2f_forward.8} parent=109 // pred_fallthru
            _
          %416 = vnop
        $region110: #{c2f_forward.8} parent=23 // pred_fallthru
          _
        // Predicated region
        $region148: #{c2f_forward.8} parent=23 // pred_check
          %p417 = pneg %p142
        $region149: #{c2f_forward.8} parent=23 // pred_check_branch
          %419 = sbr.rel (%p417) target = $region151
        $region150: #{c2f_forward.8} parent=23 // pred_region
          %s420 = sand.u32 %s132, 1
          %s421 = sand.u32 %s132, 1
          %s422 = smul.addr %s421, 16
          %s423 = scalar_lea.vmem [#allocation7], %s422
          %s424 = smul.addr %s19, 8
          %s425 = sadd.s32 %s20, %s424
          %s426 = smul.addr %s425, 4
          %s427 = scalar_lea.vmem %s3, %s426
          // Predicated region
          $region152: #{c2f_forward.8} parent=150 // pred_check
            _
          $region153: #{c2f_forward.8} parent=150 // pred_check_branch
            %429 = sbr.rel (0) target = $region155
          $region154: #{c2f_forward.8} parent=150 // pred_region
            // Predicated region
            $region156: #{c2f_forward.8} parent=154 // pred_check
              _
            $region157: #{c2f_forward.8} parent=154 // pred_check_branch
              %431 = sbr.rel target = $region159
            $region158: #{c2f_forward.8} parent=154 // pred_region
              // Predicated region
              $region171: #{c2f_forward.8} parent=158 // pred_check
                _
              $region172: #{c2f_forward.8} parent=158 // pred_check_branch
                %453 = sbr.rel (0) target = $region174
              $region173: #{c2f_forward.8} parent=158 // pred_region
                loop: start=0, step=1, limit=1
                $region175: #{c2f_forward.8} parent=173 // loop_pre_header
                  _
                $region176: #{c2f_forward.8} parent=173 // loop_header
                  %s455 = sphi 0, %s459
                  %p456 = scmp.ge.s32.totalorder %s455, 1
                  %s460 = sphi %s427, %s427
                  %s461 = sphi %s423, %s423
                $region177: #{c2f_forward.8} parent=173 // loop_header_branch
                  %458 = sbr.rel (%p456) target = $region181
                $region178: #{c2f_forward.8} parent=173 // loop_body
                  _
                $region179: #{c2f_forward.8} parent=173 // loop_footer
                  %s459 = sadd.s32 1, %s455
                $region180: #{c2f_forward.8} parent=173 // loop_footer_branch
                  %454 = sbr.rel target = $region176
                $region181: #{c2f_forward.8} parent=173 // loop_exit
                  _
                %s463 = ssub.s32 16, 1
                loop: start=0, step=1, limit=1
                $region182: #{c2f_forward.8} parent=173 // loop_pre_header
                  _
                $region183: #{c2f_forward.8} parent=173 // loop_header
                  %s465 = sphi 0, %s469
                  %p466 = scmp.ge.s32.totalorder %s465, 1
                  %s470 = sphi %s427, %s427
                  %s471 = sphi %s423, %s423
                $region184: #{c2f_forward.8} parent=173 // loop_header_branch
                  %468 = sbr.rel (%p466) target = $region188
                $region185: #{c2f_forward.8} parent=173 // loop_body
                  %v472 = vld [vmem:[%s470] sm:%s463]
                  %473 = vst [vmem:[%s471] sm:%s463] %v472
                  %v474 = vld [vmem:[%s470 + $0x8] sm:%s463]
                  %475 = vst [vmem:[%s471 + $0x4] sm:%s463] %v474
                  %v476 = vld [vmem:[%s470 + $0x10] sm:%s463]
                  %477 = vst [vmem:[%s471 + $0x8] sm:%s463] %v476
                  %v478 = vld [vmem:[%s470 + $0x18] sm:%s463]
                  %479 = vst [vmem:[%s471 + $0xc] sm:%s463] %v478
                $region186: #{c2f_forward.8} parent=173 // loop_footer
                  %s469 = sadd.s32 1, %s465
                $region187: #{c2f_forward.8} parent=173 // loop_footer_branch
                  %464 = sbr.rel target = $region183
                $region188: #{c2f_forward.8} parent=173 // loop_exit
                  _
              $region174: #{c2f_forward.8} parent=158 // pred_fallthru
                _
            $region159: #{c2f_forward.8} parent=154 // pred_fallthru
              _
            // Predicated region
            $region160: #{c2f_forward.8} parent=154 // pred_check
              _
            $region161: #{c2f_forward.8} parent=154 // pred_check_branch
              %433 = sbr.rel (0) target = $region163
            $region162: #{c2f_forward.8} parent=154 // pred_region
              %s435 = ssub.s32 16, 1
              loop: start=0, step=1, limit=1
              $region164: #{c2f_forward.8} parent=162 // loop_pre_header
                _
              $region165: #{c2f_forward.8} parent=162 // loop_header
                %s437 = sphi 0, %s441
                %p438 = scmp.ge.s32.totalorder %s437, 1
                %s442 = sphi %s427, %s427
                %s443 = sphi %s423, %s423
              $region166: #{c2f_forward.8} parent=162 // loop_header_branch
                %440 = sbr.rel (%p438) target = $region170
              $region167: #{c2f_forward.8} parent=162 // loop_body
                %v444 = vld [vmem:[%s442] sm:%s435]
                %445 = vst [vmem:[%s443] sm:%s435] %v444
                %v446 = vld [vmem:[%s442 + $0x8] sm:%s435]
                %447 = vst [vmem:[%s443 + $0x4] sm:%s435] %v446
                %v448 = vld [vmem:[%s442 + $0x10] sm:%s435]
                %449 = vst [vmem:[%s443 + $0x8] sm:%s435] %v448
                %v450 = vld [vmem:[%s442 + $0x18] sm:%s435]
                %451 = vst [vmem:[%s443 + $0xc] sm:%s435] %v450
              $region168: #{c2f_forward.8} parent=162 // loop_footer
                %s441 = sadd.s32 1, %s437
              $region169: #{c2f_forward.8} parent=162 // loop_footer_branch
                %436 = sbr.rel target = $region165
              $region170: #{c2f_forward.8} parent=162 // loop_exit
                _
            $region163: #{c2f_forward.8} parent=154 // pred_fallthru
              _
          $region155: #{c2f_forward.8} parent=150 // pred_fallthru
            _
          %480 = vnop
        $region151: #{c2f_forward.8} parent=23 // pred_fallthru
          _
      $region24: #{c2f_forward.8} parent=5 // pred_fallthru
        _
      %p481 = scmp.le.s32.totalorder 1, %s12
      %p482 = scmp.lt.s32.totalorder %s12, 5
      %p483 = pnand %p481, %p482
      %p484 = pneg %p483
      // Predicated region
      $region189: #{c2f_forward.8} parent=5 // pred_check
        _
      $region190: #{c2f_forward.8} parent=5 // pred_check_branch
        %486 = sbr.rel (%p483) target = $region192
      $region191: #{c2f_forward.8} parent=5 // pred_region
        %s487 = ssub.s32 %s12, 1
        %s488 = sand.u32 %s39, 1
        %s489 = sand.u32 %s39, 1
        %s490 = smul.addr %s489, 8
        %s491 = scalar_lea.vmem [#allocation4], %s490
        // Predicated region
        $region193: #{c2f_forward.8} parent=191 // pred_check
          %p492 = pneg %p52
        $region194: #{c2f_forward.8} parent=191 // pred_check_branch
          %494 = sbr.rel (%p492) target = $region196
        $region195: #{c2f_forward.8} parent=191 // pred_region
          _
        $region196: #{c2f_forward.8} parent=191 // pred_fallthru
          _
        %s495 = sand.u32 %s73, 1
        %s496 = sand.u32 %s73, 1
        %s497 = smul.addr %s496, 8
        %s498 = scalar_lea.vmem [#allocation5], %s497
        // Predicated region
        $region197: #{c2f_forward.8} parent=191 // pred_check
          %p499 = pneg %p86
        $region198: #{c2f_forward.8} parent=191 // pred_check_branch
          %501 = sbr.rel (%p499) target = $region200
        $region199: #{c2f_forward.8} parent=191 // pred_region
          _
        $region200: #{c2f_forward.8} parent=191 // pred_fallthru
          _
        %s502 = sand.u32 %s107, 1
        %s503 = sand.u32 %s107, 1
        %s504 = smul.addr %s503, 8
        %s505 = scalar_lea.vmem [#allocation6], %s504
        // Predicated region
        $region201: #{c2f_forward.8} parent=191 // pred_check
          %p506 = pneg %p120
        $region202: #{c2f_forward.8} parent=191 // pred_check_branch
          %508 = sbr.rel (%p506) target = $region204
        $region203: #{c2f_forward.8} parent=191 // pred_region
          _
        $region204: #{c2f_forward.8} parent=191 // pred_fallthru
          _
        %s509 = sand.u32 %s135, 1
        %s510 = sand.u32 %s135, 1
        %s511 = smul.addr %s510, 16
        %s512 = scalar_lea.vmem [#allocation7], %s511
        // Predicated region
        $region205: #{c2f_forward.8} parent=191 // pred_check
          %p513 = pneg %p148
        $region206: #{c2f_forward.8} parent=191 // pred_check_branch
          %515 = sbr.rel (%p513) target = $region208
        $region207: #{c2f_forward.8} parent=191 // pred_region
          _
        $region208: #{c2f_forward.8} parent=191 // pred_fallthru
          _
        %s516 = sand.u32 %s39, 1
        %s517 = sand.u32 %s39, 1
        %s518 = smul.addr %s517, 8
        %s519 = scalar_lea.vmem [#allocation4], %s518
        %p520 = pneg %p52
        %p521 = pneg %p49
        %s522 = sand.u32 %s73, 1
        %s523 = sand.u32 %s73, 1
        %s524 = smul.addr %s523, 8
        %s525 = scalar_lea.vmem [#allocation5], %s524
        %p526 = pneg %p86
        %p527 = pneg %p83
        %s528 = sand.u32 %s107, 1
        %s529 = sand.u32 %s107, 1
        %s530 = smul.addr %s529, 8
        %s531 = scalar_lea.vmem [#allocation6], %s530
        %p532 = pneg %p120
        %p533 = pneg %p117
        %s534 = sand.u32 %s135, 1
        %s535 = sand.u32 %s135, 1
        %s536 = smul.addr %s535, 16
        %s537 = scalar_lea.vmem [#allocation7], %s536
        %p538 = pneg %p148
        %p539 = pneg %p145
        %p540 = pneg %p169
        %p541 = pneg %p166
        %p542 = pneg %p190
        %p543 = pneg %p187
        %p544 = pneg %p218
        %p545 = pneg %p215
        %p546 = scmp.lt.s32.totalorder %s21, 1
        %s547 = scalar_select %p546, %s21, 1
        %p548 = scmp.lt.s32.totalorder %s22, 1
        %s549 = scalar_select %p548, %s22, 1
        %s550 = smul.addr %s547, 2
        %s551 = sadd.s32 %s549, %s550
        %s552 = scalar_lea.vmem %s6, %s551
        %s553 = ssub.s32 %s22, 1
        %p554 = scmp.gt.s32.totalorder %s553, 0
        %s555 = scalar_select %p554, %s553, 0
        %s556 = sadd.s32 %s22, 1
        %p557 = scmp.lt.s32.totalorder %s556, 1
        %s558 = scalar_select %p557, %s556, 1
        %p559 = scmp.lt.s32.totalorder %s21, 1
        %s560 = scalar_select %p559, %s21, 1
        %p561 = scmp.lt.s32.totalorder %s22, 1
        %s562 = scalar_select %p561, %s22, 1
        %s563 = smul.addr %s560, 2
        %s564 = sadd.s32 %s562, %s563
        %s565 = scalar_lea.vmem %s6, %s564
        %vm567 = vcmask 139264
        %vm568 = vsmask.f32 256
        %vm569 = vmand %vm567, %vm568
        %v570 = vld [vmem:[#allocation2] sm:$0x1]
        %v571 = vsel %vm569, 0, %v570
        %572 = vst [vmem:[#allocation2] sm:$0x1] %v571
        %v573 = vld [vmem:[#allocation2 + $0x8] sm:$0x1]
        %v574 = vsel %vm569, 0, %v573
        %575 = vst [vmem:[#allocation2 + $0x8] sm:$0x1] %v574
        %vm576 = vsmask.f32 7938
        %vm577 = vmand %vm567, %vm576
        %v578 = vld [vmem:[#allocation2 + $0x4] sm:$0x1]
        %v579 = vsel %vm577, 0, %v578
        %580 = vst [vmem:[#allocation2 + $0x4] sm:$0x1] %v579
        %v581 = vld [vmem:[#allocation2 + $0xc] sm:$0x1]
        %v582 = vsel %vm577, 0, %v581
        %583 = vst [vmem:[#allocation2 + $0xc] sm:$0x1] %v582
        %vm584 = vcmask 3072
        %585 = vst.msk [vmem:[#allocation2] sm:$0xf] %vm584, 0
        %vm586 = vcmask 0
        %587 = vst.msk [vmem:[#allocation2 + $0x4] sm:$0x1] %vm586, 0
        %588 = vst.msk [vmem:[#allocation2 + $0x8] sm:$0xf] %vm584, 0
        %589 = vst.msk [vmem:[#allocation2 + $0xc] sm:$0x1] %vm586, 0
        %vm590 = vcmask 142472
        %591 = vst.msk [vmem:[#allocation2] sm:$0xf] %vm590, 0
        %vm592 = vcmask 139400
        %593 = vst.msk [vmem:[#allocation2 + $0x4] sm:$0x1] %vm592, 0
        %594 = vst.msk [vmem:[#allocation2 + $0x8] sm:$0xf] %vm590, 0
        %595 = vst.msk [vmem:[#allocation2 + $0xc] sm:$0x1] %vm592, 0
        %v596 = vld [vmem:[%s491] sm:$0xf]
        %v597 = vld [vmem:[%s491 + $0x4] sm:$0xf]
        %v599 = vshrl.u32 %v596, 16
        %v601 = vrot.slane %v599, 7
        %v602 = vshll.u32 %v596, 16
        %v604 = vor.u32 %v601, %v602
        %v605 = vrot.slane %v601, 4
        %v607 = vshrl.u32 %v597, 16
        %v609 = vrot.slane %v607, 7
        %v610 = vshll.u32 %v597, 16
        %v612 = vor.u32 %v609, %v610
        %v613 = vrot.slane %v609, 4
        %614 = vrot.lane.b32.xlu0 %v604, 1
        %v615 = vpop.permute.xlu0 %614
        %616 = vrot.lane.b32.xlu0 %v605, 1
        %v617 = vpop.permute.xlu0 %616
        %618 = vrot.lane.b32.xlu0 %v612, 1
        %v619 = vpop.permute.xlu0 %618
        %620 = vrot.lane.b32.xlu0 %v613, 1
        %v621 = vpop.permute.xlu0 %620
        %vm626 = vcmask 134152
        %vm627 = vmand %vm626, %vm576
        %v628 = vld [vmem:[#allocation2] sm:$0xf]
        %v629 = vsel %vm627, %v615, %v628
        %630 = vst [vmem:[#allocation2] sm:$0xf] %v629
        %vm631 = vcmask 131080
        %vm632 = vmand %vm631, %vm568
        %v633 = vld [vmem:[#allocation2 + $0x4] sm:$0x1]
        %v634 = vsel %vm632, %v617, %v633
        %635 = vst [vmem:[#allocation2 + $0x4] sm:$0x1] %v634
        %v636 = vld [vmem:[#allocation2 + $0x8] sm:$0xf]
        %v637 = vsel %vm627, %v619, %v636
        %638 = vst [vmem:[#allocation2 + $0x8] sm:$0xf] %v637
        %v639 = vld [vmem:[#allocation2 + $0xc] sm:$0x1]
        %v640 = vsel %vm632, %v621, %v639
        %641 = vst [vmem:[#allocation2 + $0xc] sm:$0x1] %v640
        %p642 = scmp.gt.s32.totalorder %s22, 0
        // Predicated region
        $region209: #{c2f_forward.8} parent=191 // pred_check
          %p643 = pneg %p642
        $region210: #{c2f_forward.8} parent=191 // pred_check_branch
          %645 = sbr.rel (%p643) target = $region212
        $region211: #{c2f_forward.8} parent=191 // pred_region
          %v646 = vld [vmem:[%s498] sm:$0x8]
          %v647 = vld [vmem:[%s498 + $0x4] sm:$0x8]
          %v649 = vshrl.u32 %v646, 16
          %v651 = vrot.slane %v649, 7
          %v652 = vrot.slane %v651, 4
          %v654 = vshrl.u32 %v647, 16
          %v656 = vrot.slane %v654, 7
          %v657 = vrot.slane %v656, 4
          %658 = vrot.lane.b32.xlu0 %v652, 1
          %v659 = vpop.permute.xlu0 %658
          %660 = vrot.lane.b32.xlu0 %v657, 1
          %v661 = vpop.permute.xlu0 %660
          %v664 = vld [vmem:[#allocation2] sm:$0x1]
          %v665 = vsel %vm632, %v659, %v664
          %666 = vst [vmem:[#allocation2] sm:$0x1] %v665
          %v667 = vld [vmem:[#allocation2 + $0x8] sm:$0x1]
          %v668 = vsel %vm632, %v661, %v667
          %669 = vst [vmem:[#allocation2 + $0x8] sm:$0x1] %v668
        $region212: #{c2f_forward.8} parent=191 // pred_fallthru
          _
        %p670 = scmp.lt.s32.totalorder %s22, 1
        // Predicated region
        $region213: #{c2f_forward.8} parent=191 // pred_check
          %p671 = pneg %p670
        $region214: #{c2f_forward.8} parent=191 // pred_check_branch
          %673 = sbr.rel (%p671) target = $region216
        $region215: #{c2f_forward.8} parent=191 // pred_region
          %v674 = vld [vmem:[%s505] sm:$0x1]
          %v675 = vld [vmem:[%s505 + $0x4] sm:$0x1]
          %v677 = vshll.u32 %v674, 16
          %v680 = vshll.u32 %v675, 16
          %682 = vrot.lane.b32.xlu0 %v677, 1
          %v683 = vpop.permute.xlu0 %682
          %684 = vrot.lane.b32.xlu0 %v680, 1
          %v685 = vpop.permute.xlu0 %684
          %vm688 = vmand %vm631, %vm576
          %v689 = vld [vmem:[#allocation2 + $0x4] sm:$0x1]
          %v690 = vsel %vm688, %v683, %v689
          %691 = vst [vmem:[#allocation2 + $0x4] sm:$0x1] %v690
          %v692 = vld [vmem:[#allocation2 + $0xc] sm:$0x1]
          %v693 = vsel %vm688, %v685, %v692
          %694 = vst [vmem:[#allocation2 + $0xc] sm:$0x1] %v693
        $region216: #{c2f_forward.8} parent=191 // pred_fallthru
          _
        %v695 = vld [vmem:[#allocation2] sm:$0xf]
        %v696 = vld [vmem:[#allocation2 + $0x8] sm:$0xf]
        %vm697 = vcmask 125952
        %698 = vst.msk [vmem:[#allocation3] sm:$0xf] %vm697, %v695
        %699 = vst.msk [vmem:[#allocation3 + $0x4] sm:$0xf] %vm697, %v696
        %v700 = vld [vmem:[#allocation2] sm:$0xf]
        %v701 = vld [vmem:[#allocation2 + $0x8] sm:$0xf]
        %704 = vrot.lane.b32.xlu0 %v700, 127
        %v705 = vpop.permute.xlu0 %704
        %706 = vrot.lane.b32.xlu0 %v701, 127
        %v707 = vpop.permute.xlu0 %706
        %s710 = scalar_lea.vmem [#allocation3], 8
        %711 = vst.msk [vmem:[%s710] sm:$0xf] %vm697, %v705
        %712 = vst.msk [vmem:[%s710 + $0x4] sm:$0xf] %vm697, %v707
        %v713 = vld [vmem:[#allocation2] sm:$0xf]
        %v714 = vld [vmem:[#allocation2 + $0x8] sm:$0xf]
        %717 = vrot.lane.b32.xlu0 %v713, 126
        %v718 = vpop.permute.xlu0 %717
        %719 = vrot.lane.b32.xlu0 %v714, 126
        %v720 = vpop.permute.xlu0 %719
        %s723 = scalar_lea.vmem [#allocation3], 16
        %724 = vst.msk [vmem:[%s723] sm:$0xf] %vm697, %v718
        %725 = vst.msk [vmem:[%s723 + $0x4] sm:$0xf] %vm697, %v720
        %v726 = vld [vmem:[#allocation2] sm:$0xf]
        %v727 = vld [vmem:[#allocation2 + $0x4] sm:$0x1]
        %v728 = vld [vmem:[#allocation2 + $0x8] sm:$0xf]
        %v729 = vld [vmem:[#allocation2 + $0xc] sm:$0x1]
        %vm730 = vsmask.f32 3328
        %vm731 = vsmask.f32 7440
        %vm732 = vmor %vm730, %vm731
        %v734 = vshrl.u32 %v726, 16
        %v736 = vrot.slane %v734, 4
        %v737 = vshll.u32 %v726, 16
        %v739 = vrot.slane %v737, 5
        %v740 = vor.u32 %v736, %v739
        %v741 = vrot.slane %v740, 4
        %v743 = vshll.u32 %v727, 16
        %v745 = vrot.slane %v743, 5
        %v746 = vsel %vm732, %v741, %v745
        %v748 = vshrl.u32 %v728, 16
        %v750 = vrot.slane %v748, 4
        %v751 = vshll.u32 %v728, 16
        %v753 = vrot.slane %v751, 5
        %v754 = vor.u32 %v750, %v753
        %v755 = vrot.slane %v754, 4
        %v757 = vshll.u32 %v729, 16
        %v759 = vrot.slane %v757, 5
        %v760 = vsel %vm732, %v755, %v759
        %s763 = scalar_lea.vmem [#allocation3], 24
        %764 = vst.msk [vmem:[%s763] sm:$0xf] %vm697, %v746
        %765 = vst.msk [vmem:[%s763 + $0x4] sm:$0xf] %vm697, %v760
        %v766 = vld [vmem:[#allocation2] sm:$0xf]
        %v767 = vld [vmem:[#allocation2 + $0x4] sm:$0x1]
        %v768 = vld [vmem:[#allocation2 + $0x8] sm:$0xf]
        %v769 = vld [vmem:[#allocation2 + $0xc] sm:$0x1]
        %v771 = vshrl.u32 %v766, 16
        %v773 = vrot.slane %v771, 4
        %v774 = vshll.u32 %v766, 16
        %v776 = vrot.slane %v774, 5
        %v777 = vor.u32 %v773, %v776
        %v778 = vrot.slane %v777, 4
        %v780 = vshll.u32 %v767, 16
        %v782 = vrot.slane %v780, 5
        %v783 = vsel %vm732, %v778, %v782
        %v785 = vshrl.u32 %v768, 16
        %v787 = vrot.slane %v785, 4
        %v788 = vshll.u32 %v768, 16
        %v790 = vrot.slane %v788, 5
        %v791 = vor.u32 %v787, %v790
        %v792 = vrot.slane %v791, 4
        %v794 = vshll.u32 %v769, 16
        %v796 = vrot.slane %v794, 5
        %v797 = vsel %vm732, %v792, %v796
        %798 = vrot.lane.b32.xlu0 %v783, 127
        %v799 = vpop.permute.xlu0 %798
        %800 = vrot.lane.b32.xlu0 %v797, 127
        %v801 = vpop.permute.xlu0 %800
        %s804 = scalar_lea.vmem [#allocation3], 32
        %805 = vst.msk [vmem:[%s804] sm:$0xf] %vm697, %v799
        %806 = vst.msk [vmem:[%s804 + $0x4] sm:$0xf] %vm697, %v801
        %v807 = vld [vmem:[#allocation2] sm:$0xf]
        %v808 = vld [vmem:[#allocation2 + $0x4] sm:$0x1]
        %v809 = vld [vmem:[#allocation2 + $0x8] sm:$0xf]
        %v810 = vld [vmem:[#allocation2 + $0xc] sm:$0x1]
        %v812 = vshrl.u32 %v807, 16
        %v814 = vrot.slane %v812, 4
        %v815 = vshll.u32 %v807, 16
        %v817 = vrot.slane %v815, 5
        %v818 = vor.u32 %v814, %v817
        %v819 = vrot.slane %v818, 4
        %v821 = vshll.u32 %v808, 16
        %v823 = vrot.slane %v821, 5
        %v824 = vsel %vm732, %v819, %v823
        %v826 = vshrl.u32 %v809, 16
        %v828 = vrot.slane %v826, 4
        %v829 = vshll.u32 %v809, 16
        %v831 = vrot.slane %v829, 5
        %v832 = vor.u32 %v828, %v831
        %v833 = vrot.slane %v832, 4
        %v835 = vshll.u32 %v810, 16
        %v837 = vrot.slane %v835, 5
        %v838 = vsel %vm732, %v833, %v837
        %839 = vrot.lane.b32.xlu0 %v824, 126
        %v840 = vpop.permute.xlu0 %839
        %841 = vrot.lane.b32.xlu0 %v838, 126
        %v842 = vpop.permute.xlu0 %841
        %s845 = scalar_lea.vmem [#allocation3], 40
        %846 = vst.msk [vmem:[%s845] sm:$0xf] %vm697, %v840
        %847 = vst.msk [vmem:[%s845 + $0x4] sm:$0xf] %vm697, %v842
        %v848 = vld [vmem:[#allocation2] sm:$0xe]
        %v849 = vld [vmem:[#allocation2 + $0x4] sm:$0x1]
        %v850 = vld [vmem:[#allocation2 + $0x8] sm:$0xe]
        %v851 = vld [vmem:[#allocation2 + $0xc] sm:$0x1]
        %vm856 = vcmask 1042432
        %vm857 = vcmask 1046532
        %vm858 = vmor %vm856, %vm857
        %v859 = vrot.slane %v848, 5
        %v860 = vrot.slane %v859, 4
        %v861 = vrot.slane %v849, 5
        %v862 = vsel %vm858, %v860, %v861
        %v863 = vrot.slane %v850, 5
        %v864 = vrot.slane %v863, 4
        %v865 = vrot.slane %v851, 5
        %v866 = vsel %vm858, %v864, %v865
        %s869 = scalar_lea.vmem [#allocation3], 48
        %870 = vst.msk [vmem:[%s869] sm:$0xf] %vm697, %v862
        %871 = vst.msk [vmem:[%s869 + $0x4] sm:$0xf] %vm697, %v866
        %v872 = vld [vmem:[#allocation2] sm:$0xe]
        %v873 = vld [vmem:[#allocation2 + $0x4] sm:$0x1]
        %v874 = vld [vmem:[#allocation2 + $0x8] sm:$0xe]
        %v875 = vld [vmem:[#allocation2 + $0xc] sm:$0x1]
        %v880 = vrot.slane %v872, 5
        %v881 = vrot.slane %v880, 4
        %v882 = vrot.slane %v873, 5
        %v883 = vsel %vm858, %v881, %v882
        %v884 = vrot.slane %v874, 5
        %v885 = vrot.slane %v884, 4
        %v886 = vrot.slane %v875, 5
        %v887 = vsel %vm858, %v885, %v886
        %888 = vrot.lane.b32.xlu0 %v883, 127
        %v889 = vpop.permute.xlu0 %888
        %890 = vrot.lane.b32.xlu0 %v887, 127
        %v891 = vpop.permute.xlu0 %890
        %s894 = scalar_lea.vmem [#allocation3], 56
        %895 = vst.msk [vmem:[%s894] sm:$0xf] %vm697, %v889
        %896 = vst.msk [vmem:[%s894 + $0x4] sm:$0xf] %vm697, %v891
        %v897 = vld [vmem:[#allocation2] sm:$0xe]
        %v898 = vld [vmem:[#allocation2 + $0x4] sm:$0x1]
        %v899 = vld [vmem:[#allocation2 + $0x8] sm:$0xe]
        %v900 = vld [vmem:[#allocation2 + $0xc] sm:$0x1]
        %v905 = vrot.slane %v897, 5
        %v906 = vrot.slane %v905, 4
        %v907 = vrot.slane %v898, 5
        %v908 = vsel %vm858, %v906, %v907
        %v909 = vrot.slane %v899, 5
        %v910 = vrot.slane %v909, 4
        %v911 = vrot.slane %v900, 5
        %v912 = vsel %vm858, %v910, %v911
        %913 = vrot.lane.b32.xlu0 %v908, 126
        %v914 = vpop.permute.xlu0 %913
        %915 = vrot.lane.b32.xlu0 %v912, 126
        %v916 = vpop.permute.xlu0 %915
        %s919 = scalar_lea.vmem [#allocation3], 64
        %920 = vst.msk [vmem:[%s919] sm:$0xf] %vm697, %v914
        %921 = vst.msk [vmem:[%s919 + $0x4] sm:$0xf] %vm697, %v916
        %v922 = vld [vmem:[#allocation3] sm:$0xf]
        %v923 = vld [vmem:[#allocation3 + $0x4] sm:$0xf]
        %v924 = vld [vmem:[#allocation3 + $0x8] sm:$0xf]
        %v925 = vld [vmem:[#allocation3 + $0xc] sm:$0xf]
        %v926 = vld [vmem:[#allocation3 + $0x10] sm:$0xf]
        %v927 = vld [vmem:[#allocation3 + $0x14] sm:$0xf]
        %v928 = vld [vmem:[#allocation3 + $0x18] sm:$0xf]
        %v929 = vld [vmem:[#allocation3 + $0x1c] sm:$0xf]
        %v930 = vld [vmem:[#allocation3 + $0x20] sm:$0xf]
        %v931 = vld [vmem:[#allocation3 + $0x24] sm:$0xf]
        %v932 = vld [vmem:[#allocation3 + $0x28] sm:$0xf]
        %v933 = vld [vmem:[#allocation3 + $0x2c] sm:$0xf]
        %v934 = vld [vmem:[#allocation3 + $0x30] sm:$0xf]
        %v935 = vld [vmem:[#allocation3 + $0x34] sm:$0xf]
        %v936 = vld [vmem:[#allocation3 + $0x38] sm:$0xf]
        %v937 = vld [vmem:[#allocation3 + $0x3c] sm:$0xf]
        %v938 = vld [vmem:[#allocation3 + $0x40] sm:$0xf]
        %v939 = vld [vmem:[#allocation3 + $0x44] sm:$0xf]
        %v942 = vpack.i.b16 %v923, %v922
        %v944 = vshrl.u32 %v922, 16
        %v945 = vshrl.u32 %v923, 16
        %v946 = vpack.i.b16 %v945, %v944
        %v950 = vpack.i.b16 %v925, %v924
        %v952 = vshrl.u32 %v924, 16
        %v953 = vshrl.u32 %v925, 16
        %v954 = vpack.i.b16 %v953, %v952
        %v958 = vpack.i.b16 %v927, %v926
        %v960 = vshrl.u32 %v926, 16
        %v961 = vshrl.u32 %v927, 16
        %v962 = vpack.i.b16 %v961, %v960
        %v966 = vpack.i.b16 %v929, %v928
        %v968 = vshrl.u32 %v928, 16
        %v969 = vshrl.u32 %v929, 16
        %v970 = vpack.i.b16 %v969, %v968
        %v974 = vpack.i.b16 %v931, %v930
        %v976 = vshrl.u32 %v930, 16
        %v977 = vshrl.u32 %v931, 16
        %v978 = vpack.i.b16 %v977, %v976
        %v982 = vpack.i.b16 %v933, %v932
        %v984 = vshrl.u32 %v932, 16
        %v985 = vshrl.u32 %v933, 16
        %v986 = vpack.i.b16 %v985, %v984
        %v990 = vpack.i.b16 %v935, %v934
        %v992 = vshrl.u32 %v934, 16
        %v993 = vshrl.u32 %v935, 16
        %v994 = vpack.i.b16 %v993, %v992
        %v998 = vpack.i.b16 %v937, %v936
        %v1000 = vshrl.u32 %v936, 16
        %v1001 = vshrl.u32 %v937, 16
        %v1002 = vpack.i.b16 %v1001, %v1000
        %v1006 = vpack.i.b16 %v939, %v938
        %v1007 = vshrl.u32 %v938, 16
        %v1008 = vshrl.u32 %v939, 16
        %v1009 = vpack.i.b16 %v1008, %v1007
        %v1010 = vcombine.low %v942, %v958
        %v1012 = vunpack.c.l.s4 1983009808
        %v1013 = vunpack.c.0.s8 %v1012
        %v1014 = vlaneseq
        %v1015 = vshrl.u32 %v1014, 7
        %v1016 = vsub.s32 %v1013, %v1015
        %v1017 = vrot.slane %v1010, %v1016
        %v1018 = vcombine.low %v950, %v966
        %v1020 = vunpack.c.l.s4 1983009808
        %v1021 = vunpack.c.0.s8 %v1020
        %v1022 = vlaneseq
        %v1023 = vshrl.u32 %v1022, 7
        %v1024 = vsub.s32 %v1021, %v1023
        %v1025 = vrot.slane %v1018, %v1024
        %v1026 = vcombine.low %v1017, %v1025
        %v1027 = vcombine.high %v1017, %v1025
        %v1029 = vunpack.c.l.s4 1934713408
        %v1030 = vunpack.c.0.s8 %v1029
        %v1031 = vlaneseq
        %v1032 = vshrl.u32 %v1031, 7
        %v1033 = vsub.s32 %v1030, %v1032
        %v1034 = vrot.slane %v1026, %v1033
        %v1036 = vunpack.c.l.s4 1934713408
        %v1037 = vunpack.c.0.s8 %v1036
        %v1038 = vlaneseq
        %v1039 = vshrl.u32 %v1038, 7
        %v1040 = vsub.s32 %v1037, %v1039
        %v1041 = vrot.slane %v1027, %v1040
        %v1042 = vcombine.high %v1034, 0
        %v1043 = vcombine.high %v1041, 0
        %v1044 = vcombine.low %v946, %v962
        %v1046 = vunpack.c.l.s4 1983009808
        %v1047 = vunpack.c.0.s8 %v1046
        %v1048 = vlaneseq
        %v1049 = vshrl.u32 %v1048, 7
        %v1050 = vsub.s32 %v1047, %v1049
        %v1051 = vrot.slane %v1044, %v1050
        %v1052 = vcombine.low %v954, %v970
        %v1054 = vunpack.c.l.s4 1983009808
        %v1055 = vunpack.c.0.s8 %v1054
        %v1056 = vlaneseq
        %v1057 = vshrl.u32 %v1056, 7
        %v1058 = vsub.s32 %v1055, %v1057
        %v1059 = vrot.slane %v1052, %v1058
        %v1060 = vcombine.low %v1051, %v1059
        %v1061 = vcombine.high %v1051, %v1059
        %v1063 = vunpack.c.l.s4 1934713408
        %v1064 = vunpack.c.0.s8 %v1063
        %v1065 = vlaneseq
        %v1066 = vshrl.u32 %v1065, 7
        %v1067 = vsub.s32 %v1064, %v1066
        %v1068 = vrot.slane %v1060, %v1067
        %v1070 = vunpack.c.l.s4 1934713408
        %v1071 = vunpack.c.0.s8 %v1070
        %v1072 = vlaneseq
        %v1073 = vshrl.u32 %v1072, 7
        %v1074 = vsub.s32 %v1071, %v1073
        %v1075 = vrot.slane %v1061, %v1074
        %v1076 = vcombine.high %v1068, 0
        %v1077 = vcombine.high %v1075, 0
        %v1078 = vcombine.low %v974, %v990
        %v1080 = vunpack.c.l.s4 1983009808
        %v1081 = vunpack.c.0.s8 %v1080
        %v1082 = vlaneseq
        %v1083 = vshrl.u32 %v1082, 7
        %v1084 = vsub.s32 %v1081, %v1083
        %v1085 = vrot.slane %v1078, %v1084
        %v1086 = vcombine.low %v982, %v998
        %v1088 = vunpack.c.l.s4 1983009808
        %v1089 = vunpack.c.0.s8 %v1088
        %v1090 = vlaneseq
        %v1091 = vshrl.u32 %v1090, 7
        %v1092 = vsub.s32 %v1089, %v1091
        %v1093 = vrot.slane %v1086, %v1092
        %v1094 = vcombine.low %v1085, %v1093
        %v1095 = vcombine.high %v1085, %v1093
        %v1097 = vunpack.c.l.s4 1934713408
        %v1098 = vunpack.c.0.s8 %v1097
        %v1099 = vlaneseq
        %v1100 = vshrl.u32 %v1099, 7
        %v1101 = vsub.s32 %v1098, %v1100
        %v1102 = vrot.slane %v1094, %v1101
        %v1104 = vunpack.c.l.s4 1934713408
        %v1105 = vunpack.c.0.s8 %v1104
        %v1106 = vlaneseq
        %v1107 = vshrl.u32 %v1106, 7
        %v1108 = vsub.s32 %v1105, %v1107
        %v1109 = vrot.slane %v1095, %v1108
        %v1110 = vcombine.high %v1102, 0
        %v1111 = vcombine.high %v1109, 0
        %v1112 = vcombine.low %v978, %v994
        %v1114 = vunpack.c.l.s4 1983009808
        %v1115 = vunpack.c.0.s8 %v1114
        %v1116 = vlaneseq
        %v1117 = vshrl.u32 %v1116, 7
        %v1118 = vsub.s32 %v1115, %v1117
        %v1119 = vrot.slane %v1112, %v1118
        %v1120 = vcombine.low %v986, %v1002
        %v1122 = vunpack.c.l.s4 1983009808
        %v1123 = vunpack.c.0.s8 %v1122
        %v1124 = vlaneseq
        %v1125 = vshrl.u32 %v1124, 7
        %v1126 = vsub.s32 %v1123, %v1125
        %v1127 = vrot.slane %v1120, %v1126
        %v1128 = vcombine.low %v1119, %v1127
        %v1129 = vcombine.high %v1119, %v1127
        %v1131 = vunpack.c.l.s4 1934713408
        %v1132 = vunpack.c.0.s8 %v1131
        %v1133 = vlaneseq
        %v1134 = vshrl.u32 %v1133, 7
        %v1135 = vsub.s32 %v1132, %v1134
        %v1136 = vrot.slane %v1128, %v1135
        %v1138 = vunpack.c.l.s4 1934713408
        %v1139 = vunpack.c.0.s8 %v1138
        %v1140 = vlaneseq
        %v1141 = vshrl.u32 %v1140, 7
        %v1142 = vsub.s32 %v1139, %v1141
        %v1143 = vrot.slane %v1129, %v1142
        %v1144 = vcombine.high %v1136, 0
        %v1145 = vcombine.high %v1143, 0
        %v1148 = vunpack.c.l.s4 1983009808
        %v1149 = vunpack.c.0.s8 %v1148
        %v1150 = vlaneseq
        %v1151 = vshrl.u32 %v1150, 7
        %v1152 = vsub.s32 %v1149, %v1151
        %v1153 = vrot.slane %v1006, %v1152
        %v1154 = vcombine.high %v1153, 0
        %v1156 = vunpack.c.l.s4 1934713408
        %v1157 = vunpack.c.0.s8 %v1156
        %v1158 = vlaneseq
        %v1159 = vshrl.u32 %v1158, 7
        %v1160 = vsub.s32 %v1157, %v1159
        %v1161 = vrot.slane %v1153, %v1160
        %v1163 = vunpack.c.l.s4 1934713408
        %v1164 = vunpack.c.0.s8 %v1163
        %v1165 = vlaneseq
        %v1166 = vshrl.u32 %v1165, 7
        %v1167 = vsub.s32 %v1164, %v1166
        %v1168 = vrot.slane %v1154, %v1167
        %v1169 = vcombine.high %v1161, 0
        %v1170 = vcombine.high %v1168, 0
        %v1173 = vunpack.c.l.s4 1983009808
        %v1174 = vunpack.c.0.s8 %v1173
        %v1175 = vlaneseq
        %v1176 = vshrl.u32 %v1175, 7
        %v1177 = vsub.s32 %v1174, %v1176
        %v1178 = vrot.slane %v1009, %v1177
        %v1179 = vcombine.high %v1178, 0
        %v1181 = vunpack.c.l.s4 1934713408
        %v1182 = vunpack.c.0.s8 %v1181
        %v1183 = vlaneseq
        %v1184 = vshrl.u32 %v1183, 7
        %v1185 = vsub.s32 %v1182, %v1184
        %v1186 = vrot.slane %v1178, %v1185
        %v1188 = vunpack.c.l.s4 1934713408
        %v1189 = vunpack.c.0.s8 %v1188
        %v1190 = vlaneseq
        %v1191 = vshrl.u32 %v1190, 7
        %v1192 = vsub.s32 %v1189, %v1191
        %v1193 = vrot.slane %v1179, %v1192
        %v1194 = vcombine.high %v1186, 0
        %v1195 = vcombine.high %v1193, 0
        %v1199 = vunpack.c.l.b16 %v1034
        %v1200 = vunpack.c.l.b16 %v1102
        %v1201 = vunpack.c.l.b16 %v1161
        %v1202 = vpack.c.b16 %v1200, %v1199
        %v1203 = vpack.c.b16 %v1201, %v1201
        %v1207 = vunpack.c.l.b16 %v1068
        %v1208 = vunpack.c.l.b16 %v1136
        %v1209 = vunpack.c.l.b16 %v1186
        %v1210 = vpack.c.b16 %v1208, %v1207
        %v1211 = vpack.c.b16 %v1209, %v1209
        %1212 = vrot.lane.b32.xlu0 %v1210, 16
        %v1213 = vpop.permute.xlu0 %1212
        %1214 = vrot.lane.b32.xlu0 %v1211, 16
        %v1215 = vpop.permute.xlu0 %1214
        %v1219 = vunpack.c.l.b16 %v1042
        %v1220 = vunpack.c.l.b16 %v1110
        %v1221 = vunpack.c.l.b16 %v1169
        %v1222 = vpack.c.b16 %v1220, %v1219
        %v1223 = vpack.c.b16 %v1221, %v1221
        %1224 = vrot.lane.b32.xlu0 %v1222, 32
        %v1225 = vpop.permute.xlu0 %1224
        %1226 = vrot.lane.b32.xlu0 %v1223, 32
        %v1227 = vpop.permute.xlu0 %1226
        %v1231 = vunpack.c.l.b16 %v1076
        %v1232 = vunpack.c.l.b16 %v1144
        %v1233 = vunpack.c.l.b16 %v1194
        %v1234 = vpack.c.b16 %v1232, %v1231
        %v1235 = vpack.c.b16 %v1233, %v1233
        %1236 = vrot.lane.b32.xlu0 %v1234, 48
        %v1237 = vpop.permute.xlu0 %1236
        %1238 = vrot.lane.b32.xlu0 %v1235, 48
        %v1239 = vpop.permute.xlu0 %1238
        %v1243 = vunpack.c.l.b16 %v1041
        %v1244 = vunpack.c.l.b16 %v1109
        %v1245 = vunpack.c.l.b16 %v1168
        %v1246 = vpack.c.b16 %v1244, %v1243
        %v1247 = vpack.c.b16 %v1245, %v1245
        %1248 = vrot.lane.b32.xlu0 %v1246, 64
        %v1249 = vpop.permute.xlu0 %1248
        %1250 = vrot.lane.b32.xlu0 %v1247, 64
        %v1251 = vpop.permute.xlu0 %1250
        %v1255 = vunpack.c.l.b16 %v1075
        %v1256 = vunpack.c.l.b16 %v1143
        %v1257 = vunpack.c.l.b16 %v1193
        %v1258 = vpack.c.b16 %v1256, %v1255
        %v1259 = vpack.c.b16 %v1257, %v1257
        %1260 = vrot.lane.b32.xlu0 %v1258, 80
        %v1261 = vpop.permute.xlu0 %1260
        %1262 = vrot.lane.b32.xlu0 %v1259, 80
        %v1263 = vpop.permute.xlu0 %1262
        %v1267 = vunpack.c.l.b16 %v1043
        %v1268 = vunpack.c.l.b16 %v1111
        %v1269 = vunpack.c.l.b16 %v1170
        %v1270 = vpack.c.b16 %v1268, %v1267
        %v1271 = vpack.c.b16 %v1269, %v1269
        %1272 = vrot.lane.b32.xlu0 %v1270, 96
        %v1273 = vpop.permute.xlu0 %1272
        %1274 = vrot.lane.b32.xlu0 %v1271, 96
        %v1275 = vpop.permute.xlu0 %1274
        %v1279 = vunpack.c.l.b16 %v1077
        %v1280 = vunpack.c.l.b16 %v1145
        %v1281 = vunpack.c.l.b16 %v1195
        %v1282 = vpack.c.b16 %v1280, %v1279
        %v1283 = vpack.c.b16 %v1281, %v1281
        %1284 = vrot.lane.b32.xlu0 %v1282, 112
        %v1285 = vpop.permute.xlu0 %1284
        %1286 = vrot.lane.b32.xlu0 %v1283, 112
        %v1287 = vpop.permute.xlu0 %1286
        %vm1288 = vcmask 130048
        %v1291 = vsel %vm1288, %v1202, %v1213
        %v1294 = vsel %vm1288, %v1203, %v1215
        %vm1295 = vcmask 261120
        %v1297 = vsel %vm1295, %v1291, %v1225
        %v1299 = vsel %vm1295, %v1294, %v1227
        %vm1300 = vcmask 392192
        %v1302 = vsel %vm1300, %v1297, %v1237
        %v1304 = vsel %vm1300, %v1299, %v1239
        %vm1305 = vcmask 523264
        %v1307 = vsel %vm1305, %v1302, %v1249
        %v1309 = vsel %vm1305, %v1304, %v1251
        %vm1310 = vcmask 654336
        %v1312 = vsel %vm1310, %v1307, %v1261
        %v1314 = vsel %vm1310, %v1309, %v1263
        %vm1315 = vcmask 785408
        %v1317 = vsel %vm1315, %v1312, %v1273
        %v1319 = vsel %vm1315, %v1314, %v1275
        %vm1320 = vcmask 916480
        %v1322 = vsel %vm1320, %v1317, %v1285
        %v1325 = vsel %vm1320, %v1319, %v1287
        %v1326 = vld [vmem:[%s4] sm:$0x1]
        %v1327 = vld [vmem:[%s5] sm:$0x3]
        %1329 = vset.pattern.permute.xlu0 0
        %1330 = vperm.xlu0 %1329, %v1327
        %v1331 = vpop.permute.xlu0 %1330
        %vm1333 = vcmask 146432
        %v1335 = vsel %vm1333, %v1326, 0
        %vm1337 = vcmask 1040384
        %v1338 = vsel %vm1337, %v1325, 0
        %1340 = vmatprep.subr.bf16.mxu0 0
        %1341 = vmatpush1.bf16.msra.mxu0 0
        %1342 = vmatprep.subr.bf16.mxu0 0
        %1343 = vmatpush1.bf16.msra.mxu0 0
        %1344 = vmatprep.subr.bf16.mxu0 0
        %1345 = vmatpush1.bf16.msra.mxu0 0
        %1346 = vmatprep.subr.bf16.mxu0 0
        %1347 = vmatpush1.bf16.msra.mxu0 0
        %1348 = vmatprep.subr.bf16.mxu0 0
        %1349 = vmatpush1.bf16.msra.mxu0 0
        %1350 = vmatprep.subr.bf16.mxu0 0
        %1351 = vmatpush1.bf16.msra.mxu0 0
        %1352 = vmatprep.subr.bf16.mxu0 0
        %1353 = vmatpush1.bf16.msra.mxu0 %v1338
        %1354 = vmatprep.subr.bf16.mxu0 0
        %1355 = vmatpush1.bf16.msra.mxu0 %v1322
        %1356 = vmatprep.subr.bf16.mxu0 0
        %1357 = vmatpush2.bf16.msra.mxu0 0
        %1358 = vmatprep.subr.bf16.mxu0 0
        %1359 = vmatpush2.bf16.msra.mxu0 0
        %1360 = vmatprep.subr.bf16.mxu0 0
        %1361 = vmatpush2.bf16.msra.mxu0 0
        %1362 = vmatprep.subr.bf16.mxu0 0
        %1363 = vmatpush2.bf16.msra.mxu0 0
        %1364 = vmatprep.subr.bf16.mxu0 0
        %1365 = vmatpush2.bf16.msra.mxu0 0
        %1366 = vmatprep.subr.bf16.mxu0 0
        %1367 = vmatpush2.bf16.msra.mxu0 0
        %1368 = vmatprep.subr.bf16.mxu0 0
        %1369 = vmatpush2.bf16.msra.mxu0 0
        %1370 = vmatprep.subr.bf16.mxu0 0
        %1371 = vmatpush2.bf16.msra.mxu0 0
        %1372 = vmatprep.mubr.bf16.mxu0 0
        %1373 = vmatmul.mubr.bf16.gmra.mxu0 %v1335
        %v1374 = vpop.f32.mrf.mxu0
        %v1375 = vadd.f32 %v1331, %v1374
        %v1376 = vpop.f32.mrf.mxu0
        %v1377 = vpop.f32.mrf.mxu0
        %v1378 = vpop.f32.mrf.mxu0
        %1379 = vdwg.mxu0
        %v1380 = vsub.f32 0.0, %v1375
        %v1381 = vmul.f32 %v1380, 1.442695
        %v1382 = vpow.pop %v1381
        %v1383 = vadd.f32 %v1382, 1.0
        %v1384 = vrcp.pop %v1383
        %v1385 = vmul.f32 %v1375, %v1384
        %s1386 = scalar_lea.vmem %s512, 8 [#allocation7]
        %v1387 = vld [vmem:[%s1386] sm:$0xf]
        %v1388 = vld [vmem:[%s1386 + $0x4] sm:$0xf]
        %v1391 = vpack.i.b16 %v1388, %v1387
        %v1392 = vshrl.u32 %v1387, 16
        %v1393 = vshrl.u32 %v1388, 16
        %v1394 = vpack.i.b16 %v1393, %v1392
        %v1397 = vunpack.c.l.s4 1983009808
        %v1398 = vunpack.c.0.s8 %v1397
        %v1399 = vlaneseq
        %v1400 = vshrl.u32 %v1399, 7
        %v1401 = vsub.s32 %v1398, %v1400
        %v1402 = vrot.slane %v1391, %v1401
        %v1403 = vcombine.high %v1402, 0
        %v1405 = vunpack.c.l.s4 1934713408
        %v1406 = vunpack.c.0.s8 %v1405
        %v1407 = vlaneseq
        %v1408 = vshrl.u32 %v1407, 7
        %v1409 = vsub.s32 %v1406, %v1408
        %v1410 = vrot.slane %v1402, %v1409
        %v1412 = vunpack.c.l.s4 1934713408
        %v1413 = vunpack.c.0.s8 %v1412
        %v1414 = vlaneseq
        %v1415 = vshrl.u32 %v1414, 7
        %v1416 = vsub.s32 %v1413, %v1415
        %v1417 = vrot.slane %v1403, %v1416
        %v1418 = vcombine.high %v1410, 0
        %v1419 = vcombine.high %v1417, 0
        %v1422 = vunpack.c.l.s4 1983009808
        %v1423 = vunpack.c.0.s8 %v1422
        %v1424 = vlaneseq
        %v1425 = vshrl.u32 %v1424, 7
        %v1426 = vsub.s32 %v1423, %v1425
        %v1427 = vrot.slane %v1394, %v1426
        %v1428 = vcombine.high %v1427, 0
        %v1430 = vunpack.c.l.s4 1934713408
        %v1431 = vunpack.c.0.s8 %v1430
        %v1432 = vlaneseq
        %v1433 = vshrl.u32 %v1432, 7
        %v1434 = vsub.s32 %v1431, %v1433
        %v1435 = vrot.slane %v1427, %v1434
        %v1437 = vunpack.c.l.s4 1934713408
        %v1438 = vunpack.c.0.s8 %v1437
        %v1439 = vlaneseq
        %v1440 = vshrl.u32 %v1439, 7
        %v1441 = vsub.s32 %v1438, %v1440
        %v1442 = vrot.slane %v1428, %v1441
        %v1443 = vcombine.high %v1435, 0
        %v1444 = vcombine.high %v1442, 0
        %v1446 = vunpack.c.l.b16 %v1435
        %v1447 = vpack.c.b16 %v1446, %v1446
        %1448 = vrot.lane.b32.xlu0 %v1447, 16
        %v1449 = vpop.permute.xlu0 %1448
        %v1451 = vunpack.c.l.b16 %v1418
        %v1452 = vpack.c.b16 %v1451, %v1451
        %1453 = vrot.lane.b32.xlu0 %v1452, 32
        %v1454 = vpop.permute.xlu0 %1453
        %v1456 = vunpack.c.l.b16 %v1443
        %v1457 = vpack.c.b16 %v1456, %v1456
        %1458 = vrot.lane.b32.xlu0 %v1457, 48
        %v1459 = vpop.permute.xlu0 %1458
        %v1461 = vunpack.c.l.b16 %v1417
        %v1462 = vpack.c.b16 %v1461, %v1461
        %1463 = vrot.lane.b32.xlu0 %v1462, 64
        %v1464 = vpop.permute.xlu0 %1463
        %v1466 = vunpack.c.l.b16 %v1442
        %v1467 = vpack.c.b16 %v1466, %v1466
        %1468 = vrot.lane.b32.xlu0 %v1467, 80
        %v1469 = vpop.permute.xlu0 %1468
        %v1471 = vunpack.c.l.b16 %v1419
        %v1472 = vpack.c.b16 %v1471, %v1471
        %1473 = vrot.lane.b32.xlu0 %v1472, 96
        %v1474 = vpop.permute.xlu0 %1473
        %v1476 = vunpack.c.l.b16 %v1444
        %v1477 = vpack.c.b16 %v1476, %v1476
        %1478 = vrot.lane.b32.xlu0 %v1477, 112
        %v1479 = vpop.permute.xlu0 %1478
        %v1482 = vsel %vm1288, %v1410, %v1449
        %v1484 = vsel %vm1295, %v1482, %v1454
        %v1486 = vsel %vm1300, %v1484, %v1459
        %v1488 = vsel %vm1305, %v1486, %v1464
        %v1490 = vsel %vm1310, %v1488, %v1469
        %v1492 = vsel %vm1315, %v1490, %v1474
        %v1494 = vsel %vm1320, %v1492, %v1479
        %v1496 = vunpack.c.l.bf16 %v1494
        %v1497 = vadd.f32 %v1385, %v1496
        %v1498 = vpack.c.bf16 %v1497, %v1497
        %1499 = vst [vmem:[%s565] sm:$0x1] %v1498
        %p1500 = scmp.lt.s32.totalorder %s21, 1
        %s1501 = scalar_select %p1500, %s21, 1
        %p1502 = scmp.lt.s32.totalorder %s22, 1
        %s1503 = scalar_select %p1502, %s22, 1
        %s1504 = smul.addr %s1501, 2
        %s1505 = sadd.s32 %s1503, %s1504
        %s1506 = scalar_lea.vmem %s6, %s1505
        // Predicated region
        $region217: #{c2f_forward.8} parent=191 // pred_check
          %p1507 = pneg %p215
        $region218: #{c2f_forward.8} parent=191 // pred_check_branch
          %1509 = sbr.rel (%p1507) target = $region220
        $region219: #{c2f_forward.8} parent=191 // pred_region
          _
        $region220: #{c2f_forward.8} parent=191 // pred_fallthru
          _
      $region192: #{c2f_forward.8} parent=5 // pred_fallthru
        _
      %p1510 = scmp.le.s32.totalorder 2, %s12
      // Predicated region
      $region221: #{c2f_forward.8} parent=5 // pred_check
        %p1511 = pneg %p1510
      $region222: #{c2f_forward.8} parent=5 // pred_check_branch
        %1513 = sbr.rel (%p1511) target = $region224
      $region223: #{c2f_forward.8} parent=5 // pred_region
        %s1514 = ssub.s32 %s12, 2
        // Predicated region
        $region225: #{c2f_forward.8} parent=223 // pred_check
          %p1515 = pneg %p221
        $region226: #{c2f_forward.8} parent=223 // pred_check_branch
          %1517 = sbr.rel (%p1515) target = $region228
        $region227: #{c2f_forward.8} parent=223 // pred_region
          %p1518 = scmp.lt.s32.totalorder %s23, 1
          %s1519 = scalar_select %p1518, %s23, 1
          %p1520 = scmp.lt.s32.totalorder %s24, 1
          %s1521 = scalar_select %p1520, %s24, 1
          %s1522 = smul.addr %s1519, 2
          %s1523 = sadd.s32 %s1521, %s1522
          %s1524 = scalar_lea.vmem %s6, %s1523
        $region228: #{c2f_forward.8} parent=223 // pred_fallthru
          _
      $region224: #{c2f_forward.8} parent=5 // pred_fallthru
        _
    $region6: #{c2f_forward.8} parent=1 // loop_footer
      %s16 = sadd.s32 1, %s12
    $region7: #{c2f_forward.8} parent=1 // loop_footer_branch
      %11 = sbr.rel target = $region3
    $region8: #{c2f_forward.8} parent=1 // loop_exit
      _

// kernel: c2f_forward.9
$region0: #{c2f_forward.9}
  #allocation0 [shape = 'u32[]', space=smem, size = 0x4, offset = 0x4, fixed_abs, tag = 'smem constant byte address 0x4 - core index']
  #allocation1 [shape = 'u32[144,128]{1,0:T(1,128)}', space=vmem, size = 0x12000, scoped, tag = 'internal scratch']
  #allocation2 [shape = 'bf16[2,10,18]{2,1,0:T(8,128)(2,1)}', space=vmem, size = 0x2000, scoped, tag = 'scratch operand']
  #allocation3 [shape = 'bf16[9,2,8,16]{3,2,1,0:T(8,128)(2,1)}', space=vmem, size = 0x9000, scoped, tag = 'scratch operand']
  %s0 = inlined_call_operand.vmem [shape: bf16[2,2,16,16], index: 0, kind: input, shape index: {}, may-alias: {0,1,2}]
  %s1 = inlined_call_operand.vmem [shape: bf16[2,2,16,16], index: 1, kind: input, shape index: {}, may-alias: {0,1,2}]
  %s2 = inlined_call_operand.vmem [shape: bf16[2,2,16,16], index: 2, kind: input, shape index: {}, may-alias: {0,1,2}]
  %s3 = inlined_call_operand.vmem [shape: bf16[2,18], index: 3, kind: input, shape index: {}]
  %s4 = inlined_call_operand.vmem [shape: f32[2,1], index: 4, kind: input, shape index: {}]
  %s5 = inlined_call_operand.vmem [shape: bf16[2,2,256], index: 5, kind: output, shape index: {}]
  %s6 = sld [smem:[#allocation0]]
  $region184: #{c2f_forward.9} parent=0
    _
  %s8 = ssub.s32 1, %s6
  %s9 = scalar_select 0, %s8, %s6
  $region1: #{c2f_forward.9} parent=0
    #allocation4 [shape = 'u8[8192]{0}', space=vmem, size = 0x2000, scoped, tag = 'input window, operand 0']
    #allocation5 [shape = 'u8[8192]{0}', space=vmem, size = 0x2000, scoped, tag = 'input window, operand 1']
    #allocation6 [shape = 'u8[8192]{0}', space=vmem, size = 0x2000, scoped, tag = 'input window, operand 2']
    loop: start=0, step=1, limit=6
    $region2: #{c2f_forward.9} parent=1 // loop_pre_header
      _
    $region3: #{c2f_forward.9} parent=1 // loop_header
      %s11 = sphi 0, %s15
      %p12 = scmp.ge.s32.totalorder %s11, 6
      %s18 = sphi 0, %s30
      %s19 = sphi 0, %s26
      %s20 = sphi 0, %s18
      %s21 = sphi 0, %s19
      %s22 = sphi 0, %s20
      %s23 = sphi 0, %s21
      %s35 = sphi 0, %s37
      %s38 = sphi 0, %s35
      %s39 = sphi 0, %s38
      %s55 = sphi 0, %s39
      %s69 = sphi 0, %s71
      %s72 = sphi 0, %s69
      %s73 = sphi 0, %s72
      %s89 = sphi 0, %s73
      %s103 = sphi 0, %s105
      %s106 = sphi 0, %s103
      %s107 = sphi 0, %s106
      %s123 = sphi 0, %s107
      %s127 = sphi 0, %s127
      %s129 = sphi 0, %s127
      %s130 = sphi 0, %s129
      %s144 = sphi 0, %s130
      %s148 = sphi 0, %s148
      %s150 = sphi 0, %s148
      %s151 = sphi 0, %s150
      %s165 = sphi 0, %s151
      %s173 = sphi 0, %s175
      %s176 = sphi 0, %s173
      %s177 = sphi 0, %s176
      %s193 = sphi 0, %s177
    $region4: #{c2f_forward.9} parent=1 // loop_header_branch
      %14 = sbr.rel (%p12) target = $region8
    $region5: #{c2f_forward.9} parent=1 // loop_body
      %s16 = ssub.s32 %s11, 1
      %s17 = ssub.s32 %s11, 2
      %s24 = sadd.s32 1, %s19
      %p25 = scmp.ge.s32.totalorder %s24, 2
      %s26 = scalar_select %p25, 0, %s24
      %s27 = sadd.s32 1, %s18
      %s28 = scalar_select %p25, %s27, %s18
      %p29 = scmp.ge.s32.totalorder %s28, 2
      %s30 = scalar_select %p29, 0, %s28
      %s31 = ssub.s32 %s18, %s30
      %s32 = ssub.s32 %s19, %s26
      %s33 = sor.u32 %s31, %s32
      %p34 = scmp.eq.s32.totalorder %s33, 0
      %s36 = sadd.s32 %s35, 1
      %s37 = scalar_select %p34, %s35, %s36
      %p40 = pneg %p34
      %p41 = scmp.eq.s32.totalorder %s11, 3
      %p42 = por %p40, %p41
      %p43 = scmp.ne.s32.totalorder %s35, %s38
      %p44 = scmp.eq.s32.totalorder %s11, 0
      %p45 = por %p43, %p44
      %p46 = scmp.ne.s32.totalorder %s35, %s38
      %p47 = scmp.eq.s32.totalorder %s16, 3
      %p48 = por %p46, %p47
      %p49 = scmp.ne.s32.totalorder %s38, %s39
      %p50 = scmp.eq.s32.totalorder %s16, 0
      %p51 = por %p49, %p50
      %p52 = scmp.ne.s32.totalorder %s38, %s39
      %p53 = scmp.eq.s32.totalorder %s17, 3
      %p54 = por %p52, %p53
      %p56 = scmp.ne.s32.totalorder %s39, %s55
      %p57 = scmp.eq.s32.totalorder %s17, 0
      %p58 = por %p56, %p57
      %s59 = ssub.s32 %s19, 1
      %p60 = scmp.gt.s32.totalorder %s59, 0
      %s61 = scalar_select %p60, %s59, 0
      %s62 = ssub.s32 %s26, 1
      %p63 = scmp.gt.s32.totalorder %s62, 0
      %s64 = scalar_select %p63, %s62, 0
      %s65 = ssub.s32 %s18, %s30
      %s66 = ssub.s32 %s61, %s64
      %s67 = sor.u32 %s65, %s66
      %p68 = scmp.eq.s32.totalorder %s67, 0
      %s70 = sadd.s32 %s69, 1
      %s71 = scalar_select %p68, %s69, %s70
      %p74 = pneg %p68
      %p75 = scmp.eq.s32.totalorder %s11, 3
      %p76 = por %p74, %p75
      %p77 = scmp.ne.s32.totalorder %s69, %s72
      %p78 = scmp.eq.s32.totalorder %s11, 0
      %p79 = por %p77, %p78
      %p80 = scmp.ne.s32.totalorder %s69, %s72
      %p81 = scmp.eq.s32.totalorder %s16, 3
      %p82 = por %p80, %p81
      %p83 = scmp.ne.s32.totalorder %s72, %s73
      %p84 = scmp.eq.s32.totalorder %s16, 0
      %p85 = por %p83, %p84
      %p86 = scmp.ne.s32.totalorder %s72, %s73
      %p87 = scmp.eq.s32.totalorder %s17, 3
      %p88 = por %p86, %p87
      %p90 = scmp.ne.s32.totalorder %s73, %s89
      %p91 = scmp.eq.s32.totalorder %s17, 0
      %p92 = por %p90, %p91
      %s93 = sadd.s32 %s19, 1
      %p94 = scmp.lt.s32.totalorder %s93, 1
      %s95 = scalar_select %p94, %s93, 1
      %s96 = sadd.s32 %s26, 1
      %p97 = scmp.lt.s32.totalorder %s96, 1
      %s98 = scalar_select %p97, %s96, 1
      %s99 = ssub.s32 %s18, %s30
      %s100 = ssub.s32 %s95, %s98
      %s101 = sor.u32 %s99, %s100
      %p102 = scmp.eq.s32.totalorder %s101, 0
      %s104 = sadd.s32 %s103, 1
      %s105 = scalar_select %p102, %s103, %s104
      %p108 = pneg %p102
      %p109 = scmp.eq.s32.totalorder %s11, 3
      %p110 = por %p108, %p109
      %p111 = scmp.ne.s32.totalorder %s103, %s106
      %p112 = scmp.eq.s32.totalorder %s11, 0
      %p113 = por %p111, %p112
      %p114 = scmp.ne.s32.totalorder %s103, %s106
      %p115 = scmp.eq.s32.totalorder %s16, 3
      %p116 = por %p114, %p115
      %p117 = scmp.ne.s32.totalorder %s106, %s107
      %p118 = scmp.eq.s32.totalorder %s16, 0
      %p119 = por %p117, %p118
      %p120 = scmp.ne.s32.totalorder %s106, %s107
      %p121 = scmp.eq.s32.totalorder %s17, 3
      %p122 = por %p120, %p121
      %p124 = scmp.ne.s32.totalorder %s107, %s123
      %p125 = scmp.eq.s32.totalorder %s17, 0
      %p126 = por %p124, %p125
      %s128 = sadd.s32 %s127, 1
      %p131 = scmp.eq.s32.totalorder %s11, 3
      %p132 = scmp.ne.s32.totalorder %s127, %s129
      %p133 = scmp.eq.s32.totalorder %s11, 0
      %p134 = por %p132, %p133
      %p135 = scmp.ne.s32.totalorder %s127, %s129
      %p136 = scmp.eq.s32.totalorder %s16, 3
      %p137 = por %p135, %p136
      %p138 = scmp.ne.s32.totalorder %s129, %s130
      %p139 = scmp.eq.s32.totalorder %s16, 0
      %p140 = por %p138, %p139
      %p141 = scmp.ne.s32.totalorder %s129, %s130
      %p142 = scmp.eq.s32.totalorder %s17, 3
      %p143 = por %p141, %p142
      %p145 = scmp.ne.s32.totalorder %s130, %s144
      %p146 = scmp.eq.s32.totalorder %s17, 0
      %p147 = por %p145, %p146
      %s149 = sadd.s32 %s148, 1
      %p152 = scmp.eq.s32.totalorder %s11, 3
      %p153 = scmp.ne.s32.totalorder %s148, %s150
      %p154 = scmp.eq.s32.totalorder %s11, 0
      %p155 = por %p153, %p154
      %p156 = scmp.ne.s32.totalorder %s148, %s150
      %p157 = scmp.eq.s32.totalorder %s16, 3
      %p158 = por %p156, %p157
      %p159 = scmp.ne.s32.totalorder %s150, %s151
      %p160 = scmp.eq.s32.totalorder %s16, 0
      %p161 = por %p159, %p160
      %p162 = scmp.ne.s32.totalorder %s150, %s151
      %p163 = scmp.eq.s32.totalorder %s17, 3
      %p164 = por %p162, %p163
      %p166 = scmp.ne.s32.totalorder %s151, %s165
      %p167 = scmp.eq.s32.totalorder %s17, 0
      %p168 = por %p166, %p167
      %s169 = ssub.s32 %s18, %s30
      %s170 = ssub.s32 %s19, %s26
      %s171 = sor.u32 %s169, %s170
      %p172 = scmp.eq.s32.totalorder %s171, 0
      %s174 = sadd.s32 %s173, 1
      %s175 = scalar_select %p172, %s173, %s174
      %p178 = pneg %p172
      %p179 = scmp.eq.s32.totalorder %s11, 3
      %p180 = por %p178, %p179
      %p181 = scmp.ne.s32.totalorder %s173, %s176
      %p182 = scmp.eq.s32.totalorder %s11, 0
      %p183 = por %p181, %p182
      %p184 = scmp.ne.s32.totalorder %s173, %s176
      %p185 = scmp.eq.s32.totalorder %s16, 3
      %p186 = por %p184, %p185
      %p187 = scmp.ne.s32.totalorder %s176, %s177
      %p188 = scmp.eq.s32.totalorder %s16, 0
      %p189 = por %p187, %p188
      %p190 = scmp.ne.s32.totalorder %s176, %s177
      %p191 = scmp.eq.s32.totalorder %s17, 3
      %p192 = por %p190, %p191
      %p194 = scmp.ne.s32.totalorder %s177, %s193
      %p195 = scmp.eq.s32.totalorder %s17, 0
      %p196 = por %p194, %p195
      %p197 = scmp.le.s32.totalorder 1, %s11
      %p198 = scmp.lt.s32.totalorder %s11, 5
      %p199 = pnand %p197, %p198
      %p200 = pneg %p199
      // Predicated region
      $region9: #{c2f_forward.9} parent=5 // pred_check
        _
      $region10: #{c2f_forward.9} parent=5 // pred_check_branch
        %202 = sbr.rel (%p199) target = $region12
      $region11: #{c2f_forward.9} parent=5 // pred_region
        %s203 = ssub.s32 %s11, 1
        // Predicated region
        $region13: #{c2f_forward.9} parent=11 // pred_check
          %p204 = pneg %p140
        $region14: #{c2f_forward.9} parent=11 // pred_check_branch
          %206 = sbr.rel (%p204) target = $region16
        $region15: #{c2f_forward.9} parent=11 // pred_region
          _
        $region16: #{c2f_forward.9} parent=11 // pred_fallthru
          _
        // Predicated region
        $region17: #{c2f_forward.9} parent=11 // pred_check
          %p207 = pneg %p161
        $region18: #{c2f_forward.9} parent=11 // pred_check_branch
          %209 = sbr.rel (%p207) target = $region20
        $region19: #{c2f_forward.9} parent=11 // pred_region
          _
        $region20: #{c2f_forward.9} parent=11 // pred_fallthru
          _
      $region12: #{c2f_forward.9} parent=5 // pred_fallthru
        _
      %p210 = scmp.lt.s32.totalorder %s11, 4
      // Predicated region
      $region21: #{c2f_forward.9} parent=5 // pred_check
        %p211 = pneg %p210
      $region22: #{c2f_forward.9} parent=5 // pred_check_branch
        %213 = sbr.rel (%p211) target = $region24
      $region23: #{c2f_forward.9} parent=5 // pred_region
        // Predicated region
        $region25: #{c2f_forward.9} parent=23 // pred_check
          %p214 = pneg %p45
        $region26: #{c2f_forward.9} parent=23 // pred_check_branch
          %216 = sbr.rel (%p214) target = $region28
        $region27: #{c2f_forward.9} parent=23 // pred_region
          %s217 = sand.u32 %s35, 1
          %s218 = sand.u32 %s35, 1
          %s219 = smul.addr %s218, 8
          %s220 = scalar_lea.vmem [#allocation4], %s219
          %s221 = smul.addr %s18, 4
          %s222 = sadd.s32 %s19, %s221
          %s223 = smul.addr %s222, 4
          %s224 = scalar_lea.vmem %s0, %s223
          // Predicated region
          $region29: #{c2f_forward.9} parent=27 // pred_check
            _
          $region30: #{c2f_forward.9} parent=27 // pred_check_branch
            %226 = sbr.rel (0) target = $region32
          $region31: #{c2f_forward.9} parent=27 // pred_region
            // Predicated region
            $region33: #{c2f_forward.9} parent=31 // pred_check
              _
            $region34: #{c2f_forward.9} parent=31 // pred_check_branch
              %228 = sbr.rel target = $region36
            $region35: #{c2f_forward.9} parent=31 // pred_region
              // Predicated region
              $region48: #{c2f_forward.9} parent=35 // pred_check
                _
              $region49: #{c2f_forward.9} parent=35 // pred_check_branch
                %246 = sbr.rel (0) target = $region51
              $region50: #{c2f_forward.9} parent=35 // pred_region
                loop: start=0, step=1, limit=1
                $region52: #{c2f_forward.9} parent=50 // loop_pre_header
                  _
                $region53: #{c2f_forward.9} parent=50 // loop_header
                  %s248 = sphi 0, %s252
                  %p249 = scmp.ge.s32.totalorder %s248, 1
                  %s253 = sphi %s224, %s224
                  %s254 = sphi %s220, %s220
                $region54: #{c2f_forward.9} parent=50 // loop_header_branch
                  %251 = sbr.rel (%p249) target = $region58
                $region55: #{c2f_forward.9} parent=50 // loop_body
                  _
                $region56: #{c2f_forward.9} parent=50 // loop_footer
                  %s252 = sadd.s32 1, %s248
                $region57: #{c2f_forward.9} parent=50 // loop_footer_branch
                  %247 = sbr.rel target = $region53
                $region58: #{c2f_forward.9} parent=50 // loop_exit
                  _
                %s256 = ssub.s32 16, 1
                loop: start=0, step=1, limit=1
                $region59: #{c2f_forward.9} parent=50 // loop_pre_header
                  _
                $region60: #{c2f_forward.9} parent=50 // loop_header
                  %s258 = sphi 0, %s262
                  %p259 = scmp.ge.s32.totalorder %s258, 1
                  %s263 = sphi %s224, %s224
                  %s264 = sphi %s220, %s220
                $region61: #{c2f_forward.9} parent=50 // loop_header_branch
                  %261 = sbr.rel (%p259) target = $region65
                $region62: #{c2f_forward.9} parent=50 // loop_body
                  %v265 = vld [vmem:[%s263] sm:%s256]
                  %266 = vst [vmem:[%s264] sm:%s256] %v265
                  %v267 = vld [vmem:[%s263 + $0x8] sm:%s256]
                  %268 = vst [vmem:[%s264 + $0x4] sm:%s256] %v267
                $region63: #{c2f_forward.9} parent=50 // loop_footer
                  %s262 = sadd.s32 1, %s258
                $region64: #{c2f_forward.9} parent=50 // loop_footer_branch
                  %257 = sbr.rel target = $region60
                $region65: #{c2f_forward.9} parent=50 // loop_exit
                  _
              $region51: #{c2f_forward.9} parent=35 // pred_fallthru
                _
            $region36: #{c2f_forward.9} parent=31 // pred_fallthru
              _
            // Predicated region
            $region37: #{c2f_forward.9} parent=31 // pred_check
              _
            $region38: #{c2f_forward.9} parent=31 // pred_check_branch
              %230 = sbr.rel (0) target = $region40
            $region39: #{c2f_forward.9} parent=31 // pred_region
              %s232 = ssub.s32 16, 1
              loop: start=0, step=1, limit=1
              $region41: #{c2f_forward.9} parent=39 // loop_pre_header
                _
              $region42: #{c2f_forward.9} parent=39 // loop_header
                %s234 = sphi 0, %s238
                %p235 = scmp.ge.s32.totalorder %s234, 1
                %s239 = sphi %s224, %s224
                %s240 = sphi %s220, %s220
              $region43: #{c2f_forward.9} parent=39 // loop_header_branch
                %237 = sbr.rel (%p235) target = $region47
              $region44: #{c2f_forward.9} parent=39 // loop_body
                %v241 = vld [vmem:[%s239] sm:%s232]
                %242 = vst [vmem:[%s240] sm:%s232] %v241
                %v243 = vld [vmem:[%s239 + $0x8] sm:%s232]
                %244 = vst [vmem:[%s240 + $0x4] sm:%s232] %v243
              $region45: #{c2f_forward.9} parent=39 // loop_footer
                %s238 = sadd.s32 1, %s234
              $region46: #{c2f_forward.9} parent=39 // loop_footer_branch
                %233 = sbr.rel target = $region42
              $region47: #{c2f_forward.9} parent=39 // loop_exit
                _
            $region40: #{c2f_forward.9} parent=31 // pred_fallthru
              _
          $region32: #{c2f_forward.9} parent=27 // pred_fallthru
            _
          %269 = vnop
        $region28: #{c2f_forward.9} parent=23 // pred_fallthru
          _
        // Predicated region
        $region66: #{c2f_forward.9} parent=23 // pred_check
          %p270 = pneg %p79
        $region67: #{c2f_forward.9} parent=23 // pred_check_branch
          %272 = sbr.rel (%p270) target = $region69
        $region68: #{c2f_forward.9} parent=23 // pred_region
          %s273 = sand.u32 %s69, 1
          %s274 = sand.u32 %s69, 1
          %s275 = smul.addr %s274, 8
          %s276 = scalar_lea.vmem [#allocation5], %s275
          %s277 = ssub.s32 %s19, 1
          %p278 = scmp.gt.s32.totalorder %s277, 0
          %s279 = scalar_select %p278, %s277, 0
          %s280 = smul.addr %s18, 4
          %s281 = sadd.s32 %s279, %s280
          %s282 = smul.addr %s281, 4
          %s283 = scalar_lea.vmem %s1, %s282
          // Predicated region
          $region70: #{c2f_forward.9} parent=68 // pred_check
            _
          $region71: #{c2f_forward.9} parent=68 // pred_check_branch
            %285 = sbr.rel (0) target = $region73
          $region72: #{c2f_forward.9} parent=68 // pred_region
            // Predicated region
            $region74: #{c2f_forward.9} parent=72 // pred_check
              _
            $region75: #{c2f_forward.9} parent=72 // pred_check_branch
              %287 = sbr.rel target = $region77
            $region76: #{c2f_forward.9} parent=72 // pred_region
              // Predicated region
              $region89: #{c2f_forward.9} parent=76 // pred_check
                _
              $region90: #{c2f_forward.9} parent=76 // pred_check_branch
                %305 = sbr.rel (0) target = $region92
              $region91: #{c2f_forward.9} parent=76 // pred_region
                loop: start=0, step=1, limit=1
                $region93: #{c2f_forward.9} parent=91 // loop_pre_header
                  _
                $region94: #{c2f_forward.9} parent=91 // loop_header
                  %s307 = sphi 0, %s311
                  %p308 = scmp.ge.s32.totalorder %s307, 1
                  %s312 = sphi %s283, %s283
                  %s313 = sphi %s276, %s276
                $region95: #{c2f_forward.9} parent=91 // loop_header_branch
                  %310 = sbr.rel (%p308) target = $region99
                $region96: #{c2f_forward.9} parent=91 // loop_body
                  _
                $region97: #{c2f_forward.9} parent=91 // loop_footer
                  %s311 = sadd.s32 1, %s307
                $region98: #{c2f_forward.9} parent=91 // loop_footer_branch
                  %306 = sbr.rel target = $region94
                $region99: #{c2f_forward.9} parent=91 // loop_exit
                  _
                %s315 = ssub.s32 16, 1
                loop: start=0, step=1, limit=1
                $region100: #{c2f_forward.9} parent=91 // loop_pre_header
                  _
                $region101: #{c2f_forward.9} parent=91 // loop_header
                  %s317 = sphi 0, %s321
                  %p318 = scmp.ge.s32.totalorder %s317, 1
                  %s322 = sphi %s283, %s283
                  %s323 = sphi %s276, %s276
                $region102: #{c2f_forward.9} parent=91 // loop_header_branch
                  %320 = sbr.rel (%p318) target = $region106
                $region103: #{c2f_forward.9} parent=91 // loop_body
                  %v324 = vld [vmem:[%s322] sm:%s315]
                  %325 = vst [vmem:[%s323] sm:%s315] %v324
                  %v326 = vld [vmem:[%s322 + $0x8] sm:%s315]
                  %327 = vst [vmem:[%s323 + $0x4] sm:%s315] %v326
                $region104: #{c2f_forward.9} parent=91 // loop_footer
                  %s321 = sadd.s32 1, %s317
                $region105: #{c2f_forward.9} parent=91 // loop_footer_branch
                  %316 = sbr.rel target = $region101
                $region106: #{c2f_forward.9} parent=91 // loop_exit
                  _
              $region92: #{c2f_forward.9} parent=76 // pred_fallthru
                _
            $region77: #{c2f_forward.9} parent=72 // pred_fallthru
              _
            // Predicated region
            $region78: #{c2f_forward.9} parent=72 // pred_check
              _
            $region79: #{c2f_forward.9} parent=72 // pred_check_branch
              %289 = sbr.rel (0) target = $region81
            $region80: #{c2f_forward.9} parent=72 // pred_region
              %s291 = ssub.s32 16, 1
              loop: start=0, step=1, limit=1
              $region82: #{c2f_forward.9} parent=80 // loop_pre_header
                _
              $region83: #{c2f_forward.9} parent=80 // loop_header
                %s293 = sphi 0, %s297
                %p294 = scmp.ge.s32.totalorder %s293, 1
                %s298 = sphi %s283, %s283
                %s299 = sphi %s276, %s276
              $region84: #{c2f_forward.9} parent=80 // loop_header_branch
                %296 = sbr.rel (%p294) target = $region88
              $region85: #{c2f_forward.9} parent=80 // loop_body
                %v300 = vld [vmem:[%s298] sm:%s291]
                %301 = vst [vmem:[%s299] sm:%s291] %v300
                %v302 = vld [vmem:[%s298 + $0x8] sm:%s291]
                %303 = vst [vmem:[%s299 + $0x4] sm:%s291] %v302
              $region86: #{c2f_forward.9} parent=80 // loop_footer
                %s297 = sadd.s32 1, %s293
              $region87: #{c2f_forward.9} parent=80 // loop_footer_branch
                %292 = sbr.rel target = $region83
              $region88: #{c2f_forward.9} parent=80 // loop_exit
                _
            $region81: #{c2f_forward.9} parent=72 // pred_fallthru
              _
          $region73: #{c2f_forward.9} parent=68 // pred_fallthru
            _
          %328 = vnop
        $region69: #{c2f_forward.9} parent=23 // pred_fallthru
          _
        // Predicated region
        $region107: #{c2f_forward.9} parent=23 // pred_check
          %p329 = pneg %p113
        $region108: #{c2f_forward.9} parent=23 // pred_check_branch
          %331 = sbr.rel (%p329) target = $region110
        $region109: #{c2f_forward.9} parent=23 // pred_region
          %s332 = sand.u32 %s103, 1
          %s333 = sand.u32 %s103, 1
          %s334 = smul.addr %s333, 8
          %s335 = scalar_lea.vmem [#allocation6], %s334
          %s336 = sadd.s32 %s19, 1
          %p337 = scmp.lt.s32.totalorder %s336, 1
          %s338 = scalar_select %p337, %s336, 1
          %s339 = smul.addr %s18, 4
          %s340 = sadd.s32 %s338, %s339
          %s341 = smul.addr %s340, 4
          %s342 = scalar_lea.vmem %s2, %s341
          // Predicated region
          $region111: #{c2f_forward.9} parent=109 // pred_check
            _
          $region112: #{c2f_forward.9} parent=109 // pred_check_branch
            %344 = sbr.rel (0) target = $region114
          $region113: #{c2f_forward.9} parent=109 // pred_region
            // Predicated region
            $region115: #{c2f_forward.9} parent=113 // pred_check
              _
            $region116: #{c2f_forward.9} parent=113 // pred_check_branch
              %346 = sbr.rel target = $region118
            $region117: #{c2f_forward.9} parent=113 // pred_region
              // Predicated region
              $region130: #{c2f_forward.9} parent=117 // pred_check
                _
              $region131: #{c2f_forward.9} parent=117 // pred_check_branch
                %364 = sbr.rel (0) target = $region133
              $region132: #{c2f_forward.9} parent=117 // pred_region
                loop: start=0, step=1, limit=1
                $region134: #{c2f_forward.9} parent=132 // loop_pre_header
                  _
                $region135: #{c2f_forward.9} parent=132 // loop_header
                  %s366 = sphi 0, %s370
                  %p367 = scmp.ge.s32.totalorder %s366, 1
                  %s371 = sphi %s342, %s342
                  %s372 = sphi %s335, %s335
                $region136: #{c2f_forward.9} parent=132 // loop_header_branch
                  %369 = sbr.rel (%p367) target = $region140
                $region137: #{c2f_forward.9} parent=132 // loop_body
                  _
                $region138: #{c2f_forward.9} parent=132 // loop_footer
                  %s370 = sadd.s32 1, %s366
                $region139: #{c2f_forward.9} parent=132 // loop_footer_branch
                  %365 = sbr.rel target = $region135
                $region140: #{c2f_forward.9} parent=132 // loop_exit
                  _
                %s374 = ssub.s32 16, 1
                loop: start=0, step=1, limit=1
                $region141: #{c2f_forward.9} parent=132 // loop_pre_header
                  _
                $region142: #{c2f_forward.9} parent=132 // loop_header
                  %s376 = sphi 0, %s380
                  %p377 = scmp.ge.s32.totalorder %s376, 1
                  %s381 = sphi %s342, %s342
                  %s382 = sphi %s335, %s335
                $region143: #{c2f_forward.9} parent=132 // loop_header_branch
                  %379 = sbr.rel (%p377) target = $region147
                $region144: #{c2f_forward.9} parent=132 // loop_body
                  %v383 = vld [vmem:[%s381] sm:%s374]
                  %384 = vst [vmem:[%s382] sm:%s374] %v383
                  %v385 = vld [vmem:[%s381 + $0x8] sm:%s374]
                  %386 = vst [vmem:[%s382 + $0x4] sm:%s374] %v385
                $region145: #{c2f_forward.9} parent=132 // loop_footer
                  %s380 = sadd.s32 1, %s376
                $region146: #{c2f_forward.9} parent=132 // loop_footer_branch
                  %375 = sbr.rel target = $region142
                $region147: #{c2f_forward.9} parent=132 // loop_exit
                  _
              $region133: #{c2f_forward.9} parent=117 // pred_fallthru
                _
            $region118: #{c2f_forward.9} parent=113 // pred_fallthru
              _
            // Predicated region
            $region119: #{c2f_forward.9} parent=113 // pred_check
              _
            $region120: #{c2f_forward.9} parent=113 // pred_check_branch
              %348 = sbr.rel (0) target = $region122
            $region121: #{c2f_forward.9} parent=113 // pred_region
              %s350 = ssub.s32 16, 1
              loop: start=0, step=1, limit=1
              $region123: #{c2f_forward.9} parent=121 // loop_pre_header
                _
              $region124: #{c2f_forward.9} parent=121 // loop_header
                %s352 = sphi 0, %s356
                %p353 = scmp.ge.s32.totalorder %s352, 1
                %s357 = sphi %s342, %s342
                %s358 = sphi %s335, %s335
              $region125: #{c2f_forward.9} parent=121 // loop_header_branch
                %355 = sbr.rel (%p353) target = $region129
              $region126: #{c2f_forward.9} parent=121 // loop_body
                %v359 = vld [vmem:[%s357] sm:%s350]
                %360 = vst [vmem:[%s358] sm:%s350] %v359
                %v361 = vld [vmem:[%s357 + $0x8] sm:%s350]
                %362 = vst [vmem:[%s358 + $0x4] sm:%s350] %v361
              $region127: #{c2f_forward.9} parent=121 // loop_footer
                %s356 = sadd.s32 1, %s352
              $region128: #{c2f_forward.9} parent=121 // loop_footer_branch
                %351 = sbr.rel target = $region124
              $region129: #{c2f_forward.9} parent=121 // loop_exit
                _
            $region122: #{c2f_forward.9} parent=113 // pred_fallthru
              _
          $region114: #{c2f_forward.9} parent=109 // pred_fallthru
            _
          %387 = vnop
        $region110: #{c2f_forward.9} parent=23 // pred_fallthru
          _
      $region24: #{c2f_forward.9} parent=5 // pred_fallthru
        _
      %p388 = scmp.le.s32.totalorder 1, %s11
      %p389 = scmp.lt.s32.totalorder %s11, 5
      %p390 = pnand %p388, %p389
      %p391 = pneg %p390
      // Predicated region
      $region148: #{c2f_forward.9} parent=5 // pred_check
        _
      $region149: #{c2f_forward.9} parent=5 // pred_check_branch
        %393 = sbr.rel (%p390) target = $region151
      $region150: #{c2f_forward.9} parent=5 // pred_region
        %s394 = ssub.s32 %s11, 1
        %s395 = sand.u32 %s38, 1
        %s396 = sand.u32 %s38, 1
        %s397 = smul.addr %s396, 8
        %s398 = scalar_lea.vmem [#allocation4], %s397
        // Predicated region
        $region152: #{c2f_forward.9} parent=150 // pred_check
          %p399 = pneg %p51
        $region153: #{c2f_forward.9} parent=150 // pred_check_branch
          %401 = sbr.rel (%p399) target = $region155
        $region154: #{c2f_forward.9} parent=150 // pred_region
          _
        $region155: #{c2f_forward.9} parent=150 // pred_fallthru
          _
        %s402 = sand.u32 %s72, 1
        %s403 = sand.u32 %s72, 1
        %s404 = smul.addr %s403, 8
        %s405 = scalar_lea.vmem [#allocation5], %s404
        // Predicated region
        $region156: #{c2f_forward.9} parent=150 // pred_check
          %p406 = pneg %p85
        $region157: #{c2f_forward.9} parent=150 // pred_check_branch
          %408 = sbr.rel (%p406) target = $region159
        $region158: #{c2f_forward.9} parent=150 // pred_region
          _
        $region159: #{c2f_forward.9} parent=150 // pred_fallthru
          _
        %s409 = sand.u32 %s106, 1
        %s410 = sand.u32 %s106, 1
        %s411 = smul.addr %s410, 8
        %s412 = scalar_lea.vmem [#allocation6], %s411
        // Predicated region
        $region160: #{c2f_forward.9} parent=150 // pred_check
          %p413 = pneg %p119
        $region161: #{c2f_forward.9} parent=150 // pred_check_branch
          %415 = sbr.rel (%p413) target = $region163
        $region162: #{c2f_forward.9} parent=150 // pred_region
          _
        $region163: #{c2f_forward.9} parent=150 // pred_fallthru
          _
        %s416 = sand.u32 %s38, 1
        %s417 = sand.u32 %s38, 1
        %s418 = smul.addr %s417, 8
        %s419 = scalar_lea.vmem [#allocation4], %s418
        %p420 = pneg %p51
        %p421 = pneg %p48
        %s422 = sand.u32 %s72, 1
        %s423 = sand.u32 %s72, 1
        %s424 = smul.addr %s423, 8
        %s425 = scalar_lea.vmem [#allocation5], %s424
        %p426 = pneg %p85
        %p427 = pneg %p82
        %s428 = sand.u32 %s106, 1
        %s429 = sand.u32 %s106, 1
        %s430 = smul.addr %s429, 8
        %s431 = scalar_lea.vmem [#allocation6], %s430
        %p432 = pneg %p119
        %p433 = pneg %p116
        %p434 = pneg %p140
        %p435 = pneg %p137
        %p436 = pneg %p161
        %p437 = pneg %p158
        %p438 = pneg %p189
        %p439 = pneg %p186
        %p440 = scmp.lt.s32.totalorder %s20, 1
        %s441 = scalar_select %p440, %s20, 1
        %p442 = scmp.lt.s32.totalorder %s21, 1
        %s443 = scalar_select %p442, %s21, 1
        %s444 = smul.addr %s441, 2
        %s445 = sadd.s32 %s443, %s444
        %s446 = scalar_lea.vmem %s5, %s445
        %s447 = ssub.s32 %s21, 1
        %p448 = scmp.gt.s32.totalorder %s447, 0
        %s449 = scalar_select %p448, %s447, 0
        %s450 = sadd.s32 %s21, 1
        %p451 = scmp.lt.s32.totalorder %s450, 1
        %s452 = scalar_select %p451, %s450, 1
        %p453 = scmp.lt.s32.totalorder %s20, 1
        %s454 = scalar_select %p453, %s20, 1
        %p455 = scmp.lt.s32.totalorder %s21, 1
        %s456 = scalar_select %p455, %s21, 1
        %s457 = smul.addr %s454, 2
        %s458 = sadd.s32 %s456, %s457
        %s459 = scalar_lea.vmem %s5, %s458
        %vm461 = vcmask 139264
        %vm462 = vsmask.f32 256
        %vm463 = vmand %vm461, %vm462
        %v464 = vld [vmem:[#allocation2] sm:$0x1]
        %v465 = vsel %vm463, 0, %v464
        %466 = vst [vmem:[#allocation2] sm:$0x1] %v465
        %v467 = vld [vmem:[#allocation2 + $0x8] sm:$0x1]
        %v468 = vsel %vm463, 0, %v467
        %469 = vst [vmem:[#allocation2 + $0x8] sm:$0x1] %v468
        %vm470 = vsmask.f32 7938
        %vm471 = vmand %vm461, %vm470
        %v472 = vld [vmem:[#allocation2 + $0x4] sm:$0x1]
        %v473 = vsel %vm471, 0, %v472
        %474 = vst [vmem:[#allocation2 + $0x4] sm:$0x1] %v473
        %v475 = vld [vmem:[#allocation2 + $0xc] sm:$0x1]
        %v476 = vsel %vm471, 0, %v475
        %477 = vst [vmem:[#allocation2 + $0xc] sm:$0x1] %v476
        %vm478 = vcmask 3072
        %479 = vst.msk [vmem:[#allocation2] sm:$0xf] %vm478, 0
        %vm480 = vcmask 0
        %481 = vst.msk [vmem:[#allocation2 + $0x4] sm:$0x1] %vm480, 0
        %482 = vst.msk [vmem:[#allocation2 + $0x8] sm:$0xf] %vm478, 0
        %483 = vst.msk [vmem:[#allocation2 + $0xc] sm:$0x1] %vm480, 0
        %vm484 = vcmask 142472
        %485 = vst.msk [vmem:[#allocation2] sm:$0xf] %vm484, 0
        %vm486 = vcmask 139400
        %487 = vst.msk [vmem:[#allocation2 + $0x4] sm:$0x1] %vm486, 0
        %488 = vst.msk [vmem:[#allocation2 + $0x8] sm:$0xf] %vm484, 0
        %489 = vst.msk [vmem:[#allocation2 + $0xc] sm:$0x1] %vm486, 0
        %v490 = vld [vmem:[%s398] sm:$0xf]
        %v491 = vld [vmem:[%s398 + $0x4] sm:$0xf]
        %v493 = vshrl.u32 %v490, 16
        %v495 = vrot.slane %v493, 7
        %v496 = vshll.u32 %v490, 16
        %v498 = vor.u32 %v495, %v496
        %v499 = vrot.slane %v495, 4
        %v501 = vshrl.u32 %v491, 16
        %v503 = vrot.slane %v501, 7
        %v504 = vshll.u32 %v491, 16
        %v506 = vor.u32 %v503, %v504
        %v507 = vrot.slane %v503, 4
        %508 = vrot.lane.b32.xlu0 %v498, 1
        %v509 = vpop.permute.xlu0 %508
        %510 = vrot.lane.b32.xlu0 %v499, 1
        %v511 = vpop.permute.xlu0 %510
        %512 = vrot.lane.b32.xlu0 %v506, 1
        %v513 = vpop.permute.xlu0 %512
        %514 = vrot.lane.b32.xlu0 %v507, 1
        %v515 = vpop.permute.xlu0 %514
        %vm520 = vcmask 134152
        %vm521 = vmand %vm520, %vm470
        %v522 = vld [vmem:[#allocation2] sm:$0xf]
        %v523 = vsel %vm521, %v509, %v522
        %524 = vst [vmem:[#allocation2] sm:$0xf] %v523
        %vm525 = vcmask 131080
        %vm526 = vmand %vm525, %vm462
        %v527 = vld [vmem:[#allocation2 + $0x4] sm:$0x1]
        %v528 = vsel %vm526, %v511, %v527
        %529 = vst [vmem:[#allocation2 + $0x4] sm:$0x1] %v528
        %v530 = vld [vmem:[#allocation2 + $0x8] sm:$0xf]
        %v531 = vsel %vm521, %v513, %v530
        %532 = vst [vmem:[#allocation2 + $0x8] sm:$0xf] %v531
        %v533 = vld [vmem:[#allocation2 + $0xc] sm:$0x1]
        %v534 = vsel %vm526, %v515, %v533
        %535 = vst [vmem:[#allocation2 + $0xc] sm:$0x1] %v534
        %p536 = scmp.gt.s32.totalorder %s21, 0
        // Predicated region
        $region164: #{c2f_forward.9} parent=150 // pred_check
          %p537 = pneg %p536
        $region165: #{c2f_forward.9} parent=150 // pred_check_branch
          %539 = sbr.rel (%p537) target = $region167
        $region166: #{c2f_forward.9} parent=150 // pred_region
          %v540 = vld [vmem:[%s405] sm:$0x8]
          %v541 = vld [vmem:[%s405 + $0x4] sm:$0x8]
          %v543 = vshrl.u32 %v540, 16
          %v545 = vrot.slane %v543, 7
          %v546 = vrot.slane %v545, 4
          %v548 = vshrl.u32 %v541, 16
          %v550 = vrot.slane %v548, 7
          %v551 = vrot.slane %v550, 4
          %552 = vrot.lane.b32.xlu0 %v546, 1
          %v553 = vpop.permute.xlu0 %552
          %554 = vrot.lane.b32.xlu0 %v551, 1
          %v555 = vpop.permute.xlu0 %554
          %v558 = vld [vmem:[#allocation2] sm:$0x1]
          %v559 = vsel %vm526, %v553, %v558
          %560 = vst [vmem:[#allocation2] sm:$0x1] %v559
          %v561 = vld [vmem:[#allocation2 + $0x8] sm:$0x1]
          %v562 = vsel %vm526, %v555, %v561
          %563 = vst [vmem:[#allocation2 + $0x8] sm:$0x1] %v562
        $region167: #{c2f_forward.9} parent=150 // pred_fallthru
          _
        %p564 = scmp.lt.s32.totalorder %s21, 1
        // Predicated region
        $region168: #{c2f_forward.9} parent=150 // pred_check
          %p565 = pneg %p564
        $region169: #{c2f_forward.9} parent=150 // pred_check_branch
          %567 = sbr.rel (%p565) target = $region171
        $region170: #{c2f_forward.9} parent=150 // pred_region
          %v568 = vld [vmem:[%s412] sm:$0x1]
          %v569 = vld [vmem:[%s412 + $0x4] sm:$0x1]
          %v571 = vshll.u32 %v568, 16
          %v574 = vshll.u32 %v569, 16
          %576 = vrot.lane.b32.xlu0 %v571, 1
          %v577 = vpop.permute.xlu0 %576
          %578 = vrot.lane.b32.xlu0 %v574, 1
          %v579 = vpop.permute.xlu0 %578
          %vm582 = vmand %vm525, %vm470
          %v583 = vld [vmem:[#allocation2 + $0x4] sm:$0x1]
          %v584 = vsel %vm582, %v577, %v583
          %585 = vst [vmem:[#allocation2 + $0x4] sm:$0x1] %v584
          %v586 = vld [vmem:[#allocation2 + $0xc] sm:$0x1]
          %v587 = vsel %vm582, %v579, %v586
          %588 = vst [vmem:[#allocation2 + $0xc] sm:$0x1] %v587
        $region171: #{c2f_forward.9} parent=150 // pred_fallthru
          _
        %v589 = vld [vmem:[#allocation2] sm:$0xf]
        %v590 = vld [vmem:[#allocation2 + $0x8] sm:$0xf]
        %vm591 = vcmask 125952
        %592 = vst.msk [vmem:[#allocation3] sm:$0xf] %vm591, %v589
        %593 = vst.msk [vmem:[#allocation3 + $0x4] sm:$0xf] %vm591, %v590
        %v594 = vld [vmem:[#allocation2] sm:$0xf]
        %v595 = vld [vmem:[#allocation2 + $0x8] sm:$0xf]
        %598 = vrot.lane.b32.xlu0 %v594, 127
        %v599 = vpop.permute.xlu0 %598
        %600 = vrot.lane.b32.xlu0 %v595, 127
        %v601 = vpop.permute.xlu0 %600
        %s604 = scalar_lea.vmem [#allocation3], 8
        %605 = vst.msk [vmem:[%s604] sm:$0xf] %vm591, %v599
        %606 = vst.msk [vmem:[%s604 + $0x4] sm:$0xf] %vm591, %v601
        %v607 = vld [vmem:[#allocation2] sm:$0xf]
        %v608 = vld [vmem:[#allocation2 + $0x8] sm:$0xf]
        %611 = vrot.lane.b32.xlu0 %v607, 126
        %v612 = vpop.permute.xlu0 %611
        %613 = vrot.lane.b32.xlu0 %v608, 126
        %v614 = vpop.permute.xlu0 %613
        %s617 = scalar_lea.vmem [#allocation3], 16
        %618 = vst.msk [vmem:[%s617] sm:$0xf] %vm591, %v612
        %619 = vst.msk [vmem:[%s617 + $0x4] sm:$0xf] %vm591, %v614
        %v620 = vld [vmem:[#allocation2] sm:$0xf]
        %v621 = vld [vmem:[#allocation2 + $0x4] sm:$0x1]
        %v622 = vld [vmem:[#allocation2 + $0x8] sm:$0xf]
        %v623 = vld [vmem:[#allocation2 + $0xc] sm:$0x1]
        %vm624 = vsmask.f32 3328
        %vm625 = vsmask.f32 7440
        %vm626 = vmor %vm624, %vm625
        %v628 = vshrl.u32 %v620, 16
        %v630 = vrot.slane %v628, 4
        %v631 = vshll.u32 %v620, 16
        %v633 = vrot.slane %v631, 5
        %v634 = vor.u32 %v630, %v633
        %v635 = vrot.slane %v634, 4
        %v637 = vshll.u32 %v621, 16
        %v639 = vrot.slane %v637, 5
        %v640 = vsel %vm626, %v635, %v639
        %v642 = vshrl.u32 %v622, 16
        %v644 = vrot.slane %v642, 4
        %v645 = vshll.u32 %v622, 16
        %v647 = vrot.slane %v645, 5
        %v648 = vor.u32 %v644, %v647
        %v649 = vrot.slane %v648, 4
        %v651 = vshll.u32 %v623, 16
        %v653 = vrot.slane %v651, 5
        %v654 = vsel %vm626, %v649, %v653
        %s657 = scalar_lea.vmem [#allocation3], 24
        %658 = vst.msk [vmem:[%s657] sm:$0xf] %vm591, %v640
        %659 = vst.msk [vmem:[%s657 + $0x4] sm:$0xf] %vm591, %v654
        %v660 = vld [vmem:[#allocation2] sm:$0xf]
        %v661 = vld [vmem:[#allocation2 + $0x4] sm:$0x1]
        %v662 = vld [vmem:[#allocation2 + $0x8] sm:$0xf]
        %v663 = vld [vmem:[#allocation2 + $0xc] sm:$0x1]
        %v665 = vshrl.u32 %v660, 16
        %v667 = vrot.slane %v665, 4
        %v668 = vshll.u32 %v660, 16
        %v670 = vrot.slane %v668, 5
        %v671 = vor.u32 %v667, %v670
        %v672 = vrot.slane %v671, 4
        %v674 = vshll.u32 %v661, 16
        %v676 = vrot.slane %v674, 5
        %v677 = vsel %vm626, %v672, %v676
        %v679 = vshrl.u32 %v662, 16
        %v681 = vrot.slane %v679, 4
        %v682 = vshll.u32 %v662, 16
        %v684 = vrot.slane %v682, 5
        %v685 = vor.u32 %v681, %v684
        %v686 = vrot.slane %v685, 4
        %v688 = vshll.u32 %v663, 16
        %v690 = vrot.slane %v688, 5
        %v691 = vsel %vm626, %v686, %v690
        %692 = vrot.lane.b32.xlu0 %v677, 127
        %v693 = vpop.permute.xlu0 %692
        %694 = vrot.lane.b32.xlu0 %v691, 127
        %v695 = vpop.permute.xlu0 %694
        %s698 = scalar_lea.vmem [#allocation3], 32
        %699 = vst.msk [vmem:[%s698] sm:$0xf] %vm591, %v693
        %700 = vst.msk [vmem:[%s698 + $0x4] sm:$0xf] %vm591, %v695
        %v701 = vld [vmem:[#allocation2] sm:$0xf]
        %v702 = vld [vmem:[#allocation2 + $0x4] sm:$0x1]
        %v703 = vld [vmem:[#allocation2 + $0x8] sm:$0xf]
        %v704 = vld [vmem:[#allocation2 + $0xc] sm:$0x1]
        %v706 = vshrl.u32 %v701, 16
        %v708 = vrot.slane %v706, 4
        %v709 = vshll.u32 %v701, 16
        %v711 = vrot.slane %v709, 5
        %v712 = vor.u32 %v708, %v711
        %v713 = vrot.slane %v712, 4
        %v715 = vshll.u32 %v702, 16
        %v717 = vrot.slane %v715, 5
        %v718 = vsel %vm626, %v713, %v717
        %v720 = vshrl.u32 %v703, 16
        %v722 = vrot.slane %v720, 4
        %v723 = vshll.u32 %v703, 16
        %v725 = vrot.slane %v723, 5
        %v726 = vor.u32 %v722, %v725
        %v727 = vrot.slane %v726, 4
        %v729 = vshll.u32 %v704, 16
        %v731 = vrot.slane %v729, 5
        %v732 = vsel %vm626, %v727, %v731
        %733 = vrot.lane.b32.xlu0 %v718, 126
        %v734 = vpop.permute.xlu0 %733
        %735 = vrot.lane.b32.xlu0 %v732, 126
        %v736 = vpop.permute.xlu0 %735
        %s739 = scalar_lea.vmem [#allocation3], 40
        %740 = vst.msk [vmem:[%s739] sm:$0xf] %vm591, %v734
        %741 = vst.msk [vmem:[%s739 + $0x4] sm:$0xf] %vm591, %v736
        %v742 = vld [vmem:[#allocation2] sm:$0xe]
        %v743 = vld [vmem:[#allocation2 + $0x4] sm:$0x1]
        %v744 = vld [vmem:[#allocation2 + $0x8] sm:$0xe]
        %v745 = vld [vmem:[#allocation2 + $0xc] sm:$0x1]
        %vm750 = vcmask 1042432
        %vm751 = vcmask 1046532
        %vm752 = vmor %vm750, %vm751
        %v753 = vrot.slane %v742, 5
        %v754 = vrot.slane %v753, 4
        %v755 = vrot.slane %v743, 5
        %v756 = vsel %vm752, %v754, %v755
        %v757 = vrot.slane %v744, 5
        %v758 = vrot.slane %v757, 4
        %v759 = vrot.slane %v745, 5
        %v760 = vsel %vm752, %v758, %v759
        %s763 = scalar_lea.vmem [#allocation3], 48
        %764 = vst.msk [vmem:[%s763] sm:$0xf] %vm591, %v756
        %765 = vst.msk [vmem:[%s763 + $0x4] sm:$0xf] %vm591, %v760
        %v766 = vld [vmem:[#allocation2] sm:$0xe]
        %v767 = vld [vmem:[#allocation2 + $0x4] sm:$0x1]
        %v768 = vld [vmem:[#allocation2 + $0x8] sm:$0xe]
        %v769 = vld [vmem:[#allocation2 + $0xc] sm:$0x1]
        %v774 = vrot.slane %v766, 5
        %v775 = vrot.slane %v774, 4
        %v776 = vrot.slane %v767, 5
        %v777 = vsel %vm752, %v775, %v776
        %v778 = vrot.slane %v768, 5
        %v779 = vrot.slane %v778, 4
        %v780 = vrot.slane %v769, 5
        %v781 = vsel %vm752, %v779, %v780
        %782 = vrot.lane.b32.xlu0 %v777, 127
        %v783 = vpop.permute.xlu0 %782
        %784 = vrot.lane.b32.xlu0 %v781, 127
        %v785 = vpop.permute.xlu0 %784
        %s788 = scalar_lea.vmem [#allocation3], 56
        %789 = vst.msk [vmem:[%s788] sm:$0xf] %vm591, %v783
        %790 = vst.msk [vmem:[%s788 + $0x4] sm:$0xf] %vm591, %v785
        %v791 = vld [vmem:[#allocation2] sm:$0xe]
        %v792 = vld [vmem:[#allocation2 + $0x4] sm:$0x1]
        %v793 = vld [vmem:[#allocation2 + $0x8] sm:$0xe]
        %v794 = vld [vmem:[#allocation2 + $0xc] sm:$0x1]
        %v799 = vrot.slane %v791, 5
        %v800 = vrot.slane %v799, 4
        %v801 = vrot.slane %v792, 5
        %v802 = vsel %vm752, %v800, %v801
        %v803 = vrot.slane %v793, 5
        %v804 = vrot.slane %v803, 4
        %v805 = vrot.slane %v794, 5
        %v806 = vsel %vm752, %v804, %v805
        %807 = vrot.lane.b32.xlu0 %v802, 126
        %v808 = vpop.permute.xlu0 %807
        %809 = vrot.lane.b32.xlu0 %v806, 126
        %v810 = vpop.permute.xlu0 %809
        %s813 = scalar_lea.vmem [#allocation3], 64
        %814 = vst.msk [vmem:[%s813] sm:$0xf] %vm591, %v808
        %815 = vst.msk [vmem:[%s813 + $0x4] sm:$0xf] %vm591, %v810
        %v816 = vld [vmem:[#allocation3] sm:$0xf]
        %v817 = vld [vmem:[#allocation3 + $0x4] sm:$0xf]
        %v818 = vld [vmem:[#allocation3 + $0x8] sm:$0xf]
        %v819 = vld [vmem:[#allocation3 + $0xc] sm:$0xf]
        %v820 = vld [vmem:[#allocation3 + $0x10] sm:$0xf]
        %v821 = vld [vmem:[#allocation3 + $0x14] sm:$0xf]
        %v822 = vld [vmem:[#allocation3 + $0x18] sm:$0xf]
        %v823 = vld [vmem:[#allocation3 + $0x1c] sm:$0xf]
        %v824 = vld [vmem:[#allocation3 + $0x20] sm:$0xf]
        %v825 = vld [vmem:[#allocation3 + $0x24] sm:$0xf]
        %v826 = vld [vmem:[#allocation3 + $0x28] sm:$0xf]
        %v827 = vld [vmem:[#allocation3 + $0x2c] sm:$0xf]
        %v828 = vld [vmem:[#allocation3 + $0x30] sm:$0xf]
        %v829 = vld [vmem:[#allocation3 + $0x34] sm:$0xf]
        %v830 = vld [vmem:[#allocation3 + $0x38] sm:$0xf]
        %v831 = vld [vmem:[#allocation3 + $0x3c] sm:$0xf]
        %v832 = vld [vmem:[#allocation3 + $0x40] sm:$0xf]
        %v833 = vld [vmem:[#allocation3 + $0x44] sm:$0xf]
        %v836 = vpack.i.b16 %v817, %v816
        %v838 = vshrl.u32 %v816, 16
        %v839 = vshrl.u32 %v817, 16
        %v840 = vpack.i.b16 %v839, %v838
        %v844 = vpack.i.b16 %v819, %v818
        %v846 = vshrl.u32 %v818, 16
        %v847 = vshrl.u32 %v819, 16
        %v848 = vpack.i.b16 %v847, %v846
        %v852 = vpack.i.b16 %v821, %v820
        %v854 = vshrl.u32 %v820, 16
        %v855 = vshrl.u32 %v821, 16
        %v856 = vpack.i.b16 %v855, %v854
        %v860 = vpack.i.b16 %v823, %v822
        %v862 = vshrl.u32 %v822, 16
        %v863 = vshrl.u32 %v823, 16
        %v864 = vpack.i.b16 %v863, %v862
        %v868 = vpack.i.b16 %v825, %v824
        %v870 = vshrl.u32 %v824, 16
        %v871 = vshrl.u32 %v825, 16
        %v872 = vpack.i.b16 %v871, %v870
        %v876 = vpack.i.b16 %v827, %v826
        %v878 = vshrl.u32 %v826, 16
        %v879 = vshrl.u32 %v827, 16
        %v880 = vpack.i.b16 %v879, %v878
        %v884 = vpack.i.b16 %v829, %v828
        %v886 = vshrl.u32 %v828, 16
        %v887 = vshrl.u32 %v829, 16
        %v888 = vpack.i.b16 %v887, %v886
        %v892 = vpack.i.b16 %v831, %v830
        %v894 = vshrl.u32 %v830, 16
        %v895 = vshrl.u32 %v831, 16
        %v896 = vpack.i.b16 %v895, %v894
        %v900 = vpack.i.b16 %v833, %v832
        %v901 = vshrl.u32 %v832, 16
        %v902 = vshrl.u32 %v833, 16
        %v903 = vpack.i.b16 %v902, %v901
        %v904 = vcombine.low %v836, %v852
        %v906 = vunpack.c.l.s4 1983009808
        %v907 = vunpack.c.0.s8 %v906
        %v908 = vlaneseq
        %v909 = vshrl.u32 %v908, 7
        %v910 = vsub.s32 %v907, %v909
        %v911 = vrot.slane %v904, %v910
        %v912 = vcombine.low %v844, %v860
        %v914 = vunpack.c.l.s4 1983009808
        %v915 = vunpack.c.0.s8 %v914
        %v916 = vlaneseq
        %v917 = vshrl.u32 %v916, 7
        %v918 = vsub.s32 %v915, %v917
        %v919 = vrot.slane %v912, %v918
        %v920 = vcombine.low %v911, %v919
        %v921 = vcombine.high %v911, %v919
        %v923 = vunpack.c.l.s4 1934713408
        %v924 = vunpack.c.0.s8 %v923
        %v925 = vlaneseq
        %v926 = vshrl.u32 %v925, 7
        %v927 = vsub.s32 %v924, %v926
        %v928 = vrot.slane %v920, %v927
        %v930 = vunpack.c.l.s4 1934713408
        %v931 = vunpack.c.0.s8 %v930
        %v932 = vlaneseq
        %v933 = vshrl.u32 %v932, 7
        %v934 = vsub.s32 %v931, %v933
        %v935 = vrot.slane %v921, %v934
        %v936 = vcombine.high %v928, 0
        %v937 = vcombine.high %v935, 0
        %v938 = vcombine.low %v840, %v856
        %v940 = vunpack.c.l.s4 1983009808
        %v941 = vunpack.c.0.s8 %v940
        %v942 = vlaneseq
        %v943 = vshrl.u32 %v942, 7
        %v944 = vsub.s32 %v941, %v943
        %v945 = vrot.slane %v938, %v944
        %v946 = vcombine.low %v848, %v864
        %v948 = vunpack.c.l.s4 1983009808
        %v949 = vunpack.c.0.s8 %v948
        %v950 = vlaneseq
        %v951 = vshrl.u32 %v950, 7
        %v952 = vsub.s32 %v949, %v951
        %v953 = vrot.slane %v946, %v952
        %v954 = vcombine.low %v945, %v953
        %v955 = vcombine.high %v945, %v953
        %v957 = vunpack.c.l.s4 1934713408
        %v958 = vunpack.c.0.s8 %v957
        %v959 = vlaneseq
        %v960 = vshrl.u32 %v959, 7
        %v961 = vsub.s32 %v958, %v960
        %v962 = vrot.slane %v954, %v961
        %v964 = vunpack.c.l.s4 1934713408
        %v965 = vunpack.c.0.s8 %v964
        %v966 = vlaneseq
        %v967 = vshrl.u32 %v966, 7
        %v968 = vsub.s32 %v965, %v967
        %v969 = vrot.slane %v955, %v968
        %v970 = vcombine.high %v962, 0
        %v971 = vcombine.high %v969, 0
        %v972 = vcombine.low %v868, %v884
        %v974 = vunpack.c.l.s4 1983009808
        %v975 = vunpack.c.0.s8 %v974
        %v976 = vlaneseq
        %v977 = vshrl.u32 %v976, 7
        %v978 = vsub.s32 %v975, %v977
        %v979 = vrot.slane %v972, %v978
        %v980 = vcombine.low %v876, %v892
        %v982 = vunpack.c.l.s4 1983009808
        %v983 = vunpack.c.0.s8 %v982
        %v984 = vlaneseq
        %v985 = vshrl.u32 %v984, 7
        %v986 = vsub.s32 %v983, %v985
        %v987 = vrot.slane %v980, %v986
        %v988 = vcombine.low %v979, %v987
        %v989 = vcombine.high %v979, %v987
        %v991 = vunpack.c.l.s4 1934713408
        %v992 = vunpack.c.0.s8 %v991
        %v993 = vlaneseq
        %v994 = vshrl.u32 %v993, 7
        %v995 = vsub.s32 %v992, %v994
        %v996 = vrot.slane %v988, %v995
        %v998 = vunpack.c.l.s4 1934713408
        %v999 = vunpack.c.0.s8 %v998
        %v1000 = vlaneseq
        %v1001 = vshrl.u32 %v1000, 7
        %v1002 = vsub.s32 %v999, %v1001
        %v1003 = vrot.slane %v989, %v1002
        %v1004 = vcombine.high %v996, 0
        %v1005 = vcombine.high %v1003, 0
        %v1006 = vcombine.low %v872, %v888
        %v1008 = vunpack.c.l.s4 1983009808
        %v1009 = vunpack.c.0.s8 %v1008
        %v1010 = vlaneseq
        %v1011 = vshrl.u32 %v1010, 7
        %v1012 = vsub.s32 %v1009, %v1011
        %v1013 = vrot.slane %v1006, %v1012
        %v1014 = vcombine.low %v880, %v896
        %v1016 = vunpack.c.l.s4 1983009808
        %v1017 = vunpack.c.0.s8 %v1016
        %v1018 = vlaneseq
        %v1019 = vshrl.u32 %v1018, 7
        %v1020 = vsub.s32 %v1017, %v1019
        %v1021 = vrot.slane %v1014, %v1020
        %v1022 = vcombine.low %v1013, %v1021
        %v1023 = vcombine.high %v1013, %v1021
        %v1025 = vunpack.c.l.s4 1934713408
        %v1026 = vunpack.c.0.s8 %v1025
        %v1027 = vlaneseq
        %v1028 = vshrl.u32 %v1027, 7
        %v1029 = vsub.s32 %v1026, %v1028
        %v1030 = vrot.slane %v1022, %v1029
        %v1032 = vunpack.c.l.s4 1934713408
        %v1033 = vunpack.c.0.s8 %v1032
        %v1034 = vlaneseq
        %v1035 = vshrl.u32 %v1034, 7
        %v1036 = vsub.s32 %v1033, %v1035
        %v1037 = vrot.slane %v1023, %v1036
        %v1038 = vcombine.high %v1030, 0
        %v1039 = vcombine.high %v1037, 0
        %v1042 = vunpack.c.l.s4 1983009808
        %v1043 = vunpack.c.0.s8 %v1042
        %v1044 = vlaneseq
        %v1045 = vshrl.u32 %v1044, 7
        %v1046 = vsub.s32 %v1043, %v1045
        %v1047 = vrot.slane %v900, %v1046
        %v1048 = vcombine.high %v1047, 0
        %v1050 = vunpack.c.l.s4 1934713408
        %v1051 = vunpack.c.0.s8 %v1050
        %v1052 = vlaneseq
        %v1053 = vshrl.u32 %v1052, 7
        %v1054 = vsub.s32 %v1051, %v1053
        %v1055 = vrot.slane %v1047, %v1054
        %v1057 = vunpack.c.l.s4 1934713408
        %v1058 = vunpack.c.0.s8 %v1057
        %v1059 = vlaneseq
        %v1060 = vshrl.u32 %v1059, 7
        %v1061 = vsub.s32 %v1058, %v1060
        %v1062 = vrot.slane %v1048, %v1061
        %v1063 = vcombine.high %v1055, 0
        %v1064 = vcombine.high %v1062, 0
        %v1067 = vunpack.c.l.s4 1983009808
        %v1068 = vunpack.c.0.s8 %v1067
        %v1069 = vlaneseq
        %v1070 = vshrl.u32 %v1069, 7
        %v1071 = vsub.s32 %v1068, %v1070
        %v1072 = vrot.slane %v903, %v1071
        %v1073 = vcombine.high %v1072, 0
        %v1075 = vunpack.c.l.s4 1934713408
        %v1076 = vunpack.c.0.s8 %v1075
        %v1077 = vlaneseq
        %v1078 = vshrl.u32 %v1077, 7
        %v1079 = vsub.s32 %v1076, %v1078
        %v1080 = vrot.slane %v1072, %v1079
        %v1082 = vunpack.c.l.s4 1934713408
        %v1083 = vunpack.c.0.s8 %v1082
        %v1084 = vlaneseq
        %v1085 = vshrl.u32 %v1084, 7
        %v1086 = vsub.s32 %v1083, %v1085
        %v1087 = vrot.slane %v1073, %v1086
        %v1088 = vcombine.high %v1080, 0
        %v1089 = vcombine.high %v1087, 0
        %v1093 = vunpack.c.l.b16 %v928
        %v1094 = vunpack.c.l.b16 %v996
        %v1095 = vunpack.c.l.b16 %v1055
        %v1096 = vpack.c.b16 %v1094, %v1093
        %v1097 = vpack.c.b16 %v1095, %v1095
        %v1101 = vunpack.c.l.b16 %v962
        %v1102 = vunpack.c.l.b16 %v1030
        %v1103 = vunpack.c.l.b16 %v1080
        %v1104 = vpack.c.b16 %v1102, %v1101
        %v1105 = vpack.c.b16 %v1103, %v1103
        %1106 = vrot.lane.b32.xlu0 %v1104, 16
        %v1107 = vpop.permute.xlu0 %1106
        %1108 = vrot.lane.b32.xlu0 %v1105, 16
        %v1109 = vpop.permute.xlu0 %1108
        %v1113 = vunpack.c.l.b16 %v936
        %v1114 = vunpack.c.l.b16 %v1004
        %v1115 = vunpack.c.l.b16 %v1063
        %v1116 = vpack.c.b16 %v1114, %v1113
        %v1117 = vpack.c.b16 %v1115, %v1115
        %1118 = vrot.lane.b32.xlu0 %v1116, 32
        %v1119 = vpop.permute.xlu0 %1118
        %1120 = vrot.lane.b32.xlu0 %v1117, 32
        %v1121 = vpop.permute.xlu0 %1120
        %v1125 = vunpack.c.l.b16 %v970
        %v1126 = vunpack.c.l.b16 %v1038
        %v1127 = vunpack.c.l.b16 %v1088
        %v1128 = vpack.c.b16 %v1126, %v1125
        %v1129 = vpack.c.b16 %v1127, %v1127
        %1130 = vrot.lane.b32.xlu0 %v1128, 48
        %v1131 = vpop.permute.xlu0 %1130
        %1132 = vrot.lane.b32.xlu0 %v1129, 48
        %v1133 = vpop.permute.xlu0 %1132
        %v1137 = vunpack.c.l.b16 %v935
        %v1138 = vunpack.c.l.b16 %v1003
        %v1139 = vunpack.c.l.b16 %v1062
        %v1140 = vpack.c.b16 %v1138, %v1137
        %v1141 = vpack.c.b16 %v1139, %v1139
        %1142 = vrot.lane.b32.xlu0 %v1140, 64
        %v1143 = vpop.permute.xlu0 %1142
        %1144 = vrot.lane.b32.xlu0 %v1141, 64
        %v1145 = vpop.permute.xlu0 %1144
        %v1149 = vunpack.c.l.b16 %v969
        %v1150 = vunpack.c.l.b16 %v1037
        %v1151 = vunpack.c.l.b16 %v1087
        %v1152 = vpack.c.b16 %v1150, %v1149
        %v1153 = vpack.c.b16 %v1151, %v1151
        %1154 = vrot.lane.b32.xlu0 %v1152, 80
        %v1155 = vpop.permute.xlu0 %1154
        %1156 = vrot.lane.b32.xlu0 %v1153, 80
        %v1157 = vpop.permute.xlu0 %1156
        %v1161 = vunpack.c.l.b16 %v937
        %v1162 = vunpack.c.l.b16 %v1005
        %v1163 = vunpack.c.l.b16 %v1064
        %v1164 = vpack.c.b16 %v1162, %v1161
        %v1165 = vpack.c.b16 %v1163, %v1163
        %1166 = vrot.lane.b32.xlu0 %v1164, 96
        %v1167 = vpop.permute.xlu0 %1166
        %1168 = vrot.lane.b32.xlu0 %v1165, 96
        %v1169 = vpop.permute.xlu0 %1168
        %v1173 = vunpack.c.l.b16 %v971
        %v1174 = vunpack.c.l.b16 %v1039
        %v1175 = vunpack.c.l.b16 %v1089
        %v1176 = vpack.c.b16 %v1174, %v1173
        %v1177 = vpack.c.b16 %v1175, %v1175
        %1178 = vrot.lane.b32.xlu0 %v1176, 112
        %v1179 = vpop.permute.xlu0 %1178
        %1180 = vrot.lane.b32.xlu0 %v1177, 112
        %v1181 = vpop.permute.xlu0 %1180
        %vm1182 = vcmask 130048
        %v1185 = vsel %vm1182, %v1096, %v1107
        %v1188 = vsel %vm1182, %v1097, %v1109
        %vm1189 = vcmask 261120
        %v1191 = vsel %vm1189, %v1185, %v1119
        %v1193 = vsel %vm1189, %v1188, %v1121
        %vm1194 = vcmask 392192
        %v1196 = vsel %vm1194, %v1191, %v1131
        %v1198 = vsel %vm1194, %v1193, %v1133
        %vm1199 = vcmask 523264
        %v1201 = vsel %vm1199, %v1196, %v1143
        %v1203 = vsel %vm1199, %v1198, %v1145
        %vm1204 = vcmask 654336
        %v1206 = vsel %vm1204, %v1201, %v1155
        %v1208 = vsel %vm1204, %v1203, %v1157
        %vm1209 = vcmask 785408
        %v1211 = vsel %vm1209, %v1206, %v1167
        %v1213 = vsel %vm1209, %v1208, %v1169
        %vm1214 = vcmask 916480
        %v1216 = vsel %vm1214, %v1211, %v1179
        %v1219 = vsel %vm1214, %v1213, %v1181
        %v1220 = vld [vmem:[%s3] sm:$0x1]
        %v1221 = vld [vmem:[%s4] sm:$0x3]
        %1223 = vset.pattern.permute.xlu0 0
        %1224 = vperm.xlu0 %1223, %v1221
        %v1225 = vpop.permute.xlu0 %1224
        %vm1227 = vcmask 146432
        %v1229 = vsel %vm1227, %v1220, 0
        %vm1231 = vcmask 1040384
        %v1232 = vsel %vm1231, %v1219, 0
        %1234 = vmatprep.subr.bf16.mxu0 0
        %1235 = vmatpush1.bf16.msra.mxu0 0
        %1236 = vmatprep.subr.bf16.mxu0 0
        %1237 = vmatpush1.bf16.msra.mxu0 0
        %1238 = vmatprep.subr.bf16.mxu0 0
        %1239 = vmatpush1.bf16.msra.mxu0 0
        %1240 = vmatprep.subr.bf16.mxu0 0
        %1241 = vmatpush1.bf16.msra.mxu0 0
        %1242 = vmatprep.subr.bf16.mxu0 0
        %1243 = vmatpush1.bf16.msra.mxu0 0
        %1244 = vmatprep.subr.bf16.mxu0 0
        %1245 = vmatpush1.bf16.msra.mxu0 0
        %1246 = vmatprep.subr.bf16.mxu0 0
        %1247 = vmatpush1.bf16.msra.mxu0 %v1232
        %1248 = vmatprep.subr.bf16.mxu0 0
        %1249 = vmatpush1.bf16.msra.mxu0 %v1216
        %1250 = vmatprep.subr.bf16.mxu0 0
        %1251 = vmatpush2.bf16.msra.mxu0 0
        %1252 = vmatprep.subr.bf16.mxu0 0
        %1253 = vmatpush2.bf16.msra.mxu0 0
        %1254 = vmatprep.subr.bf16.mxu0 0
        %1255 = vmatpush2.bf16.msra.mxu0 0
        %1256 = vmatprep.subr.bf16.mxu0 0
        %1257 = vmatpush2.bf16.msra.mxu0 0
        %1258 = vmatprep.subr.bf16.mxu0 0
        %1259 = vmatpush2.bf16.msra.mxu0 0
        %1260 = vmatprep.subr.bf16.mxu0 0
        %1261 = vmatpush2.bf16.msra.mxu0 0
        %1262 = vmatprep.subr.bf16.mxu0 0
        %1263 = vmatpush2.bf16.msra.mxu0 0
        %1264 = vmatprep.subr.bf16.mxu0 0
        %1265 = vmatpush2.bf16.msra.mxu0 0
        %1266 = vmatprep.mubr.bf16.mxu0 0
        %1267 = vmatmul.mubr.bf16.gmra.mxu0 %v1229
        %v1268 = vpop.f32.mrf.mxu0
        %v1269 = vadd.f32 %v1225, %v1268
        %v1270 = vpop.f32.mrf.mxu0
        %v1271 = vpop.f32.mrf.mxu0
        %v1272 = vpop.f32.mrf.mxu0
        %1273 = vdwg.mxu0
        %v1274 = vsub.f32 0.0, %v1269
        %v1275 = vmul.f32 %v1274, 1.442695
        %v1276 = vpow.pop %v1275
        %v1277 = vadd.f32 %v1276, 1.0
        %v1278 = vrcp.pop %v1277
        %v1279 = vmul.f32 %v1269, %v1278
        %v1280 = vpack.c.bf16 %v1279, %v1279
        %1281 = vst [vmem:[%s459] sm:$0x1] %v1280
        %p1282 = scmp.lt.s32.totalorder %s20, 1
        %s1283 = scalar_select %p1282, %s20, 1
        %p1284 = scmp.lt.s32.totalorder %s21, 1
        %s1285 = scalar_select %p1284, %s21, 1
        %s1286 = smul.addr %s1283, 2
        %s1287 = sadd.s32 %s1285, %s1286
        %s1288 = scalar_lea.vmem %s5, %s1287
        // Predicated region
        $region172: #{c2f_forward.9} parent=150 // pred_check
          %p1289 = pneg %p186
        $region173: #{c2f_forward.9} parent=150 // pred_check_branch
          %1291 = sbr.rel (%p1289) target = $region175
        $region174: #{c2f_forward.9} parent=150 // pred_region
          _
        $region175: #{c2f_forward.9} parent=150 // pred_fallthru
          _
      $region151: #{c2f_forward.9} parent=5 // pred_fallthru
        _
      %p1292 = scmp.le.s32.totalorder 2, %s11
      // Predicated region
      $region176: #{c2f_forward.9} parent=5 // pred_check
        %p1293 = pneg %p1292
      $region177: #{c2f_forward.9} parent=5 // pred_check_branch
        %1295 = sbr.rel (%p1293) target = $region179
      $region178: #{c2f_forward.9} parent=5 // pred_region
        %s1296 = ssub.s32 %s11, 2
        // Predicated region
        $region180: #{c2f_forward.9} parent=178 // pred_check
          %p1297 = pneg %p192
        $region181: #{c2f_forward.9} parent=178 // pred_check_branch
          %1299 = sbr.rel (%p1297) target = $region183
        $region182: #{c2f_forward.9} parent=178 // pred_region
          %p1300 = scmp.lt.s32.totalorder %s22, 1
          %s1301 = scalar_select %p1300, %s22, 1
          %p1302 = scmp.lt.s32.totalorder %s23, 1
          %s1303 = scalar_select %p1302, %s23, 1
          %s1304 = smul.addr %s1301, 2
          %s1305 = sadd.s32 %s1303, %s1304
          %s1306 = scalar_lea.vmem %s5, %s1305
        $region183: #{c2f_forward.9} parent=178 // pred_fallthru
          _
      $region179: #{c2f_forward.9} parent=5 // pred_fallthru
        _
    $region6: #{c2f_forward.9} parent=1 // loop_footer
      %s15 = sadd.s32 1, %s11
    $region7: #{c2f_forward.9} parent=1 // loop_footer_branch
      %10 = sbr.rel target = $region3
    $region8: #{c2f_forward.9} parent=1 // loop_exit
      _

// kernel: c2f_forward.10
$region0: #{c2f_forward.10}
  #allocation0 [shape = 'u32[]', space=smem, size = 0x4, offset = 0x4, fixed_abs, tag = 'smem constant byte address 0x4 - core index']
  #allocation1 [shape = 'u32[144,128]{1,0:T(1,128)}', space=vmem, size = 0x12000, scoped, tag = 'internal scratch']
  #allocation2 [shape = 'bf16[2,10,18]{2,1,0:T(8,128)(2,1)}', space=vmem, size = 0x2000, scoped, tag = 'scratch operand']
  #allocation3 [shape = 'bf16[9,2,8,16]{3,2,1,0:T(8,128)(2,1)}', space=vmem, size = 0x9000, scoped, tag = 'scratch operand']
  %s0 = inlined_call_operand.vmem [shape: bf16[2,2,16,16], index: 0, kind: input, shape index: {}, may-alias: {0,1,2}]
  %s1 = inlined_call_operand.vmem [shape: bf16[2,2,16,16], index: 1, kind: input, shape index: {}, may-alias: {0,1,2}]
  %s2 = inlined_call_operand.vmem [shape: bf16[2,2,16,16], index: 2, kind: input, shape index: {}, may-alias: {0,1,2}]
  %s3 = inlined_call_operand.vmem [shape: bf16[2,2,16,16], index: 3, kind: input, shape index: {}]
  %s4 = inlined_call_operand.vmem [shape: bf16[2,18], index: 4, kind: input, shape index: {}]
  %s5 = inlined_call_operand.vmem [shape: f32[2,1], index: 5, kind: input, shape index: {}]
  %s6 = inlined_call_operand.vmem [shape: bf16[2,2,256], index: 6, kind: output, shape index: {}]
  %s7 = sld [smem:[#allocation0]]
  $region229: #{c2f_forward.10} parent=0
    _
  %s9 = ssub.s32 1, %s7
  %s10 = scalar_select 0, %s9, %s7
  $region1: #{c2f_forward.10} parent=0
    #allocation4 [shape = 'u8[8192]{0}', space=vmem, size = 0x2000, scoped, tag = 'input window, operand 0']
    #allocation5 [shape = 'u8[8192]{0}', space=vmem, size = 0x2000, scoped, tag = 'input window, operand 1']
    #allocation6 [shape = 'u8[8192]{0}', space=vmem, size = 0x2000, scoped, tag = 'input window, operand 2']
    #allocation7 [shape = 'u8[8192]{0}', space=vmem, size = 0x2000, scoped, tag = 'input window, operand 3']
    loop: start=0, step=1, limit=6
    $region2: #{c2f_forward.10} parent=1 // loop_pre_header
      _
    $region3: #{c2f_forward.10} parent=1 // loop_header
      %s12 = sphi 0, %s16
      %p13 = scmp.ge.s32.totalorder %s12, 6
      %s19 = sphi 0, %s31
      %s20 = sphi 0, %s27
      %s21 = sphi 0, %s19
      %s22 = sphi 0, %s20
      %s23 = sphi 0, %s21
      %s24 = sphi 0, %s22
      %s36 = sphi 0, %s38
      %s39 = sphi 0, %s36
      %s40 = sphi 0, %s39
      %s56 = sphi 0, %s40
      %s70 = sphi 0, %s72
      %s73 = sphi 0, %s70
      %s74 = sphi 0, %s73
      %s90 = sphi 0, %s74
      %s104 = sphi 0, %s106
      %s107 = sphi 0, %s104
      %s108 = sphi 0, %s107
      %s124 = sphi 0, %s108
      %s132 = sphi 0, %s134
      %s135 = sphi 0, %s132
      %s136 = sphi 0, %s135
      %s152 = sphi 0, %s136
      %s156 = sphi 0, %s156
      %s158 = sphi 0, %s156
      %s159 = sphi 0, %s158
      %s173 = sphi 0, %s159
      %s177 = sphi 0, %s177
      %s179 = sphi 0, %s177
      %s180 = sphi 0, %s179
      %s194 = sphi 0, %s180
      %s202 = sphi 0, %s204
      %s205 = sphi 0, %s202
      %s206 = sphi 0, %s205
      %s222 = sphi 0, %s206
    $region4: #{c2f_forward.10} parent=1 // loop_header_branch
      %15 = sbr.rel (%p13) target = $region8
    $region5: #{c2f_forward.10} parent=1 // loop_body
      %s17 = ssub.s32 %s12, 1
      %s18 = ssub.s32 %s12, 2
      %s25 = sadd.s32 1, %s20
      %p26 = scmp.ge.s32.totalorder %s25, 2
      %s27 = scalar_select %p26, 0, %s25
      %s28 = sadd.s32 1, %s19
      %s29 = scalar_select %p26, %s28, %s19
      %p30 = scmp.ge.s32.totalorder %s29, 2
      %s31 = scalar_select %p30, 0, %s29
      %s32 = ssub.s32 %s19, %s31
      %s33 = ssub.s32 %s20, %s27
      %s34 = sor.u32 %s32, %s33
      %p35 = scmp.eq.s32.totalorder %s34, 0
      %s37 = sadd.s32 %s36, 1
      %s38 = scalar_select %p35, %s36, %s37
      %p41 = pneg %p35
      %p42 = scmp.eq.s32.totalorder %s12, 3
      %p43 = por %p41, %p42
      %p44 = scmp.ne.s32.totalorder %s36, %s39
      %p45 = scmp.eq.s32.totalorder %s12, 0
      %p46 = por %p44, %p45
      %p47 = scmp.ne.s32.totalorder %s36, %s39
      %p48 = scmp.eq.s32.totalorder %s17, 3
      %p49 = por %p47, %p48
      %p50 = scmp.ne.s32.totalorder %s39, %s40
      %p51 = scmp.eq.s32.totalorder %s17, 0
      %p52 = por %p50, %p51
      %p53 = scmp.ne.s32.totalorder %s39, %s40
      %p54 = scmp.eq.s32.totalorder %s18, 3
      %p55 = por %p53, %p54
      %p57 = scmp.ne.s32.totalorder %s40, %s56
      %p58 = scmp.eq.s32.totalorder %s18, 0
      %p59 = por %p57, %p58
      %s60 = ssub.s32 %s20, 1
      %p61 = scmp.gt.s32.totalorder %s60, 0
      %s62 = scalar_select %p61, %s60, 0
      %s63 = ssub.s32 %s27, 1
      %p64 = scmp.gt.s32.totalorder %s63, 0
      %s65 = scalar_select %p64, %s63, 0
      %s66 = ssub.s32 %s19, %s31
      %s67 = ssub.s32 %s62, %s65
      %s68 = sor.u32 %s66, %s67
      %p69 = scmp.eq.s32.totalorder %s68, 0
      %s71 = sadd.s32 %s70, 1
      %s72 = scalar_select %p69, %s70, %s71
      %p75 = pneg %p69
      %p76 = scmp.eq.s32.totalorder %s12, 3
      %p77 = por %p75, %p76
      %p78 = scmp.ne.s32.totalorder %s70, %s73
      %p79 = scmp.eq.s32.totalorder %s12, 0
      %p80 = por %p78, %p79
      %p81 = scmp.ne.s32.totalorder %s70, %s73
      %p82 = scmp.eq.s32.totalorder %s17, 3
      %p83 = por %p81, %p82
      %p84 = scmp.ne.s32.totalorder %s73, %s74
      %p85 = scmp.eq.s32.totalorder %s17, 0
      %p86 = por %p84, %p85
      %p87 = scmp.ne.s32.totalorder %s73, %s74
      %p88 = scmp.eq.s32.totalorder %s18, 3
      %p89 = por %p87, %p88
      %p91 = scmp.ne.s32.totalorder %s74, %s90
      %p92 = scmp.eq.s32.totalorder %s18, 0
      %p93 = por %p91, %p92
      %s94 = sadd.s32 %s20, 1
      %p95 = scmp.lt.s32.totalorder %s94, 1
      %s96 = scalar_select %p95, %s94, 1
      %s97 = sadd.s32 %s27, 1
      %p98 = scmp.lt.s32.totalorder %s97, 1
      %s99 = scalar_select %p98, %s97, 1
      %s100 = ssub.s32 %s19, %s31
      %s101 = ssub.s32 %s96, %s99
      %s102 = sor.u32 %s100, %s101
      %p103 = scmp.eq.s32.totalorder %s102, 0
      %s105 = sadd.s32 %s104, 1
      %s106 = scalar_select %p103, %s104, %s105
      %p109 = pneg %p103
      %p110 = scmp.eq.s32.totalorder %s12, 3
      %p111 = por %p109, %p110
      %p112 = scmp.ne.s32.totalorder %s104, %s107
      %p113 = scmp.eq.s32.totalorder %s12, 0
      %p114 = por %p112, %p113
      %p115 = scmp.ne.s32.totalorder %s104, %s107
      %p116 = scmp.eq.s32.totalorder %s17, 3
      %p117 = por %p115, %p116
      %p118 = scmp.ne.s32.totalorder %s107, %s108
      %p119 = scmp.eq.s32.totalorder %s17, 0
      %p120 = por %p118, %p119
      %p121 = scmp.ne.s32.totalorder %s107, %s108
      %p122 = scmp.eq.s32.totalorder %s18, 3
      %p123 = por %p121, %p122
      %p125 = scmp.ne.s32.totalorder %s108, %s124
      %p126 = scmp.eq.s32.totalorder %s18, 0
      %p127 = por %p125, %p126
      %s128 = ssub.s32 %s19, %s31
      %s129 = ssub.s32 %s20, %s27
      %s130 = sor.u32 %s128, %s129
      %p131 = scmp.eq.s32.totalorder %s130, 0
      %s133 = sadd.s32 %s132, 1
      %s134 = scalar_select %p131, %s132, %s133
      %p137 = pneg %p131
      %p138 = scmp.eq.s32.totalorder %s12, 3
      %p139 = por %p137, %p138
      %p140 = scmp.ne.s32.totalorder %s132, %s135
      %p141 = scmp.eq.s32.totalorder %s12, 0
      %p142 = por %p140, %p141
      %p143 = scmp.ne.s32.totalorder %s132, %s135
      %p144 = scmp.eq.s32.totalorder %s17, 3
      %p145 = por %p143, %p144
      %p146 = scmp.ne.s32.totalorder %s135, %s136
      %p147 = scmp.eq.s32.totalorder %s17, 0
      %p148 = por %p146, %p147
      %p149 = scmp.ne.s32.totalorder %s135, %s136
      %p150 = scmp.eq.s32.totalorder %s18, 3
      %p151 = por %p149, %p150
      %p153 = scmp.ne.s32.totalorder %s136, %s152
      %p154 = scmp.eq.s32.totalorder %s18, 0
      %p155 = por %p153, %p154
      %s157 = sadd.s32 %s156, 1
      %p160 = scmp.eq.s32.totalorder %s12, 3
      %p161 = scmp.ne.s32.totalorder %s156, %s158
      %p162 = scmp.eq.s32.totalorder %s12, 0
      %p163 = por %p161, %p162
      %p164 = scmp.ne.s32.totalorder %s156, %s158
      %p165 = scmp.eq.s32.totalorder %s17, 3
      %p166 = por %p164, %p165
      %p167 = scmp.ne.s32.totalorder %s158, %s159
      %p168 = scmp.eq.s32.totalorder %s17, 0
      %p169 = por %p167, %p168
      %p170 = scmp.ne.s32.totalorder %s158, %s159
      %p171 = scmp.eq.s32.totalorder %s18, 3
      %p172 = por %p170, %p171
      %p174 = scmp.ne.s32.totalorder %s159, %s173
      %p175 = scmp.eq.s32.totalorder %s18, 0
      %p176 = por %p174, %p175
      %s178 = sadd.s32 %s177, 1
      %p181 = scmp.eq.s32.totalorder %s12, 3
      %p182 = scmp.ne.s32.totalorder %s177, %s179
      %p183 = scmp.eq.s32.totalorder %s12, 0
      %p184 = por %p182, %p183
      %p185 = scmp.ne.s32.totalorder %s177, %s179
      %p186 = scmp.eq.s32.totalorder %s17, 3
      %p187 = por %p185, %p186
      %p188 = scmp.ne.s32.totalorder %s179, %s180
      %p189 = scmp.eq.s32.totalorder %s17, 0
      %p190 = por %p188, %p189
      %p191 = scmp.ne.s32.totalorder %s179, %s180
      %p192 = scmp.eq.s32.totalorder %s18, 3
      %p193 = por %p191, %p192
      %p195 = scmp.ne.s32.totalorder %s180, %s194
      %p196 = scmp.eq.s32.totalorder %s18, 0
      %p197 = por %p195, %p196
      %s198 = ssub.s32 %s19, %s31
      %s199 = ssub.s32 %s20, %s27
      %s200 = sor.u32 %s198, %s199
      %p201 = scmp.eq.s32.totalorder %s200, 0
      %s203 = sadd.s32 %s202, 1
      %s204 = scalar_select %p201, %s202, %s203
      %p207 = pneg %p201
      %p208 = scmp.eq.s32.totalorder %s12, 3
      %p209 = por %p207, %p208
      %p210 = scmp.ne.s32.totalorder %s202, %s205
      %p211 = scmp.eq.s32.totalorder %s12, 0
      %p212 = por %p210, %p211
      %p213 = scmp.ne.s32.totalorder %s202, %s205
      %p214 = scmp.eq.s32.totalorder %s17, 3
      %p215 = por %p213, %p214
      %p216 = scmp.ne.s32.totalorder %s205, %s206
      %p217 = scmp.eq.s32.totalorder %s17, 0
      %p218 = por %p216, %p217
      %p219 = scmp.ne.s32.totalorder %s205, %s206
      %p220 = scmp.eq.s32.totalorder %s18, 3
      %p221 = por %p219, %p220
      %p223 = scmp.ne.s32.totalorder %s206, %s222
      %p224 = scmp.eq.s32.totalorder %s18, 0
      %p225 = por %p223, %p224
      %p226 = scmp.le.s32.totalorder 1, %s12
      %p227 = scmp.lt.s32.totalorder %s12, 5
      %p228 = pnand %p226, %p227
      %p229 = pneg %p228
      // Predicated region
      $region9: #{c2f_forward.10} parent=5 // pred_check
        _
      $region10: #{c2f_forward.10} parent=5 // pred_check_branch
        %231 = sbr.rel (%p228) target = $region12
      $region11: #{c2f_forward.10} parent=5 // pred_region
        %s232 = ssub.s32 %s12, 1
        // Predicated region
        $region13: #{c2f_forward.10} parent=11 // pred_check
          %p233 = pneg %p169
        $region14: #{c2f_forward.10} parent=11 // pred_check_branch
          %235 = sbr.rel (%p233) target = $region16
        $region15: #{c2f_forward.10} parent=11 // pred_region
          _
        $region16: #{c2f_forward.10} parent=11 // pred_fallthru
          _
        // Predicated region
        $region17: #{c2f_forward.10} parent=11 // pred_check
          %p236 = pneg %p190
        $region18: #{c2f_forward.10} parent=11 // pred_check_branch
          %238 = sbr.rel (%p236) target = $region20
        $region19: #{c2f_forward.10} parent=11 // pred_region
          _
        $region20: #{c2f_forward.10} parent=11 // pred_fallthru
          _
      $region12: #{c2f_forward.10} parent=5 // pred_fallthru
        _
      %p239 = scmp.lt.s32.totalorder %s12, 4
      // Predicated region
      $region21: #{c2f_forward.10} parent=5 // pred_check
        %p240 = pneg %p239
      $region22: #{c2f_forward.10} parent=5 // pred_check_branch
        %242 = sbr.rel (%p240) target = $region24
      $region23: #{c2f_forward.10} parent=5 // pred_region
        // Predicated region
        $region25: #{c2f_forward.10} parent=23 // pred_check
          %p243 = pneg %p46
        $region26: #{c2f_forward.10} parent=23 // pred_check_branch
          %245 = sbr.rel (%p243) target = $region28
        $region27: #{c2f_forward.10} parent=23 // pred_region
          %s246 = sand.u32 %s36, 1
          %s247 = sand.u32 %s36, 1
          %s248 = smul.addr %s247, 8
          %s249 = scalar_lea.vmem [#allocation4], %s248
          %s250 = smul.addr %s19, 4
          %s251 = sadd.s32 %s20, %s250
          %s252 = smul.addr %s251, 4
          %s253 = scalar_lea.vmem %s0, %s252
          // Predicated region
          $region29: #{c2f_forward.10} parent=27 // pred_check
            _
          $region30: #{c2f_forward.10} parent=27 // pred_check_branch
            %255 = sbr.rel (0) target = $region32
          $region31: #{c2f_forward.10} parent=27 // pred_region
            // Predicated region
            $region33: #{c2f_forward.10} parent=31 // pred_check
              _
            $region34: #{c2f_forward.10} parent=31 // pred_check_branch
              %257 = sbr.rel target = $region36
            $region35: #{c2f_forward.10} parent=31 // pred_region
              // Predicated region
              $region48: #{c2f_forward.10} parent=35 // pred_check
                _
              $region49: #{c2f_forward.10} parent=35 // pred_check_branch
                %275 = sbr.rel (0) target = $region51
              $region50: #{c2f_forward.10} parent=35 // pred_region
                loop: start=0, step=1, limit=1
                $region52: #{c2f_forward.10} parent=50 // loop_pre_header
                  _
                $region53: #{c2f_forward.10} parent=50 // loop_header
                  %s277 = sphi 0, %s281
                  %p278 = scmp.ge.s32.totalorder %s277, 1
                  %s282 = sphi %s253, %s253
                  %s283 = sphi %s249, %s249
                $region54: #{c2f_forward.10} parent=50 // loop_header_branch
                  %280 = sbr.rel (%p278) target = $region58
                $region55: #{c2f_forward.10} parent=50 // loop_body
                  _
                $region56: #{c2f_forward.10} parent=50 // loop_footer
                  %s281 = sadd.s32 1, %s277
                $region57: #{c2f_forward.10} parent=50 // loop_footer_branch
                  %276 = sbr.rel target = $region53
                $region58: #{c2f_forward.10} parent=50 // loop_exit
                  _
                %s285 = ssub.s32 16, 1
                loop: start=0, step=1, limit=1
                $region59: #{c2f_forward.10} parent=50 // loop_pre_header
                  _
                $region60: #{c2f_forward.10} parent=50 // loop_header
                  %s287 = sphi 0, %s291
                  %p288 = scmp.ge.s32.totalorder %s287, 1
                  %s292 = sphi %s253, %s253
                  %s293 = sphi %s249, %s249
                $region61: #{c2f_forward.10} parent=50 // loop_header_branch
                  %290 = sbr.rel (%p288) target = $region65
                $region62: #{c2f_forward.10} parent=50 // loop_body
                  %v294 = vld [vmem:[%s292] sm:%s285]
                  %295 = vst [vmem:[%s293] sm:%s285] %v294
                  %v296 = vld [vmem:[%s292 + $0x8] sm:%s285]
                  %297 = vst [vmem:[%s293 + $0x4] sm:%s285] %v296
                $region63: #{c2f_forward.10} parent=50 // loop_footer
                  %s291 = sadd.s32 1, %s287
                $region64: #{c2f_forward.10} parent=50 // loop_footer_branch
                  %286 = sbr.rel target = $region60
                $region65: #{c2f_forward.10} parent=50 // loop_exit
                  _
              $region51: #{c2f_forward.10} parent=35 // pred_fallthru
                _
            $region36: #{c2f_forward.10} parent=31 // pred_fallthru
              _
            // Predicated region
            $region37: #{c2f_forward.10} parent=31 // pred_check
              _
            $region38: #{c2f_forward.10} parent=31 // pred_check_branch
              %259 = sbr.rel (0) target = $region40
            $region39: #{c2f_forward.10} parent=31 // pred_region
              %s261 = ssub.s32 16, 1
              loop: start=0, step=1, limit=1
              $region41: #{c2f_forward.10} parent=39 // loop_pre_header
                _
              $region42: #{c2f_forward.10} parent=39 // loop_header
                %s263 = sphi 0, %s267
                %p264 = scmp.ge.s32.totalorder %s263, 1
                %s268 = sphi %s253, %s253
                %s269 = sphi %s249, %s249
              $region43: #{c2f_forward.10} parent=39 // loop_header_branch
                %266 = sbr.rel (%p264) target = $region47
              $region44: #{c2f_forward.10} parent=39 // loop_body
                %v270 = vld [vmem:[%s268] sm:%s261]
                %271 = vst [vmem:[%s269] sm:%s261] %v270
                %v272 = vld [vmem:[%s268 + $0x8] sm:%s261]
                %273 = vst [vmem:[%s269 + $0x4] sm:%s261] %v272
              $region45: #{c2f_forward.10} parent=39 // loop_footer
                %s267 = sadd.s32 1, %s263
              $region46: #{c2f_forward.10} parent=39 // loop_footer_branch
                %262 = sbr.rel target = $region42
              $region47: #{c2f_forward.10} parent=39 // loop_exit
                _
            $region40: #{c2f_forward.10} parent=31 // pred_fallthru
              _
          $region32: #{c2f_forward.10} parent=27 // pred_fallthru
            _
          %298 = vnop
        $region28: #{c2f_forward.10} parent=23 // pred_fallthru
          _
        // Predicated region
        $region66: #{c2f_forward.10} parent=23 // pred_check
          %p299 = pneg %p80
        $region67: #{c2f_forward.10} parent=23 // pred_check_branch
          %301 = sbr.rel (%p299) target = $region69
        $region68: #{c2f_forward.10} parent=23 // pred_region
          %s302 = sand.u32 %s70, 1
          %s303 = sand.u32 %s70, 1
          %s304 = smul.addr %s303, 8
          %s305 = scalar_lea.vmem [#allocation5], %s304
          %s306 = ssub.s32 %s20, 1
          %p307 = scmp.gt.s32.totalorder %s306, 0
          %s308 = scalar_select %p307, %s306, 0
          %s309 = smul.addr %s19, 4
          %s310 = sadd.s32 %s308, %s309
          %s311 = smul.addr %s310, 4
          %s312 = scalar_lea.vmem %s1, %s311
          // Predicated region
          $region70: #{c2f_forward.10} parent=68 // pred_check
            _
          $region71: #{c2f_forward.10} parent=68 // pred_check_branch
            %314 = sbr.rel (0) target = $region73
          $region72: #{c2f_forward.10} parent=68 // pred_region
            // Predicated region
            $region74: #{c2f_forward.10} parent=72 // pred_check
              _
            $region75: #{c2f_forward.10} parent=72 // pred_check_branch
              %316 = sbr.rel target = $region77
            $region76: #{c2f_forward.10} parent=72 // pred_region
              // Predicated region
              $region89: #{c2f_forward.10} parent=76 // pred_check
                _
              $region90: #{c2f_forward.10} parent=76 // pred_check_branch
                %334 = sbr.rel (0) target = $region92
              $region91: #{c2f_forward.10} parent=76 // pred_region
                loop: start=0, step=1, limit=1
                $region93: #{c2f_forward.10} parent=91 // loop_pre_header
                  _
                $region94: #{c2f_forward.10} parent=91 // loop_header
                  %s336 = sphi 0, %s340
                  %p337 = scmp.ge.s32.totalorder %s336, 1
                  %s341 = sphi %s312, %s312
                  %s342 = sphi %s305, %s305
                $region95: #{c2f_forward.10} parent=91 // loop_header_branch
                  %339 = sbr.rel (%p337) target = $region99
                $region96: #{c2f_forward.10} parent=91 // loop_body
                  _
                $region97: #{c2f_forward.10} parent=91 // loop_footer
                  %s340 = sadd.s32 1, %s336
                $region98: #{c2f_forward.10} parent=91 // loop_footer_branch
                  %335 = sbr.rel target = $region94
                $region99: #{c2f_forward.10} parent=91 // loop_exit
                  _
                %s344 = ssub.s32 16, 1
                loop: start=0, step=1, limit=1
                $region100: #{c2f_forward.10} parent=91 // loop_pre_header
                  _
                $region101: #{c2f_forward.10} parent=91 // loop_header
                  %s346 = sphi 0, %s350
                  %p347 = scmp.ge.s32.totalorder %s346, 1
                  %s351 = sphi %s312, %s312
                  %s352 = sphi %s305, %s305
                $region102: #{c2f_forward.10} parent=91 // loop_header_branch
                  %349 = sbr.rel (%p347) target = $region106
                $region103: #{c2f_forward.10} parent=91 // loop_body
                  %v353 = vld [vmem:[%s351] sm:%s344]
                  %354 = vst [vmem:[%s352] sm:%s344] %v353
                  %v355 = vld [vmem:[%s351 + $0x8] sm:%s344]
                  %356 = vst [vmem:[%s352 + $0x4] sm:%s344] %v355
                $region104: #{c2f_forward.10} parent=91 // loop_footer
                  %s350 = sadd.s32 1, %s346
                $region105: #{c2f_forward.10} parent=91 // loop_footer_branch
                  %345 = sbr.rel target = $region101
                $region106: #{c2f_forward.10} parent=91 // loop_exit
                  _
              $region92: #{c2f_forward.10} parent=76 // pred_fallthru
                _
            $region77: #{c2f_forward.10} parent=72 // pred_fallthru
              _
            // Predicated region
            $region78: #{c2f_forward.10} parent=72 // pred_check
              _
            $region79: #{c2f_forward.10} parent=72 // pred_check_branch
              %318 = sbr.rel (0) target = $region81
            $region80: #{c2f_forward.10} parent=72 // pred_region
              %s320 = ssub.s32 16, 1
              loop: start=0, step=1, limit=1
              $region82: #{c2f_forward.10} parent=80 // loop_pre_header
                _
              $region83: #{c2f_forward.10} parent=80 // loop_header
                %s322 = sphi 0, %s326
                %p323 = scmp.ge.s32.totalorder %s322, 1
                %s327 = sphi %s312, %s312
                %s328 = sphi %s305, %s305
              $region84: #{c2f_forward.10} parent=80 // loop_header_branch
                %325 = sbr.rel (%p323) target = $region88
              $region85: #{c2f_forward.10} parent=80 // loop_body
                %v329 = vld [vmem:[%s327] sm:%s320]
                %330 = vst [vmem:[%s328] sm:%s320] %v329
                %v331 = vld [vmem:[%s327 + $0x8] sm:%s320]
                %332 = vst [vmem:[%s328 + $0x4] sm:%s320] %v331
              $region86: #{c2f_forward.10} parent=80 // loop_footer
                %s326 = sadd.s32 1, %s322
              $region87: #{c2f_forward.10} parent=80 // loop_footer_branch
                %321 = sbr.rel target = $region83
              $region88: #{c2f_forward.10} parent=80 // loop_exit
                _
            $region81: #{c2f_forward.10} parent=72 // pred_fallthru
              _
          $region73: #{c2f_forward.10} parent=68 // pred_fallthru
            _
          %357 = vnop
        $region69: #{c2f_forward.10} parent=23 // pred_fallthru
          _
        // Predicated region
        $region107: #{c2f_forward.10} parent=23 // pred_check
          %p358 = pneg %p114
        $region108: #{c2f_forward.10} parent=23 // pred_check_branch
          %360 = sbr.rel (%p358) target = $region110
        $region109: #{c2f_forward.10} parent=23 // pred_region
          %s361 = sand.u32 %s104, 1
          %s362 = sand.u32 %s104, 1
          %s363 = smul.addr %s362, 8
          %s364 = scalar_lea.vmem [#allocation6], %s363
          %s365 = sadd.s32 %s20, 1
          %p366 = scmp.lt.s32.totalorder %s365, 1
          %s367 = scalar_select %p366, %s365, 1
          %s368 = smul.addr %s19, 4
          %s369 = sadd.s32 %s367, %s368
          %s370 = smul.addr %s369, 4
          %s371 = scalar_lea.vmem %s2, %s370
          // Predicated region
          $region111: #{c2f_forward.10} parent=109 // pred_check
            _
          $region112: #{c2f_forward.10} parent=109 // pred_check_branch
            %373 = sbr.rel (0) target = $region114
          $region113: #{c2f_forward.10} parent=109 // pred_region
            // Predicated region
            $region115: #{c2f_forward.10} parent=113 // pred_check
              _
            $region116: #{c2f_forward.10} parent=113 // pred_check_branch
              %375 = sbr.rel target = $region118
            $region117: #{c2f_forward.10} parent=113 // pred_region
              // Predicated region
              $region130: #{c2f_forward.10} parent=117 // pred_check
                _
              $region131: #{c2f_forward.10} parent=117 // pred_check_branch
                %393 = sbr.rel (0) target = $region133
              $region132: #{c2f_forward.10} parent=117 // pred_region
                loop: start=0, step=1, limit=1
                $region134: #{c2f_forward.10} parent=132 // loop_pre_header
                  _
                $region135: #{c2f_forward.10} parent=132 // loop_header
                  %s395 = sphi 0, %s399
                  %p396 = scmp.ge.s32.totalorder %s395, 1
                  %s400 = sphi %s371, %s371
                  %s401 = sphi %s364, %s364
                $region136: #{c2f_forward.10} parent=132 // loop_header_branch
                  %398 = sbr.rel (%p396) target = $region140
                $region137: #{c2f_forward.10} parent=132 // loop_body
                  _
                $region138: #{c2f_forward.10} parent=132 // loop_footer
                  %s399 = sadd.s32 1, %s395
                $region139: #{c2f_forward.10} parent=132 // loop_footer_branch
                  %394 = sbr.rel target = $region135
                $region140: #{c2f_forward.10} parent=132 // loop_exit
                  _
                %s403 = ssub.s32 16, 1
                loop: start=0, step=1, limit=1
                $region141: #{c2f_forward.10} parent=132 // loop_pre_header
                  _
                $region142: #{c2f_forward.10} parent=132 // loop_header
                  %s405 = sphi 0, %s409
                  %p406 = scmp.ge.s32.totalorder %s405, 1
                  %s410 = sphi %s371, %s371
                  %s411 = sphi %s364, %s364
                $region143: #{c2f_forward.10} parent=132 // loop_header_branch
                  %408 = sbr.rel (%p406) target = $region147
                $region144: #{c2f_forward.10} parent=132 // loop_body
                  %v412 = vld [vmem:[%s410] sm:%s403]
                  %413 = vst [vmem:[%s411] sm:%s403] %v412
                  %v414 = vld [vmem:[%s410 + $0x8] sm:%s403]
                  %415 = vst [vmem:[%s411 + $0x4] sm:%s403] %v414
                $region145: #{c2f_forward.10} parent=132 // loop_footer
                  %s409 = sadd.s32 1, %s405
                $region146: #{c2f_forward.10} parent=132 // loop_footer_branch
                  %404 = sbr.rel target = $region142
                $region147: #{c2f_forward.10} parent=132 // loop_exit
                  _
              $region133: #{c2f_forward.10} parent=117 // pred_fallthru
                _
            $region118: #{c2f_forward.10} parent=113 // pred_fallthru
              _
            // Predicated region
            $region119: #{c2f_forward.10} parent=113 // pred_check
              _
            $region120: #{c2f_forward.10} parent=113 // pred_check_branch
              %377 = sbr.rel (0) target = $region122
            $region121: #{c2f_forward.10} parent=113 // pred_region
              %s379 = ssub.s32 16, 1
              loop: start=0, step=1, limit=1
              $region123: #{c2f_forward.10} parent=121 // loop_pre_header
                _
              $region124: #{c2f_forward.10} parent=121 // loop_header
                %s381 = sphi 0, %s385
                %p382 = scmp.ge.s32.totalorder %s381, 1
                %s386 = sphi %s371, %s371
                %s387 = sphi %s364, %s364
              $region125: #{c2f_forward.10} parent=121 // loop_header_branch
                %384 = sbr.rel (%p382) target = $region129
              $region126: #{c2f_forward.10} parent=121 // loop_body
                %v388 = vld [vmem:[%s386] sm:%s379]
                %389 = vst [vmem:[%s387] sm:%s379] %v388
                %v390 = vld [vmem:[%s386 + $0x8] sm:%s379]
                %391 = vst [vmem:[%s387 + $0x4] sm:%s379] %v390
              $region127: #{c2f_forward.10} parent=121 // loop_footer
                %s385 = sadd.s32 1, %s381
              $region128: #{c2f_forward.10} parent=121 // loop_footer_branch
                %380 = sbr.rel target = $region124
              $region129: #{c2f_forward.10} parent=121 // loop_exit
                _
            $region122: #{c2f_forward.10} parent=113 // pred_fallthru
              _
          $region114: #{c2f_forward.10} parent=109 // pred_fallthru
            _
          %416 = vnop
        $region110: #{c2f_forward.10} parent=23 // pred_fallthru
          _
        // Predicated region
        $region148: #{c2f_forward.10} parent=23 // pred_check
          %p417 = pneg %p142
        $region149: #{c2f_forward.10} parent=23 // pred_check_branch
          %419 = sbr.rel (%p417) target = $region151
        $region150: #{c2f_forward.10} parent=23 // pred_region
          %s420 = sand.u32 %s132, 1
          %s421 = sand.u32 %s132, 1
          %s422 = smul.addr %s421, 8
          %s423 = scalar_lea.vmem [#allocation7], %s422
          %s424 = smul.addr %s19, 4
          %s425 = sadd.s32 %s20, %s424
          %s426 = smul.addr %s425, 4
          %s427 = scalar_lea.vmem %s3, %s426
          // Predicated region
          $region152: #{c2f_forward.10} parent=150 // pred_check
            _
          $region153: #{c2f_forward.10} parent=150 // pred_check_branch
            %429 = sbr.rel (0) target = $region155
          $region154: #{c2f_forward.10} parent=150 // pred_region
            // Predicated region
            $region156: #{c2f_forward.10} parent=154 // pred_check
              _
            $region157: #{c2f_forward.10} parent=154 // pred_check_branch
              %431 = sbr.rel target = $region159
            $region158: #{c2f_forward.10} parent=154 // pred_region
              // Predicated region
              $region171: #{c2f_forward.10} parent=158 // pred_check
                _
              $region172: #{c2f_forward.10} parent=158 // pred_check_branch
                %449 = sbr.rel (0) target = $region174
              $region173: #{c2f_forward.10} parent=158 // pred_region
                loop: start=0, step=1, limit=1
                $region175: #{c2f_forward.10} parent=173 // loop_pre_header
                  _
                $region176: #{c2f_forward.10} parent=173 // loop_header
                  %s451 = sphi 0, %s455
                  %p452 = scmp.ge.s32.totalorder %s451, 1
                  %s456 = sphi %s427, %s427
                  %s457 = sphi %s423, %s423
                $region177: #{c2f_forward.10} parent=173 // loop_header_branch
                  %454 = sbr.rel (%p452) target = $region181
                $region178: #{c2f_forward.10} parent=173 // loop_body
                  _
                $region179: #{c2f_forward.10} parent=173 // loop_footer
                  %s455 = sadd.s32 1, %s451
                $region180: #{c2f_forward.10} parent=173 // loop_footer_branch
                  %450 = sbr.rel target = $region176
                $region181: #{c2f_forward.10} parent=173 // loop_exit
                  _
                %s459 = ssub.s32 16, 1
                loop: start=0, step=1, limit=1
                $region182: #{c2f_forward.10} parent=173 // loop_pre_header
                  _
                $region183: #{c2f_forward.10} parent=173 // loop_header
                  %s461 = sphi 0, %s465
                  %p462 = scmp.ge.s32.totalorder %s461, 1
                  %s466 = sphi %s427, %s427
                  %s467 = sphi %s423, %s423
                $region184: #{c2f_forward.10} parent=173 // loop_header_branch
                  %464 = sbr.rel (%p462) target = $region188
                $region185: #{c2f_forward.10} parent=173 // loop_body
                  %v468 = vld [vmem:[%s466] sm:%s459]
                  %469 = vst [vmem:[%s467] sm:%s459] %v468
                  %v470 = vld [vmem:[%s466 + $0x8] sm:%s459]
                  %471 = vst [vmem:[%s467 + $0x4] sm:%s459] %v470
                $region186: #{c2f_forward.10} parent=173 // loop_footer
                  %s465 = sadd.s32 1, %s461
                $region187: #{c2f_forward.10} parent=173 // loop_footer_branch
                  %460 = sbr.rel target = $region183
                $region188: #{c2f_forward.10} parent=173 // loop_exit
                  _
              $region174: #{c2f_forward.10} parent=158 // pred_fallthru
                _
            $region159: #{c2f_forward.10} parent=154 // pred_fallthru
              _
            // Predicated region
            $region160: #{c2f_forward.10} parent=154 // pred_check
              _
            $region161: #{c2f_forward.10} parent=154 // pred_check_branch
              %433 = sbr.rel (0) target = $region163
            $region162: #{c2f_forward.10} parent=154 // pred_region
              %s435 = ssub.s32 16, 1
              loop: start=0, step=1, limit=1
              $region164: #{c2f_forward.10} parent=162 // loop_pre_header
                _
              $region165: #{c2f_forward.10} parent=162 // loop_header
                %s437 = sphi 0, %s441
                %p438 = scmp.ge.s32.totalorder %s437, 1
                %s442 = sphi %s427, %s427
                %s443 = sphi %s423, %s423
              $region166: #{c2f_forward.10} parent=162 // loop_header_branch
                %440 = sbr.rel (%p438) target = $region170
              $region167: #{c2f_forward.10} parent=162 // loop_body
                %v444 = vld [vmem:[%s442] sm:%s435]
                %445 = vst [vmem:[%s443] sm:%s435] %v444
                %v446 = vld [vmem:[%s442 + $0x8] sm:%s435]
                %447 = vst [vmem:[%s443 + $0x4] sm:%s435] %v446
              $region168: #{c2f_forward.10} parent=162 // loop_footer
                %s441 = sadd.s32 1, %s437
              $region169: #{c2f_forward.10} parent=162 // loop_footer_branch
                %436 = sbr.rel target = $region165
              $region170: #{c2f_forward.10} parent=162 // loop_exit
                _
            $region163: #{c2f_forward.10} parent=154 // pred_fallthru
              _
          $region155: #{c2f_forward.10} parent=150 // pred_fallthru
            _
          %472 = vnop
        $region151: #{c2f_forward.10} parent=23 // pred_fallthru
          _
      $region24: #{c2f_forward.10} parent=5 // pred_fallthru
        _
      %p473 = scmp.le.s32.totalorder 1, %s12
      %p474 = scmp.lt.s32.totalorder %s12, 5
      %p475 = pnand %p473, %p474
      %p476 = pneg %p475
      // Predicated region
      $region189: #{c2f_forward.10} parent=5 // pred_check
        _
      $region190: #{c2f_forward.10} parent=5 // pred_check_branch
        %478 = sbr.rel (%p475) target = $region192
      $region191: #{c2f_forward.10} parent=5 // pred_region
        %s479 = ssub.s32 %s12, 1
        %s480 = sand.u32 %s39, 1
        %s481 = sand.u32 %s39, 1
        %s482 = smul.addr %s481, 8
        %s483 = scalar_lea.vmem [#allocation4], %s482
        // Predicated region
        $region193: #{c2f_forward.10} parent=191 // pred_check
          %p484 = pneg %p52
        $region194: #{c2f_forward.10} parent=191 // pred_check_branch
          %486 = sbr.rel (%p484) target = $region196
        $region195: #{c2f_forward.10} parent=191 // pred_region
          _
        $region196: #{c2f_forward.10} parent=191 // pred_fallthru
          _
        %s487 = sand.u32 %s73, 1
        %s488 = sand.u32 %s73, 1
        %s489 = smul.addr %s488, 8
        %s490 = scalar_lea.vmem [#allocation5], %s489
        // Predicated region
        $region197: #{c2f_forward.10} parent=191 // pred_check
          %p491 = pneg %p86
        $region198: #{c2f_forward.10} parent=191 // pred_check_branch
          %493 = sbr.rel (%p491) target = $region200
        $region199: #{c2f_forward.10} parent=191 // pred_region
          _
        $region200: #{c2f_forward.10} parent=191 // pred_fallthru
          _
        %s494 = sand.u32 %s107, 1
        %s495 = sand.u32 %s107, 1
        %s496 = smul.addr %s495, 8
        %s497 = scalar_lea.vmem [#allocation6], %s496
        // Predicated region
        $region201: #{c2f_forward.10} parent=191 // pred_check
          %p498 = pneg %p120
        $region202: #{c2f_forward.10} parent=191 // pred_check_branch
          %500 = sbr.rel (%p498) target = $region204
        $region203: #{c2f_forward.10} parent=191 // pred_region
          _
        $region204: #{c2f_forward.10} parent=191 // pred_fallthru
          _
        %s501 = sand.u32 %s135, 1
        %s502 = sand.u32 %s135, 1
        %s503 = smul.addr %s502, 8
        %s504 = scalar_lea.vmem [#allocation7], %s503
        // Predicated region
        $region205: #{c2f_forward.10} parent=191 // pred_check
          %p505 = pneg %p148
        $region206: #{c2f_forward.10} parent=191 // pred_check_branch
          %507 = sbr.rel (%p505) target = $region208
        $region207: #{c2f_forward.10} parent=191 // pred_region
          _
        $region208: #{c2f_forward.10} parent=191 // pred_fallthru
          _
        %s508 = sand.u32 %s39, 1
        %s509 = sand.u32 %s39, 1
        %s510 = smul.addr %s509, 8
        %s511 = scalar_lea.vmem [#allocation4], %s510
        %p512 = pneg %p52
        %p513 = pneg %p49
        %s514 = sand.u32 %s73, 1
        %s515 = sand.u32 %s73, 1
        %s516 = smul.addr %s515, 8
        %s517 = scalar_lea.vmem [#allocation5], %s516
        %p518 = pneg %p86
        %p519 = pneg %p83
        %s520 = sand.u32 %s107, 1
        %s521 = sand.u32 %s107, 1
        %s522 = smul.addr %s521, 8
        %s523 = scalar_lea.vmem [#allocation6], %s522
        %p524 = pneg %p120
        %p525 = pneg %p117
        %s526 = sand.u32 %s135, 1
        %s527 = sand.u32 %s135, 1
        %s528 = smul.addr %s527, 8
        %s529 = scalar_lea.vmem [#allocation7], %s528
        %p530 = pneg %p148
        %p531 = pneg %p145
        %p532 = pneg %p169
        %p533 = pneg %p166
        %p534 = pneg %p190
        %p535 = pneg %p187
        %p536 = pneg %p218
        %p537 = pneg %p215
        %p538 = scmp.lt.s32.totalorder %s21, 1
        %s539 = scalar_select %p538, %s21, 1
        %p540 = scmp.lt.s32.totalorder %s22, 1
        %s541 = scalar_select %p540, %s22, 1
        %s542 = smul.addr %s539, 2
        %s543 = sadd.s32 %s541, %s542
        %s544 = scalar_lea.vmem %s6, %s543
        %s545 = ssub.s32 %s22, 1
        %p546 = scmp.gt.s32.totalorder %s545, 0
        %s547 = scalar_select %p546, %s545, 0
        %s548 = sadd.s32 %s22, 1
        %p549 = scmp.lt.s32.totalorder %s548, 1
        %s550 = scalar_select %p549, %s548, 1
        %p551 = scmp.lt.s32.totalorder %s21, 1
        %s552 = scalar_select %p551, %s21, 1
        %p553 = scmp.lt.s32.totalorder %s22, 1
        %s554 = scalar_select %p553, %s22, 1
        %s555 = smul.addr %s552, 2
        %s556 = sadd.s32 %s554, %s555
        %s557 = scalar_lea.vmem %s6, %s556
        %vm559 = vcmask 139264
        %vm560 = vsmask.f32 256
        %vm561 = vmand %vm559, %vm560
        %v562 = vld [vmem:[#allocation2] sm:$0x1]
        %v563 = vsel %vm561, 0, %v562
        %564 = vst [vmem:[#allocation2] sm:$0x1] %v563
        %v565 = vld [vmem:[#allocation2 + $0x8] sm:$0x1]
        %v566 = vsel %vm561, 0, %v565
        %567 = vst [vmem:[#allocation2 + $0x8] sm:$0x1] %v566
        %vm568 = vsmask.f32 7938
        %vm569 = vmand %vm559, %vm568
        %v570 = vld [vmem:[#allocation2 + $0x4] sm:$0x1]
        %v571 = vsel %vm569, 0, %v570
        %572 = vst [vmem:[#allocation2 + $0x4] sm:$0x1] %v571
        %v573 = vld [vmem:[#allocation2 + $0xc] sm:$0x1]
        %v574 = vsel %vm569, 0, %v573
        %575 = vst [vmem:[#allocation2 + $0xc] sm:$0x1] %v574
        %vm576 = vcmask 3072
        %577 = vst.msk [vmem:[#allocation2] sm:$0xf] %vm576, 0
        %vm578 = vcmask 0
        %579 = vst.msk [vmem:[#allocation2 + $0x4] sm:$0x1] %vm578, 0
        %580 = vst.msk [vmem:[#allocation2 + $0x8] sm:$0xf] %vm576, 0
        %581 = vst.msk [vmem:[#allocation2 + $0xc] sm:$0x1] %vm578, 0
        %vm582 = vcmask 142472
        %583 = vst.msk [vmem:[#allocation2] sm:$0xf] %vm582, 0
        %vm584 = vcmask 139400
        %585 = vst.msk [vmem:[#allocation2 + $0x4] sm:$0x1] %vm584, 0
        %586 = vst.msk [vmem:[#allocation2 + $0x8] sm:$0xf] %vm582, 0
        %587 = vst.msk [vmem:[#allocation2 + $0xc] sm:$0x1] %vm584, 0
        %v588 = vld [vmem:[%s483] sm:$0xf]
        %v589 = vld [vmem:[%s483 + $0x4] sm:$0xf]
        %v591 = vshrl.u32 %v588, 16
        %v593 = vrot.slane %v591, 7
        %v594 = vshll.u32 %v588, 16
        %v596 = vor.u32 %v593, %v594
        %v597 = vrot.slane %v593, 4
        %v599 = vshrl.u32 %v589, 16
        %v601 = vrot.slane %v599, 7
        %v602 = vshll.u32 %v589, 16
        %v604 = vor.u32 %v601, %v602
        %v605 = vrot.slane %v601, 4
        %606 = vrot.lane.b32.xlu0 %v596, 1
        %v607 = vpop.permute.xlu0 %606
        %608 = vrot.lane.b32.xlu0 %v597, 1
        %v609 = vpop.permute.xlu0 %608
        %610 = vrot.lane.b32.xlu0 %v604, 1
        %v611 = vpop.permute.xlu0 %610
        %612 = vrot.lane.b32.xlu0 %v605, 1
        %v613 = vpop.permute.xlu0 %612
        %vm618 = vcmask 134152
        %vm619 = vmand %vm618, %vm568
        %v620 = vld [vmem:[#allocation2] sm:$0xf]
        %v621 = vsel %vm619, %v607, %v620
        %622 = vst [vmem:[#allocation2] sm:$0xf] %v621
        %vm623 = vcmask 131080
        %vm624 = vmand %vm623, %vm560
        %v625 = vld [vmem:[#allocation2 + $0x4] sm:$0x1]
        %v626 = vsel %vm624, %v609, %v625
        %627 = vst [vmem:[#allocation2 + $0x4] sm:$0x1] %v626
        %v628 = vld [vmem:[#allocation2 + $0x8] sm:$0xf]
        %v629 = vsel %vm619, %v611, %v628
        %630 = vst [vmem:[#allocation2 + $0x8] sm:$0xf] %v629
        %v631 = vld [vmem:[#allocation2 + $0xc] sm:$0x1]
        %v632 = vsel %vm624, %v613, %v631
        %633 = vst [vmem:[#allocation2 + $0xc] sm:$0x1] %v632
        %p634 = scmp.gt.s32.totalorder %s22, 0
        // Predicated region
        $region209: #{c2f_forward.10} parent=191 // pred_check
          %p635 = pneg %p634
        $region210: #{c2f_forward.10} parent=191 // pred_check_branch
          %637 = sbr.rel (%p635) target = $region212
        $region211: #{c2f_forward.10} parent=191 // pred_region
          %v638 = vld [vmem:[%s490] sm:$0x8]
          %v639 = vld [vmem:[%s490 + $0x4] sm:$0x8]
          %v641 = vshrl.u32 %v638, 16
          %v643 = vrot.slane %v641, 7
          %v644 = vrot.slane %v643, 4
          %v646 = vshrl.u32 %v639, 16
          %v648 = vrot.slane %v646, 7
          %v649 = vrot.slane %v648, 4
          %650 = vrot.lane.b32.xlu0 %v644, 1
          %v651 = vpop.permute.xlu0 %650
          %652 = vrot.lane.b32.xlu0 %v649, 1
          %v653 = vpop.permute.xlu0 %652
          %v656 = vld [vmem:[#allocation2] sm:$0x1]
          %v657 = vsel %vm624, %v651, %v656
          %658 = vst [vmem:[#allocation2] sm:$0x1] %v657
          %v659 = vld [vmem:[#allocation2 + $0x8] sm:$0x1]
          %v660 = vsel %vm624, %v653, %v659
          %661 = vst [vmem:[#allocation2 + $0x8] sm:$0x1] %v660
        $region212: #{c2f_forward.10} parent=191 // pred_fallthru
          _
        %p662 = scmp.lt.s32.totalorder %s22, 1
        // Predicated region
        $region213: #{c2f_forward.10} parent=191 // pred_check
          %p663 = pneg %p662
        $region214: #{c2f_forward.10} parent=191 // pred_check_branch
          %665 = sbr.rel (%p663) target = $region216
        $region215: #{c2f_forward.10} parent=191 // pred_region
          %v666 = vld [vmem:[%s497] sm:$0x1]
          %v667 = vld [vmem:[%s497 + $0x4] sm:$0x1]
          %v669 = vshll.u32 %v666, 16
          %v672 = vshll.u32 %v667, 16
          %674 = vrot.lane.b32.xlu0 %v669, 1
          %v675 = vpop.permute.xlu0 %674
          %676 = vrot.lane.b32.xlu0 %v672, 1
          %v677 = vpop.permute.xlu0 %676
          %vm680 = vmand %vm623, %vm568
          %v681 = vld [vmem:[#allocation2 + $0x4] sm:$0x1]
          %v682 = vsel %vm680, %v675, %v681
          %683 = vst [vmem:[#allocation2 + $0x4] sm:$0x1] %v682
          %v684 = vld [vmem:[#allocation2 + $0xc] sm:$0x1]
          %v685 = vsel %vm680, %v677, %v684
          %686 = vst [vmem:[#allocation2 + $0xc] sm:$0x1] %v685
        $region216: #{c2f_forward.10} parent=191 // pred_fallthru
          _
        %v687 = vld [vmem:[#allocation2] sm:$0xf]
        %v688 = vld [vmem:[#allocation2 + $0x8] sm:$0xf]
        %vm689 = vcmask 125952
        %690 = vst.msk [vmem:[#allocation3] sm:$0xf] %vm689, %v687
        %691 = vst.msk [vmem:[#allocation3 + $0x4] sm:$0xf] %vm689, %v688
        %v692 = vld [vmem:[#allocation2] sm:$0xf]
        %v693 = vld [vmem:[#allocation2 + $0x8] sm:$0xf]
        %696 = vrot.lane.b32.xlu0 %v692, 127
        %v697 = vpop.permute.xlu0 %696
        %698 = vrot.lane.b32.xlu0 %v693, 127
        %v699 = vpop.permute.xlu0 %698
        %s702 = scalar_lea.vmem [#allocation3], 8
        %703 = vst.msk [vmem:[%s702] sm:$0xf] %vm689, %v697
        %704 = vst.msk [vmem:[%s702 + $0x4] sm:$0xf] %vm689, %v699
        %v705 = vld [vmem:[#allocation2] sm:$0xf]
        %v706 = vld [vmem:[#allocation2 + $0x8] sm:$0xf]
        %709 = vrot.lane.b32.xlu0 %v705, 126
        %v710 = vpop.permute.xlu0 %709
        %711 = vrot.lane.b32.xlu0 %v706, 126
        %v712 = vpop.permute.xlu0 %711
        %s715 = scalar_lea.vmem [#allocation3], 16
        %716 = vst.msk [vmem:[%s715] sm:$0xf] %vm689, %v710
        %717 = vst.msk [vmem:[%s715 + $0x4] sm:$0xf] %vm689, %v712
        %v718 = vld [vmem:[#allocation2] sm:$0xf]
        %v719 = vld [vmem:[#allocation2 + $0x4] sm:$0x1]
        %v720 = vld [vmem:[#allocation2 + $0x8] sm:$0xf]
        %v721 = vld [vmem:[#allocation2 + $0xc] sm:$0x1]
        %vm722 = vsmask.f32 3328
        %vm723 = vsmask.f32 7440
        %vm724 = vmor %vm722, %vm723
        %v726 = vshrl.u32 %v718, 16
        %v728 = vrot.slane %v726, 4
        %v729 = vshll.u32 %v718, 16
        %v731 = vrot.slane %v729, 5
        %v732 = vor.u32 %v728, %v731
        %v733 = vrot.slane %v732, 4
        %v735 = vshll.u32 %v719, 16
        %v737 = vrot.slane %v735, 5
        %v738 = vsel %vm724, %v733, %v737
        %v740 = vshrl.u32 %v720, 16
        %v742 = vrot.slane %v740, 4
        %v743 = vshll.u32 %v720, 16
        %v745 = vrot.slane %v743, 5
        %v746 = vor.u32 %v742, %v745
        %v747 = vrot.slane %v746, 4
        %v749 = vshll.u32 %v721, 16
        %v751 = vrot.slane %v749, 5
        %v752 = vsel %vm724, %v747, %v751
        %s755 = scalar_lea.vmem [#allocation3], 24
        %756 = vst.msk [vmem:[%s755] sm:$0xf] %vm689, %v738
        %757 = vst.msk [vmem:[%s755 + $0x4] sm:$0xf] %vm689, %v752
        %v758 = vld [vmem:[#allocation2] sm:$0xf]
        %v759 = vld [vmem:[#allocation2 + $0x4] sm:$0x1]
        %v760 = vld [vmem:[#allocation2 + $0x8] sm:$0xf]
        %v761 = vld [vmem:[#allocation2 + $0xc] sm:$0x1]
        %v763 = vshrl.u32 %v758, 16
        %v765 = vrot.slane %v763, 4
        %v766 = vshll.u32 %v758, 16
        %v768 = vrot.slane %v766, 5
        %v769 = vor.u32 %v765, %v768
        %v770 = vrot.slane %v769, 4
        %v772 = vshll.u32 %v759, 16
        %v774 = vrot.slane %v772, 5
        %v775 = vsel %vm724, %v770, %v774
        %v777 = vshrl.u32 %v760, 16
        %v779 = vrot.slane %v777, 4
        %v780 = vshll.u32 %v760, 16
        %v782 = vrot.slane %v780, 5
        %v783 = vor.u32 %v779, %v782
        %v784 = vrot.slane %v783, 4
        %v786 = vshll.u32 %v761, 16
        %v788 = vrot.slane %v786, 5
        %v789 = vsel %vm724, %v784, %v788
        %790 = vrot.lane.b32.xlu0 %v775, 127
        %v791 = vpop.permute.xlu0 %790
        %792 = vrot.lane.b32.xlu0 %v789, 127
        %v793 = vpop.permute.xlu0 %792
        %s796 = scalar_lea.vmem [#allocation3], 32
        %797 = vst.msk [vmem:[%s796] sm:$0xf] %vm689, %v791
        %798 = vst.msk [vmem:[%s796 + $0x4] sm:$0xf] %vm689, %v793
        %v799 = vld [vmem:[#allocation2] sm:$0xf]
        %v800 = vld [vmem:[#allocation2 + $0x4] sm:$0x1]
        %v801 = vld [vmem:[#allocation2 + $0x8] sm:$0xf]
        %v802 = vld [vmem:[#allocation2 + $0xc] sm:$0x1]
        %v804 = vshrl.u32 %v799, 16
        %v806 = vrot.slane %v804, 4
        %v807 = vshll.u32 %v799, 16
        %v809 = vrot.slane %v807, 5
        %v810 = vor.u32 %v806, %v809
        %v811 = vrot.slane %v810, 4
        %v813 = vshll.u32 %v800, 16
        %v815 = vrot.slane %v813, 5
        %v816 = vsel %vm724, %v811, %v815
        %v818 = vshrl.u32 %v801, 16
        %v820 = vrot.slane %v818, 4
        %v821 = vshll.u32 %v801, 16
        %v823 = vrot.slane %v821, 5
        %v824 = vor.u32 %v820, %v823
        %v825 = vrot.slane %v824, 4
        %v827 = vshll.u32 %v802, 16
        %v829 = vrot.slane %v827, 5
        %v830 = vsel %vm724, %v825, %v829
        %831 = vrot.lane.b32.xlu0 %v816, 126
        %v832 = vpop.permute.xlu0 %831
        %833 = vrot.lane.b32.xlu0 %v830, 126
        %v834 = vpop.permute.xlu0 %833
        %s837 = scalar_lea.vmem [#allocation3], 40
        %838 = vst.msk [vmem:[%s837] sm:$0xf] %vm689, %v832
        %839 = vst.msk [vmem:[%s837 + $0x4] sm:$0xf] %vm689, %v834
        %v840 = vld [vmem:[#allocation2] sm:$0xe]
        %v841 = vld [vmem:[#allocation2 + $0x4] sm:$0x1]
        %v842 = vld [vmem:[#allocation2 + $0x8] sm:$0xe]
        %v843 = vld [vmem:[#allocation2 + $0xc] sm:$0x1]
        %vm848 = vcmask 1042432
        %vm849 = vcmask 1046532
        %vm850 = vmor %vm848, %vm849
        %v851 = vrot.slane %v840, 5
        %v852 = vrot.slane %v851, 4
        %v853 = vrot.slane %v841, 5
        %v854 = vsel %vm850, %v852, %v853
        %v855 = vrot.slane %v842, 5
        %v856 = vrot.slane %v855, 4
        %v857 = vrot.slane %v843, 5
        %v858 = vsel %vm850, %v856, %v857
        %s861 = scalar_lea.vmem [#allocation3], 48
        %862 = vst.msk [vmem:[%s861] sm:$0xf] %vm689, %v854
        %863 = vst.msk [vmem:[%s861 + $0x4] sm:$0xf] %vm689, %v858
        %v864 = vld [vmem:[#allocation2] sm:$0xe]
        %v865 = vld [vmem:[#allocation2 + $0x4] sm:$0x1]
        %v866 = vld [vmem:[#allocation2 + $0x8] sm:$0xe]
        %v867 = vld [vmem:[#allocation2 + $0xc] sm:$0x1]
        %v872 = vrot.slane %v864, 5
        %v873 = vrot.slane %v872, 4
        %v874 = vrot.slane %v865, 5
        %v875 = vsel %vm850, %v873, %v874
        %v876 = vrot.slane %v866, 5
        %v877 = vrot.slane %v876, 4
        %v878 = vrot.slane %v867, 5
        %v879 = vsel %vm850, %v877, %v878
        %880 = vrot.lane.b32.xlu0 %v875, 127
        %v881 = vpop.permute.xlu0 %880
        %882 = vrot.lane.b32.xlu0 %v879, 127
        %v883 = vpop.permute.xlu0 %882
        %s886 = scalar_lea.vmem [#allocation3], 56
        %887 = vst.msk [vmem:[%s886] sm:$0xf] %vm689, %v881
        %888 = vst.msk [vmem:[%s886 + $0x4] sm:$0xf] %vm689, %v883
        %v889 = vld [vmem:[#allocation2] sm:$0xe]
        %v890 = vld [vmem:[#allocation2 + $0x4] sm:$0x1]
        %v891 = vld [vmem:[#allocation2 + $0x8] sm:$0xe]
        %v892 = vld [vmem:[#allocation2 + $0xc] sm:$0x1]
        %v897 = vrot.slane %v889, 5
        %v898 = vrot.slane %v897, 4
        %v899 = vrot.slane %v890, 5
        %v900 = vsel %vm850, %v898, %v899
        %v901 = vrot.slane %v891, 5
        %v902 = vrot.slane %v901, 4
        %v903 = vrot.slane %v892, 5
        %v904 = vsel %vm850, %v902, %v903
        %905 = vrot.lane.b32.xlu0 %v900, 126
        %v906 = vpop.permute.xlu0 %905
        %907 = vrot.lane.b32.xlu0 %v904, 126
        %v908 = vpop.permute.xlu0 %907
        %s911 = scalar_lea.vmem [#allocation3], 64
        %912 = vst.msk [vmem:[%s911] sm:$0xf] %vm689, %v906
        %913 = vst.msk [vmem:[%s911 + $0x4] sm:$0xf] %vm689, %v908
        %v914 = vld [vmem:[#allocation3] sm:$0xf]
        %v915 = vld [vmem:[#allocation3 + $0x4] sm:$0xf]
        %v916 = vld [vmem:[#allocation3 + $0x8] sm:$0xf]
        %v917 = vld [vmem:[#allocation3 + $0xc] sm:$0xf]
        %v918 = vld [vmem:[#allocation3 + $0x10] sm:$0xf]
        %v919 = vld [vmem:[#allocation3 + $0x14] sm:$0xf]
        %v920 = vld [vmem:[#allocation3 + $0x18] sm:$0xf]
        %v921 = vld [vmem:[#allocation3 + $0x1c] sm:$0xf]
        %v922 = vld [vmem:[#allocation3 + $0x20] sm:$0xf]
        %v923 = vld [vmem:[#allocation3 + $0x24] sm:$0xf]
        %v924 = vld [vmem:[#allocation3 + $0x28] sm:$0xf]
        %v925 = vld [vmem:[#allocation3 + $0x2c] sm:$0xf]
        %v926 = vld [vmem:[#allocation3 + $0x30] sm:$0xf]
        %v927 = vld [vmem:[#allocation3 + $0x34] sm:$0xf]
        %v928 = vld [vmem:[#allocation3 + $0x38] sm:$0xf]
        %v929 = vld [vmem:[#allocation3 + $0x3c] sm:$0xf]
        %v930 = vld [vmem:[#allocation3 + $0x40] sm:$0xf]
        %v931 = vld [vmem:[#allocation3 + $0x44] sm:$0xf]
        %v934 = vpack.i.b16 %v915, %v914
        %v936 = vshrl.u32 %v914, 16
        %v937 = vshrl.u32 %v915, 16
        %v938 = vpack.i.b16 %v937, %v936
        %v942 = vpack.i.b16 %v917, %v916
        %v944 = vshrl.u32 %v916, 16
        %v945 = vshrl.u32 %v917, 16
        %v946 = vpack.i.b16 %v945, %v944
        %v950 = vpack.i.b16 %v919, %v918
        %v952 = vshrl.u32 %v918, 16
        %v953 = vshrl.u32 %v919, 16
        %v954 = vpack.i.b16 %v953, %v952
        %v958 = vpack.i.b16 %v921, %v920
        %v960 = vshrl.u32 %v920, 16
        %v961 = vshrl.u32 %v921, 16
        %v962 = vpack.i.b16 %v961, %v960
        %v966 = vpack.i.b16 %v923, %v922
        %v968 = vshrl.u32 %v922, 16
        %v969 = vshrl.u32 %v923, 16
        %v970 = vpack.i.b16 %v969, %v968
        %v974 = vpack.i.b16 %v925, %v924
        %v976 = vshrl.u32 %v924, 16
        %v977 = vshrl.u32 %v925, 16
        %v978 = vpack.i.b16 %v977, %v976
        %v982 = vpack.i.b16 %v927, %v926
        %v984 = vshrl.u32 %v926, 16
        %v985 = vshrl.u32 %v927, 16
        %v986 = vpack.i.b16 %v985, %v984
        %v990 = vpack.i.b16 %v929, %v928
        %v992 = vshrl.u32 %v928, 16
        %v993 = vshrl.u32 %v929, 16
        %v994 = vpack.i.b16 %v993, %v992
        %v998 = vpack.i.b16 %v931, %v930
        %v999 = vshrl.u32 %v930, 16
        %v1000 = vshrl.u32 %v931, 16
        %v1001 = vpack.i.b16 %v1000, %v999
        %v1002 = vcombine.low %v934, %v950
        %v1004 = vunpack.c.l.s4 1983009808
        %v1005 = vunpack.c.0.s8 %v1004
        %v1006 = vlaneseq
        %v1007 = vshrl.u32 %v1006, 7
        %v1008 = vsub.s32 %v1005, %v1007
        %v1009 = vrot.slane %v1002, %v1008
        %v1010 = vcombine.low %v942, %v958
        %v1012 = vunpack.c.l.s4 1983009808
        %v1013 = vunpack.c.0.s8 %v1012
        %v1014 = vlaneseq
        %v1015 = vshrl.u32 %v1014, 7
        %v1016 = vsub.s32 %v1013, %v1015
        %v1017 = vrot.slane %v1010, %v1016
        %v1018 = vcombine.low %v1009, %v1017
        %v1019 = vcombine.high %v1009, %v1017
        %v1021 = vunpack.c.l.s4 1934713408
        %v1022 = vunpack.c.0.s8 %v1021
        %v1023 = vlaneseq
        %v1024 = vshrl.u32 %v1023, 7
        %v1025 = vsub.s32 %v1022, %v1024
        %v1026 = vrot.slane %v1018, %v1025
        %v1028 = vunpack.c.l.s4 1934713408
        %v1029 = vunpack.c.0.s8 %v1028
        %v1030 = vlaneseq
        %v1031 = vshrl.u32 %v1030, 7
        %v1032 = vsub.s32 %v1029, %v1031
        %v1033 = vrot.slane %v1019, %v1032
        %v1034 = vcombine.high %v1026, 0
        %v1035 = vcombine.high %v1033, 0
        %v1036 = vcombine.low %v938, %v954
        %v1038 = vunpack.c.l.s4 1983009808
        %v1039 = vunpack.c.0.s8 %v1038
        %v1040 = vlaneseq
        %v1041 = vshrl.u32 %v1040, 7
        %v1042 = vsub.s32 %v1039, %v1041
        %v1043 = vrot.slane %v1036, %v1042
        %v1044 = vcombine.low %v946, %v962
        %v1046 = vunpack.c.l.s4 1983009808
        %v1047 = vunpack.c.0.s8 %v1046
        %v1048 = vlaneseq
        %v1049 = vshrl.u32 %v1048, 7
        %v1050 = vsub.s32 %v1047, %v1049
        %v1051 = vrot.slane %v1044, %v1050
        %v1052 = vcombine.low %v1043, %v1051
        %v1053 = vcombine.high %v1043, %v1051
        %v1055 = vunpack.c.l.s4 1934713408
        %v1056 = vunpack.c.0.s8 %v1055
        %v1057 = vlaneseq
        %v1058 = vshrl.u32 %v1057, 7
        %v1059 = vsub.s32 %v1056, %v1058
        %v1060 = vrot.slane %v1052, %v1059
        %v1062 = vunpack.c.l.s4 1934713408
        %v1063 = vunpack.c.0.s8 %v1062
        %v1064 = vlaneseq
        %v1065 = vshrl.u32 %v1064, 7
        %v1066 = vsub.s32 %v1063, %v1065
        %v1067 = vrot.slane %v1053, %v1066
        %v1068 = vcombine.high %v1060, 0
        %v1069 = vcombine.high %v1067, 0
        %v1070 = vcombine.low %v966, %v982
        %v1072 = vunpack.c.l.s4 1983009808
        %v1073 = vunpack.c.0.s8 %v1072
        %v1074 = vlaneseq
        %v1075 = vshrl.u32 %v1074, 7
        %v1076 = vsub.s32 %v1073, %v1075
        %v1077 = vrot.slane %v1070, %v1076
        %v1078 = vcombine.low %v974, %v990
        %v1080 = vunpack.c.l.s4 1983009808
        %v1081 = vunpack.c.0.s8 %v1080
        %v1082 = vlaneseq
        %v1083 = vshrl.u32 %v1082, 7
        %v1084 = vsub.s32 %v1081, %v1083
        %v1085 = vrot.slane %v1078, %v1084
        %v1086 = vcombine.low %v1077, %v1085
        %v1087 = vcombine.high %v1077, %v1085
        %v1089 = vunpack.c.l.s4 1934713408
        %v1090 = vunpack.c.0.s8 %v1089
        %v1091 = vlaneseq
        %v1092 = vshrl.u32 %v1091, 7
        %v1093 = vsub.s32 %v1090, %v1092
        %v1094 = vrot.slane %v1086, %v1093
        %v1096 = vunpack.c.l.s4 1934713408
        %v1097 = vunpack.c.0.s8 %v1096
        %v1098 = vlaneseq
        %v1099 = vshrl.u32 %v1098, 7
        %v1100 = vsub.s32 %v1097, %v1099
        %v1101 = vrot.slane %v1087, %v1100
        %v1102 = vcombine.high %v1094, 0
        %v1103 = vcombine.high %v1101, 0
        %v1104 = vcombine.low %v970, %v986
        %v1106 = vunpack.c.l.s4 1983009808
        %v1107 = vunpack.c.0.s8 %v1106
        %v1108 = vlaneseq
        %v1109 = vshrl.u32 %v1108, 7
        %v1110 = vsub.s32 %v1107, %v1109
        %v1111 = vrot.slane %v1104, %v1110
        %v1112 = vcombine.low %v978, %v994
        %v1114 = vunpack.c.l.s4 1983009808
        %v1115 = vunpack.c.0.s8 %v1114
        %v1116 = vlaneseq
        %v1117 = vshrl.u32 %v1116, 7
        %v1118 = vsub.s32 %v1115, %v1117
        %v1119 = vrot.slane %v1112, %v1118
        %v1120 = vcombine.low %v1111, %v1119
        %v1121 = vcombine.high %v1111, %v1119
        %v1123 = vunpack.c.l.s4 1934713408
        %v1124 = vunpack.c.0.s8 %v1123
        %v1125 = vlaneseq
        %v1126 = vshrl.u32 %v1125, 7
        %v1127 = vsub.s32 %v1124, %v1126
        %v1128 = vrot.slane %v1120, %v1127
        %v1130 = vunpack.c.l.s4 1934713408
        %v1131 = vunpack.c.0.s8 %v1130
        %v1132 = vlaneseq
        %v1133 = vshrl.u32 %v1132, 7
        %v1134 = vsub.s32 %v1131, %v1133
        %v1135 = vrot.slane %v1121, %v1134
        %v1136 = vcombine.high %v1128, 0
        %v1137 = vcombine.high %v1135, 0
        %v1140 = vunpack.c.l.s4 1983009808
        %v1141 = vunpack.c.0.s8 %v1140
        %v1142 = vlaneseq
        %v1143 = vshrl.u32 %v1142, 7
        %v1144 = vsub.s32 %v1141, %v1143
        %v1145 = vrot.slane %v998, %v1144
        %v1146 = vcombine.high %v1145, 0
        %v1148 = vunpack.c.l.s4 1934713408
        %v1149 = vunpack.c.0.s8 %v1148
        %v1150 = vlaneseq
        %v1151 = vshrl.u32 %v1150, 7
        %v1152 = vsub.s32 %v1149, %v1151
        %v1153 = vrot.slane %v1145, %v1152
        %v1155 = vunpack.c.l.s4 1934713408
        %v1156 = vunpack.c.0.s8 %v1155
        %v1157 = vlaneseq
        %v1158 = vshrl.u32 %v1157, 7
        %v1159 = vsub.s32 %v1156, %v1158
        %v1160 = vrot.slane %v1146, %v1159
        %v1161 = vcombine.high %v1153, 0
        %v1162 = vcombine.high %v1160, 0
        %v1165 = vunpack.c.l.s4 1983009808
        %v1166 = vunpack.c.0.s8 %v1165
        %v1167 = vlaneseq
        %v1168 = vshrl.u32 %v1167, 7
        %v1169 = vsub.s32 %v1166, %v1168
        %v1170 = vrot.slane %v1001, %v1169
        %v1171 = vcombine.high %v1170, 0
        %v1173 = vunpack.c.l.s4 1934713408
        %v1174 = vunpack.c.0.s8 %v1173
        %v1175 = vlaneseq
        %v1176 = vshrl.u32 %v1175, 7
        %v1177 = vsub.s32 %v1174, %v1176
        %v1178 = vrot.slane %v1170, %v1177
        %v1180 = vunpack.c.l.s4 1934713408
        %v1181 = vunpack.c.0.s8 %v1180
        %v1182 = vlaneseq
        %v1183 = vshrl.u32 %v1182, 7
        %v1184 = vsub.s32 %v1181, %v1183
        %v1185 = vrot.slane %v1171, %v1184
        %v1186 = vcombine.high %v1178, 0
        %v1187 = vcombine.high %v1185, 0
        %v1191 = vunpack.c.l.b16 %v1026
        %v1192 = vunpack.c.l.b16 %v1094
        %v1193 = vunpack.c.l.b16 %v1153
        %v1194 = vpack.c.b16 %v1192, %v1191
        %v1195 = vpack.c.b16 %v1193, %v1193
        %v1199 = vunpack.c.l.b16 %v1060
        %v1200 = vunpack.c.l.b16 %v1128
        %v1201 = vunpack.c.l.b16 %v1178
        %v1202 = vpack.c.b16 %v1200, %v1199
        %v1203 = vpack.c.b16 %v1201, %v1201
        %1204 = vrot.lane.b32.xlu0 %v1202, 16
        %v1205 = vpop.permute.xlu0 %1204
        %1206 = vrot.lane.b32.xlu0 %v1203, 16
        %v1207 = vpop.permute.xlu0 %1206
        %v1211 = vunpack.c.l.b16 %v1034
        %v1212 = vunpack.c.l.b16 %v1102
        %v1213 = vunpack.c.l.b16 %v1161
        %v1214 = vpack.c.b16 %v1212, %v1211
        %v1215 = vpack.c.b16 %v1213, %v1213
        %1216 = vrot.lane.b32.xlu0 %v1214, 32
        %v1217 = vpop.permute.xlu0 %1216
        %1218 = vrot.lane.b32.xlu0 %v1215, 32
        %v1219 = vpop.permute.xlu0 %1218
        %v1223 = vunpack.c.l.b16 %v1068
        %v1224 = vunpack.c.l.b16 %v1136
        %v1225 = vunpack.c.l.b16 %v1186
        %v1226 = vpack.c.b16 %v1224, %v1223
        %v1227 = vpack.c.b16 %v1225, %v1225
        %1228 = vrot.lane.b32.xlu0 %v1226, 48
        %v1229 = vpop.permute.xlu0 %1228
        %1230 = vrot.lane.b32.xlu0 %v1227, 48
        %v1231 = vpop.permute.xlu0 %1230
        %v1235 = vunpack.c.l.b16 %v1033
        %v1236 = vunpack.c.l.b16 %v1101
        %v1237 = vunpack.c.l.b16 %v1160
        %v1238 = vpack.c.b16 %v1236, %v1235
        %v1239 = vpack.c.b16 %v1237, %v1237
        %1240 = vrot.lane.b32.xlu0 %v1238, 64
        %v1241 = vpop.permute.xlu0 %1240
        %1242 = vrot.lane.b32.xlu0 %v1239, 64
        %v1243 = vpop.permute.xlu0 %1242
        %v1247 = vunpack.c.l.b16 %v1067
        %v1248 = vunpack.c.l.b16 %v1135
        %v1249 = vunpack.c.l.b16 %v1185
        %v1250 = vpack.c.b16 %v1248, %v1247
        %v1251 = vpack.c.b16 %v1249, %v1249
        %1252 = vrot.lane.b32.xlu0 %v1250, 80
        %v1253 = vpop.permute.xlu0 %1252
        %1254 = vrot.lane.b32.xlu0 %v1251, 80
        %v1255 = vpop.permute.xlu0 %1254
        %v1259 = vunpack.c.l.b16 %v1035
        %v1260 = vunpack.c.l.b16 %v1103
        %v1261 = vunpack.c.l.b16 %v1162
        %v1262 = vpack.c.b16 %v1260, %v1259
        %v1263 = vpack.c.b16 %v1261, %v1261
        %1264 = vrot.lane.b32.xlu0 %v1262, 96
        %v1265 = vpop.permute.xlu0 %1264
        %1266 = vrot.lane.b32.xlu0 %v1263, 96
        %v1267 = vpop.permute.xlu0 %1266
        %v1271 = vunpack.c.l.b16 %v1069
        %v1272 = vunpack.c.l.b16 %v1137
        %v1273 = vunpack.c.l.b16 %v1187
        %v1274 = vpack.c.b16 %v1272, %v1271
        %v1275 = vpack.c.b16 %v1273, %v1273
        %1276 = vrot.lane.b32.xlu0 %v1274, 112
        %v1277 = vpop.permute.xlu0 %1276
        %1278 = vrot.lane.b32.xlu0 %v1275, 112
        %v1279 = vpop.permute.xlu0 %1278
        %vm1280 = vcmask 130048
        %v1283 = vsel %vm1280, %v1194, %v1205
        %v1286 = vsel %vm1280, %v1195, %v1207
        %vm1287 = vcmask 261120
        %v1289 = vsel %vm1287, %v1283, %v1217
        %v1291 = vsel %vm1287, %v1286, %v1219
        %vm1292 = vcmask 392192
        %v1294 = vsel %vm1292, %v1289, %v1229
        %v1296 = vsel %vm1292, %v1291, %v1231
        %vm1297 = vcmask 523264
        %v1299 = vsel %vm1297, %v1294, %v1241
        %v1301 = vsel %vm1297, %v1296, %v1243
        %vm1302 = vcmask 654336
        %v1304 = vsel %vm1302, %v1299, %v1253
        %v1306 = vsel %vm1302, %v1301, %v1255
        %vm1307 = vcmask 785408
        %v1309 = vsel %vm1307, %v1304, %v1265
        %v1311 = vsel %vm1307, %v1306, %v1267
        %vm1312 = vcmask 916480
        %v1314 = vsel %vm1312, %v1309, %v1277
        %v1317 = vsel %vm1312, %v1311, %v1279
        %v1318 = vld [vmem:[%s4] sm:$0x1]
        %v1319 = vld [vmem:[%s5] sm:$0x3]
        %1321 = vset.pattern.permute.xlu0 0
        %1322 = vperm.xlu0 %1321, %v1319
        %v1323 = vpop.permute.xlu0 %1322
        %vm1325 = vcmask 146432
        %v1327 = vsel %vm1325, %v1318, 0
        %vm1329 = vcmask 1040384
        %v1330 = vsel %vm1329, %v1317, 0
        %1332 = vmatprep.subr.bf16.mxu0 0
        %1333 = vmatpush1.bf16.msra.mxu0 0
        %1334 = vmatprep.subr.bf16.mxu0 0
        %1335 = vmatpush1.bf16.msra.mxu0 0
        %1336 = vmatprep.subr.bf16.mxu0 0
        %1337 = vmatpush1.bf16.msra.mxu0 0
        %1338 = vmatprep.subr.bf16.mxu0 0
        %1339 = vmatpush1.bf16.msra.mxu0 0
        %1340 = vmatprep.subr.bf16.mxu0 0
        %1341 = vmatpush1.bf16.msra.mxu0 0
        %1342 = vmatprep.subr.bf16.mxu0 0
        %1343 = vmatpush1.bf16.msra.mxu0 0
        %1344 = vmatprep.subr.bf16.mxu0 0
        %1345 = vmatpush1.bf16.msra.mxu0 %v1330
        %1346 = vmatprep.subr.bf16.mxu0 0
        %1347 = vmatpush1.bf16.msra.mxu0 %v1314
        %1348 = vmatprep.subr.bf16.mxu0 0
        %1349 = vmatpush2.bf16.msra.mxu0 0
        %1350 = vmatprep.subr.bf16.mxu0 0
        %1351 = vmatpush2.bf16.msra.mxu0 0
        %1352 = vmatprep.subr.bf16.mxu0 0
        %1353 = vmatpush2.bf16.msra.mxu0 0
        %1354 = vmatprep.subr.bf16.mxu0 0
        %1355 = vmatpush2.bf16.msra.mxu0 0
        %1356 = vmatprep.subr.bf16.mxu0 0
        %1357 = vmatpush2.bf16.msra.mxu0 0
        %1358 = vmatprep.subr.bf16.mxu0 0
        %1359 = vmatpush2.bf16.msra.mxu0 0
        %1360 = vmatprep.subr.bf16.mxu0 0
        %1361 = vmatpush2.bf16.msra.mxu0 0
        %1362 = vmatprep.subr.bf16.mxu0 0
        %1363 = vmatpush2.bf16.msra.mxu0 0
        %1364 = vmatprep.mubr.bf16.mxu0 0
        %1365 = vmatmul.mubr.bf16.gmra.mxu0 %v1327
        %v1366 = vpop.f32.mrf.mxu0
        %v1367 = vadd.f32 %v1323, %v1366
        %v1368 = vpop.f32.mrf.mxu0
        %v1369 = vpop.f32.mrf.mxu0
        %v1370 = vpop.f32.mrf.mxu0
        %1371 = vdwg.mxu0
        %v1372 = vsub.f32 0.0, %v1367
        %v1373 = vmul.f32 %v1372, 1.442695
        %v1374 = vpow.pop %v1373
        %v1375 = vadd.f32 %v1374, 1.0
        %v1376 = vrcp.pop %v1375
        %v1377 = vmul.f32 %v1367, %v1376
        %v1378 = vld [vmem:[%s504] sm:$0xf]
        %v1379 = vld [vmem:[%s504 + $0x4] sm:$0xf]
        %v1382 = vpack.i.b16 %v1379, %v1378
        %v1383 = vshrl.u32 %v1378, 16
        %v1384 = vshrl.u32 %v1379, 16
        %v1385 = vpack.i.b16 %v1384, %v1383
        %v1388 = vunpack.c.l.s4 1983009808
        %v1389 = vunpack.c.0.s8 %v1388
        %v1390 = vlaneseq
        %v1391 = vshrl.u32 %v1390, 7
        %v1392 = vsub.s32 %v1389, %v1391
        %v1393 = vrot.slane %v1382, %v1392
        %v1394 = vcombine.high %v1393, 0
        %v1396 = vunpack.c.l.s4 1934713408
        %v1397 = vunpack.c.0.s8 %v1396
        %v1398 = vlaneseq
        %v1399 = vshrl.u32 %v1398, 7
        %v1400 = vsub.s32 %v1397, %v1399
        %v1401 = vrot.slane %v1393, %v1400
        %v1403 = vunpack.c.l.s4 1934713408
        %v1404 = vunpack.c.0.s8 %v1403
        %v1405 = vlaneseq
        %v1406 = vshrl.u32 %v1405, 7
        %v1407 = vsub.s32 %v1404, %v1406
        %v1408 = vrot.slane %v1394, %v1407
        %v1409 = vcombine.high %v1401, 0
        %v1410 = vcombine.high %v1408, 0
        %v1413 = vunpack.c.l.s4 1983009808
        %v1414 = vunpack.c.0.s8 %v1413
        %v1415 = vlaneseq
        %v1416 = vshrl.u32 %v1415, 7
        %v1417 = vsub.s32 %v1414, %v1416
        %v1418 = vrot.slane %v1385, %v1417
        %v1419 = vcombine.high %v1418, 0
        %v1421 = vunpack.c.l.s4 1934713408
        %v1422 = vunpack.c.0.s8 %v1421
        %v1423 = vlaneseq
        %v1424 = vshrl.u32 %v1423, 7
        %v1425 = vsub.s32 %v1422, %v1424
        %v1426 = vrot.slane %v1418, %v1425
        %v1428 = vunpack.c.l.s4 1934713408
        %v1429 = vunpack.c.0.s8 %v1428
        %v1430 = vlaneseq
        %v1431 = vshrl.u32 %v1430, 7
        %v1432 = vsub.s32 %v1429, %v1431
        %v1433 = vrot.slane %v1419, %v1432
        %v1434 = vcombine.high %v1426, 0
        %v1435 = vcombine.high %v1433, 0
        %v1437 = vunpack.c.l.b16 %v1426
        %v1438 = vpack.c.b16 %v1437, %v1437
        %1439 = vrot.lane.b32.xlu0 %v1438, 16
        %v1440 = vpop.permute.xlu0 %1439
        %v1442 = vunpack.c.l.b16 %v1409
        %v1443 = vpack.c.b16 %v1442, %v1442
        %1444 = vrot.lane.b32.xlu0 %v1443, 32
        %v1445 = vpop.permute.xlu0 %1444
        %v1447 = vunpack.c.l.b16 %v1434
        %v1448 = vpack.c.b16 %v1447, %v1447
        %1449 = vrot.lane.b32.xlu0 %v1448, 48
        %v1450 = vpop.permute.xlu0 %1449
        %v1452 = vunpack.c.l.b16 %v1408
        %v1453 = vpack.c.b16 %v1452, %v1452
        %1454 = vrot.lane.b32.xlu0 %v1453, 64
        %v1455 = vpop.permute.xlu0 %1454
        %v1457 = vunpack.c.l.b16 %v1433
        %v1458 = vpack.c.b16 %v1457, %v1457
        %1459 = vrot.lane.b32.xlu0 %v1458, 80
        %v1460 = vpop.permute.xlu0 %1459
        %v1462 = vunpack.c.l.b16 %v1410
        %v1463 = vpack.c.b16 %v1462, %v1462
        %1464 = vrot.lane.b32.xlu0 %v1463, 96
        %v1465 = vpop.permute.xlu0 %1464
        %v1467 = vunpack.c.l.b16 %v1435
        %v1468 = vpack.c.b16 %v1467, %v1467
        %1469 = vrot.lane.b32.xlu0 %v1468, 112
        %v1470 = vpop.permute.xlu0 %1469
        %v1473 = vsel %vm1280, %v1401, %v1440
        %v1475 = vsel %vm1287, %v1473, %v1445
        %v1477 = vsel %vm1292, %v1475, %v1450
        %v1479 = vsel %vm1297, %v1477, %v1455
        %v1481 = vsel %vm1302, %v1479, %v1460
        %v1483 = vsel %vm1307, %v1481, %v1465
        %v1485 = vsel %vm1312, %v1483, %v1470
        %v1487 = vunpack.c.l.bf16 %v1485
        %v1488 = vadd.f32 %v1377, %v1487
        %v1489 = vpack.c.bf16 %v1488, %v1488
        %1490 = vst [vmem:[%s557] sm:$0x1] %v1489
        %p1491 = scmp.lt.s32.totalorder %s21, 1
        %s1492 = scalar_select %p1491, %s21, 1
        %p1493 = scmp.lt.s32.totalorder %s22, 1
        %s1494 = scalar_select %p1493, %s22, 1
        %s1495 = smul.addr %s1492, 2
        %s1496 = sadd.s32 %s1494, %s1495
        %s1497 = scalar_lea.vmem %s6, %s1496
        // Predicated region
        $region217: #{c2f_forward.10} parent=191 // pred_check
          %p1498 = pneg %p215
        $region218: #{c2f_forward.10} parent=191 // pred_check_branch
          %1500 = sbr.rel (%p1498) target = $region220
        $region219: #{c2f_forward.10} parent=191 // pred_region
          _
        $region220: #{c2f_forward.10} parent=191 // pred_fallthru
          _
      $region192: #{c2f_forward.10} parent=5 // pred_fallthru
        _
      %p1501 = scmp.le.s32.totalorder 2, %s12
      // Predicated region
      $region221: #{c2f_forward.10} parent=5 // pred_check
        %p1502 = pneg %p1501
      $region222: #{c2f_forward.10} parent=5 // pred_check_branch
        %1504 = sbr.rel (%p1502) target = $region224
      $region223: #{c2f_forward.10} parent=5 // pred_region
        %s1505 = ssub.s32 %s12, 2
        // Predicated region
        $region225: #{c2f_forward.10} parent=223 // pred_check
          %p1506 = pneg %p221
        $region226: #{c2f_forward.10} parent=223 // pred_check_branch
          %1508 = sbr.rel (%p1506) target = $region228
        $region227: #{c2f_forward.10} parent=223 // pred_region
          %p1509 = scmp.lt.s32.totalorder %s23, 1
          %s1510 = scalar_select %p1509, %s23, 1
          %p1511 = scmp.lt.s32.totalorder %s24, 1
          %s1512 = scalar_select %p1511, %s24, 1
          %s1513 = smul.addr %s1510, 2
          %s1514 = sadd.s32 %s1512, %s1513
          %s1515 = scalar_lea.vmem %s6, %s1514
        $region228: #{c2f_forward.10} parent=223 // pred_fallthru
          _
      $region224: #{c2f_forward.10} parent=5 // pred_fallthru
        _
    $region6: #{c2f_forward.10} parent=1 // loop_footer
      %s16 = sadd.s32 1, %s12
    $region7: #{c2f_forward.10} parent=1 // loop_footer_branch
      %11 = sbr.rel target = $region3
    $region8: #{c2f_forward.10} parent=1 // loop_exit
      _

// kernel: c2f_forward.11
$region0: #{c2f_forward.11}
  #allocation0 [shape = 'u32[]', space=smem, size = 0x4, offset = 0x4, fixed_abs, tag = 'smem constant byte address 0x4 - core index']
  #allocation1 [shape = 'u32[144,128]{1,0:T(1,128)}', space=vmem, size = 0x12000, scoped, tag = 'internal scratch']
  #allocation2 [shape = 'bf16[8,128]{1,0:T(8,128)(2,1)}', space=vmem, size = 0x800, scoped, tag = 'scratch operand']
  %s0 = inlined_call_operand.vmem [shape: bf16[2,4,256], index: 0, kind: input, shape index: {}]
  %s1 = inlined_call_operand.vmem [shape: bf16[2,2,256], index: 1, kind: input, shape index: {}]
  %s2 = inlined_call_operand.vmem [shape: bf16[2,2,256], index: 2, kind: input, shape index: {}]
  %s3 = inlined_call_operand.vmem [shape: bf16[4,8], index: 3, kind: input, shape index: {}]
  %s4 = inlined_call_operand.vmem [shape: f32[4,1], index: 4, kind: input, shape index: {}]
  %s5 = inlined_call_operand.vmem [shape: f32[2,4,256], index: 5, kind: output, shape index: {}]
  %s6 = sld [smem:[#allocation0]]
  $region53: #{c2f_forward.11} parent=0
    _
  %s8 = ssub.s32 1, %s6
  %s9 = scalar_select 0, %s8, %s6
  loop: start=0, step=1, limit=6
  $region2: #{c2f_forward.11} parent=0 // loop_pre_header
    _
  $region3: #{c2f_forward.11} parent=0 // loop_header
    %s11 = sphi 0, %s15
    %p12 = scmp.ge.s32.totalorder %s11, 6
    %s18 = sphi 0, %s30
    %s19 = sphi 0, %s26
    %s20 = sphi 0, %s18
    %s21 = sphi 0, %s19
    %s22 = sphi 0, %s20
    %s23 = sphi 0, %s21
    %s35 = sphi 0, %s37
    %s38 = sphi 0, %s35
    %s39 = sphi 0, %s38
    %s55 = sphi 0, %s39
    %s63 = sphi 0, %s65
    %s66 = sphi 0, %s63
    %s67 = sphi 0, %s66
    %s83 = sphi 0, %s67
    %s91 = sphi 0, %s93
    %s94 = sphi 0, %s91
    %s95 = sphi 0, %s94
    %s111 = sphi 0, %s95
    %s115 = sphi 0, %s115
    %s117 = sphi 0, %s115
    %s118 = sphi 0, %s117
    %s132 = sphi 0, %s118
    %s136 = sphi 0, %s136
    %s138 = sphi 0, %s136
    %s139 = sphi 0, %s138
    %s153 = sphi 0, %s139
    %s161 = sphi 0, %s163
    %s164 = sphi 0, %s161
    %s165 = sphi 0, %s164
    %s181 = sphi 0, %s165
  $region4: #{c2f_forward.11} parent=0 // loop_header_branch
    %14 = sbr.rel (%p12) target = $region8
  $region5: #{c2f_forward.11} parent=0 // loop_body
    %s16 = ssub.s32 %s11, 1
    %s17 = ssub.s32 %s11, 2
    %s24 = sadd.s32 1, %s19
    %p25 = scmp.ge.s32.totalorder %s24, 2
    %s26 = scalar_select %p25, 0, %s24
    %s27 = sadd.s32 1, %s18
    %s28 = scalar_select %p25, %s27, %s18
    %p29 = scmp.ge.s32.totalorder %s28, 2
    %s30 = scalar_select %p29, 0, %s28
    %s31 = ssub.s32 %s18, %s30
    %s32 = ssub.s32 %s19, %s26
    %s33 = sor.u32 %s31, %s32
    %p34 = scmp.eq.s32.totalorder %s33, 0
    %s36 = sadd.s32 %s35, 1
    %s37 = scalar_select %p34, %s35, %s36
    %p40 = pneg %p34
    %p41 = scmp.eq.s32.totalorder %s11, 3
    %p42 = por %p40, %p41
    %p43 = scmp.ne.s32.totalorder %s35, %s38
    %p44 = scmp.eq.s32.totalorder %s11, 0
    %p45 = por %p43, %p44
    %p46 = scmp.ne.s32.totalorder %s35, %s38
    %p47 = scmp.eq.s32.totalorder %s16, 3
    %p48 = por %p46, %p47
    %p49 = scmp.ne.s32.totalorder %s38, %s39
    %p50 = scmp.eq.s32.totalorder %s16, 0
    %p51 = por %p49, %p50
    %p52 = scmp.ne.s32.totalorder %s38, %s39
    %p53 = scmp.eq.s32.totalorder %s17, 3
    %p54 = por %p52, %p53
    %p56 = scmp.ne.s32.totalorder %s39, %s55
    %p57 = scmp.eq.s32.totalorder %s17, 0
    %p58 = por %p56, %p57
    %s59 = ssub.s32 %s18, %s30
    %s60 = ssub.s32 %s19, %s26
    %s61 = sor.u32 %s59, %s60
    %p62 = scmp.eq.s32.totalorder %s61, 0
    %s64 = sadd.s32 %s63, 1
    %s65 = scalar_select %p62, %s63, %s64
    %p68 = pneg %p62
    %p69 = scmp.eq.s32.totalorder %s11, 3
    %p70 = por %p68, %p69
    %p71 = scmp.ne.s32.totalorder %s63, %s66
    %p72 = scmp.eq.s32.totalorder %s11, 0
    %p73 = por %p71, %p72
    %p74 = scmp.ne.s32.totalorder %s63, %s66
    %p75 = scmp.eq.s32.totalorder %s16, 3
    %p76 = por %p74, %p75
    %p77 = scmp.ne.s32.totalorder %s66, %s67
    %p78 = scmp.eq.s32.totalorder %s16, 0
    %p79 = por %p77, %p78
    %p80 = scmp.ne.s32.totalorder %s66, %s67
    %p81 = scmp.eq.s32.totalorder %s17, 3
    %p82 = por %p80, %p81
    %p84 = scmp.ne.s32.totalorder %s67, %s83
    %p85 = scmp.eq.s32.totalorder %s17, 0
    %p86 = por %p84, %p85
    %s87 = ssub.s32 %s18, %s30
    %s88 = ssub.s32 %s19, %s26
    %s89 = sor.u32 %s87, %s88
    %p90 = scmp.eq.s32.totalorder %s89, 0
    %s92 = sadd.s32 %s91, 1
    %s93 = scalar_select %p90, %s91, %s92
    %p96 = pneg %p90
    %p97 = scmp.eq.s32.totalorder %s11, 3
    %p98 = por %p96, %p97
    %p99 = scmp.ne.s32.totalorder %s91, %s94
    %p100 = scmp.eq.s32.totalorder %s11, 0
    %p101 = por %p99, %p100
    %p102 = scmp.ne.s32.totalorder %s91, %s94
    %p103 = scmp.eq.s32.totalorder %s16, 3
    %p104 = por %p102, %p103
    %p105 = scmp.ne.s32.totalorder %s94, %s95
    %p106 = scmp.eq.s32.totalorder %s16, 0
    %p107 = por %p105, %p106
    %p108 = scmp.ne.s32.totalorder %s94, %s95
    %p109 = scmp.eq.s32.totalorder %s17, 3
    %p110 = por %p108, %p109
    %p112 = scmp.ne.s32.totalorder %s95, %s111
    %p113 = scmp.eq.s32.totalorder %s17, 0
    %p114 = por %p112, %p113
    %s116 = sadd.s32 %s115, 1
    %p119 = scmp.eq.s32.totalorder %s11, 3
    %p120 = scmp.ne.s32.totalorder %s115, %s117
    %p121 = scmp.eq.s32.totalorder %s11, 0
    %p122 = por %p120, %p121
    %p123 = scmp.ne.s32.totalorder %s115, %s117
    %p124 = scmp.eq.s32.totalorder %s16, 3
    %p125 = por %p123, %p124
    %p126 = scmp.ne.s32.totalorder %s117, %s118
    %p127 = scmp.eq.s32.totalorder %s16, 0
    %p128 = por %p126, %p127
    %p129 = scmp.ne.s32.totalorder %s117, %s118
    %p130 = scmp.eq.s32.totalorder %s17, 3
    %p131 = por %p129, %p130
    %p133 = scmp.ne.s32.totalorder %s118, %s132
    %p134 = scmp.eq.s32.totalorder %s17, 0
    %p135 = por %p133, %p134
    %s137 = sadd.s32 %s136, 1
    %p140 = scmp.eq.s32.totalorder %s11, 3
    %p141 = scmp.ne.s32.totalorder %s136, %s138
    %p142 = scmp.eq.s32.totalorder %s11, 0
    %p143 = por %p141, %p142
    %p144 = scmp.ne.s32.totalorder %s136, %s138
    %p145 = scmp.eq.s32.totalorder %s16, 3
    %p146 = por %p144, %p145
    %p147 = scmp.ne.s32.totalorder %s138, %s139
    %p148 = scmp.eq.s32.totalorder %s16, 0
    %p149 = por %p147, %p148
    %p150 = scmp.ne.s32.totalorder %s138, %s139
    %p151 = scmp.eq.s32.totalorder %s17, 3
    %p152 = por %p150, %p151
    %p154 = scmp.ne.s32.totalorder %s139, %s153
    %p155 = scmp.eq.s32.totalorder %s17, 0
    %p156 = por %p154, %p155
    %s157 = ssub.s32 %s18, %s30
    %s158 = ssub.s32 %s19, %s26
    %s159 = sor.u32 %s157, %s158
    %p160 = scmp.eq.s32.totalorder %s159, 0
    %s162 = sadd.s32 %s161, 1
    %s163 = scalar_select %p160, %s161, %s162
    %p166 = pneg %p160
    %p167 = scmp.eq.s32.totalorder %s11, 3
    %p168 = por %p166, %p167
    %p169 = scmp.ne.s32.totalorder %s161, %s164
    %p170 = scmp.eq.s32.totalorder %s11, 0
    %p171 = por %p169, %p170
    %p172 = scmp.ne.s32.totalorder %s161, %s164
    %p173 = scmp.eq.s32.totalorder %s16, 3
    %p174 = por %p172, %p173
    %p175 = scmp.ne.s32.totalorder %s164, %s165
    %p176 = scmp.eq.s32.totalorder %s16, 0
    %p177 = por %p175, %p176
    %p178 = scmp.ne.s32.totalorder %s164, %s165
    %p179 = scmp.eq.s32.totalorder %s17, 3
    %p180 = por %p178, %p179
    %p182 = scmp.ne.s32.totalorder %s165, %s181
    %p183 = scmp.eq.s32.totalorder %s17, 0
    %p184 = por %p182, %p183
    %p185 = scmp.le.s32.totalorder 1, %s11
    %p186 = scmp.lt.s32.totalorder %s11, 5
    %p187 = pnand %p185, %p186
    %p188 = pneg %p187
    // Predicated region
    $region9: #{c2f_forward.11} parent=5 // pred_check
      _
    $region10: #{c2f_forward.11} parent=5 // pred_check_branch
      %190 = sbr.rel (%p187) target = $region12
    $region11: #{c2f_forward.11} parent=5 // pred_region
      %s191 = ssub.s32 %s11, 1
      // Predicated region
      $region13: #{c2f_forward.11} parent=11 // pred_check
        %p192 = pneg %p128
      $region14: #{c2f_forward.11} parent=11 // pred_check_branch
        %194 = sbr.rel (%p192) target = $region16
      $region15: #{c2f_forward.11} parent=11 // pred_region
        _
      $region16: #{c2f_forward.11} parent=11 // pred_fallthru
        _
      // Predicated region
      $region17: #{c2f_forward.11} parent=11 // pred_check
        %p195 = pneg %p149
      $region18: #{c2f_forward.11} parent=11 // pred_check_branch
        %197 = sbr.rel (%p195) target = $region20
      $region19: #{c2f_forward.11} parent=11 // pred_region
        _
      $region20: #{c2f_forward.11} parent=11 // pred_fallthru
        _
    $region12: #{c2f_forward.11} parent=5 // pred_fallthru
      _
    %p198 = scmp.lt.s32.totalorder %s11, 4
    // Predicated region
    $region21: #{c2f_forward.11} parent=5 // pred_check
      %p199 = pneg %p198
    $region22: #{c2f_forward.11} parent=5 // pred_check_branch
      %201 = sbr.rel (%p199) target = $region24
    $region23: #{c2f_forward.11} parent=5 // pred_region
      // Predicated region
      $region25: #{c2f_forward.11} parent=23 // pred_check
        %p202 = pneg %p45
      $region26: #{c2f_forward.11} parent=23 // pred_check_branch
        %204 = sbr.rel (%p202) target = $region28
      $region27: #{c2f_forward.11} parent=23 // pred_region
        %p205 = scmp.lt.s32.totalorder %s18, 1
        %s206 = scalar_select %p205, %s18, 1
        %p207 = scmp.lt.s32.totalorder %s19, 1
        %s208 = scalar_select %p207, %s19, 1
        %s209 = smul.addr %s206, 2
        %s210 = sadd.s32 %s208, %s209
        %s211 = smul.addr %s210, 2
        %s212 = scalar_lea.vmem %s0, %s211
      $region28: #{c2f_forward.11} parent=23 // pred_fallthru
        _
      // Predicated region
      $region29: #{c2f_forward.11} parent=23 // pred_check
        %p213 = pneg %p73
      $region30: #{c2f_forward.11} parent=23 // pred_check_branch
        %215 = sbr.rel (%p213) target = $region32
      $region31: #{c2f_forward.11} parent=23 // pred_region
        %p216 = scmp.lt.s32.totalorder %s18, 1
        %s217 = scalar_select %p216, %s18, 1
        %p218 = scmp.lt.s32.totalorder %s19, 1
        %s219 = scalar_select %p218, %s19, 1
        %s220 = smul.addr %s217, 2
        %s221 = sadd.s32 %s219, %s220
        %s222 = scalar_lea.vmem %s1, %s221
      $region32: #{c2f_forward.11} parent=23 // pred_fallthru
        _
      // Predicated region
      $region33: #{c2f_forward.11} parent=23 // pred_check
        %p223 = pneg %p101
      $region34: #{c2f_forward.11} parent=23 // pred_check_branch
        %225 = sbr.rel (%p223) target = $region36
      $region35: #{c2f_forward.11} parent=23 // pred_region
        %p226 = scmp.lt.s32.totalorder %s18, 1
        %s227 = scalar_select %p226, %s18, 1
        %p228 = scmp.lt.s32.totalorder %s19, 1
        %s229 = scalar_select %p228, %s19, 1
        %s230 = smul.addr %s227, 2
        %s231 = sadd.s32 %s229, %s230
        %s232 = scalar_lea.vmem %s2, %s231
      $region36: #{c2f_forward.11} parent=23 // pred_fallthru
        _
    $region24: #{c2f_forward.11} parent=5 // pred_fallthru
      _
    %p233 = scmp.le.s32.totalorder 1, %s11
    %p234 = scmp.lt.s32.totalorder %s11, 5
    %p235 = pnand %p233, %p234
    %p236 = pneg %p235
    // Predicated region
    $region37: #{c2f_forward.11} parent=5 // pred_check
      _
    $region38: #{c2f_forward.11} parent=5 // pred_check_branch
      %238 = sbr.rel (%p235) target = $region40
    $region39: #{c2f_forward.11} parent=5 // pred_region
      %s239 = ssub.s32 %s11, 1
      %p240 = scmp.lt.s32.totalorder %s20, 1
      %s241 = scalar_select %p240, %s20, 1
      %p242 = scmp.lt.s32.totalorder %s21, 1
      %s243 = scalar_select %p242, %s21, 1
      %s244 = smul.addr %s241, 2
      %s245 = sadd.s32 %s243, %s244
      %s246 = smul.addr %s245, 2
      %s247 = scalar_lea.vmem %s0, %s246
      %p248 = pneg %p51
      %p249 = pneg %p48
      %p250 = scmp.lt.s32.totalorder %s20, 1
      %s251 = scalar_select %p250, %s20, 1
      %p252 = scmp.lt.s32.totalorder %s21, 1
      %s253 = scalar_select %p252, %s21, 1
      %s254 = smul.addr %s251, 2
      %s255 = sadd.s32 %s253, %s254
      %s256 = scalar_lea.vmem %s1, %s255
      %p257 = pneg %p79
      %p258 = pneg %p76
      %p259 = scmp.lt.s32.totalorder %s20, 1
      %s260 = scalar_select %p259, %s20, 1
      %p261 = scmp.lt.s32.totalorder %s21, 1
      %s262 = scalar_select %p261, %s21, 1
      %s263 = smul.addr %s260, 2
      %s264 = sadd.s32 %s262, %s263
      %s265 = scalar_lea.vmem %s2, %s264
      %p266 = pneg %p107
      %p267 = pneg %p104
      %p268 = pneg %p128
      %p269 = pneg %p125
      %p270 = pneg %p149
      %p271 = pneg %p146
      %p272 = pneg %p177
      %p273 = pneg %p174
      %p274 = scmp.lt.s32.totalorder %s20, 1
      %s275 = scalar_select %p274, %s20, 1
      %p276 = scmp.lt.s32.totalorder %s21, 1
      %s277 = scalar_select %p276, %s21, 1
      %s278 = smul.addr %s275, 2
      %s279 = sadd.s32 %s277, %s278
      %s280 = smul.addr %s279, 4
      %s281 = scalar_lea.vmem %s5, %s280
      %p282 = scmp.lt.s32.totalorder %s20, 1
      %s283 = scalar_select %p282, %s20, 1
      %p284 = scmp.lt.s32.totalorder %s21, 1
      %s285 = scalar_select %p284, %s21, 1
      %s286 = smul.addr %s283, 2
      %s287 = sadd.s32 %s285, %s286
      %s288 = smul.addr %s287, 2
      %s289 = scalar_lea.vmem %s0, %s288
      %p290 = scmp.lt.s32.totalorder %s20, 1
      %s291 = scalar_select %p290, %s20, 1
      %p292 = scmp.lt.s32.totalorder %s21, 1
      %s293 = scalar_select %p292, %s21, 1
      %s294 = smul.addr %s291, 2
      %s295 = sadd.s32 %s293, %s294
      %s296 = scalar_lea.vmem %s1, %s295
      %p297 = scmp.lt.s32.totalorder %s20, 1
      %s298 = scalar_select %p297, %s20, 1
      %p299 = scmp.lt.s32.totalorder %s21, 1
      %s300 = scalar_select %p299, %s21, 1
      %s301 = smul.addr %s298, 2
      %s302 = sadd.s32 %s300, %s301
      %s303 = scalar_lea.vmem %s2, %s302
      %p304 = scmp.lt.s32.totalorder %s20, 1
      %s305 = scalar_select %p304, %s20, 1
      %p306 = scmp.lt.s32.totalorder %s21, 1
      %s307 = scalar_select %p306, %s21, 1
      %s308 = smul.addr %s305, 2
      %s309 = sadd.s32 %s307, %s308
      %s310 = smul.addr %s309, 4
      %s311 = scalar_lea.vmem %s5, %s310
      %v313 = vld [vmem:[%s289] sm:$0x3]
      %314 = vst [vmem:[#allocation2] sm:$0x3] %v313
      %v315 = vld [vmem:[%s296] sm:$0x1]
      %v317 = vcombine.low %v315, %v315
      %v319 = vunpack.c.l.s4 1935823168
      %v320 = vunpack.c.0.s8 %v319
      %v321 = vlaneseq
      %v322 = vshrl.u32 %v321, 7
      %v323 = vsub.s32 %v320, %v322
      %v324 = vrot.slane %v317, %v323
      %v326 = vunpack.c.l.s4 1935823168
      %v327 = vunpack.c.0.s8 %v326
      %v328 = vlaneseq
      %v329 = vshrl.u32 %v328, 7
      %v330 = vsub.s32 %v327, %v329
      %v331 = vrot.slane %v324, %v330
      %333 = vst [vmem:[#allocation2] sm:$0x4] %v331
      %v334 = vld [vmem:[%s303] sm:$0x1]
      %v336 = vcombine.low %v334, %v334
      %v338 = vunpack.c.l.s4 1935823168
      %v339 = vunpack.c.0.s8 %v338
      %v340 = vlaneseq
      %v341 = vshrl.u32 %v340, 7
      %v342 = vsub.s32 %v339, %v341
      %v343 = vrot.slane %v336, %v342
      %v344 = vcombine.low %v343, %v343
      %v346 = vunpack.c.l.s4 1935823168
      %v347 = vunpack.c.0.s8 %v346
      %v348 = vlaneseq
      %v349 = vshrl.u32 %v348, 7
      %v350 = vsub.s32 %v347, %v349
      %v351 = vrot.slane %v344, %v350
      %353 = vst [vmem:[#allocation2] sm:$0x8] %v351
      %v354 = vld [vmem:[%s3] sm:$0x3]
      %v355 = vld [vmem:[#allocation2] sm:$0xf]
      %v356 = vld [vmem:[%s4] sm:$0xf]
      %358 = vset.pattern.permute.xlu0 0
      %359 = vperm.xlu0 %358, %v356
      %v360 = vpop.permute.xlu0 %359
      %vm362 = vcmask 64512
      %v364 = vsel %vm362, %v354, 0
      %vm366 = vcmask 1043456
      %v368 = vsel %vm366, %v355, 0
      %370 = vmatprep.subr.bf16.mxu0 0
      %371 = vmatpush1.bf16.msra.mxu0 0
      %372 = vmatprep.subr.bf16.mxu0 0
      %373 = vmatpush1.bf16.msra.mxu0 0
      %374 = vmatprep.subr.bf16.mxu0 0
      %375 = vmatpush1.bf16.msra.mxu0 0
      %376 = vmatprep.subr.bf16.mxu0 0
      %377 = vmatpush1.bf16.msra.mxu0 0
      %378 = vmatprep.subr.bf16.mxu0 0
      %379 = vmatpush1.bf16.msra.mxu0 0
      %380 = vmatprep.subr.bf16.mxu0 0
      %381 = vmatpush1.bf16.msra.mxu0 0
      %382 = vmatprep.subr.bf16.mxu0 0
      %383 = vmatpush1.bf16.msra.mxu0 0
      %384 = vmatprep.subr.bf16.mxu0 0
      %385 = vmatpush1.bf16.msra.mxu0 %v368
      %386 = vmatprep.subr.bf16.mxu0 0
      %387 = vmatpush2.bf16.msra.mxu0 0
      %388 = vmatprep.subr.bf16.mxu0 0
      %389 = vmatpush2.bf16.msra.mxu0 0
      %390 = vmatprep.subr.bf16.mxu0 0
      %391 = vmatpush2.bf16.msra.mxu0 0
      %392 = vmatprep.subr.bf16.mxu0 0
      %393 = vmatpush2.bf16.msra.mxu0 0
      %394 = vmatprep.subr.bf16.mxu0 0
      %395 = vmatpush2.bf16.msra.mxu0 0
      %396 = vmatprep.subr.bf16.mxu0 0
      %397 = vmatpush2.bf16.msra.mxu0 0
      %398 = vmatprep.subr.bf16.mxu0 0
      %399 = vmatpush2.bf16.msra.mxu0 0
      %400 = vmatprep.subr.bf16.mxu0 0
      %401 = vmatpush2.bf16.msra.mxu0 0
      %402 = vmatprep.mubr.bf16.mxu0 0
      %403 = vmatmul.mubr.bf16.gmra.mxu0 %v364
      %v404 = vpop.f32.mrf.mxu0
      %v405 = vadd.f32 %v360, %v404
      %v406 = vpop.f32.mrf.mxu0
      %v407 = vpop.f32.mrf.mxu0
      %v408 = vpop.f32.mrf.mxu0
      %409 = vdwg.mxu0
      %v410 = vsub.f32 0.0, %v405
      %v411 = vmul.f32 %v410, 1.442695
      %v412 = vpow.pop %v411
      %v413 = vadd.f32 %v412, 1.0
      %v414 = vrcp.pop %v413
      %v415 = vmul.f32 %v405, %v414
      %416 = vst [vmem:[%s311] sm:$0xf] %v415
      %p417 = scmp.lt.s32.totalorder %s20, 1
      %s418 = scalar_select %p417, %s20, 1
      %p419 = scmp.lt.s32.totalorder %s21, 1
      %s420 = scalar_select %p419, %s21, 1
      %s421 = smul.addr %s418, 2
      %s422 = sadd.s32 %s420, %s421
      %s423 = smul.addr %s422, 4
      %s424 = scalar_lea.vmem %s5, %s423
      // Predicated region
      $region41: #{c2f_forward.11} parent=39 // pred_check
        %p425 = pneg %p174
      $region42: #{c2f_forward.11} parent=39 // pred_check_branch
        %427 = sbr.rel (%p425) target = $region44
      $region43: #{c2f_forward.11} parent=39 // pred_region
        _
      $region44: #{c2f_forward.11} parent=39 // pred_fallthru
        _
    $region40: #{c2f_forward.11} parent=5 // pred_fallthru
      _
    %p428 = scmp.le.s32.totalorder 2, %s11
    // Predicated region
    $region45: #{c2f_forward.11} parent=5 // pred_check
      %p429 = pneg %p428
    $region46: #{c2f_forward.11} parent=5 // pred_check_branch
      %431 = sbr.rel (%p429) target = $region48
    $region47: #{c2f_forward.11} parent=5 // pred_region
      %s432 = ssub.s32 %s11, 2
      // Predicated region
      $region49: #{c2f_forward.11} parent=47 // pred_check
        %p433 = pneg %p180
      $region50: #{c2f_forward.11} parent=47 // pred_check_branch
        %435 = sbr.rel (%p433) target = $region52
      $region51: #{c2f_forward.11} parent=47 // pred_region
        %p436 = scmp.lt.s32.totalorder %s22, 1
        %s437 = scalar_select %p436, %s22, 1
        %p438 = scmp.lt.s32.totalorder %s23, 1
        %s439 = scalar_select %p438, %s23, 1
        %s440 = smul.addr %s437, 2
        %s441 = sadd.s32 %s439, %s440
        %s442 = smul.addr %s441, 4
        %s443 = scalar_lea.vmem %s5, %s442
      $region52: #{c2f_forward.11} parent=47 // pred_fallthru
        _
    $region48: #{c2f_forward.11} parent=5 // pred_fallthru
      _
  $region6: #{c2f_forward.11} parent=0 // loop_footer
    %s15 = sadd.s32 1, %s11
  $region7: #{c2f_forward.11} parent=0 // loop_footer_branch
    %10 = sbr.rel target = $region3
  $region8: #{c2f_forward.11} parent=0 // loop_exit
    _

</llo_original>
